<compile_context>
chip_gen: v7x
topology: tpu7x:2x2x1
jax: 0.10.0
libtpu: 0.0.40
codegen_flags: <defaults>
</compile_context>

<pallas_src>
import functools

import jax
import jax.numpy as jnp
from jax.experimental import pallas as pl
from jax.experimental.pallas import tpu as pltpu

LANE = 128  # pad output channels to a multiple of the 128-lane vreg width


def _ceil_to(v, m):
    return -(-v // m) * m


# ----------------------------- Pallas kernels ------------------------------ #

def _conv_bn_relu_kernel(x_ref, w_ref, b_ref, o_ref, *, K, s, Wc, R):
    """Fused KxK conv (K*K tap matmuls) + folded-BN bias + ReLU (one image).

    x_ref: (1, s, s, Rp, Cin)   bf16 phase-split activation
    w_ref: (K*K, Cin, Coutp)    bf16 weights with BN scale folded in
    b_ref: (1, Coutp)           f32 folded BN bias
    o_ref: (1, R, Coutp)        R = OH * Wc (junk right-edge cols sliced outside)
    """
    coutp = o_ref.shape[-1]
    acc = jnp.zeros((R, coutp), jnp.float32)
    for kh in range(K):
        qh, rh = kh // s, kh % s
        for kw in range(K):
            qw, rw = kw // s, kw % s
            start = qh * Wc + qw                       # static Python int
            lhs = x_ref[0, rh, rw, start:start + R, :]  # (R, Cin) bf16
            acc = acc + jnp.dot(lhs, w_ref[kh * K + kw],
                                preferred_element_type=jnp.float32)
    o_ref[0] = jnp.maximum(acc + b_ref[...], 0.0).astype(o_ref.dtype)


def _maxpool_kernel(x_ref, o_ref, *, K, s, Wc, R):
    """KxK / stride-s max pool from the phase-split layout (one image)."""
    result = None
    for kh in range(K):
        qh, rh = kh // s, kh % s
        for kw in range(K):
            qw, rw = kw // s, kw % s
            start = qh * Wc + qw
            tap = x_ref[0, rh, rw, start:start + R, :]
            result = tap if result is None else jnp.maximum(result, tap)
    o_ref[0] = result.astype(o_ref.dtype)


# ------------------------------ JAX glue ----------------------------------- #

def _phase_split(x, K, s, p):
    """(N,H,W,C) -> (N, s, s, Hc*Wc, C) coarse/phase split.  One XLA copy.

    For every valid output (oh, ow) and tap (kh, kw):
        x_pad[oh*s + kh, ow*s + kw] == xps[kh%s, kw%s, (oh + kh//s)*Wc + (ow + kw//s)]
    and (ow + kw//s) < Wc, so inside the kernel each tap is a contiguous slice
    of length OH*Wc starting at (kh//s)*Wc + (kw//s).
    """
    N, H, W, C = x.shape
    Hp, Wp = H + 2 * p, W + 2 * p
    OH = (Hp - K) // s + 1
    OW = (Wp - K) // s + 1
    d = (K - 1) // s                       # extra coarse rows/cols per window
    Wc = -(-Wp // s)
    Hc = OH + d + (1 if d > 0 else 0)      # +1 row so wrapped junk cols stay in-bounds
    pad_b = Hc * s - H - p
    pad_r = Wc * s - W - p
    x = jnp.pad(x, ((0, 0), (p, pad_b), (p, pad_r), (0, 0)))
    x = x.reshape(N, Hc, s, Wc, s, C)
    x = jnp.transpose(x, (0, 2, 4, 1, 3, 5)).reshape(N, s, s, Hc * Wc, C)
    return x, OH, OW, Wc


def conv_bn_relu(x_nhwc, w, gamma, beta, mean, var, *, stride, padding,
                 out_dtype=jnp.float32, eps=1e-5):
    """Conv2d(bias=False) + BatchNorm2d(eval) + ReLU, NHWC in/out."""
    Cout, Cin, K, _ = w.shape
    N = x_nhwc.shape[0]
    s = stride

    xps, OH, OW, Wc = _phase_split(x_nhwc, K, s, padding)
    xps = xps.astype(jnp.bfloat16)
    Rp = xps.shape[3]
    R = OH * Wc

    # Fold BN (eval mode): scale into weights, single bias vector left for kernel.
    scale = gamma / jnp.sqrt(var + eps)
    bias = beta - mean * scale
    w2 = (jnp.transpose(w, (2, 3, 1, 0)).reshape(K * K, Cin, Cout)
          * scale[None, None, :])

    Coutp = _ceil_to(Cout, LANE)
    if Coutp != Cout:
        w2 = jnp.pad(w2, ((0, 0), (0, 0), (0, Coutp - Cout)))
        bias = jnp.pad(bias, (0, Coutp - Cout))
    w2 = w2.astype(jnp.bfloat16)
    bias = bias.reshape(1, Coutp).astype(jnp.float32)

    kern = functools.partial(_conv_bn_relu_kernel, K=K, s=s, Wc=Wc, R=R)
    out = pl.pallas_call(
        kern,
        out_shape=jax.ShapeDtypeStruct((N, R, Coutp), out_dtype),
        grid=(N,),
        in_specs=[
            pl.BlockSpec((1, s, s, Rp, Cin), lambda n: (n, 0, 0, 0, 0)),
            pl.BlockSpec((K * K, Cin, Coutp), lambda n: (0, 0, 0)),
            pl.BlockSpec((1, Coutp), lambda n: (0, 0)),
        ],
        out_specs=pl.BlockSpec((1, R, Coutp), lambda n: (n, 0, 0)),
        compiler_params=pltpu.CompilerParams(
            dimension_semantics=("parallel",)),
    )(xps, w2, bias)

    return out.reshape(N, OH, Wc, Coutp)[:, :, :OW, :Cout]


def maxpool3x3_s2(x_nhwc):
    """MaxPool2d(kernel_size=3, stride=2, padding=0), NHWC in/out."""
    N, _, _, C = x_nhwc.shape
    K, s = 3, 2
    xps, OH, OW, Wc = _phase_split(x_nhwc, K, s, 0)
    Rp = xps.shape[3]
    R = OH * Wc

    kern = functools.partial(_maxpool_kernel, K=K, s=s, Wc=Wc, R=R)
    out = pl.pallas_call(
        kern,
        out_shape=jax.ShapeDtypeStruct((N, R, C), x_nhwc.dtype),
        grid=(N,),
        in_specs=[pl.BlockSpec((1, s, s, Rp, C), lambda n: (n, 0, 0, 0, 0))],
        out_specs=pl.BlockSpec((1, R, C), lambda n: (n, 0, 0)),
        compiler_params=pltpu.CompilerParams(
            dimension_semantics=("parallel",)),
    )(xps)

    return out.reshape(N, OH, Wc, C)[:, :, :OW, :]


# --------------------------- parameters & forward --------------------------- #

def init_params(key, in_channel):
    def conv_bn(k, cin, cout, ksize):
        kw, kg, kb, km, kv = jax.random.split(k, 5)
        return dict(
            w=jax.random.normal(kw, (cout, cin, ksize, ksize), jnp.float32) * 0.05,
            gamma=1.0 + 0.1 * jax.random.normal(kg, (cout,), jnp.float32),
            beta=0.05 * jax.random.normal(kb, (cout,), jnp.float32),
            mean=0.02 * jax.random.normal(km, (cout,), jnp.float32),
            var=1.0 + 0.1 * jax.random.uniform(kv, (cout,), jnp.float32),
        )

    k1, k2a, k2b, k2c = jax.random.split(key, 4)
    return dict(
        b1=conv_bn(k1, in_channel, 384, 3),    # out1: 3x3 / s2 / p0
        b2a=conv_bn(k2a, in_channel, 64, 1),   # out2: 1x1 / s1 / p0
        b2b=conv_bn(k2b, 64, 96, 3),           #       3x3 / s1 / p1
        b2c=conv_bn(k2c, 96, 96, 3),           #       3x3 / s2 / p0
    )


def make_b_forward(params, x_nchw):
    """Equivalent of MakeB.forward. x: (N, C, H, W) -> (N, 384+96+C, OH, OW)."""
    x = jnp.transpose(x_nchw, (0, 2, 3, 1)).astype(jnp.float32)  # NCHW -> NHWC

    def run(p, inp, stride, padding, out_dtype):
        return conv_bn_relu(inp, p["w"], p["gamma"], p["beta"], p["mean"],
                            p["var"], stride=stride, padding=padding,
                            out_dtype=out_dtype)

    # branch 1 (final output -> f32)
    o1 = run(params["b1"], x, 2, 0, jnp.float32)
    # branch 2 (intermediates stay bf16, final conv emits f32)
    o2 = run(params["b2a"], x, 1, 0, jnp.bfloat16)
    o2 = run(params["b2b"], o2, 1, 1, jnp.bfloat16)
    o2 = run(params["b2c"], o2, 2, 0, jnp.float32)
    # branch 3
    o3 = maxpool3x3_s2(x)

    out = jnp.concatenate([o1, o2, o3], axis=-1)  # NHWC concat on channels
    return jnp.transpose(out, (0, 3, 1, 2))       # back to NCHW


if __name__ == "__main__":
    key = jax.random.PRNGKey(0)
    kx, kp = jax.random.split(key)

    N, C, H, W = 2, 4, 16, 16
    x = jax.random.normal(kx, (N, C, H, W), jnp.float32)   # NCHW like PyTorch
    params = init_params(kp, C)

    out = jax.jit(make_b_forward)(params, x)
    out = jax.block_until_ready(out)

    OH = (H - 3) // 2 + 1
    assert out.shape == (N, 384 + 96 + C, OH, OH), out.shape
    assert bool(jnp.all(jnp.isfinite(out)))
    print("KERNEL_OK")
</pallas_src>

<mosaic_0001>
module attributes {stable_mosaic.version = 11 : i64} {
  func.func @_conv_bn_relu_kernel(%arg0: i32, %arg1: memref<1x1x1x256x4xbf16, #tpu.memory_space<vmem>>, %arg2: memref<1x4x128xbf16, #tpu.memory_space<vmem>>, %arg3: memref<1x128xf32, #tpu.memory_space<vmem>>, %arg4: memref<1x256x128xbf16, #tpu.memory_space<vmem>>) attributes {dimension_semantics = [#tpu.dimension_semantics<parallel>], iteration_bounds = array<i64: 2>, scalar_prefetch = 0 : i64, scratch_operands = 0 : i64, tpu.core_type = #tpu.core_type<tc>, window_params = [{transform_indices = @transform_0, window_bounds = array<i64: 1, 1, 1, 256, 4>}, {pipeline_mode = #tpu.pipeline_mode<synchronous>, transform_indices = @transform_1, window_bounds = array<i64: 1, 4, 128>}, {pipeline_mode = #tpu.pipeline_mode<synchronous>, transform_indices = @transform_2, window_bounds = array<i64: 1, 128>}, {transform_indices = @transform_3, window_bounds = array<i64: 1, 256, 128>}]} {
    %cst = arith.constant 0.000000e+00 : f32
    %0 = vector.broadcast %cst : f32 to vector<256x128xf32>
    %c0 = arith.constant 0 : index
    %c0_0 = arith.constant 0 : index
    %c0_1 = arith.constant 0 : index
    %c0_2 = arith.constant 0 : index
    %c0_3 = arith.constant 0 : index
    %1 = vector.load %arg1[%c0, %c0_0, %c0_1, %c0_2, %c0_3] : memref<1x1x1x256x4xbf16, #tpu.memory_space<vmem>>, vector<1x1x1x256x4xbf16>
    %2 = vector.shape_cast %1 : vector<1x1x1x256x4xbf16> to vector<256x4xbf16>
    %c0_4 = arith.constant 0 : index
    %c0_5 = arith.constant 0 : index
    %c0_6 = arith.constant 0 : index
    %3 = vector.load %arg2[%c0_4, %c0_5, %c0_6] : memref<1x4x128xbf16, #tpu.memory_space<vmem>>, vector<1x4x128xbf16>
    %4 = vector.shape_cast %3 : vector<1x4x128xbf16> to vector<4x128xbf16>
    %cst_7 = arith.constant dense<0.000000e+00> : vector<256x128xf32>
    %5 = tpu.matmul %2, %4, %cst_7 {dimension_numbers = #tpu.dot_dimension_numbers<[1], [0], [0], [1], [0, 0, 1, 1], [], []>} : vector<256x4xbf16>, vector<4x128xbf16>, vector<256x128xf32> -> vector<256x128xf32>
    %6 = arith.addf %0, %5 : vector<256x128xf32>
    %c0_8 = arith.constant 0 : index
    %c0_9 = arith.constant 0 : index
    %7 = vector.load %arg3[%c0_8, %c0_9] : memref<1x128xf32, #tpu.memory_space<vmem>>, vector<1x128xf32>
    %8 = vector.broadcast %7 : vector<1x128xf32> to vector<256x128xf32>
    %9 = arith.addf %6, %8 : vector<256x128xf32>
    %cst_10 = arith.constant 0.000000e+00 : f32
    %10 = vector.broadcast %cst_10 : f32 to vector<256x128xf32>
    %11 = arith.maximumf %9, %10 : vector<256x128xf32>
    %12 = arith.truncf %11 : vector<256x128xf32> to vector<256x128xbf16>
    %c0_11 = arith.constant 0 : index
    %c0_12 = arith.constant 0 : index
    %c0_13 = arith.constant 0 : index
    %13 = vector.load %arg4[%c0_11, %c0_12, %c0_13] : memref<1x256x128xbf16, #tpu.memory_space<vmem>>, vector<1x256x128xbf16>
    %14 = vector.shape_cast %13 : vector<1x256x128xbf16> to vector<256x128xbf16>
    %15 = vector.shape_cast %12 : vector<256x128xbf16> to vector<1x256x128xbf16>
    tpu.vector_store %arg4[%c0_11, %c0_12, %c0_13], %15 {strides = array<i32>} : memref<1x256x128xbf16, #tpu.memory_space<vmem>>, vector<1x256x128xbf16>,
    return
  }
  func.func @transform_0(%arg0: i32) -> (i32, i32, i32, i32, i32) {
    %c0_i32 = arith.constant 0 : i32
    %c0_i32_0 = arith.constant 0 : i32
    %c0_i32_1 = arith.constant 0 : i32
    %c0_i32_2 = arith.constant 0 : i32
    %c0_i32_3 = arith.constant 0 : i32
    return %arg0, %c0_i32, %c0_i32_0, %c0_i32_1, %c0_i32_2 : i32, i32, i32, i32, i32
  }
  func.func @transform_1(%arg0: i32) -> (i32, i32, i32) {
    %c0_i32 = arith.constant 0 : i32
    %c0_i32_0 = arith.constant 0 : i32
    %c0_i32_1 = arith.constant 0 : i32
    %c0_i32_2 = arith.constant 0 : i32
    return %c0_i32, %c0_i32_0, %c0_i32_1 : i32, i32, i32
  }
  func.func @transform_2(%arg0: i32) -> (i32, i32) {
    %c0_i32 = arith.constant 0 : i32
    %c0_i32_0 = arith.constant 0 : i32
    %c0_i32_1 = arith.constant 0 : i32
    return %c0_i32, %c0_i32_0 : i32, i32
  }
  func.func @transform_3(%arg0: i32) -> (i32, i32, i32) {
    %c0_i32 = arith.constant 0 : i32
    %c0_i32_0 = arith.constant 0 : i32
    %c0_i32_1 = arith.constant 0 : i32
    return %arg0, %c0_i32, %c0_i32_0 : i32, i32, i32
  }
}

module attributes {stable_mosaic.version = 11 : i64} {
  func.func @_conv_bn_relu_kernel(%arg0: i32, %arg1: memref<1x1x1x342x64xbf16, #tpu.memory_space<vmem>>, %arg2: memref<9x64x128xbf16, #tpu.memory_space<vmem>>, %arg3: memref<1x128xf32, #tpu.memory_space<vmem>>, %arg4: memref<1x288x128xbf16, #tpu.memory_space<vmem>>) attributes {dimension_semantics = [#tpu.dimension_semantics<parallel>], iteration_bounds = array<i64: 2>, scalar_prefetch = 0 : i64, scratch_operands = 0 : i64, tpu.core_type = #tpu.core_type<tc>, window_params = [{transform_indices = @transform_0, window_bounds = array<i64: 1, 1, 1, 342, 64>}, {pipeline_mode = #tpu.pipeline_mode<synchronous>, transform_indices = @transform_1, window_bounds = array<i64: 9, 64, 128>}, {pipeline_mode = #tpu.pipeline_mode<synchronous>, transform_indices = @transform_2, window_bounds = array<i64: 1, 128>}, {transform_indices = @transform_3, window_bounds = array<i64: 1, 288, 128>}]} {
    %cst = arith.constant 0.000000e+00 : f32
    %0 = vector.broadcast %cst : f32 to vector<288x128xf32>
    %c0 = arith.constant 0 : index
    %c0_0 = arith.constant 0 : index
    %c0_1 = arith.constant 0 : index
    %c0_2 = arith.constant 0 : index
    %c0_3 = arith.constant 0 : index
    %1 = vector.load %arg1[%c0, %c0_0, %c0_1, %c0_2, %c0_3] : memref<1x1x1x342x64xbf16, #tpu.memory_space<vmem>>, vector<1x1x1x288x64xbf16>
    %2 = vector.shape_cast %1 : vector<1x1x1x288x64xbf16> to vector<288x64xbf16>
    %c0_4 = arith.constant 0 : index
    %c0_5 = arith.constant 0 : index
    %c0_6 = arith.constant 0 : index
    %3 = vector.load %arg2[%c0_4, %c0_5, %c0_6] : memref<9x64x128xbf16, #tpu.memory_space<vmem>>, vector<1x64x128xbf16>
    %4 = vector.shape_cast %3 : vector<1x64x128xbf16> to vector<64x128xbf16>
    %cst_7 = arith.constant dense<0.000000e+00> : vector<288x128xf32>
    %5 = tpu.matmul %2, %4, %cst_7 {dimension_numbers = #tpu.dot_dimension_numbers<[1], [0], [0], [1], [0, 0, 1, 1], [], []>} : vector<288x64xbf16>, vector<64x128xbf16>, vector<288x128xf32> -> vector<288x128xf32>
    %6 = arith.addf %0, %5 : vector<288x128xf32>
    %c0_8 = arith.constant 0 : index
    %c0_9 = arith.constant 0 : index
    %c0_10 = arith.constant 0 : index
    %c1 = arith.constant 1 : index
    %c0_11 = arith.constant 0 : index
    %7 = vector.load %arg1[%c0_8, %c0_9, %c0_10, %c1, %c0_11] : memref<1x1x1x342x64xbf16, #tpu.memory_space<vmem>>, vector<1x1x1x288x64xbf16>
    %8 = vector.shape_cast %7 : vector<1x1x1x288x64xbf16> to vector<288x64xbf16>
    %c1_12 = arith.constant 1 : index
    %c0_13 = arith.constant 0 : index
    %c0_14 = arith.constant 0 : index
    %9 = vector.load %arg2[%c1_12, %c0_13, %c0_14] : memref<9x64x128xbf16, #tpu.memory_space<vmem>>, vector<1x64x128xbf16>
    %10 = vector.shape_cast %9 : vector<1x64x128xbf16> to vector<64x128xbf16>
    %cst_15 = arith.constant dense<0.000000e+00> : vector<288x128xf32>
    %11 = tpu.matmul %8, %10, %cst_15 {dimension_numbers = #tpu.dot_dimension_numbers<[1], [0], [0], [1], [0, 0, 1, 1], [], []>} : vector<288x64xbf16>, vector<64x128xbf16>, vector<288x128xf32> -> vector<288x128xf32>
    %12 = arith.addf %6, %11 : vector<288x128xf32>
    %c0_16 = arith.constant 0 : index
    %c0_17 = arith.constant 0 : index
    %c0_18 = arith.constant 0 : index
    %c2 = arith.constant 2 : index
    %c0_19 = arith.constant 0 : index
    %13 = vector.load %arg1[%c0_16, %c0_17, %c0_18, %c2, %c0_19] : memref<1x1x1x342x64xbf16, #tpu.memory_space<vmem>>, vector<1x1x1x288x64xbf16>
    %14 = vector.shape_cast %13 : vector<1x1x1x288x64xbf16> to vector<288x64xbf16>
    %c2_20 = arith.constant 2 : index
    %c0_21 = arith.constant 0 : index
    %c0_22 = arith.constant 0 : index
    %15 = vector.load %arg2[%c2_20, %c0_21, %c0_22] : memref<9x64x128xbf16, #tpu.memory_space<vmem>>, vector<1x64x128xbf16>
    %16 = vector.shape_cast %15 : vector<1x64x128xbf16> to vector<64x128xbf16>
    %cst_23 = arith.constant dense<0.000000e+00> : vector<288x128xf32>
    %17 = tpu.matmul %14, %16, %cst_23 {dimension_numbers = #tpu.dot_dimension_numbers<[1], [0], [0], [1], [0, 0, 1, 1], [], []>} : vector<288x64xbf16>, vector<64x128xbf16>, vector<288x128xf32> -> vector<288x128xf32>
    %18 = arith.addf %12, %17 : vector<288x128xf32>
    %c0_24 = arith.constant 0 : index
    %c0_25 = arith.constant 0 : index
    %c0_26 = arith.constant 0 : index
    %c18 = arith.constant 18 : index
    %c0_27 = arith.constant 0 : index
    %19 = vector.load %arg1[%c0_24, %c0_25, %c0_26, %c18, %c0_27] : memref<1x1x1x342x64xbf16, #tpu.memory_space<vmem>>, vector<1x1x1x288x64xbf16>
    %20 = vector.shape_cast %19 : vector<1x1x1x288x64xbf16> to vector<288x64xbf16>
    %c3 = arith.constant 3 : index
    %c0_28 = arith.constant 0 : index
    %c0_29 = arith.constant 0 : index
    %21 = vector.load %arg2[%c3, %c0_28, %c0_29] : memref<9x64x128xbf16, #tpu.memory_space<vmem>>, vector<1x64x128xbf16>
    %22 = vector.shape_cast %21 : vector<1x64x128xbf16> to vector<64x128xbf16>
    %cst_30 = arith.constant dense<0.000000e+00> : vector<288x128xf32>
    %23 = tpu.matmul %20, %22, %cst_30 {dimension_numbers = #tpu.dot_dimension_numbers<[1], [0], [0], [1], [0, 0, 1, 1], [], []>} : vector<288x64xbf16>, vector<64x128xbf16>, vector<288x128xf32> -> vector<288x128xf32>
    %24 = arith.addf %18, %23 : vector<288x128xf32>
    %c0_31 = arith.constant 0 : index
    %c0_32 = arith.constant 0 : index
    %c0_33 = arith.constant 0 : index
    %c19 = arith.constant 19 : index
    %c0_34 = arith.constant 0 : index
    %25 = vector.load %arg1[%c0_31, %c0_32, %c0_33, %c19, %c0_34] : memref<1x1x1x342x64xbf16, #tpu.memory_space<vmem>>, vector<1x1x1x288x64xbf16>
    %26 = vector.shape_cast %25 : vector<1x1x1x288x64xbf16> to vector<288x64xbf16>
    %c4 = arith.constant 4 : index
    %c0_35 = arith.constant 0 : index
    %c0_36 = arith.constant 0 : index
    %27 = vector.load %arg2[%c4, %c0_35, %c0_36] : memref<9x64x128xbf16, #tpu.memory_space<vmem>>, vector<1x64x128xbf16>
    %28 = vector.shape_cast %27 : vector<1x64x128xbf16> to vector<64x128xbf16>
    %cst_37 = arith.constant dense<0.000000e+00> : vector<288x128xf32>
    %29 = tpu.matmul %26, %28, %cst_37 {dimension_numbers = #tpu.dot_dimension_numbers<[1], [0], [0], [1], [0, 0, 1, 1], [], []>} : vector<288x64xbf16>, vector<64x128xbf16>, vector<288x128xf32> -> vector<288x128xf32>
    %30 = arith.addf %24, %29 : vector<288x128xf32>
    %c0_38 = arith.constant 0 : index
    %c0_39 = arith.constant 0 : index
    %c0_40 = arith.constant 0 : index
    %c20 = arith.constant 20 : index
    %c0_41 = arith.constant 0 : index
    %31 = vector.load %arg1[%c0_38, %c0_39, %c0_40, %c20, %c0_41] : memref<1x1x1x342x64xbf16, #tpu.memory_space<vmem>>, vector<1x1x1x288x64xbf16>
    %32 = vector.shape_cast %31 : vector<1x1x1x288x64xbf16> to vector<288x64xbf16>
    %c5 = arith.constant 5 : index
    %c0_42 = arith.constant 0 : index
    %c0_43 = arith.constant 0 : index
    %33 = vector.load %arg2[%c5, %c0_42, %c0_43] : memref<9x64x128xbf16, #tpu.memory_space<vmem>>, vector<1x64x128xbf16>
    %34 = vector.shape_cast %33 : vector<1x64x128xbf16> to vector<64x128xbf16>
    %cst_44 = arith.constant dense<0.000000e+00> : vector<288x128xf32>
    %35 = tpu.matmul %32, %34, %cst_44 {dimension_numbers = #tpu.dot_dimension_numbers<[1], [0], [0], [1], [0, 0, 1, 1], [], []>} : vector<288x64xbf16>, vector<64x128xbf16>, vector<288x128xf32> -> vector<288x128xf32>
    %36 = arith.addf %30, %35 : vector<288x128xf32>
    %c0_45 = arith.constant 0 : index
    %c0_46 = arith.constant 0 : index
    %c0_47 = arith.constant 0 : index
    %c36 = arith.constant 36 : index
    %c0_48 = arith.constant 0 : index
    %37 = vector.load %arg1[%c0_45, %c0_46, %c0_47, %c36, %c0_48] : memref<1x1x1x342x64xbf16, #tpu.memory_space<vmem>>, vector<1x1x1x288x64xbf16>
    %38 = vector.shape_cast %37 : vector<1x1x1x288x64xbf16> to vector<288x64xbf16>
    %c6 = arith.constant 6 : index
    %c0_49 = arith.constant 0 : index
    %c0_50 = arith.constant 0 : index
    %39 = vector.load %arg2[%c6, %c0_49, %c0_50] : memref<9x64x128xbf16, #tpu.memory_space<vmem>>, vector<1x64x128xbf16>
    %40 = vector.shape_cast %39 : vector<1x64x128xbf16> to vector<64x128xbf16>
    %cst_51 = arith.constant dense<0.000000e+00> : vector<288x128xf32>
    %41 = tpu.matmul %38, %40, %cst_51 {dimension_numbers = #tpu.dot_dimension_numbers<[1], [0], [0], [1], [0, 0, 1, 1], [], []>} : vector<288x64xbf16>, vector<64x128xbf16>, vector<288x128xf32> -> vector<288x128xf32>
    %42 = arith.addf %36, %41 : vector<288x128xf32>
    %c0_52 = arith.constant 0 : index
    %c0_53 = arith.constant 0 : index
    %c0_54 = arith.constant 0 : index
    %c37 = arith.constant 37 : index
    %c0_55 = arith.constant 0 : index
    %43 = vector.load %arg1[%c0_52, %c0_53, %c0_54, %c37, %c0_55] : memref<1x1x1x342x64xbf16, #tpu.memory_space<vmem>>, vector<1x1x1x288x64xbf16>
    %44 = vector.shape_cast %43 : vector<1x1x1x288x64xbf16> to vector<288x64xbf16>
    %c7 = arith.constant 7 : index
    %c0_56 = arith.constant 0 : index
    %c0_57 = arith.constant 0 : index
    %45 = vector.load %arg2[%c7, %c0_56, %c0_57] : memref<9x64x128xbf16, #tpu.memory_space<vmem>>, vector<1x64x128xbf16>
    %46 = vector.shape_cast %45 : vector<1x64x128xbf16> to vector<64x128xbf16>
    %cst_58 = arith.constant dense<0.000000e+00> : vector<288x128xf32>
    %47 = tpu.matmul %44, %46, %cst_58 {dimension_numbers = #tpu.dot_dimension_numbers<[1], [0], [0], [1], [0, 0, 1, 1], [], []>} : vector<288x64xbf16>, vector<64x128xbf16>, vector<288x128xf32> -> vector<288x128xf32>
    %48 = arith.addf %42, %47 : vector<288x128xf32>
    %c0_59 = arith.constant 0 : index
    %c0_60 = arith.constant 0 : index
    %c0_61 = arith.constant 0 : index
    %c38 = arith.constant 38 : index
    %c0_62 = arith.constant 0 : index
    %49 = vector.load %arg1[%c0_59, %c0_60, %c0_61, %c38, %c0_62] : memref<1x1x1x342x64xbf16, #tpu.memory_space<vmem>>, vector<1x1x1x288x64xbf16>
    %50 = vector.shape_cast %49 : vector<1x1x1x288x64xbf16> to vector<288x64xbf16>
    %c8 = arith.constant 8 : index
    %c0_63 = arith.constant 0 : index
    %c0_64 = arith.constant 0 : index
    %51 = vector.load %arg2[%c8, %c0_63, %c0_64] : memref<9x64x128xbf16, #tpu.memory_space<vmem>>, vector<1x64x128xbf16>
    %52 = vector.shape_cast %51 : vector<1x64x128xbf16> to vector<64x128xbf16>
    %cst_65 = arith.constant dense<0.000000e+00> : vector<288x128xf32>
    %53 = tpu.matmul %50, %52, %cst_65 {dimension_numbers = #tpu.dot_dimension_numbers<[1], [0], [0], [1], [0, 0, 1, 1], [], []>} : vector<288x64xbf16>, vector<64x128xbf16>, vector<288x128xf32> -> vector<288x128xf32>
    %54 = arith.addf %48, %53 : vector<288x128xf32>
    %c0_66 = arith.constant 0 : index
    %c0_67 = arith.constant 0 : index
    %55 = vector.load %arg3[%c0_66, %c0_67] : memref<1x128xf32, #tpu.memory_space<vmem>>, vector<1x128xf32>
    %56 = vector.broadcast %55 : vector<1x128xf32> to vector<288x128xf32>
    %57 = arith.addf %54, %56 : vector<288x128xf32>
    %cst_68 = arith.constant 0.000000e+00 : f32
    %58 = vector.broadcast %cst_68 : f32 to vector<288x128xf32>
    %59 = arith.maximumf %57, %58 : vector<288x128xf32>
    %60 = arith.truncf %59 : vector<288x128xf32> to vector<288x128xbf16>
    %c0_69 = arith.constant 0 : index
    %c0_70 = arith.constant 0 : index
    %c0_71 = arith.constant 0 : index
    %61 = vector.load %arg4[%c0_69, %c0_70, %c0_71] : memref<1x288x128xbf16, #tpu.memory_space<vmem>>, vector<1x288x128xbf16>
    %62 = vector.shape_cast %61 : vector<1x288x128xbf16> to vector<288x128xbf16>
    %63 = vector.shape_cast %60 : vector<288x128xbf16> to vector<1x288x128xbf16>
    tpu.vector_store %arg4[%c0_69, %c0_70, %c0_71], %63 {strides = array<i32>} : memref<1x288x128xbf16, #tpu.memory_space<vmem>>, vector<1x288x128xbf16>,
    return
  }
  func.func @transform_0(%arg0: i32) -> (i32, i32, i32, i32, i32) {
    %c0_i32 = arith.constant 0 : i32
    %c0_i32_0 = arith.constant 0 : i32
    %c0_i32_1 = arith.constant 0 : i32
    %c0_i32_2 = arith.constant 0 : i32
    %c0_i32_3 = arith.constant 0 : i32
    return %arg0, %c0_i32, %c0_i32_0, %c0_i32_1, %c0_i32_2 : i32, i32, i32, i32, i32
  }
  func.func @transform_1(%arg0: i32) -> (i32, i32, i32) {
    %c0_i32 = arith.constant 0 : i32
    %c0_i32_0 = arith.constant 0 : i32
    %c0_i32_1 = arith.constant 0 : i32
    %c0_i32_2 = arith.constant 0 : i32
    return %c0_i32, %c0_i32_0, %c0_i32_1 : i32, i32, i32
  }
  func.func @transform_2(%arg0: i32) -> (i32, i32) {
    %c0_i32 = arith.constant 0 : i32
    %c0_i32_0 = arith.constant 0 : i32
    %c0_i32_1 = arith.constant 0 : i32
    return %c0_i32, %c0_i32_0 : i32, i32
  }
  func.func @transform_3(%arg0: i32) -> (i32, i32, i32) {
    %c0_i32 = arith.constant 0 : i32
    %c0_i32_0 = arith.constant 0 : i32
    %c0_i32_1 = arith.constant 0 : i32
    return %arg0, %c0_i32, %c0_i32_0 : i32, i32, i32
  }
}

module attributes {stable_mosaic.version = 11 : i64} {
  func.func @_conv_bn_relu_kernel(%arg0: i32, %arg1: memref<1x2x2x72x96xbf16, #tpu.memory_space<vmem>>, %arg2: memref<9x96x128xbf16, #tpu.memory_space<vmem>>, %arg3: memref<1x128xf32, #tpu.memory_space<vmem>>, %arg4: memref<1x56x128xf32, #tpu.memory_space<vmem>>) attributes {dimension_semantics = [#tpu.dimension_semantics<parallel>], iteration_bounds = array<i64: 2>, scalar_prefetch = 0 : i64, scratch_operands = 0 : i64, tpu.core_type = #tpu.core_type<tc>, window_params = [{transform_indices = @transform_0, window_bounds = array<i64: 1, 2, 2, 72, 96>}, {pipeline_mode = #tpu.pipeline_mode<synchronous>, transform_indices = @transform_1, window_bounds = array<i64: 9, 96, 128>}, {pipeline_mode = #tpu.pipeline_mode<synchronous>, transform_indices = @transform_2, window_bounds = array<i64: 1, 128>}, {transform_indices = @transform_3, window_bounds = array<i64: 1, 56, 128>}]} {
    %cst = arith.constant 0.000000e+00 : f32
    %0 = vector.broadcast %cst : f32 to vector<56x128xf32>
    %c0 = arith.constant 0 : index
    %c0_0 = arith.constant 0 : index
    %c0_1 = arith.constant 0 : index
    %c0_2 = arith.constant 0 : index
    %c0_3 = arith.constant 0 : index
    %1 = vector.load %arg1[%c0, %c0_0, %c0_1, %c0_2, %c0_3] : memref<1x2x2x72x96xbf16, #tpu.memory_space<vmem>>, vector<1x1x1x56x96xbf16>
    %2 = vector.shape_cast %1 : vector<1x1x1x56x96xbf16> to vector<56x96xbf16>
    %c0_4 = arith.constant 0 : index
    %c0_5 = arith.constant 0 : index
    %c0_6 = arith.constant 0 : index
    %3 = vector.load %arg2[%c0_4, %c0_5, %c0_6] : memref<9x96x128xbf16, #tpu.memory_space<vmem>>, vector<1x96x128xbf16>
    %4 = vector.shape_cast %3 : vector<1x96x128xbf16> to vector<96x128xbf16>
    %cst_7 = arith.constant dense<0.000000e+00> : vector<56x128xf32>
    %5 = tpu.matmul %2, %4, %cst_7 {dimension_numbers = #tpu.dot_dimension_numbers<[1], [0], [0], [1], [0, 0, 1, 1], [], []>} : vector<56x96xbf16>, vector<96x128xbf16>, vector<56x128xf32> -> vector<56x128xf32>
    %6 = arith.addf %0, %5 : vector<56x128xf32>
    %c0_8 = arith.constant 0 : index
    %c0_9 = arith.constant 0 : index
    %c1 = arith.constant 1 : index
    %c0_10 = arith.constant 0 : index
    %c0_11 = arith.constant 0 : index
    %7 = vector.load %arg1[%c0_8, %c0_9, %c1, %c0_10, %c0_11] : memref<1x2x2x72x96xbf16, #tpu.memory_space<vmem>>, vector<1x1x1x56x96xbf16>
    %8 = vector.shape_cast %7 : vector<1x1x1x56x96xbf16> to vector<56x96xbf16>
    %c1_12 = arith.constant 1 : index
    %c0_13 = arith.constant 0 : index
    %c0_14 = arith.constant 0 : index
    %9 = vector.load %arg2[%c1_12, %c0_13, %c0_14] : memref<9x96x128xbf16, #tpu.memory_space<vmem>>, vector<1x96x128xbf16>
    %10 = vector.shape_cast %9 : vector<1x96x128xbf16> to vector<96x128xbf16>
    %cst_15 = arith.constant dense<0.000000e+00> : vector<56x128xf32>
    %11 = tpu.matmul %8, %10, %cst_15 {dimension_numbers = #tpu.dot_dimension_numbers<[1], [0], [0], [1], [0, 0, 1, 1], [], []>} : vector<56x96xbf16>, vector<96x128xbf16>, vector<56x128xf32> -> vector<56x128xf32>
    %12 = arith.addf %6, %11 : vector<56x128xf32>
    %c0_16 = arith.constant 0 : index
    %c0_17 = arith.constant 0 : index
    %c0_18 = arith.constant 0 : index
    %c1_19 = arith.constant 1 : index
    %c0_20 = arith.constant 0 : index
    %13 = vector.load %arg1[%c0_16, %c0_17, %c0_18, %c1_19, %c0_20] : memref<1x2x2x72x96xbf16, #tpu.memory_space<vmem>>, vector<1x1x1x56x96xbf16>
    %14 = vector.shape_cast %13 : vector<1x1x1x56x96xbf16> to vector<56x96xbf16>
    %c2 = arith.constant 2 : index
    %c0_21 = arith.constant 0 : index
    %c0_22 = arith.constant 0 : index
    %15 = vector.load %arg2[%c2, %c0_21, %c0_22] : memref<9x96x128xbf16, #tpu.memory_space<vmem>>, vector<1x96x128xbf16>
    %16 = vector.shape_cast %15 : vector<1x96x128xbf16> to vector<96x128xbf16>
    %cst_23 = arith.constant dense<0.000000e+00> : vector<56x128xf32>
    %17 = tpu.matmul %14, %16, %cst_23 {dimension_numbers = #tpu.dot_dimension_numbers<[1], [0], [0], [1], [0, 0, 1, 1], [], []>} : vector<56x96xbf16>, vector<96x128xbf16>, vector<56x128xf32> -> vector<56x128xf32>
    %18 = arith.addf %12, %17 : vector<56x128xf32>
    %c0_24 = arith.constant 0 : index
    %c1_25 = arith.constant 1 : index
    %c0_26 = arith.constant 0 : index
    %c0_27 = arith.constant 0 : index
    %c0_28 = arith.constant 0 : index
    %19 = vector.load %arg1[%c0_24, %c1_25, %c0_26, %c0_27, %c0_28] : memref<1x2x2x72x96xbf16, #tpu.memory_space<vmem>>, vector<1x1x1x56x96xbf16>
    %20 = vector.shape_cast %19 : vector<1x1x1x56x96xbf16> to vector<56x96xbf16>
    %c3 = arith.constant 3 : index
    %c0_29 = arith.constant 0 : index
    %c0_30 = arith.constant 0 : index
    %21 = vector.load %arg2[%c3, %c0_29, %c0_30] : memref<9x96x128xbf16, #tpu.memory_space<vmem>>, vector<1x96x128xbf16>
    %22 = vector.shape_cast %21 : vector<1x96x128xbf16> to vector<96x128xbf16>
    %cst_31 = arith.constant dense<0.000000e+00> : vector<56x128xf32>
    %23 = tpu.matmul %20, %22, %cst_31 {dimension_numbers = #tpu.dot_dimension_numbers<[1], [0], [0], [1], [0, 0, 1, 1], [], []>} : vector<56x96xbf16>, vector<96x128xbf16>, vector<56x128xf32> -> vector<56x128xf32>
    %24 = arith.addf %18, %23 : vector<56x128xf32>
    %c0_32 = arith.constant 0 : index
    %c1_33 = arith.constant 1 : index
    %c1_34 = arith.constant 1 : index
    %c0_35 = arith.constant 0 : index
    %c0_36 = arith.constant 0 : index
    %25 = vector.load %arg1[%c0_32, %c1_33, %c1_34, %c0_35, %c0_36] : memref<1x2x2x72x96xbf16, #tpu.memory_space<vmem>>, vector<1x1x1x56x96xbf16>
    %26 = vector.shape_cast %25 : vector<1x1x1x56x96xbf16> to vector<56x96xbf16>
    %c4 = arith.constant 4 : index
    %c0_37 = arith.constant 0 : index
    %c0_38 = arith.constant 0 : index
    %27 = vector.load %arg2[%c4, %c0_37, %c0_38] : memref<9x96x128xbf16, #tpu.memory_space<vmem>>, vector<1x96x128xbf16>
    %28 = vector.shape_cast %27 : vector<1x96x128xbf16> to vector<96x128xbf16>
    %cst_39 = arith.constant dense<0.000000e+00> : vector<56x128xf32>
    %29 = tpu.matmul %26, %28, %cst_39 {dimension_numbers = #tpu.dot_dimension_numbers<[1], [0], [0], [1], [0, 0, 1, 1], [], []>} : vector<56x96xbf16>, vector<96x128xbf16>, vector<56x128xf32> -> vector<56x128xf32>
    %30 = arith.addf %24, %29 : vector<56x128xf32>
    %c0_40 = arith.constant 0 : index
    %c1_41 = arith.constant 1 : index
    %c0_42 = arith.constant 0 : index
    %c1_43 = arith.constant 1 : index
    %c0_44 = arith.constant 0 : index
    %31 = vector.load %arg1[%c0_40, %c1_41, %c0_42, %c1_43, %c0_44] : memref<1x2x2x72x96xbf16, #tpu.memory_space<vmem>>, vector<1x1x1x56x96xbf16>
    %32 = vector.shape_cast %31 : vector<1x1x1x56x96xbf16> to vector<56x96xbf16>
    %c5 = arith.constant 5 : index
    %c0_45 = arith.constant 0 : index
    %c0_46 = arith.constant 0 : index
    %33 = vector.load %arg2[%c5, %c0_45, %c0_46] : memref<9x96x128xbf16, #tpu.memory_space<vmem>>, vector<1x96x128xbf16>
    %34 = vector.shape_cast %33 : vector<1x96x128xbf16> to vector<96x128xbf16>
    %cst_47 = arith.constant dense<0.000000e+00> : vector<56x128xf32>
    %35 = tpu.matmul %32, %34, %cst_47 {dimension_numbers = #tpu.dot_dimension_numbers<[1], [0], [0], [1], [0, 0, 1, 1], [], []>} : vector<56x96xbf16>, vector<96x128xbf16>, vector<56x128xf32> -> vector<56x128xf32>
    %36 = arith.addf %30, %35 : vector<56x128xf32>
    %c0_48 = arith.constant 0 : index
    %c0_49 = arith.constant 0 : index
    %c0_50 = arith.constant 0 : index
    %c8 = arith.constant 8 : index
    %c0_51 = arith.constant 0 : index
    %37 = vector.load %arg1[%c0_48, %c0_49, %c0_50, %c8, %c0_51] : memref<1x2x2x72x96xbf16, #tpu.memory_space<vmem>>, vector<1x1x1x56x96xbf16>
    %38 = vector.shape_cast %37 : vector<1x1x1x56x96xbf16> to vector<56x96xbf16>
    %c6 = arith.constant 6 : index
    %c0_52 = arith.constant 0 : index
    %c0_53 = arith.constant 0 : index
    %39 = vector.load %arg2[%c6, %c0_52, %c0_53] : memref<9x96x128xbf16, #tpu.memory_space<vmem>>, vector<1x96x128xbf16>
    %40 = vector.shape_cast %39 : vector<1x96x128xbf16> to vector<96x128xbf16>
    %cst_54 = arith.constant dense<0.000000e+00> : vector<56x128xf32>
    %41 = tpu.matmul %38, %40, %cst_54 {dimension_numbers = #tpu.dot_dimension_numbers<[1], [0], [0], [1], [0, 0, 1, 1], [], []>} : vector<56x96xbf16>, vector<96x128xbf16>, vector<56x128xf32> -> vector<56x128xf32>
    %42 = arith.addf %36, %41 : vector<56x128xf32>
    %c0_55 = arith.constant 0 : index
    %c0_56 = arith.constant 0 : index
    %c1_57 = arith.constant 1 : index
    %c8_58 = arith.constant 8 : index
    %c0_59 = arith.constant 0 : index
    %43 = vector.load %arg1[%c0_55, %c0_56, %c1_57, %c8_58, %c0_59] : memref<1x2x2x72x96xbf16, #tpu.memory_space<vmem>>, vector<1x1x1x56x96xbf16>
    %44 = vector.shape_cast %43 : vector<1x1x1x56x96xbf16> to vector<56x96xbf16>
    %c7 = arith.constant 7 : index
    %c0_60 = arith.constant 0 : index
    %c0_61 = arith.constant 0 : index
    %45 = vector.load %arg2[%c7, %c0_60, %c0_61] : memref<9x96x128xbf16, #tpu.memory_space<vmem>>, vector<1x96x128xbf16>
    %46 = vector.shape_cast %45 : vector<1x96x128xbf16> to vector<96x128xbf16>
    %cst_62 = arith.constant dense<0.000000e+00> : vector<56x128xf32>
    %47 = tpu.matmul %44, %46, %cst_62 {dimension_numbers = #tpu.dot_dimension_numbers<[1], [0], [0], [1], [0, 0, 1, 1], [], []>} : vector<56x96xbf16>, vector<96x128xbf16>, vector<56x128xf32> -> vector<56x128xf32>
    %48 = arith.addf %42, %47 : vector<56x128xf32>
    %c0_63 = arith.constant 0 : index
    %c0_64 = arith.constant 0 : index
    %c0_65 = arith.constant 0 : index
    %c9 = arith.constant 9 : index
    %c0_66 = arith.constant 0 : index
    %49 = vector.load %arg1[%c0_63, %c0_64, %c0_65, %c9, %c0_66] : memref<1x2x2x72x96xbf16, #tpu.memory_space<vmem>>, vector<1x1x1x56x96xbf16>
    %50 = vector.shape_cast %49 : vector<1x1x1x56x96xbf16> to vector<56x96xbf16>
    %c8_67 = arith.constant 8 : index
    %c0_68 = arith.constant 0 : index
    %c0_69 = arith.constant 0 : index
    %51 = vector.load %arg2[%c8_67, %c0_68, %c0_69] : memref<9x96x128xbf16, #tpu.memory_space<vmem>>, vector<1x96x128xbf16>
    %52 = vector.shape_cast %51 : vector<1x96x128xbf16> to vector<96x128xbf16>
    %cst_70 = arith.constant dense<0.000000e+00> : vector<56x128xf32>
    %53 = tpu.matmul %50, %52, %cst_70 {dimension_numbers = #tpu.dot_dimension_numbers<[1], [0], [0], [1], [0, 0, 1, 1], [], []>} : vector<56x96xbf16>, vector<96x128xbf16>, vector<56x128xf32> -> vector<56x128xf32>
    %54 = arith.addf %48, %53 : vector<56x128xf32>
    %c0_71 = arith.constant 0 : index
    %c0_72 = arith.constant 0 : index
    %55 = vector.load %arg3[%c0_71, %c0_72] : memref<1x128xf32, #tpu.memory_space<vmem>>, vector<1x128xf32>
    %56 = vector.broadcast %55 : vector<1x128xf32> to vector<56x128xf32>
    %57 = arith.addf %54, %56 : vector<56x128xf32>
    %cst_73 = arith.constant 0.000000e+00 : f32
    %58 = vector.broadcast %cst_73 : f32 to vector<56x128xf32>
    %59 = arith.maximumf %57, %58 : vector<56x128xf32>
    %c0_74 = arith.constant 0 : index
    %c0_75 = arith.constant 0 : index
    %c0_76 = arith.constant 0 : index
    %60 = vector.load %arg4[%c0_74, %c0_75, %c0_76] : memref<1x56x128xf32, #tpu.memory_space<vmem>>, vector<1x56x128xf32>
    %61 = vector.shape_cast %60 : vector<1x56x128xf32> to vector<56x128xf32>
    %62 = vector.shape_cast %59 : vector<56x128xf32> to vector<1x56x128xf32>
    tpu.vector_store %arg4[%c0_74, %c0_75, %c0_76], %62 {strides = array<i32>} : memref<1x56x128xf32, #tpu.memory_space<vmem>>, vector<1x56x128xf32>,
    return
  }
  func.func @transform_0(%arg0: i32) -> (i32, i32, i32, i32, i32) {
    %c0_i32 = arith.constant 0 : i32
    %c0_i32_0 = arith.constant 0 : i32
    %c0_i32_1 = arith.constant 0 : i32
    %c0_i32_2 = arith.constant 0 : i32
    %c0_i32_3 = arith.constant 0 : i32
    return %arg0, %c0_i32, %c0_i32_0, %c0_i32_1, %c0_i32_2 : i32, i32, i32, i32, i32
  }
  func.func @transform_1(%arg0: i32) -> (i32, i32, i32) {
    %c0_i32 = arith.constant 0 : i32
    %c0_i32_0 = arith.constant 0 : i32
    %c0_i32_1 = arith.constant 0 : i32
    %c0_i32_2 = arith.constant 0 : i32
    return %c0_i32, %c0_i32_0, %c0_i32_1 : i32, i32, i32
  }
  func.func @transform_2(%arg0: i32) -> (i32, i32) {
    %c0_i32 = arith.constant 0 : i32
    %c0_i32_0 = arith.constant 0 : i32
    %c0_i32_1 = arith.constant 0 : i32
    return %c0_i32, %c0_i32_0 : i32, i32
  }
  func.func @transform_3(%arg0: i32) -> (i32, i32, i32) {
    %c0_i32 = arith.constant 0 : i32
    %c0_i32_0 = arith.constant 0 : i32
    %c0_i32_1 = arith.constant 0 : i32
    return %arg0, %c0_i32, %c0_i32_0 : i32, i32, i32
  }
}

module attributes {stable_mosaic.version = 11 : i64} {
  func.func @_conv_bn_relu_kernel(%arg0: i32, %arg1: memref<1x2x2x72x4xbf16, #tpu.memory_space<vmem>>, %arg2: memref<9x4x384xbf16, #tpu.memory_space<vmem>>, %arg3: memref<1x384xf32, #tpu.memory_space<vmem>>, %arg4: memref<1x56x384xf32, #tpu.memory_space<vmem>>) attributes {dimension_semantics = [#tpu.dimension_semantics<parallel>], iteration_bounds = array<i64: 2>, scalar_prefetch = 0 : i64, scratch_operands = 0 : i64, tpu.core_type = #tpu.core_type<tc>, window_params = [{transform_indices = @transform_0, window_bounds = array<i64: 1, 2, 2, 72, 4>}, {pipeline_mode = #tpu.pipeline_mode<synchronous>, transform_indices = @transform_1, window_bounds = array<i64: 9, 4, 384>}, {pipeline_mode = #tpu.pipeline_mode<synchronous>, transform_indices = @transform_2, window_bounds = array<i64: 1, 384>}, {transform_indices = @transform_3, window_bounds = array<i64: 1, 56, 384>}]} {
    %cst = arith.constant 0.000000e+00 : f32
    %0 = vector.broadcast %cst : f32 to vector<56x384xf32>
    %c0 = arith.constant 0 : index
    %c0_0 = arith.constant 0 : index
    %c0_1 = arith.constant 0 : index
    %c0_2 = arith.constant 0 : index
    %c0_3 = arith.constant 0 : index
    %1 = vector.load %arg1[%c0, %c0_0, %c0_1, %c0_2, %c0_3] : memref<1x2x2x72x4xbf16, #tpu.memory_space<vmem>>, vector<1x1x1x56x4xbf16>
    %2 = vector.shape_cast %1 : vector<1x1x1x56x4xbf16> to vector<56x4xbf16>
    %c0_4 = arith.constant 0 : index
    %c0_5 = arith.constant 0 : index
    %c0_6 = arith.constant 0 : index
    %3 = vector.load %arg2[%c0_4, %c0_5, %c0_6] : memref<9x4x384xbf16, #tpu.memory_space<vmem>>, vector<1x4x384xbf16>
    %4 = vector.shape_cast %3 : vector<1x4x384xbf16> to vector<4x384xbf16>
    %cst_7 = arith.constant dense<0.000000e+00> : vector<56x384xf32>
    %5 = tpu.matmul %2, %4, %cst_7 {dimension_numbers = #tpu.dot_dimension_numbers<[1], [0], [0], [1], [0, 0, 1, 1], [], []>} : vector<56x4xbf16>, vector<4x384xbf16>, vector<56x384xf32> -> vector<56x384xf32>
    %6 = arith.addf %0, %5 : vector<56x384xf32>
    %c0_8 = arith.constant 0 : index
    %c0_9 = arith.constant 0 : index
    %c1 = arith.constant 1 : index
    %c0_10 = arith.constant 0 : index
    %c0_11 = arith.constant 0 : index
    %7 = vector.load %arg1[%c0_8, %c0_9, %c1, %c0_10, %c0_11] : memref<1x2x2x72x4xbf16, #tpu.memory_space<vmem>>, vector<1x1x1x56x4xbf16>
    %8 = vector.shape_cast %7 : vector<1x1x1x56x4xbf16> to vector<56x4xbf16>
    %c1_12 = arith.constant 1 : index
    %c0_13 = arith.constant 0 : index
    %c0_14 = arith.constant 0 : index
    %9 = vector.load %arg2[%c1_12, %c0_13, %c0_14] : memref<9x4x384xbf16, #tpu.memory_space<vmem>>, vector<1x4x384xbf16>
    %10 = vector.shape_cast %9 : vector<1x4x384xbf16> to vector<4x384xbf16>
    %cst_15 = arith.constant dense<0.000000e+00> : vector<56x384xf32>
    %11 = tpu.matmul %8, %10, %cst_15 {dimension_numbers = #tpu.dot_dimension_numbers<[1], [0], [0], [1], [0, 0, 1, 1], [], []>} : vector<56x4xbf16>, vector<4x384xbf16>, vector<56x384xf32> -> vector<56x384xf32>
    %12 = arith.addf %6, %11 : vector<56x384xf32>
    %c0_16 = arith.constant 0 : index
    %c0_17 = arith.constant 0 : index
    %c0_18 = arith.constant 0 : index
    %c1_19 = arith.constant 1 : index
    %c0_20 = arith.constant 0 : index
    %13 = vector.load %arg1[%c0_16, %c0_17, %c0_18, %c1_19, %c0_20] : memref<1x2x2x72x4xbf16, #tpu.memory_space<vmem>>, vector<1x1x1x56x4xbf16>
    %14 = vector.shape_cast %13 : vector<1x1x1x56x4xbf16> to vector<56x4xbf16>
    %c2 = arith.constant 2 : index
    %c0_21 = arith.constant 0 : index
    %c0_22 = arith.constant 0 : index
    %15 = vector.load %arg2[%c2, %c0_21, %c0_22] : memref<9x4x384xbf16, #tpu.memory_space<vmem>>, vector<1x4x384xbf16>
    %16 = vector.shape_cast %15 : vector<1x4x384xbf16> to vector<4x384xbf16>
    %cst_23 = arith.constant dense<0.000000e+00> : vector<56x384xf32>
    %17 = tpu.matmul %14, %16, %cst_23 {dimension_numbers = #tpu.dot_dimension_numbers<[1], [0], [0], [1], [0, 0, 1, 1], [], []>} : vector<56x4xbf16>, vector<4x384xbf16>, vector<56x384xf32> -> vector<56x384xf32>
    %18 = arith.addf %12, %17 : vector<56x384xf32>
    %c0_24 = arith.constant 0 : index
    %c1_25 = arith.constant 1 : index
    %c0_26 = arith.constant 0 : index
    %c0_27 = arith.constant 0 : index
    %c0_28 = arith.constant 0 : index
    %19 = vector.load %arg1[%c0_24, %c1_25, %c0_26, %c0_27, %c0_28] : memref<1x2x2x72x4xbf16, #tpu.memory_space<vmem>>, vector<1x1x1x56x4xbf16>
    %20 = vector.shape_cast %19 : vector<1x1x1x56x4xbf16> to vector<56x4xbf16>
    %c3 = arith.constant 3 : index
    %c0_29 = arith.constant 0 : index
    %c0_30 = arith.constant 0 : index
    %21 = vector.load %arg2[%c3, %c0_29, %c0_30] : memref<9x4x384xbf16, #tpu.memory_space<vmem>>, vector<1x4x384xbf16>
    %22 = vector.shape_cast %21 : vector<1x4x384xbf16> to vector<4x384xbf16>
    %cst_31 = arith.constant dense<0.000000e+00> : vector<56x384xf32>
    %23 = tpu.matmul %20, %22, %cst_31 {dimension_numbers = #tpu.dot_dimension_numbers<[1], [0], [0], [1], [0, 0, 1, 1], [], []>} : vector<56x4xbf16>, vector<4x384xbf16>, vector<56x384xf32> -> vector<56x384xf32>
    %24 = arith.addf %18, %23 : vector<56x384xf32>
    %c0_32 = arith.constant 0 : index
    %c1_33 = arith.constant 1 : index
    %c1_34 = arith.constant 1 : index
    %c0_35 = arith.constant 0 : index
    %c0_36 = arith.constant 0 : index
    %25 = vector.load %arg1[%c0_32, %c1_33, %c1_34, %c0_35, %c0_36] : memref<1x2x2x72x4xbf16, #tpu.memory_space<vmem>>, vector<1x1x1x56x4xbf16>
    %26 = vector.shape_cast %25 : vector<1x1x1x56x4xbf16> to vector<56x4xbf16>
    %c4 = arith.constant 4 : index
    %c0_37 = arith.constant 0 : index
    %c0_38 = arith.constant 0 : index
    %27 = vector.load %arg2[%c4, %c0_37, %c0_38] : memref<9x4x384xbf16, #tpu.memory_space<vmem>>, vector<1x4x384xbf16>
    %28 = vector.shape_cast %27 : vector<1x4x384xbf16> to vector<4x384xbf16>
    %cst_39 = arith.constant dense<0.000000e+00> : vector<56x384xf32>
    %29 = tpu.matmul %26, %28, %cst_39 {dimension_numbers = #tpu.dot_dimension_numbers<[1], [0], [0], [1], [0, 0, 1, 1], [], []>} : vector<56x4xbf16>, vector<4x384xbf16>, vector<56x384xf32> -> vector<56x384xf32>
    %30 = arith.addf %24, %29 : vector<56x384xf32>
    %c0_40 = arith.constant 0 : index
    %c1_41 = arith.constant 1 : index
    %c0_42 = arith.constant 0 : index
    %c1_43 = arith.constant 1 : index
    %c0_44 = arith.constant 0 : index
    %31 = vector.load %arg1[%c0_40, %c1_41, %c0_42, %c1_43, %c0_44] : memref<1x2x2x72x4xbf16, #tpu.memory_space<vmem>>, vector<1x1x1x56x4xbf16>
    %32 = vector.shape_cast %31 : vector<1x1x1x56x4xbf16> to vector<56x4xbf16>
    %c5 = arith.constant 5 : index
    %c0_45 = arith.constant 0 : index
    %c0_46 = arith.constant 0 : index
    %33 = vector.load %arg2[%c5, %c0_45, %c0_46] : memref<9x4x384xbf16, #tpu.memory_space<vmem>>, vector<1x4x384xbf16>
    %34 = vector.shape_cast %33 : vector<1x4x384xbf16> to vector<4x384xbf16>
    %cst_47 = arith.constant dense<0.000000e+00> : vector<56x384xf32>
    %35 = tpu.matmul %32, %34, %cst_47 {dimension_numbers = #tpu.dot_dimension_numbers<[1], [0], [0], [1], [0, 0, 1, 1], [], []>} : vector<56x4xbf16>, vector<4x384xbf16>, vector<56x384xf32> -> vector<56x384xf32>
    %36 = arith.addf %30, %35 : vector<56x384xf32>
    %c0_48 = arith.constant 0 : index
    %c0_49 = arith.constant 0 : index
    %c0_50 = arith.constant 0 : index
    %c8 = arith.constant 8 : index
    %c0_51 = arith.constant 0 : index
    %37 = vector.load %arg1[%c0_48, %c0_49, %c0_50, %c8, %c0_51] : memref<1x2x2x72x4xbf16, #tpu.memory_space<vmem>>, vector<1x1x1x56x4xbf16>
    %38 = vector.shape_cast %37 : vector<1x1x1x56x4xbf16> to vector<56x4xbf16>
    %c6 = arith.constant 6 : index
    %c0_52 = arith.constant 0 : index
    %c0_53 = arith.constant 0 : index
    %39 = vector.load %arg2[%c6, %c0_52, %c0_53] : memref<9x4x384xbf16, #tpu.memory_space<vmem>>, vector<1x4x384xbf16>
    %40 = vector.shape_cast %39 : vector<1x4x384xbf16> to vector<4x384xbf16>
    %cst_54 = arith.constant dense<0.000000e+00> : vector<56x384xf32>
    %41 = tpu.matmul %38, %40, %cst_54 {dimension_numbers = #tpu.dot_dimension_numbers<[1], [0], [0], [1], [0, 0, 1, 1], [], []>} : vector<56x4xbf16>, vector<4x384xbf16>, vector<56x384xf32> -> vector<56x384xf32>
    %42 = arith.addf %36, %41 : vector<56x384xf32>
    %c0_55 = arith.constant 0 : index
    %c0_56 = arith.constant 0 : index
    %c1_57 = arith.constant 1 : index
    %c8_58 = arith.constant 8 : index
    %c0_59 = arith.constant 0 : index
    %43 = vector.load %arg1[%c0_55, %c0_56, %c1_57, %c8_58, %c0_59] : memref<1x2x2x72x4xbf16, #tpu.memory_space<vmem>>, vector<1x1x1x56x4xbf16>
    %44 = vector.shape_cast %43 : vector<1x1x1x56x4xbf16> to vector<56x4xbf16>
    %c7 = arith.constant 7 : index
    %c0_60 = arith.constant 0 : index
    %c0_61 = arith.constant 0 : index
    %45 = vector.load %arg2[%c7, %c0_60, %c0_61] : memref<9x4x384xbf16, #tpu.memory_space<vmem>>, vector<1x4x384xbf16>
    %46 = vector.shape_cast %45 : vector<1x4x384xbf16> to vector<4x384xbf16>
    %cst_62 = arith.constant dense<0.000000e+00> : vector<56x384xf32>
    %47 = tpu.matmul %44, %46, %cst_62 {dimension_numbers = #tpu.dot_dimension_numbers<[1], [0], [0], [1], [0, 0, 1, 1], [], []>} : vector<56x4xbf16>, vector<4x384xbf16>, vector<56x384xf32> -> vector<56x384xf32>
    %48 = arith.addf %42, %47 : vector<56x384xf32>
    %c0_63 = arith.constant 0 : index
    %c0_64 = arith.constant 0 : index
    %c0_65 = arith.constant 0 : index
    %c9 = arith.constant 9 : index
    %c0_66 = arith.constant 0 : index
    %49 = vector.load %arg1[%c0_63, %c0_64, %c0_65, %c9, %c0_66] : memref<1x2x2x72x4xbf16, #tpu.memory_space<vmem>>, vector<1x1x1x56x4xbf16>
    %50 = vector.shape_cast %49 : vector<1x1x1x56x4xbf16> to vector<56x4xbf16>
    %c8_67 = arith.constant 8 : index
    %c0_68 = arith.constant 0 : index
    %c0_69 = arith.constant 0 : index
    %51 = vector.load %arg2[%c8_67, %c0_68, %c0_69] : memref<9x4x384xbf16, #tpu.memory_space<vmem>>, vector<1x4x384xbf16>
    %52 = vector.shape_cast %51 : vector<1x4x384xbf16> to vector<4x384xbf16>
    %cst_70 = arith.constant dense<0.000000e+00> : vector<56x384xf32>
    %53 = tpu.matmul %50, %52, %cst_70 {dimension_numbers = #tpu.dot_dimension_numbers<[1], [0], [0], [1], [0, 0, 1, 1], [], []>} : vector<56x4xbf16>, vector<4x384xbf16>, vector<56x384xf32> -> vector<56x384xf32>
    %54 = arith.addf %48, %53 : vector<56x384xf32>
    %c0_71 = arith.constant 0 : index
    %c0_72 = arith.constant 0 : index
    %55 = vector.load %arg3[%c0_71, %c0_72] : memref<1x384xf32, #tpu.memory_space<vmem>>, vector<1x384xf32>
    %56 = vector.broadcast %55 : vector<1x384xf32> to vector<56x384xf32>
    %57 = arith.addf %54, %56 : vector<56x384xf32>
    %cst_73 = arith.constant 0.000000e+00 : f32
    %58 = vector.broadcast %cst_73 : f32 to vector<56x384xf32>
    %59 = arith.maximumf %57, %58 : vector<56x384xf32>
    %c0_74 = arith.constant 0 : index
    %c0_75 = arith.constant 0 : index
    %c0_76 = arith.constant 0 : index
    %60 = vector.load %arg4[%c0_74, %c0_75, %c0_76] : memref<1x56x384xf32, #tpu.memory_space<vmem>>, vector<1x56x384xf32>
    %61 = vector.shape_cast %60 : vector<1x56x384xf32> to vector<56x384xf32>
    %62 = vector.shape_cast %59 : vector<56x384xf32> to vector<1x56x384xf32>
    tpu.vector_store %arg4[%c0_74, %c0_75, %c0_76], %62 {strides = array<i32>} : memref<1x56x384xf32, #tpu.memory_space<vmem>>, vector<1x56x384xf32>,
    return
  }
  func.func @transform_0(%arg0: i32) -> (i32, i32, i32, i32, i32) {
    %c0_i32 = arith.constant 0 : i32
    %c0_i32_0 = arith.constant 0 : i32
    %c0_i32_1 = arith.constant 0 : i32
    %c0_i32_2 = arith.constant 0 : i32
    %c0_i32_3 = arith.constant 0 : i32
    return %arg0, %c0_i32, %c0_i32_0, %c0_i32_1, %c0_i32_2 : i32, i32, i32, i32, i32
  }
  func.func @transform_1(%arg0: i32) -> (i32, i32, i32) {
    %c0_i32 = arith.constant 0 : i32
    %c0_i32_0 = arith.constant 0 : i32
    %c0_i32_1 = arith.constant 0 : i32
    %c0_i32_2 = arith.constant 0 : i32
    return %c0_i32, %c0_i32_0, %c0_i32_1 : i32, i32, i32
  }
  func.func @transform_2(%arg0: i32) -> (i32, i32) {
    %c0_i32 = arith.constant 0 : i32
    %c0_i32_0 = arith.constant 0 : i32
    %c0_i32_1 = arith.constant 0 : i32
    return %c0_i32, %c0_i32_0 : i32, i32
  }
  func.func @transform_3(%arg0: i32) -> (i32, i32, i32) {
    %c0_i32 = arith.constant 0 : i32
    %c0_i32_0 = arith.constant 0 : i32
    %c0_i32_1 = arith.constant 0 : i32
    return %arg0, %c0_i32, %c0_i32_0 : i32, i32, i32
  }
}

module attributes {stable_mosaic.version = 11 : i64} {
  func.func @_maxpool_kernel(%arg0: i32, %arg1: memref<1x2x2x72x4xf32, #tpu.memory_space<vmem>>, %arg2: memref<1x56x4xf32, #tpu.memory_space<vmem>>) attributes {dimension_semantics = [#tpu.dimension_semantics<parallel>], iteration_bounds = array<i64: 2>, scalar_prefetch = 0 : i64, scratch_operands = 0 : i64, tpu.core_type = #tpu.core_type<tc>, window_params = [{transform_indices = @transform_0, window_bounds = array<i64: 1, 2, 2, 72, 4>}, {transform_indices = @transform_1, window_bounds = array<i64: 1, 56, 4>}]} {
    %c0 = arith.constant 0 : index
    %c0_0 = arith.constant 0 : index
    %c0_1 = arith.constant 0 : index
    %c0_2 = arith.constant 0 : index
    %c0_3 = arith.constant 0 : index
    %0 = vector.load %arg1[%c0, %c0_0, %c0_1, %c0_2, %c0_3] : memref<1x2x2x72x4xf32, #tpu.memory_space<vmem>>, vector<1x1x1x56x4xf32>
    %1 = vector.shape_cast %0 : vector<1x1x1x56x4xf32> to vector<56x4xf32>
    %c0_4 = arith.constant 0 : index
    %c0_5 = arith.constant 0 : index
    %c1 = arith.constant 1 : index
    %c0_6 = arith.constant 0 : index
    %c0_7 = arith.constant 0 : index
    %2 = vector.load %arg1[%c0_4, %c0_5, %c1, %c0_6, %c0_7] : memref<1x2x2x72x4xf32, #tpu.memory_space<vmem>>, vector<1x1x1x56x4xf32>
    %3 = vector.shape_cast %2 : vector<1x1x1x56x4xf32> to vector<56x4xf32>
    %4 = arith.maximumf %1, %3 : vector<56x4xf32>
    %c0_8 = arith.constant 0 : index
    %c0_9 = arith.constant 0 : index
    %c0_10 = arith.constant 0 : index
    %c1_11 = arith.constant 1 : index
    %c0_12 = arith.constant 0 : index
    %5 = vector.load %arg1[%c0_8, %c0_9, %c0_10, %c1_11, %c0_12] : memref<1x2x2x72x4xf32, #tpu.memory_space<vmem>>, vector<1x1x1x56x4xf32>
    %6 = vector.shape_cast %5 : vector<1x1x1x56x4xf32> to vector<56x4xf32>
    %7 = arith.maximumf %4, %6 : vector<56x4xf32>
    %c0_13 = arith.constant 0 : index
    %c1_14 = arith.constant 1 : index
    %c0_15 = arith.constant 0 : index
    %c0_16 = arith.constant 0 : index
    %c0_17 = arith.constant 0 : index
    %8 = vector.load %arg1[%c0_13, %c1_14, %c0_15, %c0_16, %c0_17] : memref<1x2x2x72x4xf32, #tpu.memory_space<vmem>>, vector<1x1x1x56x4xf32>
    %9 = vector.shape_cast %8 : vector<1x1x1x56x4xf32> to vector<56x4xf32>
    %10 = arith.maximumf %7, %9 : vector<56x4xf32>
    %c0_18 = arith.constant 0 : index
    %c1_19 = arith.constant 1 : index
    %c1_20 = arith.constant 1 : index
    %c0_21 = arith.constant 0 : index
    %c0_22 = arith.constant 0 : index
    %11 = vector.load %arg1[%c0_18, %c1_19, %c1_20, %c0_21, %c0_22] : memref<1x2x2x72x4xf32, #tpu.memory_space<vmem>>, vector<1x1x1x56x4xf32>
    %12 = vector.shape_cast %11 : vector<1x1x1x56x4xf32> to vector<56x4xf32>
    %13 = arith.maximumf %10, %12 : vector<56x4xf32>
    %c0_23 = arith.constant 0 : index
    %c1_24 = arith.constant 1 : index
    %c0_25 = arith.constant 0 : index
    %c1_26 = arith.constant 1 : index
    %c0_27 = arith.constant 0 : index
    %14 = vector.load %arg1[%c0_23, %c1_24, %c0_25, %c1_26, %c0_27] : memref<1x2x2x72x4xf32, #tpu.memory_space<vmem>>, vector<1x1x1x56x4xf32>
    %15 = vector.shape_cast %14 : vector<1x1x1x56x4xf32> to vector<56x4xf32>
    %16 = arith.maximumf %13, %15 : vector<56x4xf32>
    %c0_28 = arith.constant 0 : index
    %c0_29 = arith.constant 0 : index
    %c0_30 = arith.constant 0 : index
    %c8 = arith.constant 8 : index
    %c0_31 = arith.constant 0 : index
    %17 = vector.load %arg1[%c0_28, %c0_29, %c0_30, %c8, %c0_31] : memref<1x2x2x72x4xf32, #tpu.memory_space<vmem>>, vector<1x1x1x56x4xf32>
    %18 = vector.shape_cast %17 : vector<1x1x1x56x4xf32> to vector<56x4xf32>
    %19 = arith.maximumf %16, %18 : vector<56x4xf32>
    %c0_32 = arith.constant 0 : index
    %c0_33 = arith.constant 0 : index
    %c1_34 = arith.constant 1 : index
    %c8_35 = arith.constant 8 : index
    %c0_36 = arith.constant 0 : index
    %20 = vector.load %arg1[%c0_32, %c0_33, %c1_34, %c8_35, %c0_36] : memref<1x2x2x72x4xf32, #tpu.memory_space<vmem>>, vector<1x1x1x56x4xf32>
    %21 = vector.shape_cast %20 : vector<1x1x1x56x4xf32> to vector<56x4xf32>
    %22 = arith.maximumf %19, %21 : vector<56x4xf32>
    %c0_37 = arith.constant 0 : index
    %c0_38 = arith.constant 0 : index
    %c0_39 = arith.constant 0 : index
    %c9 = arith.constant 9 : index
    %c0_40 = arith.constant 0 : index
    %23 = vector.load %arg1[%c0_37, %c0_38, %c0_39, %c9, %c0_40] : memref<1x2x2x72x4xf32, #tpu.memory_space<vmem>>, vector<1x1x1x56x4xf32>
    %24 = vector.shape_cast %23 : vector<1x1x1x56x4xf32> to vector<56x4xf32>
    %25 = arith.maximumf %22, %24 : vector<56x4xf32>
    %c0_41 = arith.constant 0 : index
    %c0_42 = arith.constant 0 : index
    %c0_43 = arith.constant 0 : index
    %26 = vector.load %arg2[%c0_41, %c0_42, %c0_43] : memref<1x56x4xf32, #tpu.memory_space<vmem>>, vector<1x56x4xf32>
    %27 = vector.shape_cast %26 : vector<1x56x4xf32> to vector<56x4xf32>
    %28 = vector.shape_cast %25 : vector<56x4xf32> to vector<1x56x4xf32>
    tpu.vector_store %arg2[%c0_41, %c0_42, %c0_43], %28 {strides = array<i32>} : memref<1x56x4xf32, #tpu.memory_space<vmem>>, vector<1x56x4xf32>,
    return
  }
  func.func @transform_0(%arg0: i32) -> (i32, i32, i32, i32, i32) {
    %c0_i32 = arith.constant 0 : i32
    %c0_i32_0 = arith.constant 0 : i32
    %c0_i32_1 = arith.constant 0 : i32
    %c0_i32_2 = arith.constant 0 : i32
    %c0_i32_3 = arith.constant 0 : i32
    return %arg0, %c0_i32, %c0_i32_0, %c0_i32_1, %c0_i32_2 : i32, i32, i32, i32, i32
  }
  func.func @transform_1(%arg0: i32) -> (i32, i32, i32) {
    %c0_i32 = arith.constant 0 : i32
    %c0_i32_0 = arith.constant 0 : i32
    %c0_i32_1 = arith.constant 0 : i32
    return %arg0, %c0_i32, %c0_i32_0 : i32, i32, i32
  }
}

</mosaic_0001>

<llo_original>
// kernel: make_b_forward.6
$region0: #{make_b_forward.6}
  #allocation0 [shape = 'u32[]', space=smem, size = 0x4, offset = 0x4, fixed_abs, tag = 'smem constant byte address 0x4 - core index']
  #allocation1 [shape = 'u32[144,128]{1,0:T(1,128)}', space=vmem, size = 0x12000, scoped, tag = 'internal scratch']
  %s0 = inlined_call_operand.vmem [shape: bf16[2,1,1,256,4], index: 0, kind: input, shape index: {}]
  %s1 = inlined_call_operand.vmem [shape: bf16[1,4,128], index: 1, kind: input, shape index: {}]
  %s2 = inlined_call_operand.vmem [shape: f32[1,128], index: 2, kind: input, shape index: {}]
  %s3 = inlined_call_operand.vmem [shape: bf16[2,256,128], index: 3, kind: output, shape index: {}]
  %s4 = sld [smem:[#allocation0]]
  $region45: #{make_b_forward.6} parent=0
    _
  %s6 = ssub.s32 1, %s4
  %s7 = scalar_select 0, %s6, %s4
  loop: start=0, step=1, limit=4
  $region2: #{make_b_forward.6} parent=0 // loop_pre_header
    _
  $region3: #{make_b_forward.6} parent=0 // loop_header
    %s9 = sphi 0, %s13
    %p10 = scmp.ge.s32.totalorder %s9, 4
    %s19 = sphi 0, %s21
    %s22 = sphi 0, %s19
    %s23 = sphi 0, %s22
    %s39 = sphi 0, %s23
    %s43 = sphi 0, %s43
    %s45 = sphi 0, %s43
    %s46 = sphi 0, %s45
    %s60 = sphi 0, %s46
    %s64 = sphi 0, %s64
    %s66 = sphi 0, %s64
    %s67 = sphi 0, %s66
    %s81 = sphi 0, %s67
    %s87 = sphi 0, %s89
    %s90 = sphi 0, %s87
    %s91 = sphi 0, %s90
    %s107 = sphi 0, %s91
  $region4: #{make_b_forward.6} parent=0 // loop_header_branch
    %12 = sbr.rel (%p10) target = $region8
  $region5: #{make_b_forward.6} parent=0 // loop_body
    %s14 = ssub.s32 %s9, 1
    %s15 = ssub.s32 %s9, 2
    %s16 = sadd.s32 %s9, 1
    %s17 = ssub.s32 %s9, %s16
    %p18 = scmp.eq.s32.totalorder %s17, 0
    %s20 = sadd.s32 %s19, 1
    %s21 = scalar_select %p18, %s19, %s20
    %p24 = pneg %p18
    %p25 = scmp.eq.s32.totalorder %s9, 1
    %p26 = por %p24, %p25
    %p27 = scmp.ne.s32.totalorder %s19, %s22
    %p28 = scmp.eq.s32.totalorder %s9, 0
    %p29 = por %p27, %p28
    %p30 = scmp.ne.s32.totalorder %s19, %s22
    %p31 = scmp.eq.s32.totalorder %s14, 1
    %p32 = por %p30, %p31
    %p33 = scmp.ne.s32.totalorder %s22, %s23
    %p34 = scmp.eq.s32.totalorder %s14, 0
    %p35 = por %p33, %p34
    %p36 = scmp.ne.s32.totalorder %s22, %s23
    %p37 = scmp.eq.s32.totalorder %s15, 1
    %p38 = por %p36, %p37
    %p40 = scmp.ne.s32.totalorder %s23, %s39
    %p41 = scmp.eq.s32.totalorder %s15, 0
    %p42 = por %p40, %p41
    %s44 = sadd.s32 %s43, 1
    %p47 = scmp.eq.s32.totalorder %s9, 1
    %p48 = scmp.ne.s32.totalorder %s43, %s45
    %p49 = scmp.eq.s32.totalorder %s9, 0
    %p50 = por %p48, %p49
    %p51 = scmp.ne.s32.totalorder %s43, %s45
    %p52 = scmp.eq.s32.totalorder %s14, 1
    %p53 = por %p51, %p52
    %p54 = scmp.ne.s32.totalorder %s45, %s46
    %p55 = scmp.eq.s32.totalorder %s14, 0
    %p56 = por %p54, %p55
    %p57 = scmp.ne.s32.totalorder %s45, %s46
    %p58 = scmp.eq.s32.totalorder %s15, 1
    %p59 = por %p57, %p58
    %p61 = scmp.ne.s32.totalorder %s46, %s60
    %p62 = scmp.eq.s32.totalorder %s15, 0
    %p63 = por %p61, %p62
    %s65 = sadd.s32 %s64, 1
    %p68 = scmp.eq.s32.totalorder %s9, 1
    %p69 = scmp.ne.s32.totalorder %s64, %s66
    %p70 = scmp.eq.s32.totalorder %s9, 0
    %p71 = por %p69, %p70
    %p72 = scmp.ne.s32.totalorder %s64, %s66
    %p73 = scmp.eq.s32.totalorder %s14, 1
    %p74 = por %p72, %p73
    %p75 = scmp.ne.s32.totalorder %s66, %s67
    %p76 = scmp.eq.s32.totalorder %s14, 0
    %p77 = por %p75, %p76
    %p78 = scmp.ne.s32.totalorder %s66, %s67
    %p79 = scmp.eq.s32.totalorder %s15, 1
    %p80 = por %p78, %p79
    %p82 = scmp.ne.s32.totalorder %s67, %s81
    %p83 = scmp.eq.s32.totalorder %s15, 0
    %p84 = por %p82, %p83
    %s85 = ssub.s32 %s9, %s16
    %p86 = scmp.eq.s32.totalorder %s85, 0
    %s88 = sadd.s32 %s87, 1
    %s89 = scalar_select %p86, %s87, %s88
    %p92 = pneg %p86
    %p93 = scmp.eq.s32.totalorder %s9, 1
    %p94 = por %p92, %p93
    %p95 = scmp.ne.s32.totalorder %s87, %s90
    %p96 = scmp.eq.s32.totalorder %s9, 0
    %p97 = por %p95, %p96
    %p98 = scmp.ne.s32.totalorder %s87, %s90
    %p99 = scmp.eq.s32.totalorder %s14, 1
    %p100 = por %p98, %p99
    %p101 = scmp.ne.s32.totalorder %s90, %s91
    %p102 = scmp.eq.s32.totalorder %s14, 0
    %p103 = por %p101, %p102
    %p104 = scmp.ne.s32.totalorder %s90, %s91
    %p105 = scmp.eq.s32.totalorder %s15, 1
    %p106 = por %p104, %p105
    %p108 = scmp.ne.s32.totalorder %s91, %s107
    %p109 = scmp.eq.s32.totalorder %s15, 0
    %p110 = por %p108, %p109
    %p111 = scmp.le.s32.totalorder 1, %s9
    %p112 = scmp.lt.s32.totalorder %s9, 3
    %p113 = pnand %p111, %p112
    %p114 = pneg %p113
    // Predicated region
    $region9: #{make_b_forward.6} parent=5 // pred_check
      _
    $region10: #{make_b_forward.6} parent=5 // pred_check_branch
      %116 = sbr.rel (%p113) target = $region12
    $region11: #{make_b_forward.6} parent=5 // pred_region
      %s117 = ssub.s32 %s9, 1
      // Predicated region
      $region13: #{make_b_forward.6} parent=11 // pred_check
        %p118 = pneg %p56
      $region14: #{make_b_forward.6} parent=11 // pred_check_branch
        %120 = sbr.rel (%p118) target = $region16
      $region15: #{make_b_forward.6} parent=11 // pred_region
        _
      $region16: #{make_b_forward.6} parent=11 // pred_fallthru
        _
      // Predicated region
      $region17: #{make_b_forward.6} parent=11 // pred_check
        %p121 = pneg %p77
      $region18: #{make_b_forward.6} parent=11 // pred_check_branch
        %123 = sbr.rel (%p121) target = $region20
      $region19: #{make_b_forward.6} parent=11 // pred_region
        _
      $region20: #{make_b_forward.6} parent=11 // pred_fallthru
        _
    $region12: #{make_b_forward.6} parent=5 // pred_fallthru
      _
    %p124 = scmp.lt.s32.totalorder %s9, 2
    // Predicated region
    $region21: #{make_b_forward.6} parent=5 // pred_check
      %p125 = pneg %p124
    $region22: #{make_b_forward.6} parent=5 // pred_check_branch
      %127 = sbr.rel (%p125) target = $region24
    $region23: #{make_b_forward.6} parent=5 // pred_region
      // Predicated region
      $region25: #{make_b_forward.6} parent=23 // pred_check
        %p128 = pneg %p29
      $region26: #{make_b_forward.6} parent=23 // pred_check_branch
        %130 = sbr.rel (%p128) target = $region28
      $region27: #{make_b_forward.6} parent=23 // pred_region
        %p131 = scmp.lt.s32.totalorder %s9, 1
        %s132 = scalar_select %p131, %s9, 1
        %s133 = smul.addr %s132, 32
        %s134 = smul.addr %s133, 4
        %s135 = scalar_lea.vmem %s0, %s134
      $region28: #{make_b_forward.6} parent=23 // pred_fallthru
        _
    $region24: #{make_b_forward.6} parent=5 // pred_fallthru
      _
    %p136 = scmp.le.s32.totalorder 1, %s9
    %p137 = scmp.lt.s32.totalorder %s9, 3
    %p138 = pnand %p136, %p137
    %p139 = pneg %p138
    // Predicated region
    $region29: #{make_b_forward.6} parent=5 // pred_check
      _
    $region30: #{make_b_forward.6} parent=5 // pred_check_branch
      %141 = sbr.rel (%p138) target = $region32
    $region31: #{make_b_forward.6} parent=5 // pred_region
      %s142 = ssub.s32 %s9, 1
      %p143 = scmp.lt.s32.totalorder %s14, 1
      %s144 = scalar_select %p143, %s14, 1
      %s145 = smul.addr %s144, 32
      %s146 = smul.addr %s145, 4
      %s147 = scalar_lea.vmem %s0, %s146
      %p148 = pneg %p35
      %p149 = pneg %p32
      %p150 = pneg %p56
      %p151 = pneg %p53
      %p152 = pneg %p77
      %p153 = pneg %p74
      %p154 = pneg %p103
      %p155 = pneg %p100
      %p156 = scmp.lt.s32.totalorder %s14, 1
      %s157 = scalar_select %p156, %s14, 1
      %s158 = smul.addr %s157, 32
      %s159 = smul.addr %s158, 4
      %s160 = scalar_lea.vmem %s3, %s159
      %p161 = scmp.lt.s32.totalorder %s14, 1
      %s162 = scalar_select %p161, %s14, 1
      %s163 = smul.addr %s162, 32
      %s164 = smul.addr %s163, 4
      %s165 = scalar_lea.vmem %s0, %s164
      %p166 = scmp.lt.s32.totalorder %s14, 1
      %s167 = scalar_select %p166, %s14, 1
      %s168 = smul.addr %s167, 32
      %s169 = smul.addr %s168, 4
      %s170 = scalar_lea.vmem %s3, %s169
      %v172 = vld [vmem:[%s165] sm:$0xf]
      %v173 = vld [vmem:[%s165 + $0x4] sm:$0xf]
      %v174 = vld [vmem:[%s165 + $0x8] sm:$0xf]
      %v175 = vld [vmem:[%s165 + $0xc] sm:$0xf]
      %v176 = vld [vmem:[%s165 + $0x10] sm:$0xf]
      %v177 = vld [vmem:[%s165 + $0x14] sm:$0xf]
      %v178 = vld [vmem:[%s165 + $0x18] sm:$0xf]
      %v179 = vld [vmem:[%s165 + $0x1c] sm:$0xf]
      %v180 = vld [vmem:[%s165 + $0x20] sm:$0xf]
      %v181 = vld [vmem:[%s165 + $0x24] sm:$0xf]
      %v182 = vld [vmem:[%s165 + $0x28] sm:$0xf]
      %v183 = vld [vmem:[%s165 + $0x2c] sm:$0xf]
      %v184 = vld [vmem:[%s165 + $0x30] sm:$0xf]
      %v185 = vld [vmem:[%s165 + $0x34] sm:$0xf]
      %v186 = vld [vmem:[%s165 + $0x38] sm:$0xf]
      %v187 = vld [vmem:[%s165 + $0x3c] sm:$0xf]
      %v188 = vld [vmem:[%s165 + $0x40] sm:$0xf]
      %v189 = vld [vmem:[%s165 + $0x44] sm:$0xf]
      %v190 = vld [vmem:[%s165 + $0x48] sm:$0xf]
      %v191 = vld [vmem:[%s165 + $0x4c] sm:$0xf]
      %v192 = vld [vmem:[%s165 + $0x50] sm:$0xf]
      %v193 = vld [vmem:[%s165 + $0x54] sm:$0xf]
      %v194 = vld [vmem:[%s165 + $0x58] sm:$0xf]
      %v195 = vld [vmem:[%s165 + $0x5c] sm:$0xf]
      %v196 = vld [vmem:[%s165 + $0x60] sm:$0xf]
      %v197 = vld [vmem:[%s165 + $0x64] sm:$0xf]
      %v198 = vld [vmem:[%s165 + $0x68] sm:$0xf]
      %v199 = vld [vmem:[%s165 + $0x6c] sm:$0xf]
      %v200 = vld [vmem:[%s165 + $0x70] sm:$0xf]
      %v201 = vld [vmem:[%s165 + $0x74] sm:$0xf]
      %v202 = vld [vmem:[%s165 + $0x78] sm:$0xf]
      %v203 = vld [vmem:[%s165 + $0x7c] sm:$0xf]
      %v204 = vld [vmem:[%s1] sm:$0x3]
      %v205 = vld [vmem:[%s2] sm:$0x1]
      %v207 = vlaneseq
      %v208 = vshrl.u32 %v207, 7
      %v209 = vsub.s32 0, %v208
      %v210 = vrot.slane %v205, %v209
      %v244 = vunpack.c.l.b16 %v172
      %v245 = vunpack.c.l.b16 %v173
      %v246 = vunpack.c.l.b16 %v174
      %v247 = vunpack.c.l.b16 %v175
      %v248 = vunpack.c.l.b16 %v176
      %v249 = vunpack.c.l.b16 %v177
      %v250 = vunpack.c.l.b16 %v178
      %v251 = vunpack.c.l.b16 %v179
      %v252 = vunpack.c.l.b16 %v180
      %v253 = vunpack.c.l.b16 %v181
      %v254 = vunpack.c.l.b16 %v182
      %v255 = vunpack.c.l.b16 %v183
      %v256 = vunpack.c.l.b16 %v184
      %v257 = vunpack.c.l.b16 %v185
      %v258 = vunpack.c.l.b16 %v186
      %v259 = vunpack.c.l.b16 %v187
      %v260 = vunpack.c.l.b16 %v188
      %v261 = vunpack.c.l.b16 %v189
      %v262 = vunpack.c.l.b16 %v190
      %v263 = vunpack.c.l.b16 %v191
      %v264 = vunpack.c.l.b16 %v192
      %v265 = vunpack.c.l.b16 %v193
      %v266 = vunpack.c.l.b16 %v194
      %v267 = vunpack.c.l.b16 %v195
      %v268 = vunpack.c.l.b16 %v196
      %v269 = vunpack.c.l.b16 %v197
      %v270 = vunpack.c.l.b16 %v198
      %v271 = vunpack.c.l.b16 %v199
      %v272 = vunpack.c.l.b16 %v200
      %v273 = vunpack.c.l.b16 %v201
      %v274 = vunpack.c.l.b16 %v202
      %v275 = vunpack.c.l.b16 %v203
      %v276 = vpack.c.b16 %v245, %v244
      %v277 = vpack.c.b16 %v247, %v246
      %v278 = vpack.c.b16 %v249, %v248
      %v279 = vpack.c.b16 %v251, %v250
      %v280 = vpack.c.b16 %v253, %v252
      %v281 = vpack.c.b16 %v255, %v254
      %v282 = vpack.c.b16 %v257, %v256
      %v283 = vpack.c.b16 %v259, %v258
      %v284 = vpack.c.b16 %v261, %v260
      %v285 = vpack.c.b16 %v263, %v262
      %v286 = vpack.c.b16 %v265, %v264
      %v287 = vpack.c.b16 %v267, %v266
      %v288 = vpack.c.b16 %v269, %v268
      %v289 = vpack.c.b16 %v271, %v270
      %v290 = vpack.c.b16 %v273, %v272
      %v291 = vpack.c.b16 %v275, %v274
      %vm292 = vcmask 31744
      %v294 = vsel %vm292, %v276, 0
      %v297 = vsel %vm292, %v277, 0
      %v300 = vsel %vm292, %v278, 0
      %v303 = vsel %vm292, %v279, 0
      %v306 = vsel %vm292, %v280, 0
      %v309 = vsel %vm292, %v281, 0
      %v312 = vsel %vm292, %v282, 0
      %v315 = vsel %vm292, %v283, 0
      %v318 = vsel %vm292, %v284, 0
      %v321 = vsel %vm292, %v285, 0
      %v324 = vsel %vm292, %v286, 0
      %v327 = vsel %vm292, %v287, 0
      %v330 = vsel %vm292, %v288, 0
      %v333 = vsel %vm292, %v289, 0
      %v336 = vsel %vm292, %v290, 0
      %v339 = vsel %vm292, %v291, 0
      %vm341 = vcmask 1041408
      %v343 = vsel %vm341, %v204, 0
      %345 = vmatprep.subr.bf16.mxu0 0
      %346 = vmatpush1.bf16.msra.mxu0 %v343
      %347 = vmatprep.subr.bf16.mxu0 0
      %348 = vmatpush1.bf16.msra.mxu0 0
      %349 = vmatprep.subr.bf16.mxu0 0
      %350 = vmatpush1.bf16.msra.mxu0 0
      %351 = vmatprep.subr.bf16.mxu0 0
      %352 = vmatpush1.bf16.msra.mxu0 0
      %353 = vmatprep.subr.bf16.mxu0 0
      %354 = vmatpush1.bf16.msra.mxu0 0
      %355 = vmatprep.subr.bf16.mxu0 0
      %356 = vmatpush1.bf16.msra.mxu0 0
      %357 = vmatprep.subr.bf16.mxu0 0
      %358 = vmatpush1.bf16.msra.mxu0 0
      %359 = vmatprep.subr.bf16.mxu0 0
      %360 = vmatpush1.bf16.msra.mxu0 0
      %361 = vmatprep.subr.bf16.mxu0 0
      %362 = vmatpush1.bf16.msra.mxu0 0
      %363 = vmatprep.subr.bf16.mxu0 0
      %364 = vmatpush1.bf16.msra.mxu0 0
      %365 = vmatprep.subr.bf16.mxu0 0
      %366 = vmatpush1.bf16.msra.mxu0 0
      %367 = vmatprep.subr.bf16.mxu0 0
      %368 = vmatpush1.bf16.msra.mxu0 0
      %369 = vmatprep.subr.bf16.mxu0 0
      %370 = vmatpush1.bf16.msra.mxu0 0
      %371 = vmatprep.subr.bf16.mxu0 0
      %372 = vmatpush1.bf16.msra.mxu0 0
      %373 = vmatprep.subr.bf16.mxu0 0
      %374 = vmatpush1.bf16.msra.mxu0 0
      %375 = vmatprep.subr.bf16.mxu0 0
      %376 = vmatpush1.bf16.msra.mxu0 0
      %377 = vmatprep.mubr.bf16.mxu0 0
      %378 = vmatmul.mubr.bf16.gmra.mrb[0].mxu0 %v294
      %v379 = vpop.f32.mrb[0].mxu0
      %v380 = vadd.f32 %v210, %v379
      %v381 = vpop.f32.mrb[0].mxu0
      %v382 = vpop.f32.mrb[0].mxu0
      %v383 = vadd.f32 %v210, %v382
      %v384 = vpop.f32.mrb[0].mxu0
      %385 = vmatprep.mubr.bf16.mxu0 0
      %386 = vmatmul.mubr.bf16.gmra.mrb[0].mxu0 %v297
      %v387 = vpop.f32.mrb[0].mxu0
      %v388 = vadd.f32 %v210, %v387
      %v389 = vpop.f32.mrb[0].mxu0
      %v390 = vpop.f32.mrb[0].mxu0
      %v391 = vadd.f32 %v210, %v390
      %v392 = vpop.f32.mrb[0].mxu0
      %393 = vmatprep.mubr.bf16.mxu0 0
      %394 = vmatmul.mubr.bf16.gmra.mrb[0].mxu0 %v300
      %v395 = vpop.f32.mrb[0].mxu0
      %v396 = vadd.f32 %v210, %v395
      %v397 = vpop.f32.mrb[0].mxu0
      %v398 = vpop.f32.mrb[0].mxu0
      %v399 = vadd.f32 %v210, %v398
      %v400 = vpop.f32.mrb[0].mxu0
      %401 = vmatprep.mubr.bf16.mxu0 0
      %402 = vmatmul.mubr.bf16.gmra.mrb[0].mxu0 %v303
      %v403 = vpop.f32.mrb[0].mxu0
      %v404 = vadd.f32 %v210, %v403
      %v405 = vpop.f32.mrb[0].mxu0
      %v406 = vpop.f32.mrb[0].mxu0
      %v407 = vadd.f32 %v210, %v406
      %v408 = vpop.f32.mrb[0].mxu0
      %409 = vmatprep.mubr.bf16.mxu0 0
      %410 = vmatmul.mubr.bf16.gmra.mrb[0].mxu0 %v306
      %v411 = vpop.f32.mrb[0].mxu0
      %v412 = vadd.f32 %v210, %v411
      %v413 = vpop.f32.mrb[0].mxu0
      %v414 = vpop.f32.mrb[0].mxu0
      %v415 = vadd.f32 %v210, %v414
      %v416 = vpop.f32.mrb[0].mxu0
      %417 = vmatprep.mubr.bf16.mxu0 0
      %418 = vmatmul.mubr.bf16.gmra.mrb[0].mxu0 %v309
      %v419 = vpop.f32.mrb[0].mxu0
      %v420 = vadd.f32 %v210, %v419
      %v421 = vpop.f32.mrb[0].mxu0
      %v422 = vpop.f32.mrb[0].mxu0
      %v423 = vadd.f32 %v210, %v422
      %v424 = vpop.f32.mrb[0].mxu0
      %425 = vmatprep.mubr.bf16.mxu0 0
      %426 = vmatmul.mubr.bf16.gmra.mrb[0].mxu0 %v312
      %v427 = vpop.f32.mrb[0].mxu0
      %v428 = vadd.f32 %v210, %v427
      %v429 = vpop.f32.mrb[0].mxu0
      %v430 = vpop.f32.mrb[0].mxu0
      %v431 = vadd.f32 %v210, %v430
      %v432 = vpop.f32.mrb[0].mxu0
      %433 = vmatprep.mubr.bf16.mxu0 0
      %434 = vmatmul.mubr.bf16.gmra.mrb[0].mxu0 %v315
      %v435 = vpop.f32.mrb[0].mxu0
      %v436 = vadd.f32 %v210, %v435
      %v437 = vpop.f32.mrb[0].mxu0
      %v438 = vpop.f32.mrb[0].mxu0
      %v439 = vadd.f32 %v210, %v438
      %v440 = vpop.f32.mrb[0].mxu0
      %441 = vmatprep.mubr.bf16.mxu0 0
      %442 = vmatmul.mubr.bf16.gmra.mrb[0].mxu0 %v318
      %v443 = vpop.f32.mrb[0].mxu0
      %v444 = vadd.f32 %v210, %v443
      %v445 = vpop.f32.mrb[0].mxu0
      %v446 = vpop.f32.mrb[0].mxu0
      %v447 = vadd.f32 %v210, %v446
      %v448 = vpop.f32.mrb[0].mxu0
      %449 = vmatprep.mubr.bf16.mxu0 0
      %450 = vmatmul.mubr.bf16.gmra.mrb[0].mxu0 %v321
      %v451 = vpop.f32.mrb[0].mxu0
      %v452 = vadd.f32 %v210, %v451
      %v453 = vpop.f32.mrb[0].mxu0
      %v454 = vpop.f32.mrb[0].mxu0
      %v455 = vadd.f32 %v210, %v454
      %v456 = vpop.f32.mrb[0].mxu0
      %457 = vmatprep.mubr.bf16.mxu0 0
      %458 = vmatmul.mubr.bf16.gmra.mrb[0].mxu0 %v324
      %v459 = vpop.f32.mrb[0].mxu0
      %v460 = vadd.f32 %v210, %v459
      %v461 = vpop.f32.mrb[0].mxu0
      %v462 = vpop.f32.mrb[0].mxu0
      %v463 = vadd.f32 %v210, %v462
      %v464 = vpop.f32.mrb[0].mxu0
      %465 = vmatprep.mubr.bf16.mxu0 0
      %466 = vmatmul.mubr.bf16.gmra.mrb[0].mxu0 %v327
      %v467 = vpop.f32.mrb[0].mxu0
      %v468 = vadd.f32 %v210, %v467
      %v469 = vpop.f32.mrb[0].mxu0
      %v470 = vpop.f32.mrb[0].mxu0
      %v471 = vadd.f32 %v210, %v470
      %v472 = vpop.f32.mrb[0].mxu0
      %473 = vmatprep.mubr.bf16.mxu0 0
      %474 = vmatmul.mubr.bf16.gmra.mrb[0].mxu0 %v330
      %v475 = vpop.f32.mrb[0].mxu0
      %v476 = vadd.f32 %v210, %v475
      %v477 = vpop.f32.mrb[0].mxu0
      %v478 = vpop.f32.mrb[0].mxu0
      %v479 = vadd.f32 %v210, %v478
      %v480 = vpop.f32.mrb[0].mxu0
      %481 = vmatprep.mubr.bf16.mxu0 0
      %482 = vmatmul.mubr.bf16.gmra.mrb[0].mxu0 %v333
      %v483 = vpop.f32.mrb[0].mxu0
      %v484 = vadd.f32 %v210, %v483
      %v485 = vpop.f32.mrb[0].mxu0
      %v486 = vpop.f32.mrb[0].mxu0
      %v487 = vadd.f32 %v210, %v486
      %v488 = vpop.f32.mrb[0].mxu0
      %489 = vmatprep.mubr.bf16.mxu0 0
      %490 = vmatmul.mubr.bf16.gmra.mrb[0].mxu0 %v336
      %v491 = vpop.f32.mrb[0].mxu0
      %v492 = vadd.f32 %v210, %v491
      %v493 = vpop.f32.mrb[0].mxu0
      %v494 = vpop.f32.mrb[0].mxu0
      %v495 = vadd.f32 %v210, %v494
      %v496 = vpop.f32.mrb[0].mxu0
      %497 = vmatprep.mubr.bf16.mxu0 0
      %498 = vmatmul.mubr.bf16.gmra.mrb[0].mxu0 %v339
      %v499 = vpop.f32.mrb[0].mxu0
      %v500 = vadd.f32 %v210, %v499
      %v501 = vpop.f32.mrb[0].mxu0
      %v502 = vpop.f32.mrb[0].mxu0
      %v503 = vadd.f32 %v210, %v502
      %v504 = vpop.f32.mrb[0].mxu0
      %505 = vdwg.mxu0
      %v506 = vmax.f32 %v380, 0.0
      %v507 = vmax.f32 %v383, 0.0
      %v508 = vmax.f32 %v388, 0.0
      %v509 = vmax.f32 %v391, 0.0
      %v510 = vmax.f32 %v396, 0.0
      %v511 = vmax.f32 %v399, 0.0
      %v512 = vmax.f32 %v404, 0.0
      %v513 = vmax.f32 %v407, 0.0
      %v514 = vmax.f32 %v412, 0.0
      %v515 = vmax.f32 %v415, 0.0
      %v516 = vmax.f32 %v420, 0.0
      %v517 = vmax.f32 %v423, 0.0
      %v518 = vmax.f32 %v428, 0.0
      %v519 = vmax.f32 %v431, 0.0
      %v520 = vmax.f32 %v436, 0.0
      %v521 = vmax.f32 %v439, 0.0
      %v522 = vmax.f32 %v444, 0.0
      %v523 = vmax.f32 %v447, 0.0
      %v524 = vmax.f32 %v452, 0.0
      %v525 = vmax.f32 %v455, 0.0
      %v526 = vmax.f32 %v460, 0.0
      %v527 = vmax.f32 %v463, 0.0
      %v528 = vmax.f32 %v468, 0.0
      %v529 = vmax.f32 %v471, 0.0
      %v530 = vmax.f32 %v476, 0.0
      %v531 = vmax.f32 %v479, 0.0
      %v532 = vmax.f32 %v484, 0.0
      %v533 = vmax.f32 %v487, 0.0
      %v534 = vmax.f32 %v492, 0.0
      %v535 = vmax.f32 %v495, 0.0
      %v536 = vmax.f32 %v500, 0.0
      %v537 = vmax.f32 %v503, 0.0
      %v538 = vpack.c.bf16 %v507, %v506
      %v539 = vpack.c.bf16 %v509, %v508
      %v540 = vpack.c.bf16 %v511, %v510
      %v541 = vpack.c.bf16 %v513, %v512
      %v542 = vpack.c.bf16 %v515, %v514
      %v543 = vpack.c.bf16 %v517, %v516
      %v544 = vpack.c.bf16 %v519, %v518
      %v545 = vpack.c.bf16 %v521, %v520
      %v546 = vpack.c.bf16 %v523, %v522
      %v547 = vpack.c.bf16 %v525, %v524
      %v548 = vpack.c.bf16 %v527, %v526
      %v549 = vpack.c.bf16 %v529, %v528
      %v550 = vpack.c.bf16 %v531, %v530
      %v551 = vpack.c.bf16 %v533, %v532
      %v552 = vpack.c.bf16 %v535, %v534
      %v553 = vpack.c.bf16 %v537, %v536
      %v570 = vunpack.c.l.b16 %v538
      %v571 = vunpack.c.h.b16 %v538
      %v572 = vunpack.c.l.b16 %v539
      %v573 = vunpack.c.h.b16 %v539
      %v574 = vunpack.c.l.b16 %v540
      %v575 = vunpack.c.h.b16 %v540
      %v576 = vunpack.c.l.b16 %v541
      %v577 = vunpack.c.h.b16 %v541
      %v578 = vunpack.c.l.b16 %v542
      %v579 = vunpack.c.h.b16 %v542
      %v580 = vunpack.c.l.b16 %v543
      %v581 = vunpack.c.h.b16 %v543
      %v582 = vunpack.c.l.b16 %v544
      %v583 = vunpack.c.h.b16 %v544
      %v584 = vunpack.c.l.b16 %v545
      %v585 = vunpack.c.h.b16 %v545
      %v586 = vunpack.c.l.b16 %v546
      %v587 = vunpack.c.h.b16 %v546
      %v588 = vunpack.c.l.b16 %v547
      %v589 = vunpack.c.h.b16 %v547
      %v590 = vunpack.c.l.b16 %v548
      %v591 = vunpack.c.h.b16 %v548
      %v592 = vunpack.c.l.b16 %v549
      %v593 = vunpack.c.h.b16 %v549
      %v594 = vunpack.c.l.b16 %v550
      %v595 = vunpack.c.h.b16 %v550
      %v596 = vunpack.c.l.b16 %v551
      %v597 = vunpack.c.h.b16 %v551
      %v598 = vunpack.c.l.b16 %v552
      %v599 = vunpack.c.h.b16 %v552
      %v600 = vunpack.c.l.b16 %v553
      %v601 = vunpack.c.h.b16 %v553
      %v602 = vpack.c.b16 %v570, %v570
      %v603 = vpack.c.b16 %v571, %v571
      %v604 = vpack.c.b16 %v572, %v572
      %v605 = vpack.c.b16 %v573, %v573
      %v606 = vpack.c.b16 %v574, %v574
      %v607 = vpack.c.b16 %v575, %v575
      %v608 = vpack.c.b16 %v576, %v576
      %v609 = vpack.c.b16 %v577, %v577
      %v610 = vpack.c.b16 %v578, %v578
      %v611 = vpack.c.b16 %v579, %v579
      %v612 = vpack.c.b16 %v580, %v580
      %v613 = vpack.c.b16 %v581, %v581
      %v614 = vpack.c.b16 %v582, %v582
      %v615 = vpack.c.b16 %v583, %v583
      %v616 = vpack.c.b16 %v584, %v584
      %v617 = vpack.c.b16 %v585, %v585
      %v618 = vpack.c.b16 %v586, %v586
      %v619 = vpack.c.b16 %v587, %v587
      %v620 = vpack.c.b16 %v588, %v588
      %v621 = vpack.c.b16 %v589, %v589
      %v622 = vpack.c.b16 %v590, %v590
      %v623 = vpack.c.b16 %v591, %v591
      %v624 = vpack.c.b16 %v592, %v592
      %v625 = vpack.c.b16 %v593, %v593
      %v626 = vpack.c.b16 %v594, %v594
      %v627 = vpack.c.b16 %v595, %v595
      %v628 = vpack.c.b16 %v596, %v596
      %v629 = vpack.c.b16 %v597, %v597
      %v630 = vpack.c.b16 %v598, %v598
      %v631 = vpack.c.b16 %v599, %v599
      %v632 = vpack.c.b16 %v600, %v600
      %v633 = vpack.c.b16 %v601, %v601
      %666 = vst [vmem:[%s170] sm:$0xf] %v602
      %667 = vst [vmem:[%s170 + $0x4] sm:$0xf] %v603
      %668 = vst [vmem:[%s170 + $0x8] sm:$0xf] %v604
      %669 = vst [vmem:[%s170 + $0xc] sm:$0xf] %v605
      %670 = vst [vmem:[%s170 + $0x10] sm:$0xf] %v606
      %671 = vst [vmem:[%s170 + $0x14] sm:$0xf] %v607
      %672 = vst [vmem:[%s170 + $0x18] sm:$0xf] %v608
      %673 = vst [vmem:[%s170 + $0x1c] sm:$0xf] %v609
      %674 = vst [vmem:[%s170 + $0x20] sm:$0xf] %v610
      %675 = vst [vmem:[%s170 + $0x24] sm:$0xf] %v611
      %676 = vst [vmem:[%s170 + $0x28] sm:$0xf] %v612
      %677 = vst [vmem:[%s170 + $0x2c] sm:$0xf] %v613
      %678 = vst [vmem:[%s170 + $0x30] sm:$0xf] %v614
      %679 = vst [vmem:[%s170 + $0x34] sm:$0xf] %v615
      %680 = vst [vmem:[%s170 + $0x38] sm:$0xf] %v616
      %681 = vst [vmem:[%s170 + $0x3c] sm:$0xf] %v617
      %682 = vst [vmem:[%s170 + $0x40] sm:$0xf] %v618
      %683 = vst [vmem:[%s170 + $0x44] sm:$0xf] %v619
      %684 = vst [vmem:[%s170 + $0x48] sm:$0xf] %v620
      %685 = vst [vmem:[%s170 + $0x4c] sm:$0xf] %v621
      %686 = vst [vmem:[%s170 + $0x50] sm:$0xf] %v622
      %687 = vst [vmem:[%s170 + $0x54] sm:$0xf] %v623
      %688 = vst [vmem:[%s170 + $0x58] sm:$0xf] %v624
      %689 = vst [vmem:[%s170 + $0x5c] sm:$0xf] %v625
      %690 = vst [vmem:[%s170 + $0x60] sm:$0xf] %v626
      %691 = vst [vmem:[%s170 + $0x64] sm:$0xf] %v627
      %692 = vst [vmem:[%s170 + $0x68] sm:$0xf] %v628
      %693 = vst [vmem:[%s170 + $0x6c] sm:$0xf] %v629
      %694 = vst [vmem:[%s170 + $0x70] sm:$0xf] %v630
      %695 = vst [vmem:[%s170 + $0x74] sm:$0xf] %v631
      %696 = vst [vmem:[%s170 + $0x78] sm:$0xf] %v632
      %697 = vst [vmem:[%s170 + $0x7c] sm:$0xf] %v633
      %p698 = scmp.lt.s32.totalorder %s14, 1
      %s699 = scalar_select %p698, %s14, 1
      %s700 = smul.addr %s699, 32
      %s701 = smul.addr %s700, 4
      %s702 = scalar_lea.vmem %s3, %s701
      // Predicated region
      $region33: #{make_b_forward.6} parent=31 // pred_check
        %p703 = pneg %p100
      $region34: #{make_b_forward.6} parent=31 // pred_check_branch
        %705 = sbr.rel (%p703) target = $region36
      $region35: #{make_b_forward.6} parent=31 // pred_region
        _
      $region36: #{make_b_forward.6} parent=31 // pred_fallthru
        _
    $region32: #{make_b_forward.6} parent=5 // pred_fallthru
      _
    %p706 = scmp.le.s32.totalorder 2, %s9
    // Predicated region
    $region37: #{make_b_forward.6} parent=5 // pred_check
      %p707 = pneg %p706
    $region38: #{make_b_forward.6} parent=5 // pred_check_branch
      %709 = sbr.rel (%p707) target = $region40
    $region39: #{make_b_forward.6} parent=5 // pred_region
      %s710 = ssub.s32 %s9, 2
      // Predicated region
      $region41: #{make_b_forward.6} parent=39 // pred_check
        %p711 = pneg %p106
      $region42: #{make_b_forward.6} parent=39 // pred_check_branch
        %713 = sbr.rel (%p711) target = $region44
      $region43: #{make_b_forward.6} parent=39 // pred_region
        %p714 = scmp.lt.s32.totalorder %s15, 1
        %s715 = scalar_select %p714, %s15, 1
        %s716 = smul.addr %s715, 32
        %s717 = smul.addr %s716, 4
        %s718 = scalar_lea.vmem %s3, %s717
      $region44: #{make_b_forward.6} parent=39 // pred_fallthru
        _
    $region40: #{make_b_forward.6} parent=5 // pred_fallthru
      _
  $region6: #{make_b_forward.6} parent=0 // loop_footer
    %s13 = sadd.s32 1, %s9
  $region7: #{make_b_forward.6} parent=0 // loop_footer_branch
    %8 = sbr.rel target = $region3
  $region8: #{make_b_forward.6} parent=0 // loop_exit
    _

// kernel: make_b_forward.7
$region0: #{make_b_forward.7}
  #allocation0 [shape = 'u32[]', space=smem, size = 0x4, offset = 0x4, fixed_abs, tag = 'smem constant byte address 0x4 - core index']
  #allocation1 [shape = 'u32[144,128]{1,0:T(1,128)}', space=vmem, size = 0x12000, scoped, tag = 'internal scratch']
  %s0 = inlined_call_operand.vmem [shape: bf16[2,1,1,342,64], index: 0, kind: input, shape index: {}]
  %s1 = inlined_call_operand.vmem [shape: bf16[9,64,128], index: 1, kind: input, shape index: {}]
  %s2 = inlined_call_operand.vmem [shape: f32[1,128], index: 2, kind: input, shape index: {}]
  %s3 = inlined_call_operand.vmem [shape: bf16[2,288,128], index: 3, kind: output, shape index: {}]
  %s4 = sld [smem:[#allocation0]]
  $region45: #{make_b_forward.7} parent=0
    _
  %s6 = ssub.s32 1, %s4
  %s7 = scalar_select 0, %s6, %s4
  loop: start=0, step=1, limit=4
  $region2: #{make_b_forward.7} parent=0 // loop_pre_header
    _
  $region3: #{make_b_forward.7} parent=0 // loop_header
    %s9 = sphi 0, %s13
    %p10 = scmp.ge.s32.totalorder %s9, 4
    %s19 = sphi 0, %s21
    %s22 = sphi 0, %s19
    %s23 = sphi 0, %s22
    %s39 = sphi 0, %s23
    %s43 = sphi 0, %s43
    %s45 = sphi 0, %s43
    %s46 = sphi 0, %s45
    %s60 = sphi 0, %s46
    %s64 = sphi 0, %s64
    %s66 = sphi 0, %s64
    %s67 = sphi 0, %s66
    %s81 = sphi 0, %s67
    %s87 = sphi 0, %s89
    %s90 = sphi 0, %s87
    %s91 = sphi 0, %s90
    %s107 = sphi 0, %s91
  $region4: #{make_b_forward.7} parent=0 // loop_header_branch
    %12 = sbr.rel (%p10) target = $region8
  $region5: #{make_b_forward.7} parent=0 // loop_body
    %s14 = ssub.s32 %s9, 1
    %s15 = ssub.s32 %s9, 2
    %s16 = sadd.s32 %s9, 1
    %s17 = ssub.s32 %s9, %s16
    %p18 = scmp.eq.s32.totalorder %s17, 0
    %s20 = sadd.s32 %s19, 1
    %s21 = scalar_select %p18, %s19, %s20
    %p24 = pneg %p18
    %p25 = scmp.eq.s32.totalorder %s9, 1
    %p26 = por %p24, %p25
    %p27 = scmp.ne.s32.totalorder %s19, %s22
    %p28 = scmp.eq.s32.totalorder %s9, 0
    %p29 = por %p27, %p28
    %p30 = scmp.ne.s32.totalorder %s19, %s22
    %p31 = scmp.eq.s32.totalorder %s14, 1
    %p32 = por %p30, %p31
    %p33 = scmp.ne.s32.totalorder %s22, %s23
    %p34 = scmp.eq.s32.totalorder %s14, 0
    %p35 = por %p33, %p34
    %p36 = scmp.ne.s32.totalorder %s22, %s23
    %p37 = scmp.eq.s32.totalorder %s15, 1
    %p38 = por %p36, %p37
    %p40 = scmp.ne.s32.totalorder %s23, %s39
    %p41 = scmp.eq.s32.totalorder %s15, 0
    %p42 = por %p40, %p41
    %s44 = sadd.s32 %s43, 1
    %p47 = scmp.eq.s32.totalorder %s9, 1
    %p48 = scmp.ne.s32.totalorder %s43, %s45
    %p49 = scmp.eq.s32.totalorder %s9, 0
    %p50 = por %p48, %p49
    %p51 = scmp.ne.s32.totalorder %s43, %s45
    %p52 = scmp.eq.s32.totalorder %s14, 1
    %p53 = por %p51, %p52
    %p54 = scmp.ne.s32.totalorder %s45, %s46
    %p55 = scmp.eq.s32.totalorder %s14, 0
    %p56 = por %p54, %p55
    %p57 = scmp.ne.s32.totalorder %s45, %s46
    %p58 = scmp.eq.s32.totalorder %s15, 1
    %p59 = por %p57, %p58
    %p61 = scmp.ne.s32.totalorder %s46, %s60
    %p62 = scmp.eq.s32.totalorder %s15, 0
    %p63 = por %p61, %p62
    %s65 = sadd.s32 %s64, 1
    %p68 = scmp.eq.s32.totalorder %s9, 1
    %p69 = scmp.ne.s32.totalorder %s64, %s66
    %p70 = scmp.eq.s32.totalorder %s9, 0
    %p71 = por %p69, %p70
    %p72 = scmp.ne.s32.totalorder %s64, %s66
    %p73 = scmp.eq.s32.totalorder %s14, 1
    %p74 = por %p72, %p73
    %p75 = scmp.ne.s32.totalorder %s66, %s67
    %p76 = scmp.eq.s32.totalorder %s14, 0
    %p77 = por %p75, %p76
    %p78 = scmp.ne.s32.totalorder %s66, %s67
    %p79 = scmp.eq.s32.totalorder %s15, 1
    %p80 = por %p78, %p79
    %p82 = scmp.ne.s32.totalorder %s67, %s81
    %p83 = scmp.eq.s32.totalorder %s15, 0
    %p84 = por %p82, %p83
    %s85 = ssub.s32 %s9, %s16
    %p86 = scmp.eq.s32.totalorder %s85, 0
    %s88 = sadd.s32 %s87, 1
    %s89 = scalar_select %p86, %s87, %s88
    %p92 = pneg %p86
    %p93 = scmp.eq.s32.totalorder %s9, 1
    %p94 = por %p92, %p93
    %p95 = scmp.ne.s32.totalorder %s87, %s90
    %p96 = scmp.eq.s32.totalorder %s9, 0
    %p97 = por %p95, %p96
    %p98 = scmp.ne.s32.totalorder %s87, %s90
    %p99 = scmp.eq.s32.totalorder %s14, 1
    %p100 = por %p98, %p99
    %p101 = scmp.ne.s32.totalorder %s90, %s91
    %p102 = scmp.eq.s32.totalorder %s14, 0
    %p103 = por %p101, %p102
    %p104 = scmp.ne.s32.totalorder %s90, %s91
    %p105 = scmp.eq.s32.totalorder %s15, 1
    %p106 = por %p104, %p105
    %p108 = scmp.ne.s32.totalorder %s91, %s107
    %p109 = scmp.eq.s32.totalorder %s15, 0
    %p110 = por %p108, %p109
    %p111 = scmp.le.s32.totalorder 1, %s9
    %p112 = scmp.lt.s32.totalorder %s9, 3
    %p113 = pnand %p111, %p112
    %p114 = pneg %p113
    // Predicated region
    $region9: #{make_b_forward.7} parent=5 // pred_check
      _
    $region10: #{make_b_forward.7} parent=5 // pred_check_branch
      %116 = sbr.rel (%p113) target = $region12
    $region11: #{make_b_forward.7} parent=5 // pred_region
      %s117 = ssub.s32 %s9, 1
      // Predicated region
      $region13: #{make_b_forward.7} parent=11 // pred_check
        %p118 = pneg %p56
      $region14: #{make_b_forward.7} parent=11 // pred_check_branch
        %120 = sbr.rel (%p118) target = $region16
      $region15: #{make_b_forward.7} parent=11 // pred_region
        _
      $region16: #{make_b_forward.7} parent=11 // pred_fallthru
        _
      // Predicated region
      $region17: #{make_b_forward.7} parent=11 // pred_check
        %p121 = pneg %p77
      $region18: #{make_b_forward.7} parent=11 // pred_check_branch
        %123 = sbr.rel (%p121) target = $region20
      $region19: #{make_b_forward.7} parent=11 // pred_region
        _
      $region20: #{make_b_forward.7} parent=11 // pred_fallthru
        _
    $region12: #{make_b_forward.7} parent=5 // pred_fallthru
      _
    %p124 = scmp.lt.s32.totalorder %s9, 2
    // Predicated region
    $region21: #{make_b_forward.7} parent=5 // pred_check
      %p125 = pneg %p124
    $region22: #{make_b_forward.7} parent=5 // pred_check_branch
      %127 = sbr.rel (%p125) target = $region24
    $region23: #{make_b_forward.7} parent=5 // pred_region
      // Predicated region
      $region25: #{make_b_forward.7} parent=23 // pred_check
        %p128 = pneg %p29
      $region26: #{make_b_forward.7} parent=23 // pred_check_branch
        %130 = sbr.rel (%p128) target = $region28
      $region27: #{make_b_forward.7} parent=23 // pred_region
        %p131 = scmp.lt.s32.totalorder %s9, 1
        %s132 = scalar_select %p131, %s9, 1
        %s133 = smul.addr %s132, 43
        %s134 = smul.addr %s133, 4
        %s135 = scalar_lea.vmem %s0, %s134
      $region28: #{make_b_forward.7} parent=23 // pred_fallthru
        _
    $region24: #{make_b_forward.7} parent=5 // pred_fallthru
      _
    %p136 = scmp.le.s32.totalorder 1, %s9
    %p137 = scmp.lt.s32.totalorder %s9, 3
    %p138 = pnand %p136, %p137
    %p139 = pneg %p138
    // Predicated region
    $region29: #{make_b_forward.7} parent=5 // pred_check
      _
    $region30: #{make_b_forward.7} parent=5 // pred_check_branch
      %141 = sbr.rel (%p138) target = $region32
    $region31: #{make_b_forward.7} parent=5 // pred_region
      %s142 = ssub.s32 %s9, 1
      %p143 = scmp.lt.s32.totalorder %s14, 1
      %s144 = scalar_select %p143, %s14, 1
      %s145 = smul.addr %s144, 43
      %s146 = smul.addr %s145, 4
      %s147 = scalar_lea.vmem %s0, %s146
      %p148 = pneg %p35
      %p149 = pneg %p32
      %p150 = pneg %p56
      %p151 = pneg %p53
      %p152 = pneg %p77
      %p153 = pneg %p74
      %p154 = pneg %p103
      %p155 = pneg %p100
      %p156 = scmp.lt.s32.totalorder %s14, 1
      %s157 = scalar_select %p156, %s14, 1
      %s158 = smul.addr %s157, 36
      %s159 = smul.addr %s158, 4
      %s160 = scalar_lea.vmem %s3, %s159
      %p161 = scmp.lt.s32.totalorder %s14, 1
      %s162 = scalar_select %p161, %s14, 1
      %s163 = smul.addr %s162, 43
      %s164 = smul.addr %s163, 4
      %s165 = scalar_lea.vmem %s0, %s164
      %p166 = scmp.lt.s32.totalorder %s14, 1
      %s167 = scalar_select %p166, %s14, 1
      %s168 = smul.addr %s167, 36
      %s169 = smul.addr %s168, 4
      %s170 = scalar_lea.vmem %s3, %s169
      %v172 = vld [vmem:[%s165] sm:$0xf]
      %v173 = vld [vmem:[%s165 + $0x4] sm:$0xf]
      %v174 = vld [vmem:[%s165 + $0x8] sm:$0xf]
      %v175 = vld [vmem:[%s165 + $0xc] sm:$0xf]
      %v176 = vld [vmem:[%s165 + $0x10] sm:$0xf]
      %v177 = vld [vmem:[%s165 + $0x14] sm:$0xf]
      %v178 = vld [vmem:[%s165 + $0x18] sm:$0xf]
      %v179 = vld [vmem:[%s165 + $0x1c] sm:$0xf]
      %v180 = vld [vmem:[%s165 + $0x20] sm:$0xf]
      %v181 = vld [vmem:[%s165 + $0x24] sm:$0xf]
      %v182 = vld [vmem:[%s165 + $0x28] sm:$0xf]
      %v183 = vld [vmem:[%s165 + $0x2c] sm:$0xf]
      %v184 = vld [vmem:[%s165 + $0x30] sm:$0xf]
      %v185 = vld [vmem:[%s165 + $0x34] sm:$0xf]
      %v186 = vld [vmem:[%s165 + $0x38] sm:$0xf]
      %v187 = vld [vmem:[%s165 + $0x3c] sm:$0xf]
      %v188 = vld [vmem:[%s165 + $0x40] sm:$0xf]
      %v189 = vld [vmem:[%s165 + $0x44] sm:$0xf]
      %v190 = vld [vmem:[%s165 + $0x48] sm:$0xf]
      %v191 = vld [vmem:[%s165 + $0x4c] sm:$0xf]
      %v192 = vld [vmem:[%s165 + $0x50] sm:$0xf]
      %v193 = vld [vmem:[%s165 + $0x54] sm:$0xf]
      %v194 = vld [vmem:[%s165 + $0x58] sm:$0xf]
      %v195 = vld [vmem:[%s165 + $0x5c] sm:$0xf]
      %v196 = vld [vmem:[%s165 + $0x60] sm:$0xf]
      %v197 = vld [vmem:[%s165 + $0x64] sm:$0xf]
      %v198 = vld [vmem:[%s165 + $0x68] sm:$0xf]
      %v199 = vld [vmem:[%s165 + $0x6c] sm:$0xf]
      %v200 = vld [vmem:[%s165 + $0x70] sm:$0xf]
      %v201 = vld [vmem:[%s165 + $0x74] sm:$0xf]
      %v202 = vld [vmem:[%s165 + $0x78] sm:$0xf]
      %v203 = vld [vmem:[%s165 + $0x7c] sm:$0xf]
      %v204 = vld [vmem:[%s165 + $0x80] sm:$0xf]
      %v205 = vld [vmem:[%s165 + $0x84] sm:$0xf]
      %v206 = vld [vmem:[%s165 + $0x88] sm:$0xf]
      %v207 = vld [vmem:[%s165 + $0x8c] sm:$0xf]
      %v208 = vld [vmem:[%s1] sm:$0xf]
      %v209 = vld [vmem:[%s1 + $0x4] sm:$0xf]
      %v210 = vld [vmem:[%s1 + $0x8] sm:$0xf]
      %v211 = vld [vmem:[%s1 + $0xc] sm:$0xf]
      %v212 = vld [vmem:[%s1 + $0x10] sm:$0xf]
      %v213 = vld [vmem:[%s1 + $0x14] sm:$0xf]
      %v214 = vld [vmem:[%s1 + $0x18] sm:$0xf]
      %v215 = vld [vmem:[%s1 + $0x1c] sm:$0xf]
      %v216 = vld [vmem:[%s165 + $0x90] sm:$0x1]
      %s217 = scalar_lea.vmem %s1, 32
      %v218 = vld [vmem:[%s217] sm:$0xf]
      %v219 = vld [vmem:[%s217 + $0x4] sm:$0xf]
      %v220 = vld [vmem:[%s217 + $0x8] sm:$0xf]
      %v221 = vld [vmem:[%s217 + $0xc] sm:$0xf]
      %v222 = vld [vmem:[%s217 + $0x10] sm:$0xf]
      %v223 = vld [vmem:[%s217 + $0x14] sm:$0xf]
      %v224 = vld [vmem:[%s217 + $0x18] sm:$0xf]
      %v225 = vld [vmem:[%s217 + $0x1c] sm:$0xf]
      %v263 = vunpack.c.l.b16 %v172
      %v264 = vunpack.c.l.b16 %v173
      %v265 = vunpack.c.l.b16 %v174
      %v266 = vunpack.c.l.b16 %v175
      %v267 = vunpack.c.l.b16 %v176
      %v268 = vunpack.c.l.b16 %v177
      %v269 = vunpack.c.l.b16 %v178
      %v270 = vunpack.c.l.b16 %v179
      %v271 = vunpack.c.l.b16 %v180
      %v272 = vunpack.c.l.b16 %v181
      %v273 = vunpack.c.l.b16 %v182
      %v274 = vunpack.c.l.b16 %v183
      %v275 = vunpack.c.l.b16 %v184
      %v276 = vunpack.c.l.b16 %v185
      %v277 = vunpack.c.l.b16 %v186
      %v278 = vunpack.c.l.b16 %v187
      %v279 = vunpack.c.l.b16 %v188
      %v280 = vunpack.c.l.b16 %v189
      %v281 = vunpack.c.l.b16 %v190
      %v282 = vunpack.c.l.b16 %v191
      %v283 = vunpack.c.l.b16 %v192
      %v284 = vunpack.c.l.b16 %v193
      %v285 = vunpack.c.l.b16 %v194
      %v286 = vunpack.c.l.b16 %v195
      %v287 = vunpack.c.l.b16 %v196
      %v288 = vunpack.c.l.b16 %v197
      %v289 = vunpack.c.l.b16 %v198
      %v290 = vunpack.c.l.b16 %v199
      %v291 = vunpack.c.l.b16 %v200
      %v292 = vunpack.c.l.b16 %v201
      %v293 = vunpack.c.l.b16 %v202
      %v294 = vunpack.c.l.b16 %v203
      %v295 = vunpack.c.l.b16 %v204
      %v296 = vunpack.c.l.b16 %v205
      %v297 = vunpack.c.l.b16 %v206
      %v298 = vunpack.c.l.b16 %v207
      %v299 = vunpack.c.l.b16 %v216
      %v300 = vpack.c.b16 %v264, %v263
      %v301 = vpack.c.b16 %v266, %v265
      %v302 = vpack.c.b16 %v268, %v267
      %v303 = vpack.c.b16 %v270, %v269
      %v304 = vpack.c.b16 %v272, %v271
      %v305 = vpack.c.b16 %v274, %v273
      %v306 = vpack.c.b16 %v276, %v275
      %v307 = vpack.c.b16 %v278, %v277
      %v308 = vpack.c.b16 %v280, %v279
      %v309 = vpack.c.b16 %v282, %v281
      %v310 = vpack.c.b16 %v284, %v283
      %v311 = vpack.c.b16 %v286, %v285
      %v312 = vpack.c.b16 %v288, %v287
      %v313 = vpack.c.b16 %v290, %v289
      %v314 = vpack.c.b16 %v292, %v291
      %v315 = vpack.c.b16 %v294, %v293
      %v316 = vpack.c.b16 %v296, %v295
      %v317 = vpack.c.b16 %v298, %v297
      %v318 = vpack.c.b16 %v299, %v299
      %vm319 = vsmask.f32 7424
      %v321 = vshrl.u32 %v300, 16
      %v323 = vshll.u32 %v300, 16
      %v325 = vrot.slane %v323, 1
      %v326 = vor.u32 %v321, %v325
      %v328 = vshll.u32 %v301, 16
      %v330 = vrot.slane %v328, 1
      %v331 = vsel %vm319, %v326, %v330
      %v332 = vshrl.u32 %v301, 16
      %v334 = vor.u32 %v332, %v330
      %v336 = vshll.u32 %v302, 16
      %v338 = vrot.slane %v336, 1
      %v339 = vsel %vm319, %v334, %v338
      %v340 = vshrl.u32 %v302, 16
      %v342 = vor.u32 %v340, %v338
      %v344 = vshll.u32 %v303, 16
      %v346 = vrot.slane %v344, 1
      %v347 = vsel %vm319, %v342, %v346
      %v348 = vshrl.u32 %v303, 16
      %v350 = vor.u32 %v348, %v346
      %v352 = vshll.u32 %v304, 16
      %v354 = vrot.slane %v352, 1
      %v355 = vsel %vm319, %v350, %v354
      %v356 = vshrl.u32 %v304, 16
      %v358 = vor.u32 %v356, %v354
      %v360 = vshll.u32 %v305, 16
      %v362 = vrot.slane %v360, 1
      %v363 = vsel %vm319, %v358, %v362
      %v364 = vshrl.u32 %v305, 16
      %v366 = vor.u32 %v364, %v362
      %v368 = vshll.u32 %v306, 16
      %v370 = vrot.slane %v368, 1
      %v371 = vsel %vm319, %v366, %v370
      %v372 = vshrl.u32 %v306, 16
      %v374 = vor.u32 %v372, %v370
      %v376 = vshll.u32 %v307, 16
      %v378 = vrot.slane %v376, 1
      %v379 = vsel %vm319, %v374, %v378
      %v380 = vshrl.u32 %v307, 16
      %v382 = vor.u32 %v380, %v378
      %v384 = vshll.u32 %v308, 16
      %v386 = vrot.slane %v384, 1
      %v387 = vsel %vm319, %v382, %v386
      %v388 = vshrl.u32 %v308, 16
      %v390 = vor.u32 %v388, %v386
      %v392 = vshll.u32 %v309, 16
      %v394 = vrot.slane %v392, 1
      %v395 = vsel %vm319, %v390, %v394
      %v396 = vshrl.u32 %v309, 16
      %v398 = vor.u32 %v396, %v394
      %v400 = vshll.u32 %v310, 16
      %v402 = vrot.slane %v400, 1
      %v403 = vsel %vm319, %v398, %v402
      %v404 = vshrl.u32 %v310, 16
      %v406 = vor.u32 %v404, %v402
      %v408 = vshll.u32 %v311, 16
      %v410 = vrot.slane %v408, 1
      %v411 = vsel %vm319, %v406, %v410
      %v412 = vshrl.u32 %v311, 16
      %v414 = vor.u32 %v412, %v410
      %v416 = vshll.u32 %v312, 16
      %v418 = vrot.slane %v416, 1
      %v419 = vsel %vm319, %v414, %v418
      %v420 = vshrl.u32 %v312, 16
      %v422 = vor.u32 %v420, %v418
      %v424 = vshll.u32 %v313, 16
      %v426 = vrot.slane %v424, 1
      %v427 = vsel %vm319, %v422, %v426
      %v428 = vshrl.u32 %v313, 16
      %v430 = vor.u32 %v428, %v426
      %v432 = vshll.u32 %v314, 16
      %v434 = vrot.slane %v432, 1
      %v435 = vsel %vm319, %v430, %v434
      %v436 = vshrl.u32 %v314, 16
      %v438 = vor.u32 %v436, %v434
      %v440 = vshll.u32 %v315, 16
      %v442 = vrot.slane %v440, 1
      %v443 = vsel %vm319, %v438, %v442
      %v444 = vshrl.u32 %v315, 16
      %v446 = vor.u32 %v444, %v442
      %v448 = vshll.u32 %v316, 16
      %v450 = vrot.slane %v448, 1
      %v451 = vsel %vm319, %v446, %v450
      %v452 = vshrl.u32 %v316, 16
      %v454 = vor.u32 %v452, %v450
      %v456 = vshll.u32 %v317, 16
      %v458 = vrot.slane %v456, 1
      %v459 = vsel %vm319, %v454, %v458
      %v460 = vshrl.u32 %v317, 16
      %v462 = vor.u32 %v460, %v458
      %v464 = vshll.u32 %v318, 16
      %v466 = vrot.slane %v464, 1
      %v467 = vsel %vm319, %v462, %v466
      %v476 = vunpack.c.l.b16 %v218
      %v477 = vunpack.c.l.b16 %v219
      %v478 = vunpack.c.l.b16 %v220
      %v479 = vunpack.c.l.b16 %v221
      %v480 = vunpack.c.l.b16 %v222
      %v481 = vunpack.c.l.b16 %v223
      %v482 = vunpack.c.l.b16 %v224
      %v483 = vunpack.c.l.b16 %v225
      %v484 = vpack.c.b16 %v477, %v476
      %v485 = vpack.c.b16 %v479, %v478
      %v486 = vpack.c.b16 %v481, %v480
      %v487 = vpack.c.b16 %v483, %v482
      %vm492 = vcmask 523264
      %v494 = vsel %vm492, %v331, 0
      %v497 = vsel %vm492, %v339, 0
      %v500 = vsel %vm492, %v347, 0
      %v503 = vsel %vm492, %v355, 0
      %v506 = vsel %vm492, %v363, 0
      %v509 = vsel %vm492, %v371, 0
      %v512 = vsel %vm492, %v379, 0
      %v515 = vsel %vm492, %v387, 0
      %v518 = vsel %vm492, %v395, 0
      %v521 = vsel %vm492, %v403, 0
      %v524 = vsel %vm492, %v411, 0
      %v527 = vsel %vm492, %v419, 0
      %v530 = vsel %vm492, %v427, 0
      %v533 = vsel %vm492, %v435, 0
      %v536 = vsel %vm492, %v443, 0
      %v539 = vsel %vm492, %v451, 0
      %v542 = vsel %vm492, %v459, 0
      %v545 = vsel %vm492, %v467, 0
      %547 = vmatprep.subr.bf16.mxu0 0
      %548 = vmatpush1.bf16.msra.mxu0 %v484
      %549 = vmatprep.subr.bf16.mxu0 0
      %550 = vmatpush1.bf16.msra.mxu0 %v485
      %551 = vmatprep.subr.bf16.mxu0 0
      %552 = vmatpush1.bf16.msra.mxu0 %v486
      %553 = vmatprep.subr.bf16.mxu0 0
      %554 = vmatpush1.bf16.msra.mxu0 %v487
      %555 = vmatprep.subr.bf16.mxu0 0
      %556 = vmatpush1.bf16.msra.mxu0 0
      %557 = vmatprep.subr.bf16.mxu0 0
      %558 = vmatpush1.bf16.msra.mxu0 0
      %559 = vmatprep.subr.bf16.mxu0 0
      %560 = vmatpush1.bf16.msra.mxu0 0
      %561 = vmatprep.subr.bf16.mxu0 0
      %562 = vmatpush1.bf16.msra.mxu0 0
      %563 = vmatprep.subr.bf16.mxu0 0
      %564 = vmatpush1.bf16.msra.mxu0 0
      %565 = vmatprep.subr.bf16.mxu0 0
      %566 = vmatpush1.bf16.msra.mxu0 0
      %567 = vmatprep.subr.bf16.mxu0 0
      %568 = vmatpush1.bf16.msra.mxu0 0
      %569 = vmatprep.subr.bf16.mxu0 0
      %570 = vmatpush1.bf16.msra.mxu0 0
      %571 = vmatprep.subr.bf16.mxu0 0
      %572 = vmatpush1.bf16.msra.mxu0 0
      %573 = vmatprep.subr.bf16.mxu0 0
      %574 = vmatpush1.bf16.msra.mxu0 0
      %575 = vmatprep.subr.bf16.mxu0 0
      %576 = vmatpush1.bf16.msra.mxu0 0
      %577 = vmatprep.subr.bf16.mxu0 0
      %578 = vmatpush1.bf16.msra.mxu0 0
      %579 = vmatprep.mubr.bf16.mxu0 0
      %580 = vmatmul.mubr.bf16.gmra.mrb[0].mxu0 %v494
      %v581 = vpop.f32.mrb[0].mxu0
      %v582 = vadd.f32 0.0, %v581
      %v583 = vpop.f32.mrb[0].mxu0
      %v584 = vpop.f32.mrb[0].mxu0
      %v585 = vadd.f32 0.0, %v584
      %v586 = vpop.f32.mrb[0].mxu0
      %587 = vmatprep.mubr.bf16.mxu0 0
      %588 = vmatmul.mubr.bf16.gmra.mrb[0].mxu0 %v497
      %v589 = vpop.f32.mrb[0].mxu0
      %v590 = vadd.f32 0.0, %v589
      %v591 = vpop.f32.mrb[0].mxu0
      %v592 = vpop.f32.mrb[0].mxu0
      %v593 = vadd.f32 0.0, %v592
      %v594 = vpop.f32.mrb[0].mxu0
      %595 = vmatprep.mubr.bf16.mxu0 0
      %596 = vmatmul.mubr.bf16.gmra.mrb[0].mxu0 %v500
      %v597 = vpop.f32.mrb[0].mxu0
      %v598 = vadd.f32 0.0, %v597
      %v599 = vpop.f32.mrb[0].mxu0
      %v600 = vpop.f32.mrb[0].mxu0
      %v601 = vadd.f32 0.0, %v600
      %v602 = vpop.f32.mrb[0].mxu0
      %603 = vmatprep.mubr.bf16.mxu0 0
      %604 = vmatmul.mubr.bf16.gmra.mrb[0].mxu0 %v503
      %v605 = vpop.f32.mrb[0].mxu0
      %v606 = vadd.f32 0.0, %v605
      %v607 = vpop.f32.mrb[0].mxu0
      %v608 = vpop.f32.mrb[0].mxu0
      %v609 = vadd.f32 0.0, %v608
      %v610 = vpop.f32.mrb[0].mxu0
      %611 = vmatprep.mubr.bf16.mxu0 0
      %612 = vmatmul.mubr.bf16.gmra.mrb[0].mxu0 %v506
      %v613 = vpop.f32.mrb[0].mxu0
      %v614 = vadd.f32 0.0, %v613
      %v615 = vpop.f32.mrb[0].mxu0
      %v616 = vpop.f32.mrb[0].mxu0
      %v617 = vadd.f32 0.0, %v616
      %v618 = vpop.f32.mrb[0].mxu0
      %619 = vmatprep.mubr.bf16.mxu0 0
      %620 = vmatmul.mubr.bf16.gmra.mrb[0].mxu0 %v509
      %v621 = vpop.f32.mrb[0].mxu0
      %v622 = vadd.f32 0.0, %v621
      %v623 = vpop.f32.mrb[0].mxu0
      %v624 = vpop.f32.mrb[0].mxu0
      %v625 = vadd.f32 0.0, %v624
      %v626 = vpop.f32.mrb[0].mxu0
      %627 = vmatprep.mubr.bf16.mxu0 0
      %628 = vmatmul.mubr.bf16.gmra.mrb[0].mxu0 %v512
      %v629 = vpop.f32.mrb[0].mxu0
      %v630 = vadd.f32 0.0, %v629
      %v631 = vpop.f32.mrb[0].mxu0
      %v632 = vpop.f32.mrb[0].mxu0
      %v633 = vadd.f32 0.0, %v632
      %v634 = vpop.f32.mrb[0].mxu0
      %635 = vmatprep.mubr.bf16.mxu0 0
      %636 = vmatmul.mubr.bf16.gmra.mrb[0].mxu0 %v515
      %v637 = vpop.f32.mrb[0].mxu0
      %v638 = vadd.f32 0.0, %v637
      %v639 = vpop.f32.mrb[0].mxu0
      %v640 = vpop.f32.mrb[0].mxu0
      %v641 = vadd.f32 0.0, %v640
      %v642 = vpop.f32.mrb[0].mxu0
      %643 = vmatprep.mubr.bf16.mxu0 0
      %644 = vmatmul.mubr.bf16.gmra.mrb[0].mxu0 %v518
      %v645 = vpop.f32.mrb[0].mxu0
      %v646 = vadd.f32 0.0, %v645
      %v647 = vpop.f32.mrb[0].mxu0
      %v648 = vpop.f32.mrb[0].mxu0
      %v649 = vadd.f32 0.0, %v648
      %v650 = vpop.f32.mrb[0].mxu0
      %651 = vmatprep.mubr.bf16.mxu0 0
      %652 = vmatmul.mubr.bf16.gmra.mrb[0].mxu0 %v521
      %v653 = vpop.f32.mrb[0].mxu0
      %v654 = vadd.f32 0.0, %v653
      %v655 = vpop.f32.mrb[0].mxu0
      %v656 = vpop.f32.mrb[0].mxu0
      %v657 = vadd.f32 0.0, %v656
      %v658 = vpop.f32.mrb[0].mxu0
      %659 = vmatprep.mubr.bf16.mxu0 0
      %660 = vmatmul.mubr.bf16.gmra.mrb[0].mxu0 %v524
      %v661 = vpop.f32.mrb[0].mxu0
      %v662 = vadd.f32 0.0, %v661
      %v663 = vpop.f32.mrb[0].mxu0
      %v664 = vpop.f32.mrb[0].mxu0
      %v665 = vadd.f32 0.0, %v664
      %v666 = vpop.f32.mrb[0].mxu0
      %667 = vmatprep.mubr.bf16.mxu0 0
      %668 = vmatmul.mubr.bf16.gmra.mrb[0].mxu0 %v527
      %v669 = vpop.f32.mrb[0].mxu0
      %v670 = vadd.f32 0.0, %v669
      %v671 = vpop.f32.mrb[0].mxu0
      %v672 = vpop.f32.mrb[0].mxu0
      %v673 = vadd.f32 0.0, %v672
      %v674 = vpop.f32.mrb[0].mxu0
      %675 = vmatprep.mubr.bf16.mxu0 0
      %676 = vmatmul.mubr.bf16.gmra.mrb[0].mxu0 %v530
      %v677 = vpop.f32.mrb[0].mxu0
      %v678 = vadd.f32 0.0, %v677
      %v679 = vpop.f32.mrb[0].mxu0
      %v680 = vpop.f32.mrb[0].mxu0
      %v681 = vadd.f32 0.0, %v680
      %v682 = vpop.f32.mrb[0].mxu0
      %683 = vmatprep.mubr.bf16.mxu0 0
      %684 = vmatmul.mubr.bf16.gmra.mrb[0].mxu0 %v533
      %v685 = vpop.f32.mrb[0].mxu0
      %v686 = vadd.f32 0.0, %v685
      %v687 = vpop.f32.mrb[0].mxu0
      %v688 = vpop.f32.mrb[0].mxu0
      %v689 = vadd.f32 0.0, %v688
      %v690 = vpop.f32.mrb[0].mxu0
      %691 = vmatprep.mubr.bf16.mxu0 0
      %692 = vmatmul.mubr.bf16.gmra.mrb[0].mxu0 %v536
      %v693 = vpop.f32.mrb[0].mxu0
      %v694 = vadd.f32 0.0, %v693
      %v695 = vpop.f32.mrb[0].mxu0
      %v696 = vpop.f32.mrb[0].mxu0
      %v697 = vadd.f32 0.0, %v696
      %v698 = vpop.f32.mrb[0].mxu0
      %699 = vmatprep.mubr.bf16.mxu0 0
      %700 = vmatmul.mubr.bf16.gmra.mrb[0].mxu0 %v539
      %v701 = vpop.f32.mrb[0].mxu0
      %v702 = vadd.f32 0.0, %v701
      %v703 = vpop.f32.mrb[0].mxu0
      %v704 = vpop.f32.mrb[0].mxu0
      %v705 = vadd.f32 0.0, %v704
      %v706 = vpop.f32.mrb[0].mxu0
      %707 = vmatprep.mubr.bf16.mxu0 0
      %708 = vmatmul.mubr.bf16.gmra.mrb[0].mxu0 %v542
      %v709 = vpop.f32.mrb[0].mxu0
      %v710 = vadd.f32 0.0, %v709
      %v711 = vpop.f32.mrb[0].mxu0
      %v712 = vpop.f32.mrb[0].mxu0
      %v713 = vadd.f32 0.0, %v712
      %v714 = vpop.f32.mrb[0].mxu0
      %715 = vmatprep.mubr.bf16.mxu0 0
      %716 = vmatmul.mubr.bf16.gmra.mrb[0].mxu0 %v545
      %v717 = vpop.f32.mrb[0].mxu0
      %v718 = vadd.f32 0.0, %v717
      %v719 = vpop.f32.mrb[0].mxu0
      %v720 = vpop.f32.mrb[0].mxu0
      %v721 = vadd.f32 0.0, %v720
      %v722 = vpop.f32.mrb[0].mxu0
      %723 = vdwg.mxu0
      %v732 = vunpack.c.l.b16 %v208
      %v733 = vunpack.c.l.b16 %v209
      %v734 = vunpack.c.l.b16 %v210
      %v735 = vunpack.c.l.b16 %v211
      %v736 = vunpack.c.l.b16 %v212
      %v737 = vunpack.c.l.b16 %v213
      %v738 = vunpack.c.l.b16 %v214
      %v739 = vunpack.c.l.b16 %v215
      %v740 = vpack.c.b16 %v733, %v732
      %v741 = vpack.c.b16 %v735, %v734
      %v742 = vpack.c.b16 %v737, %v736
      %v743 = vpack.c.b16 %v739, %v738
      %v748 = vsel %vm492, %v300, 0
      %v750 = vsel %vm492, %v301, 0
      %v752 = vsel %vm492, %v302, 0
      %v754 = vsel %vm492, %v303, 0
      %v756 = vsel %vm492, %v304, 0
      %v758 = vsel %vm492, %v305, 0
      %v760 = vsel %vm492, %v306, 0
      %v762 = vsel %vm492, %v307, 0
      %v764 = vsel %vm492, %v308, 0
      %v766 = vsel %vm492, %v309, 0
      %v768 = vsel %vm492, %v310, 0
      %v770 = vsel %vm492, %v311, 0
      %v772 = vsel %vm492, %v312, 0
      %v774 = vsel %vm492, %v313, 0
      %v776 = vsel %vm492, %v314, 0
      %v778 = vsel %vm492, %v315, 0
      %v780 = vsel %vm492, %v316, 0
      %v782 = vsel %vm492, %v317, 0
      %784 = vmatprep.subr.bf16.mxu0 0
      %785 = vmatpush1.bf16.msra.mxu0 %v740
      %786 = vmatprep.subr.bf16.mxu0 0
      %787 = vmatpush1.bf16.msra.mxu0 %v741
      %788 = vmatprep.subr.bf16.mxu0 0
      %789 = vmatpush1.bf16.msra.mxu0 %v742
      %790 = vmatprep.subr.bf16.mxu0 0
      %791 = vmatpush1.bf16.msra.mxu0 %v743
      %792 = vmatprep.subr.bf16.mxu0 0
      %793 = vmatpush1.bf16.msra.mxu0 0
      %794 = vmatprep.subr.bf16.mxu0 0
      %795 = vmatpush1.bf16.msra.mxu0 0
      %796 = vmatprep.subr.bf16.mxu0 0
      %797 = vmatpush1.bf16.msra.mxu0 0
      %798 = vmatprep.subr.bf16.mxu0 0
      %799 = vmatpush1.bf16.msra.mxu0 0
      %800 = vmatprep.subr.bf16.mxu0 0
      %801 = vmatpush1.bf16.msra.mxu0 0
      %802 = vmatprep.subr.bf16.mxu0 0
      %803 = vmatpush1.bf16.msra.mxu0 0
      %804 = vmatprep.subr.bf16.mxu0 0
      %805 = vmatpush1.bf16.msra.mxu0 0
      %806 = vmatprep.subr.bf16.mxu0 0
      %807 = vmatpush1.bf16.msra.mxu0 0
      %808 = vmatprep.subr.bf16.mxu0 0
      %809 = vmatpush1.bf16.msra.mxu0 0
      %810 = vmatprep.subr.bf16.mxu0 0
      %811 = vmatpush1.bf16.msra.mxu0 0
      %812 = vmatprep.subr.bf16.mxu0 0
      %813 = vmatpush1.bf16.msra.mxu0 0
      %814 = vmatprep.subr.bf16.mxu0 0
      %815 = vmatpush1.bf16.msra.mxu0 0
      %816 = vmatprep.mubr.bf16.mxu0 0
      %817 = vmatmul.mubr.bf16.gmra.mrb[0].mxu0 %v748
      %v818 = vpop.f32.mrb[0].mxu0
      %v819 = vadd.f32 %v582, %v818
      %v820 = vpop.f32.mrb[0].mxu0
      %v821 = vpop.f32.mrb[0].mxu0
      %v822 = vadd.f32 %v585, %v821
      %v823 = vpop.f32.mrb[0].mxu0
      %824 = vmatprep.mubr.bf16.mxu0 0
      %825 = vmatmul.mubr.bf16.gmra.mrb[0].mxu0 %v750
      %v826 = vpop.f32.mrb[0].mxu0
      %v827 = vadd.f32 %v590, %v826
      %v828 = vpop.f32.mrb[0].mxu0
      %v829 = vpop.f32.mrb[0].mxu0
      %v830 = vadd.f32 %v593, %v829
      %v831 = vpop.f32.mrb[0].mxu0
      %832 = vmatprep.mubr.bf16.mxu0 0
      %833 = vmatmul.mubr.bf16.gmra.mrb[0].mxu0 %v752
      %v834 = vpop.f32.mrb[0].mxu0
      %v835 = vadd.f32 %v598, %v834
      %v836 = vpop.f32.mrb[0].mxu0
      %v837 = vpop.f32.mrb[0].mxu0
      %v838 = vadd.f32 %v601, %v837
      %v839 = vpop.f32.mrb[0].mxu0
      %840 = vmatprep.mubr.bf16.mxu0 0
      %841 = vmatmul.mubr.bf16.gmra.mrb[0].mxu0 %v754
      %v842 = vpop.f32.mrb[0].mxu0
      %v843 = vadd.f32 %v606, %v842
      %v844 = vpop.f32.mrb[0].mxu0
      %v845 = vpop.f32.mrb[0].mxu0
      %v846 = vadd.f32 %v609, %v845
      %v847 = vpop.f32.mrb[0].mxu0
      %848 = vmatprep.mubr.bf16.mxu0 0
      %849 = vmatmul.mubr.bf16.gmra.mrb[0].mxu0 %v756
      %v850 = vpop.f32.mrb[0].mxu0
      %v851 = vadd.f32 %v614, %v850
      %v852 = vpop.f32.mrb[0].mxu0
      %v853 = vpop.f32.mrb[0].mxu0
      %v854 = vadd.f32 %v617, %v853
      %v855 = vpop.f32.mrb[0].mxu0
      %856 = vmatprep.mubr.bf16.mxu0 0
      %857 = vmatmul.mubr.bf16.gmra.mrb[0].mxu0 %v758
      %v858 = vpop.f32.mrb[0].mxu0
      %v859 = vadd.f32 %v622, %v858
      %v860 = vpop.f32.mrb[0].mxu0
      %v861 = vpop.f32.mrb[0].mxu0
      %v862 = vadd.f32 %v625, %v861
      %v863 = vpop.f32.mrb[0].mxu0
      %864 = vmatprep.mubr.bf16.mxu0 0
      %865 = vmatmul.mubr.bf16.gmra.mrb[0].mxu0 %v760
      %v866 = vpop.f32.mrb[0].mxu0
      %v867 = vadd.f32 %v630, %v866
      %v868 = vpop.f32.mrb[0].mxu0
      %v869 = vpop.f32.mrb[0].mxu0
      %v870 = vadd.f32 %v633, %v869
      %v871 = vpop.f32.mrb[0].mxu0
      %872 = vmatprep.mubr.bf16.mxu0 0
      %873 = vmatmul.mubr.bf16.gmra.mrb[0].mxu0 %v762
      %v874 = vpop.f32.mrb[0].mxu0
      %v875 = vadd.f32 %v638, %v874
      %v876 = vpop.f32.mrb[0].mxu0
      %v877 = vpop.f32.mrb[0].mxu0
      %v878 = vadd.f32 %v641, %v877
      %v879 = vpop.f32.mrb[0].mxu0
      %880 = vmatprep.mubr.bf16.mxu0 0
      %881 = vmatmul.mubr.bf16.gmra.mrb[0].mxu0 %v764
      %v882 = vpop.f32.mrb[0].mxu0
      %v883 = vadd.f32 %v646, %v882
      %v884 = vpop.f32.mrb[0].mxu0
      %v885 = vpop.f32.mrb[0].mxu0
      %v886 = vadd.f32 %v649, %v885
      %v887 = vpop.f32.mrb[0].mxu0
      %888 = vmatprep.mubr.bf16.mxu0 0
      %889 = vmatmul.mubr.bf16.gmra.mrb[0].mxu0 %v766
      %v890 = vpop.f32.mrb[0].mxu0
      %v891 = vadd.f32 %v654, %v890
      %v892 = vpop.f32.mrb[0].mxu0
      %v893 = vpop.f32.mrb[0].mxu0
      %v894 = vadd.f32 %v657, %v893
      %v895 = vpop.f32.mrb[0].mxu0
      %896 = vmatprep.mubr.bf16.mxu0 0
      %897 = vmatmul.mubr.bf16.gmra.mrb[0].mxu0 %v768
      %v898 = vpop.f32.mrb[0].mxu0
      %v899 = vadd.f32 %v662, %v898
      %v900 = vpop.f32.mrb[0].mxu0
      %v901 = vpop.f32.mrb[0].mxu0
      %v902 = vadd.f32 %v665, %v901
      %v903 = vpop.f32.mrb[0].mxu0
      %904 = vmatprep.mubr.bf16.mxu0 0
      %905 = vmatmul.mubr.bf16.gmra.mrb[0].mxu0 %v770
      %v906 = vpop.f32.mrb[0].mxu0
      %v907 = vadd.f32 %v670, %v906
      %v908 = vpop.f32.mrb[0].mxu0
      %v909 = vpop.f32.mrb[0].mxu0
      %v910 = vadd.f32 %v673, %v909
      %v911 = vpop.f32.mrb[0].mxu0
      %912 = vmatprep.mubr.bf16.mxu0 0
      %913 = vmatmul.mubr.bf16.gmra.mrb[0].mxu0 %v772
      %v914 = vpop.f32.mrb[0].mxu0
      %v915 = vadd.f32 %v678, %v914
      %v916 = vpop.f32.mrb[0].mxu0
      %v917 = vpop.f32.mrb[0].mxu0
      %v918 = vadd.f32 %v681, %v917
      %v919 = vpop.f32.mrb[0].mxu0
      %920 = vmatprep.mubr.bf16.mxu0 0
      %921 = vmatmul.mubr.bf16.gmra.mrb[0].mxu0 %v774
      %v922 = vpop.f32.mrb[0].mxu0
      %v923 = vadd.f32 %v686, %v922
      %v924 = vpop.f32.mrb[0].mxu0
      %v925 = vpop.f32.mrb[0].mxu0
      %v926 = vadd.f32 %v689, %v925
      %v927 = vpop.f32.mrb[0].mxu0
      %928 = vmatprep.mubr.bf16.mxu0 0
      %929 = vmatmul.mubr.bf16.gmra.mrb[0].mxu0 %v776
      %v930 = vpop.f32.mrb[0].mxu0
      %v931 = vadd.f32 %v694, %v930
      %v932 = vpop.f32.mrb[0].mxu0
      %v933 = vpop.f32.mrb[0].mxu0
      %v934 = vadd.f32 %v697, %v933
      %v935 = vpop.f32.mrb[0].mxu0
      %936 = vmatprep.mubr.bf16.mxu0 0
      %937 = vmatmul.mubr.bf16.gmra.mrb[0].mxu0 %v778
      %v938 = vpop.f32.mrb[0].mxu0
      %v939 = vadd.f32 %v702, %v938
      %v940 = vpop.f32.mrb[0].mxu0
      %v941 = vpop.f32.mrb[0].mxu0
      %v942 = vadd.f32 %v705, %v941
      %v943 = vpop.f32.mrb[0].mxu0
      %944 = vmatprep.mubr.bf16.mxu0 0
      %945 = vmatmul.mubr.bf16.gmra.mrb[0].mxu0 %v780
      %v946 = vpop.f32.mrb[0].mxu0
      %v947 = vadd.f32 %v710, %v946
      %v948 = vpop.f32.mrb[0].mxu0
      %v949 = vpop.f32.mrb[0].mxu0
      %v950 = vadd.f32 %v713, %v949
      %v951 = vpop.f32.mrb[0].mxu0
      %952 = vmatprep.mubr.bf16.mxu0 0
      %953 = vmatmul.mubr.bf16.gmra.mrb[0].mxu0 %v782
      %v954 = vpop.f32.mrb[0].mxu0
      %v955 = vadd.f32 %v718, %v954
      %v956 = vpop.f32.mrb[0].mxu0
      %v957 = vpop.f32.mrb[0].mxu0
      %v958 = vadd.f32 %v721, %v957
      %v959 = vpop.f32.mrb[0].mxu0
      %960 = vdwg.mxu0
      %v961 = vld [vmem:[%s165] sm:$0xe]
      %s962 = scalar_lea.vmem %s1, 64
      %v963 = vld [vmem:[%s962] sm:$0xf]
      %v964 = vld [vmem:[%s962 + $0x4] sm:$0xf]
      %v965 = vld [vmem:[%s962 + $0x8] sm:$0xf]
      %v966 = vld [vmem:[%s962 + $0xc] sm:$0xf]
      %v967 = vld [vmem:[%s962 + $0x10] sm:$0xf]
      %v968 = vld [vmem:[%s962 + $0x14] sm:$0xf]
      %v969 = vld [vmem:[%s962 + $0x18] sm:$0xf]
      %v970 = vld [vmem:[%s962 + $0x1c] sm:$0xf]
      %v972 = vunpack.c.l.b16 %v961
      %v973 = vpack.c.b16 %v264, %v972
      %vm974 = vcmask 1046528
      %v975 = vrot.slane %v973, 1
      %v976 = vrot.slane %v301, 1
      %v977 = vsel %vm974, %v975, %v976
      %v978 = vrot.slane %v302, 1
      %v979 = vsel %vm974, %v976, %v978
      %v980 = vrot.slane %v303, 1
      %v981 = vsel %vm974, %v978, %v980
      %v982 = vrot.slane %v304, 1
      %v983 = vsel %vm974, %v980, %v982
      %v984 = vrot.slane %v305, 1
      %v985 = vsel %vm974, %v982, %v984
      %v986 = vrot.slane %v306, 1
      %v987 = vsel %vm974, %v984, %v986
      %v988 = vrot.slane %v307, 1
      %v989 = vsel %vm974, %v986, %v988
      %v990 = vrot.slane %v308, 1
      %v991 = vsel %vm974, %v988, %v990
      %v992 = vrot.slane %v309, 1
      %v993 = vsel %vm974, %v990, %v992
      %v994 = vrot.slane %v310, 1
      %v995 = vsel %vm974, %v992, %v994
      %v996 = vrot.slane %v311, 1
      %v997 = vsel %vm974, %v994, %v996
      %v998 = vrot.slane %v312, 1
      %v999 = vsel %vm974, %v996, %v998
      %v1000 = vrot.slane %v313, 1
      %v1001 = vsel %vm974, %v998, %v1000
      %v1002 = vrot.slane %v314, 1
      %v1003 = vsel %vm974, %v1000, %v1002
      %v1004 = vrot.slane %v315, 1
      %v1005 = vsel %vm974, %v1002, %v1004
      %v1006 = vrot.slane %v316, 1
      %v1007 = vsel %vm974, %v1004, %v1006
      %v1008 = vrot.slane %v317, 1
      %v1009 = vsel %vm974, %v1006, %v1008
      %v1010 = vrot.slane %v318, 1
      %v1011 = vsel %vm974, %v1008, %v1010
      %v1020 = vunpack.c.l.b16 %v963
      %v1021 = vunpack.c.l.b16 %v964
      %v1022 = vunpack.c.l.b16 %v965
      %v1023 = vunpack.c.l.b16 %v966
      %v1024 = vunpack.c.l.b16 %v967
      %v1025 = vunpack.c.l.b16 %v968
      %v1026 = vunpack.c.l.b16 %v969
      %v1027 = vunpack.c.l.b16 %v970
      %v1028 = vpack.c.b16 %v1021, %v1020
      %v1029 = vpack.c.b16 %v1023, %v1022
      %v1030 = vpack.c.b16 %v1025, %v1024
      %v1031 = vpack.c.b16 %v1027, %v1026
      %v1037 = vsel %vm492, %v977, 0
      %v1040 = vsel %vm492, %v979, 0
      %v1043 = vsel %vm492, %v981, 0
      %v1046 = vsel %vm492, %v983, 0
      %v1049 = vsel %vm492, %v985, 0
      %v1052 = vsel %vm492, %v987, 0
      %v1055 = vsel %vm492, %v989, 0
      %v1058 = vsel %vm492, %v991, 0
      %v1061 = vsel %vm492, %v993, 0
      %v1064 = vsel %vm492, %v995, 0
      %v1067 = vsel %vm492, %v997, 0
      %v1070 = vsel %vm492, %v999, 0
      %v1073 = vsel %vm492, %v1001, 0
      %v1076 = vsel %vm492, %v1003, 0
      %v1079 = vsel %vm492, %v1005, 0
      %v1082 = vsel %vm492, %v1007, 0
      %v1085 = vsel %vm492, %v1009, 0
      %v1088 = vsel %vm492, %v1011, 0
      %1090 = vmatprep.subr.bf16.mxu0 0
      %1091 = vmatpush1.bf16.msra.mxu0 %v1028
      %1092 = vmatprep.subr.bf16.mxu0 0
      %1093 = vmatpush1.bf16.msra.mxu0 %v1029
      %1094 = vmatprep.subr.bf16.mxu0 0
      %1095 = vmatpush1.bf16.msra.mxu0 %v1030
      %1096 = vmatprep.subr.bf16.mxu0 0
      %1097 = vmatpush1.bf16.msra.mxu0 %v1031
      %1098 = vmatprep.subr.bf16.mxu0 0
      %1099 = vmatpush1.bf16.msra.mxu0 0
      %1100 = vmatprep.subr.bf16.mxu0 0
      %1101 = vmatpush1.bf16.msra.mxu0 0
      %1102 = vmatprep.subr.bf16.mxu0 0
      %1103 = vmatpush1.bf16.msra.mxu0 0
      %1104 = vmatprep.subr.bf16.mxu0 0
      %1105 = vmatpush1.bf16.msra.mxu0 0
      %1106 = vmatprep.subr.bf16.mxu0 0
      %1107 = vmatpush1.bf16.msra.mxu0 0
      %1108 = vmatprep.subr.bf16.mxu0 0
      %1109 = vmatpush1.bf16.msra.mxu0 0
      %1110 = vmatprep.subr.bf16.mxu0 0
      %1111 = vmatpush1.bf16.msra.mxu0 0
      %1112 = vmatprep.subr.bf16.mxu0 0
      %1113 = vmatpush1.bf16.msra.mxu0 0
      %1114 = vmatprep.subr.bf16.mxu0 0
      %1115 = vmatpush1.bf16.msra.mxu0 0
      %1116 = vmatprep.subr.bf16.mxu0 0
      %1117 = vmatpush1.bf16.msra.mxu0 0
      %1118 = vmatprep.subr.bf16.mxu0 0
      %1119 = vmatpush1.bf16.msra.mxu0 0
      %1120 = vmatprep.subr.bf16.mxu0 0
      %1121 = vmatpush1.bf16.msra.mxu0 0
      %1122 = vmatprep.mubr.bf16.mxu0 0
      %1123 = vmatmul.mubr.bf16.gmra.mrb[0].mxu0 %v1037
      %v1124 = vpop.f32.mrb[0].mxu0
      %v1125 = vadd.f32 0.0, %v1124
      %v1126 = vpop.f32.mrb[0].mxu0
      %v1127 = vpop.f32.mrb[0].mxu0
      %v1128 = vadd.f32 0.0, %v1127
      %v1129 = vpop.f32.mrb[0].mxu0
      %1130 = vmatprep.mubr.bf16.mxu0 0
      %1131 = vmatmul.mubr.bf16.gmra.mrb[0].mxu0 %v1040
      %v1132 = vpop.f32.mrb[0].mxu0
      %v1133 = vadd.f32 0.0, %v1132
      %v1134 = vpop.f32.mrb[0].mxu0
      %v1135 = vpop.f32.mrb[0].mxu0
      %v1136 = vadd.f32 0.0, %v1135
      %v1137 = vpop.f32.mrb[0].mxu0
      %1138 = vmatprep.mubr.bf16.mxu0 0
      %1139 = vmatmul.mubr.bf16.gmra.mrb[0].mxu0 %v1043
      %v1140 = vpop.f32.mrb[0].mxu0
      %v1141 = vadd.f32 0.0, %v1140
      %v1142 = vpop.f32.mrb[0].mxu0
      %v1143 = vpop.f32.mrb[0].mxu0
      %v1144 = vadd.f32 0.0, %v1143
      %v1145 = vpop.f32.mrb[0].mxu0
      %1146 = vmatprep.mubr.bf16.mxu0 0
      %1147 = vmatmul.mubr.bf16.gmra.mrb[0].mxu0 %v1046
      %v1148 = vpop.f32.mrb[0].mxu0
      %v1149 = vadd.f32 0.0, %v1148
      %v1150 = vpop.f32.mrb[0].mxu0
      %v1151 = vpop.f32.mrb[0].mxu0
      %v1152 = vadd.f32 0.0, %v1151
      %v1153 = vpop.f32.mrb[0].mxu0
      %1154 = vmatprep.mubr.bf16.mxu0 0
      %1155 = vmatmul.mubr.bf16.gmra.mrb[0].mxu0 %v1049
      %v1156 = vpop.f32.mrb[0].mxu0
      %v1157 = vadd.f32 0.0, %v1156
      %v1158 = vpop.f32.mrb[0].mxu0
      %v1159 = vpop.f32.mrb[0].mxu0
      %v1160 = vadd.f32 0.0, %v1159
      %v1161 = vpop.f32.mrb[0].mxu0
      %1162 = vmatprep.mubr.bf16.mxu0 0
      %1163 = vmatmul.mubr.bf16.gmra.mrb[0].mxu0 %v1052
      %v1164 = vpop.f32.mrb[0].mxu0
      %v1165 = vadd.f32 0.0, %v1164
      %v1166 = vpop.f32.mrb[0].mxu0
      %v1167 = vpop.f32.mrb[0].mxu0
      %v1168 = vadd.f32 0.0, %v1167
      %v1169 = vpop.f32.mrb[0].mxu0
      %1170 = vmatprep.mubr.bf16.mxu0 0
      %1171 = vmatmul.mubr.bf16.gmra.mrb[0].mxu0 %v1055
      %v1172 = vpop.f32.mrb[0].mxu0
      %v1173 = vadd.f32 0.0, %v1172
      %v1174 = vpop.f32.mrb[0].mxu0
      %v1175 = vpop.f32.mrb[0].mxu0
      %v1176 = vadd.f32 0.0, %v1175
      %v1177 = vpop.f32.mrb[0].mxu0
      %1178 = vmatprep.mubr.bf16.mxu0 0
      %1179 = vmatmul.mubr.bf16.gmra.mrb[0].mxu0 %v1058
      %v1180 = vpop.f32.mrb[0].mxu0
      %v1181 = vadd.f32 0.0, %v1180
      %v1182 = vpop.f32.mrb[0].mxu0
      %v1183 = vpop.f32.mrb[0].mxu0
      %v1184 = vadd.f32 0.0, %v1183
      %v1185 = vpop.f32.mrb[0].mxu0
      %1186 = vmatprep.mubr.bf16.mxu0 0
      %1187 = vmatmul.mubr.bf16.gmra.mrb[0].mxu0 %v1061
      %v1188 = vpop.f32.mrb[0].mxu0
      %v1189 = vadd.f32 0.0, %v1188
      %v1190 = vpop.f32.mrb[0].mxu0
      %v1191 = vpop.f32.mrb[0].mxu0
      %v1192 = vadd.f32 0.0, %v1191
      %v1193 = vpop.f32.mrb[0].mxu0
      %1194 = vmatprep.mubr.bf16.mxu0 0
      %1195 = vmatmul.mubr.bf16.gmra.mrb[0].mxu0 %v1064
      %v1196 = vpop.f32.mrb[0].mxu0
      %v1197 = vadd.f32 0.0, %v1196
      %v1198 = vpop.f32.mrb[0].mxu0
      %v1199 = vpop.f32.mrb[0].mxu0
      %v1200 = vadd.f32 0.0, %v1199
      %v1201 = vpop.f32.mrb[0].mxu0
      %1202 = vmatprep.mubr.bf16.mxu0 0
      %1203 = vmatmul.mubr.bf16.gmra.mrb[0].mxu0 %v1067
      %v1204 = vpop.f32.mrb[0].mxu0
      %v1205 = vadd.f32 0.0, %v1204
      %v1206 = vpop.f32.mrb[0].mxu0
      %v1207 = vpop.f32.mrb[0].mxu0
      %v1208 = vadd.f32 0.0, %v1207
      %v1209 = vpop.f32.mrb[0].mxu0
      %1210 = vmatprep.mubr.bf16.mxu0 0
      %1211 = vmatmul.mubr.bf16.gmra.mrb[0].mxu0 %v1070
      %v1212 = vpop.f32.mrb[0].mxu0
      %v1213 = vadd.f32 0.0, %v1212
      %v1214 = vpop.f32.mrb[0].mxu0
      %v1215 = vpop.f32.mrb[0].mxu0
      %v1216 = vadd.f32 0.0, %v1215
      %v1217 = vpop.f32.mrb[0].mxu0
      %1218 = vmatprep.mubr.bf16.mxu0 0
      %1219 = vmatmul.mubr.bf16.gmra.mrb[0].mxu0 %v1073
      %v1220 = vpop.f32.mrb[0].mxu0
      %v1221 = vadd.f32 0.0, %v1220
      %v1222 = vpop.f32.mrb[0].mxu0
      %v1223 = vpop.f32.mrb[0].mxu0
      %v1224 = vadd.f32 0.0, %v1223
      %v1225 = vpop.f32.mrb[0].mxu0
      %1226 = vmatprep.mubr.bf16.mxu0 0
      %1227 = vmatmul.mubr.bf16.gmra.mrb[0].mxu0 %v1076
      %v1228 = vpop.f32.mrb[0].mxu0
      %v1229 = vadd.f32 0.0, %v1228
      %v1230 = vpop.f32.mrb[0].mxu0
      %v1231 = vpop.f32.mrb[0].mxu0
      %v1232 = vadd.f32 0.0, %v1231
      %v1233 = vpop.f32.mrb[0].mxu0
      %1234 = vmatprep.mubr.bf16.mxu0 0
      %1235 = vmatmul.mubr.bf16.gmra.mrb[0].mxu0 %v1079
      %v1236 = vpop.f32.mrb[0].mxu0
      %v1237 = vadd.f32 0.0, %v1236
      %v1238 = vpop.f32.mrb[0].mxu0
      %v1239 = vpop.f32.mrb[0].mxu0
      %v1240 = vadd.f32 0.0, %v1239
      %v1241 = vpop.f32.mrb[0].mxu0
      %1242 = vmatprep.mubr.bf16.mxu0 0
      %1243 = vmatmul.mubr.bf16.gmra.mrb[0].mxu0 %v1082
      %v1244 = vpop.f32.mrb[0].mxu0
      %v1245 = vadd.f32 0.0, %v1244
      %v1246 = vpop.f32.mrb[0].mxu0
      %v1247 = vpop.f32.mrb[0].mxu0
      %v1248 = vadd.f32 0.0, %v1247
      %v1249 = vpop.f32.mrb[0].mxu0
      %1250 = vmatprep.mubr.bf16.mxu0 0
      %1251 = vmatmul.mubr.bf16.gmra.mrb[0].mxu0 %v1085
      %v1252 = vpop.f32.mrb[0].mxu0
      %v1253 = vadd.f32 0.0, %v1252
      %v1254 = vpop.f32.mrb[0].mxu0
      %v1255 = vpop.f32.mrb[0].mxu0
      %v1256 = vadd.f32 0.0, %v1255
      %v1257 = vpop.f32.mrb[0].mxu0
      %1258 = vmatprep.mubr.bf16.mxu0 0
      %1259 = vmatmul.mubr.bf16.gmra.mrb[0].mxu0 %v1088
      %v1260 = vpop.f32.mrb[0].mxu0
      %v1261 = vadd.f32 0.0, %v1260
      %v1262 = vpop.f32.mrb[0].mxu0
      %v1263 = vpop.f32.mrb[0].mxu0
      %v1264 = vadd.f32 0.0, %v1263
      %v1265 = vpop.f32.mrb[0].mxu0
      %1266 = vdwg.mxu0
      %v1267 = vadd.f32 %v819, %v1125
      %v1268 = vadd.f32 %v822, %v1128
      %v1269 = vadd.f32 %v827, %v1133
      %v1270 = vadd.f32 %v830, %v1136
      %v1271 = vadd.f32 %v835, %v1141
      %v1272 = vadd.f32 %v838, %v1144
      %v1273 = vadd.f32 %v843, %v1149
      %v1274 = vadd.f32 %v846, %v1152
      %v1275 = vadd.f32 %v851, %v1157
      %v1276 = vadd.f32 %v854, %v1160
      %v1277 = vadd.f32 %v859, %v1165
      %v1278 = vadd.f32 %v862, %v1168
      %v1279 = vadd.f32 %v867, %v1173
      %v1280 = vadd.f32 %v870, %v1176
      %v1281 = vadd.f32 %v875, %v1181
      %v1282 = vadd.f32 %v878, %v1184
      %v1283 = vadd.f32 %v883, %v1189
      %v1284 = vadd.f32 %v886, %v1192
      %v1285 = vadd.f32 %v891, %v1197
      %v1286 = vadd.f32 %v894, %v1200
      %v1287 = vadd.f32 %v899, %v1205
      %v1288 = vadd.f32 %v902, %v1208
      %v1289 = vadd.f32 %v907, %v1213
      %v1290 = vadd.f32 %v910, %v1216
      %v1291 = vadd.f32 %v915, %v1221
      %v1292 = vadd.f32 %v918, %v1224
      %v1293 = vadd.f32 %v923, %v1229
      %v1294 = vadd.f32 %v926, %v1232
      %v1295 = vadd.f32 %v931, %v1237
      %v1296 = vadd.f32 %v934, %v1240
      %v1297 = vadd.f32 %v939, %v1245
      %v1298 = vadd.f32 %v942, %v1248
      %v1299 = vadd.f32 %v947, %v1253
      %v1300 = vadd.f32 %v950, %v1256
      %v1301 = vadd.f32 %v955, %v1261
      %v1302 = vadd.f32 %v958, %v1264
      %v1303 = vld [vmem:[%s165 + $0x8] sm:$0xe]
      %v1304 = vld [vmem:[%s165 + $0xc] sm:$0xf]
      %v1305 = vld [vmem:[%s165 + $0x10] sm:$0xf]
      %v1306 = vld [vmem:[%s165 + $0x14] sm:$0xf]
      %v1307 = vld [vmem:[%s165 + $0x18] sm:$0xf]
      %v1308 = vld [vmem:[%s165 + $0x1c] sm:$0xf]
      %v1309 = vld [vmem:[%s165 + $0x20] sm:$0xf]
      %v1310 = vld [vmem:[%s165 + $0x24] sm:$0xf]
      %v1311 = vld [vmem:[%s165 + $0x28] sm:$0xf]
      %v1312 = vld [vmem:[%s165 + $0x2c] sm:$0xf]
      %v1313 = vld [vmem:[%s165 + $0x30] sm:$0xf]
      %v1314 = vld [vmem:[%s165 + $0x34] sm:$0xf]
      %v1315 = vld [vmem:[%s165 + $0x38] sm:$0xf]
      %v1316 = vld [vmem:[%s165 + $0x3c] sm:$0xf]
      %v1317 = vld [vmem:[%s165 + $0x40] sm:$0xf]
      %v1318 = vld [vmem:[%s165 + $0x44] sm:$0xf]
      %v1319 = vld [vmem:[%s165 + $0x48] sm:$0xf]
      %v1320 = vld [vmem:[%s165 + $0x4c] sm:$0xf]
      %v1321 = vld [vmem:[%s165 + $0x50] sm:$0xf]
      %v1322 = vld [vmem:[%s165 + $0x54] sm:$0xf]
      %v1323 = vld [vmem:[%s165 + $0x58] sm:$0xf]
      %v1324 = vld [vmem:[%s165 + $0x5c] sm:$0xf]
      %v1325 = vld [vmem:[%s165 + $0x60] sm:$0xf]
      %v1326 = vld [vmem:[%s165 + $0x64] sm:$0xf]
      %v1327 = vld [vmem:[%s165 + $0x68] sm:$0xf]
      %v1328 = vld [vmem:[%s165 + $0x6c] sm:$0xf]
      %v1329 = vld [vmem:[%s165 + $0x70] sm:$0xf]
      %v1330 = vld [vmem:[%s165 + $0x74] sm:$0xf]
      %v1331 = vld [vmem:[%s165 + $0x78] sm:$0xf]
      %v1332 = vld [vmem:[%s165 + $0x7c] sm:$0xf]
      %v1333 = vld [vmem:[%s165 + $0x80] sm:$0xf]
      %v1334 = vld [vmem:[%s165 + $0x84] sm:$0xf]
      %v1335 = vld [vmem:[%s165 + $0x88] sm:$0xf]
      %v1336 = vld [vmem:[%s165 + $0x8c] sm:$0xf]
      %v1337 = vld [vmem:[%s165 + $0x90] sm:$0xf]
      %v1338 = vld [vmem:[%s165 + $0x94] sm:$0xf]
      %v1339 = vld [vmem:[%s165 + $0x98] sm:$0x1]
      %s1340 = scalar_lea.vmem %s1, 96
      %v1341 = vld [vmem:[%s1340] sm:$0xf]
      %v1342 = vld [vmem:[%s1340 + $0x4] sm:$0xf]
      %v1343 = vld [vmem:[%s1340 + $0x8] sm:$0xf]
      %v1344 = vld [vmem:[%s1340 + $0xc] sm:$0xf]
      %v1345 = vld [vmem:[%s1340 + $0x10] sm:$0xf]
      %v1346 = vld [vmem:[%s1340 + $0x14] sm:$0xf]
      %v1347 = vld [vmem:[%s1340 + $0x18] sm:$0xf]
      %v1348 = vld [vmem:[%s1340 + $0x1c] sm:$0xf]
      %v1386 = vunpack.c.l.b16 %v1303
      %v1387 = vunpack.c.l.b16 %v1304
      %v1388 = vunpack.c.l.b16 %v1305
      %v1389 = vunpack.c.l.b16 %v1306
      %v1390 = vunpack.c.l.b16 %v1307
      %v1391 = vunpack.c.l.b16 %v1308
      %v1392 = vunpack.c.l.b16 %v1309
      %v1393 = vunpack.c.l.b16 %v1310
      %v1394 = vunpack.c.l.b16 %v1311
      %v1395 = vunpack.c.l.b16 %v1312
      %v1396 = vunpack.c.l.b16 %v1313
      %v1397 = vunpack.c.l.b16 %v1314
      %v1398 = vunpack.c.l.b16 %v1315
      %v1399 = vunpack.c.l.b16 %v1316
      %v1400 = vunpack.c.l.b16 %v1317
      %v1401 = vunpack.c.l.b16 %v1318
      %v1402 = vunpack.c.l.b16 %v1319
      %v1403 = vunpack.c.l.b16 %v1320
      %v1404 = vunpack.c.l.b16 %v1321
      %v1405 = vunpack.c.l.b16 %v1322
      %v1406 = vunpack.c.l.b16 %v1323
      %v1407 = vunpack.c.l.b16 %v1324
      %v1408 = vunpack.c.l.b16 %v1325
      %v1409 = vunpack.c.l.b16 %v1326
      %v1410 = vunpack.c.l.b16 %v1327
      %v1411 = vunpack.c.l.b16 %v1328
      %v1412 = vunpack.c.l.b16 %v1329
      %v1413 = vunpack.c.l.b16 %v1330
      %v1414 = vunpack.c.l.b16 %v1331
      %v1415 = vunpack.c.l.b16 %v1332
      %v1416 = vunpack.c.l.b16 %v1333
      %v1417 = vunpack.c.l.b16 %v1334
      %v1418 = vunpack.c.l.b16 %v1335
      %v1419 = vunpack.c.l.b16 %v1336
      %v1420 = vunpack.c.l.b16 %v1337
      %v1421 = vunpack.c.l.b16 %v1338
      %v1422 = vunpack.c.l.b16 %v1339
      %v1423 = vpack.c.b16 %v1387, %v1386
      %v1424 = vpack.c.b16 %v1389, %v1388
      %v1425 = vpack.c.b16 %v1391, %v1390
      %v1426 = vpack.c.b16 %v1393, %v1392
      %v1427 = vpack.c.b16 %v1395, %v1394
      %v1428 = vpack.c.b16 %v1397, %v1396
      %v1429 = vpack.c.b16 %v1399, %v1398
      %v1430 = vpack.c.b16 %v1401, %v1400
      %v1431 = vpack.c.b16 %v1403, %v1402
      %v1432 = vpack.c.b16 %v1405, %v1404
      %v1433 = vpack.c.b16 %v1407, %v1406
      %v1434 = vpack.c.b16 %v1409, %v1408
      %v1435 = vpack.c.b16 %v1411, %v1410
      %v1436 = vpack.c.b16 %v1413, %v1412
      %v1437 = vpack.c.b16 %v1415, %v1414
      %v1438 = vpack.c.b16 %v1417, %v1416
      %v1439 = vpack.c.b16 %v1419, %v1418
      %v1440 = vpack.c.b16 %v1421, %v1420
      %v1441 = vpack.c.b16 %v1422, %v1422
      %v1442 = vrot.slane %v1423, 1
      %v1443 = vrot.slane %v1424, 1
      %v1444 = vsel %vm974, %v1442, %v1443
      %v1445 = vrot.slane %v1425, 1
      %v1446 = vsel %vm974, %v1443, %v1445
      %v1447 = vrot.slane %v1426, 1
      %v1448 = vsel %vm974, %v1445, %v1447
      %v1449 = vrot.slane %v1427, 1
      %v1450 = vsel %vm974, %v1447, %v1449
      %v1451 = vrot.slane %v1428, 1
      %v1452 = vsel %vm974, %v1449, %v1451
      %v1453 = vrot.slane %v1429, 1
      %v1454 = vsel %vm974, %v1451, %v1453
      %v1455 = vrot.slane %v1430, 1
      %v1456 = vsel %vm974, %v1453, %v1455
      %v1457 = vrot.slane %v1431, 1
      %v1458 = vsel %vm974, %v1455, %v1457
      %v1459 = vrot.slane %v1432, 1
      %v1460 = vsel %vm974, %v1457, %v1459
      %v1461 = vrot.slane %v1433, 1
      %v1462 = vsel %vm974, %v1459, %v1461
      %v1463 = vrot.slane %v1434, 1
      %v1464 = vsel %vm974, %v1461, %v1463
      %v1465 = vrot.slane %v1435, 1
      %v1466 = vsel %vm974, %v1463, %v1465
      %v1467 = vrot.slane %v1436, 1
      %v1468 = vsel %vm974, %v1465, %v1467
      %v1469 = vrot.slane %v1437, 1
      %v1470 = vsel %vm974, %v1467, %v1469
      %v1471 = vrot.slane %v1438, 1
      %v1472 = vsel %vm974, %v1469, %v1471
      %v1473 = vrot.slane %v1439, 1
      %v1474 = vsel %vm974, %v1471, %v1473
      %v1475 = vrot.slane %v1440, 1
      %v1476 = vsel %vm974, %v1473, %v1475
      %v1477 = vrot.slane %v1441, 1
      %v1478 = vsel %vm974, %v1475, %v1477
      %v1487 = vunpack.c.l.b16 %v1341
      %v1488 = vunpack.c.l.b16 %v1342
      %v1489 = vunpack.c.l.b16 %v1343
      %v1490 = vunpack.c.l.b16 %v1344
      %v1491 = vunpack.c.l.b16 %v1345
      %v1492 = vunpack.c.l.b16 %v1346
      %v1493 = vunpack.c.l.b16 %v1347
      %v1494 = vunpack.c.l.b16 %v1348
      %v1495 = vpack.c.b16 %v1488, %v1487
      %v1496 = vpack.c.b16 %v1490, %v1489
      %v1497 = vpack.c.b16 %v1492, %v1491
      %v1498 = vpack.c.b16 %v1494, %v1493
      %v1504 = vsel %vm492, %v1444, 0
      %v1507 = vsel %vm492, %v1446, 0
      %v1510 = vsel %vm492, %v1448, 0
      %v1513 = vsel %vm492, %v1450, 0
      %v1516 = vsel %vm492, %v1452, 0
      %v1519 = vsel %vm492, %v1454, 0
      %v1522 = vsel %vm492, %v1456, 0
      %v1525 = vsel %vm492, %v1458, 0
      %v1528 = vsel %vm492, %v1460, 0
      %v1531 = vsel %vm492, %v1462, 0
      %v1534 = vsel %vm492, %v1464, 0
      %v1537 = vsel %vm492, %v1466, 0
      %v1540 = vsel %vm492, %v1468, 0
      %v1543 = vsel %vm492, %v1470, 0
      %v1546 = vsel %vm492, %v1472, 0
      %v1549 = vsel %vm492, %v1474, 0
      %v1552 = vsel %vm492, %v1476, 0
      %v1555 = vsel %vm492, %v1478, 0
      %1557 = vmatprep.subr.bf16.mxu0 0
      %1558 = vmatpush1.bf16.msra.mxu0 %v1495
      %1559 = vmatprep.subr.bf16.mxu0 0
      %1560 = vmatpush1.bf16.msra.mxu0 %v1496
      %1561 = vmatprep.subr.bf16.mxu0 0
      %1562 = vmatpush1.bf16.msra.mxu0 %v1497
      %1563 = vmatprep.subr.bf16.mxu0 0
      %1564 = vmatpush1.bf16.msra.mxu0 %v1498
      %1565 = vmatprep.subr.bf16.mxu0 0
      %1566 = vmatpush1.bf16.msra.mxu0 0
      %1567 = vmatprep.subr.bf16.mxu0 0
      %1568 = vmatpush1.bf16.msra.mxu0 0
      %1569 = vmatprep.subr.bf16.mxu0 0
      %1570 = vmatpush1.bf16.msra.mxu0 0
      %1571 = vmatprep.subr.bf16.mxu0 0
      %1572 = vmatpush1.bf16.msra.mxu0 0
      %1573 = vmatprep.subr.bf16.mxu0 0
      %1574 = vmatpush1.bf16.msra.mxu0 0
      %1575 = vmatprep.subr.bf16.mxu0 0
      %1576 = vmatpush1.bf16.msra.mxu0 0
      %1577 = vmatprep.subr.bf16.mxu0 0
      %1578 = vmatpush1.bf16.msra.mxu0 0
      %1579 = vmatprep.subr.bf16.mxu0 0
      %1580 = vmatpush1.bf16.msra.mxu0 0
      %1581 = vmatprep.subr.bf16.mxu0 0
      %1582 = vmatpush1.bf16.msra.mxu0 0
      %1583 = vmatprep.subr.bf16.mxu0 0
      %1584 = vmatpush1.bf16.msra.mxu0 0
      %1585 = vmatprep.subr.bf16.mxu0 0
      %1586 = vmatpush1.bf16.msra.mxu0 0
      %1587 = vmatprep.subr.bf16.mxu0 0
      %1588 = vmatpush1.bf16.msra.mxu0 0
      %1589 = vmatprep.mubr.bf16.mxu0 0
      %1590 = vmatmul.mubr.bf16.gmra.mrb[0].mxu0 %v1504
      %v1591 = vpop.f32.mrb[0].mxu0
      %v1592 = vadd.f32 0.0, %v1591
      %v1593 = vpop.f32.mrb[0].mxu0
      %v1594 = vpop.f32.mrb[0].mxu0
      %v1595 = vadd.f32 0.0, %v1594
      %v1596 = vpop.f32.mrb[0].mxu0
      %1597 = vmatprep.mubr.bf16.mxu0 0
      %1598 = vmatmul.mubr.bf16.gmra.mrb[0].mxu0 %v1507
      %v1599 = vpop.f32.mrb[0].mxu0
      %v1600 = vadd.f32 0.0, %v1599
      %v1601 = vpop.f32.mrb[0].mxu0
      %v1602 = vpop.f32.mrb[0].mxu0
      %v1603 = vadd.f32 0.0, %v1602
      %v1604 = vpop.f32.mrb[0].mxu0
      %1605 = vmatprep.mubr.bf16.mxu0 0
      %1606 = vmatmul.mubr.bf16.gmra.mrb[0].mxu0 %v1510
      %v1607 = vpop.f32.mrb[0].mxu0
      %v1608 = vadd.f32 0.0, %v1607
      %v1609 = vpop.f32.mrb[0].mxu0
      %v1610 = vpop.f32.mrb[0].mxu0
      %v1611 = vadd.f32 0.0, %v1610
      %v1612 = vpop.f32.mrb[0].mxu0
      %1613 = vmatprep.mubr.bf16.mxu0 0
      %1614 = vmatmul.mubr.bf16.gmra.mrb[0].mxu0 %v1513
      %v1615 = vpop.f32.mrb[0].mxu0
      %v1616 = vadd.f32 0.0, %v1615
      %v1617 = vpop.f32.mrb[0].mxu0
      %v1618 = vpop.f32.mrb[0].mxu0
      %v1619 = vadd.f32 0.0, %v1618
      %v1620 = vpop.f32.mrb[0].mxu0
      %1621 = vmatprep.mubr.bf16.mxu0 0
      %1622 = vmatmul.mubr.bf16.gmra.mrb[0].mxu0 %v1516
      %v1623 = vpop.f32.mrb[0].mxu0
      %v1624 = vadd.f32 0.0, %v1623
      %v1625 = vpop.f32.mrb[0].mxu0
      %v1626 = vpop.f32.mrb[0].mxu0
      %v1627 = vadd.f32 0.0, %v1626
      %v1628 = vpop.f32.mrb[0].mxu0
      %1629 = vmatprep.mubr.bf16.mxu0 0
      %1630 = vmatmul.mubr.bf16.gmra.mrb[0].mxu0 %v1519
      %v1631 = vpop.f32.mrb[0].mxu0
      %v1632 = vadd.f32 0.0, %v1631
      %v1633 = vpop.f32.mrb[0].mxu0
      %v1634 = vpop.f32.mrb[0].mxu0
      %v1635 = vadd.f32 0.0, %v1634
      %v1636 = vpop.f32.mrb[0].mxu0
      %1637 = vmatprep.mubr.bf16.mxu0 0
      %1638 = vmatmul.mubr.bf16.gmra.mrb[0].mxu0 %v1522
      %v1639 = vpop.f32.mrb[0].mxu0
      %v1640 = vadd.f32 0.0, %v1639
      %v1641 = vpop.f32.mrb[0].mxu0
      %v1642 = vpop.f32.mrb[0].mxu0
      %v1643 = vadd.f32 0.0, %v1642
      %v1644 = vpop.f32.mrb[0].mxu0
      %1645 = vmatprep.mubr.bf16.mxu0 0
      %1646 = vmatmul.mubr.bf16.gmra.mrb[0].mxu0 %v1525
      %v1647 = vpop.f32.mrb[0].mxu0
      %v1648 = vadd.f32 0.0, %v1647
      %v1649 = vpop.f32.mrb[0].mxu0
      %v1650 = vpop.f32.mrb[0].mxu0
      %v1651 = vadd.f32 0.0, %v1650
      %v1652 = vpop.f32.mrb[0].mxu0
      %1653 = vmatprep.mubr.bf16.mxu0 0
      %1654 = vmatmul.mubr.bf16.gmra.mrb[0].mxu0 %v1528
      %v1655 = vpop.f32.mrb[0].mxu0
      %v1656 = vadd.f32 0.0, %v1655
      %v1657 = vpop.f32.mrb[0].mxu0
      %v1658 = vpop.f32.mrb[0].mxu0
      %v1659 = vadd.f32 0.0, %v1658
      %v1660 = vpop.f32.mrb[0].mxu0
      %1661 = vmatprep.mubr.bf16.mxu0 0
      %1662 = vmatmul.mubr.bf16.gmra.mrb[0].mxu0 %v1531
      %v1663 = vpop.f32.mrb[0].mxu0
      %v1664 = vadd.f32 0.0, %v1663
      %v1665 = vpop.f32.mrb[0].mxu0
      %v1666 = vpop.f32.mrb[0].mxu0
      %v1667 = vadd.f32 0.0, %v1666
      %v1668 = vpop.f32.mrb[0].mxu0
      %1669 = vmatprep.mubr.bf16.mxu0 0
      %1670 = vmatmul.mubr.bf16.gmra.mrb[0].mxu0 %v1534
      %v1671 = vpop.f32.mrb[0].mxu0
      %v1672 = vadd.f32 0.0, %v1671
      %v1673 = vpop.f32.mrb[0].mxu0
      %v1674 = vpop.f32.mrb[0].mxu0
      %v1675 = vadd.f32 0.0, %v1674
      %v1676 = vpop.f32.mrb[0].mxu0
      %1677 = vmatprep.mubr.bf16.mxu0 0
      %1678 = vmatmul.mubr.bf16.gmra.mrb[0].mxu0 %v1537
      %v1679 = vpop.f32.mrb[0].mxu0
      %v1680 = vadd.f32 0.0, %v1679
      %v1681 = vpop.f32.mrb[0].mxu0
      %v1682 = vpop.f32.mrb[0].mxu0
      %v1683 = vadd.f32 0.0, %v1682
      %v1684 = vpop.f32.mrb[0].mxu0
      %1685 = vmatprep.mubr.bf16.mxu0 0
      %1686 = vmatmul.mubr.bf16.gmra.mrb[0].mxu0 %v1540
      %v1687 = vpop.f32.mrb[0].mxu0
      %v1688 = vadd.f32 0.0, %v1687
      %v1689 = vpop.f32.mrb[0].mxu0
      %v1690 = vpop.f32.mrb[0].mxu0
      %v1691 = vadd.f32 0.0, %v1690
      %v1692 = vpop.f32.mrb[0].mxu0
      %1693 = vmatprep.mubr.bf16.mxu0 0
      %1694 = vmatmul.mubr.bf16.gmra.mrb[0].mxu0 %v1543
      %v1695 = vpop.f32.mrb[0].mxu0
      %v1696 = vadd.f32 0.0, %v1695
      %v1697 = vpop.f32.mrb[0].mxu0
      %v1698 = vpop.f32.mrb[0].mxu0
      %v1699 = vadd.f32 0.0, %v1698
      %v1700 = vpop.f32.mrb[0].mxu0
      %1701 = vmatprep.mubr.bf16.mxu0 0
      %1702 = vmatmul.mubr.bf16.gmra.mrb[0].mxu0 %v1546
      %v1703 = vpop.f32.mrb[0].mxu0
      %v1704 = vadd.f32 0.0, %v1703
      %v1705 = vpop.f32.mrb[0].mxu0
      %v1706 = vpop.f32.mrb[0].mxu0
      %v1707 = vadd.f32 0.0, %v1706
      %v1708 = vpop.f32.mrb[0].mxu0
      %1709 = vmatprep.mubr.bf16.mxu0 0
      %1710 = vmatmul.mubr.bf16.gmra.mrb[0].mxu0 %v1549
      %v1711 = vpop.f32.mrb[0].mxu0
      %v1712 = vadd.f32 0.0, %v1711
      %v1713 = vpop.f32.mrb[0].mxu0
      %v1714 = vpop.f32.mrb[0].mxu0
      %v1715 = vadd.f32 0.0, %v1714
      %v1716 = vpop.f32.mrb[0].mxu0
      %1717 = vmatprep.mubr.bf16.mxu0 0
      %1718 = vmatmul.mubr.bf16.gmra.mrb[0].mxu0 %v1552
      %v1719 = vpop.f32.mrb[0].mxu0
      %v1720 = vadd.f32 0.0, %v1719
      %v1721 = vpop.f32.mrb[0].mxu0
      %v1722 = vpop.f32.mrb[0].mxu0
      %v1723 = vadd.f32 0.0, %v1722
      %v1724 = vpop.f32.mrb[0].mxu0
      %1725 = vmatprep.mubr.bf16.mxu0 0
      %1726 = vmatmul.mubr.bf16.gmra.mrb[0].mxu0 %v1555
      %v1727 = vpop.f32.mrb[0].mxu0
      %v1728 = vadd.f32 0.0, %v1727
      %v1729 = vpop.f32.mrb[0].mxu0
      %v1730 = vpop.f32.mrb[0].mxu0
      %v1731 = vadd.f32 0.0, %v1730
      %v1732 = vpop.f32.mrb[0].mxu0
      %1733 = vdwg.mxu0
      %v1734 = vadd.f32 %v1267, %v1592
      %v1735 = vadd.f32 %v1268, %v1595
      %v1736 = vadd.f32 %v1269, %v1600
      %v1737 = vadd.f32 %v1270, %v1603
      %v1738 = vadd.f32 %v1271, %v1608
      %v1739 = vadd.f32 %v1272, %v1611
      %v1740 = vadd.f32 %v1273, %v1616
      %v1741 = vadd.f32 %v1274, %v1619
      %v1742 = vadd.f32 %v1275, %v1624
      %v1743 = vadd.f32 %v1276, %v1627
      %v1744 = vadd.f32 %v1277, %v1632
      %v1745 = vadd.f32 %v1278, %v1635
      %v1746 = vadd.f32 %v1279, %v1640
      %v1747 = vadd.f32 %v1280, %v1643
      %v1748 = vadd.f32 %v1281, %v1648
      %v1749 = vadd.f32 %v1282, %v1651
      %v1750 = vadd.f32 %v1283, %v1656
      %v1751 = vadd.f32 %v1284, %v1659
      %v1752 = vadd.f32 %v1285, %v1664
      %v1753 = vadd.f32 %v1286, %v1667
      %v1754 = vadd.f32 %v1287, %v1672
      %v1755 = vadd.f32 %v1288, %v1675
      %v1756 = vadd.f32 %v1289, %v1680
      %v1757 = vadd.f32 %v1290, %v1683
      %v1758 = vadd.f32 %v1291, %v1688
      %v1759 = vadd.f32 %v1292, %v1691
      %v1760 = vadd.f32 %v1293, %v1696
      %v1761 = vadd.f32 %v1294, %v1699
      %v1762 = vadd.f32 %v1295, %v1704
      %v1763 = vadd.f32 %v1296, %v1707
      %v1764 = vadd.f32 %v1297, %v1712
      %v1765 = vadd.f32 %v1298, %v1715
      %v1766 = vadd.f32 %v1299, %v1720
      %v1767 = vadd.f32 %v1300, %v1723
      %v1768 = vadd.f32 %v1301, %v1728
      %v1769 = vadd.f32 %v1302, %v1731
      %v1770 = vld [vmem:[%s165 + $0x98] sm:$0x3]
      %s1771 = scalar_lea.vmem %s1, 128
      %v1772 = vld [vmem:[%s1771] sm:$0xf]
      %v1773 = vld [vmem:[%s1771 + $0x4] sm:$0xf]
      %v1774 = vld [vmem:[%s1771 + $0x8] sm:$0xf]
      %v1775 = vld [vmem:[%s1771 + $0xc] sm:$0xf]
      %v1776 = vld [vmem:[%s1771 + $0x10] sm:$0xf]
      %v1777 = vld [vmem:[%s1771 + $0x14] sm:$0xf]
      %v1778 = vld [vmem:[%s1771 + $0x18] sm:$0xf]
      %v1779 = vld [vmem:[%s1771 + $0x1c] sm:$0xf]
      %v1781 = vunpack.c.l.b16 %v1770
      %v1782 = vpack.c.b16 %v1781, %v1781
      %vm1783 = vsmask.f32 6400
      %v1785 = vshrl.u32 %v1423, 16
      %v1787 = vrot.slane %v1785, 1
      %v1788 = vshll.u32 %v1423, 16
      %v1790 = vrot.slane %v1788, 2
      %v1791 = vor.u32 %v1787, %v1790
      %v1793 = vshrl.u32 %v1424, 16
      %v1795 = vrot.slane %v1793, 1
      %v1796 = vshll.u32 %v1424, 16
      %v1798 = vrot.slane %v1796, 2
      %v1799 = vor.u32 %v1795, %v1798
      %v1800 = vsel %vm1783, %v1791, %v1799
      %v1802 = vshrl.u32 %v1425, 16
      %v1804 = vrot.slane %v1802, 1
      %v1805 = vshll.u32 %v1425, 16
      %v1807 = vrot.slane %v1805, 2
      %v1808 = vor.u32 %v1804, %v1807
      %v1809 = vsel %vm1783, %v1799, %v1808
      %v1811 = vshrl.u32 %v1426, 16
      %v1813 = vrot.slane %v1811, 1
      %v1814 = vshll.u32 %v1426, 16
      %v1816 = vrot.slane %v1814, 2
      %v1817 = vor.u32 %v1813, %v1816
      %v1818 = vsel %vm1783, %v1808, %v1817
      %v1820 = vshrl.u32 %v1427, 16
      %v1822 = vrot.slane %v1820, 1
      %v1823 = vshll.u32 %v1427, 16
      %v1825 = vrot.slane %v1823, 2
      %v1826 = vor.u32 %v1822, %v1825
      %v1827 = vsel %vm1783, %v1817, %v1826
      %v1829 = vshrl.u32 %v1428, 16
      %v1831 = vrot.slane %v1829, 1
      %v1832 = vshll.u32 %v1428, 16
      %v1834 = vrot.slane %v1832, 2
      %v1835 = vor.u32 %v1831, %v1834
      %v1836 = vsel %vm1783, %v1826, %v1835
      %v1838 = vshrl.u32 %v1429, 16
      %v1840 = vrot.slane %v1838, 1
      %v1841 = vshll.u32 %v1429, 16
      %v1843 = vrot.slane %v1841, 2
      %v1844 = vor.u32 %v1840, %v1843
      %v1845 = vsel %vm1783, %v1835, %v1844
      %v1847 = vshrl.u32 %v1430, 16
      %v1849 = vrot.slane %v1847, 1
      %v1850 = vshll.u32 %v1430, 16
      %v1852 = vrot.slane %v1850, 2
      %v1853 = vor.u32 %v1849, %v1852
      %v1854 = vsel %vm1783, %v1844, %v1853
      %v1856 = vshrl.u32 %v1431, 16
      %v1858 = vrot.slane %v1856, 1
      %v1859 = vshll.u32 %v1431, 16
      %v1861 = vrot.slane %v1859, 2
      %v1862 = vor.u32 %v1858, %v1861
      %v1863 = vsel %vm1783, %v1853, %v1862
      %v1865 = vshrl.u32 %v1432, 16
      %v1867 = vrot.slane %v1865, 1
      %v1868 = vshll.u32 %v1432, 16
      %v1870 = vrot.slane %v1868, 2
      %v1871 = vor.u32 %v1867, %v1870
      %v1872 = vsel %vm1783, %v1862, %v1871
      %v1874 = vshrl.u32 %v1433, 16
      %v1876 = vrot.slane %v1874, 1
      %v1877 = vshll.u32 %v1433, 16
      %v1879 = vrot.slane %v1877, 2
      %v1880 = vor.u32 %v1876, %v1879
      %v1881 = vsel %vm1783, %v1871, %v1880
      %v1883 = vshrl.u32 %v1434, 16
      %v1885 = vrot.slane %v1883, 1
      %v1886 = vshll.u32 %v1434, 16
      %v1888 = vrot.slane %v1886, 2
      %v1889 = vor.u32 %v1885, %v1888
      %v1890 = vsel %vm1783, %v1880, %v1889
      %v1892 = vshrl.u32 %v1435, 16
      %v1894 = vrot.slane %v1892, 1
      %v1895 = vshll.u32 %v1435, 16
      %v1897 = vrot.slane %v1895, 2
      %v1898 = vor.u32 %v1894, %v1897
      %v1899 = vsel %vm1783, %v1889, %v1898
      %v1901 = vshrl.u32 %v1436, 16
      %v1903 = vrot.slane %v1901, 1
      %v1904 = vshll.u32 %v1436, 16
      %v1906 = vrot.slane %v1904, 2
      %v1907 = vor.u32 %v1903, %v1906
      %v1908 = vsel %vm1783, %v1898, %v1907
      %v1910 = vshrl.u32 %v1437, 16
      %v1912 = vrot.slane %v1910, 1
      %v1913 = vshll.u32 %v1437, 16
      %v1915 = vrot.slane %v1913, 2
      %v1916 = vor.u32 %v1912, %v1915
      %v1917 = vsel %vm1783, %v1907, %v1916
      %v1919 = vshrl.u32 %v1438, 16
      %v1921 = vrot.slane %v1919, 1
      %v1922 = vshll.u32 %v1438, 16
      %v1924 = vrot.slane %v1922, 2
      %v1925 = vor.u32 %v1921, %v1924
      %v1926 = vsel %vm1783, %v1916, %v1925
      %v1928 = vshrl.u32 %v1439, 16
      %v1930 = vrot.slane %v1928, 1
      %v1931 = vshll.u32 %v1439, 16
      %v1933 = vrot.slane %v1931, 2
      %v1934 = vor.u32 %v1930, %v1933
      %v1935 = vsel %vm1783, %v1925, %v1934
      %v1937 = vshrl.u32 %v1440, 16
      %v1939 = vrot.slane %v1937, 1
      %v1940 = vshll.u32 %v1440, 16
      %v1942 = vrot.slane %v1940, 2
      %v1943 = vor.u32 %v1939, %v1942
      %v1944 = vsel %vm1783, %v1934, %v1943
      %v1946 = vshrl.u32 %v1782, 16
      %v1948 = vrot.slane %v1946, 1
      %v1949 = vshll.u32 %v1782, 16
      %v1951 = vrot.slane %v1949, 2
      %v1952 = vor.u32 %v1948, %v1951
      %v1953 = vsel %vm1783, %v1943, %v1952
      %v1962 = vunpack.c.l.b16 %v1772
      %v1963 = vunpack.c.l.b16 %v1773
      %v1964 = vunpack.c.l.b16 %v1774
      %v1965 = vunpack.c.l.b16 %v1775
      %v1966 = vunpack.c.l.b16 %v1776
      %v1967 = vunpack.c.l.b16 %v1777
      %v1968 = vunpack.c.l.b16 %v1778
      %v1969 = vunpack.c.l.b16 %v1779
      %v1970 = vpack.c.b16 %v1963, %v1962
      %v1971 = vpack.c.b16 %v1965, %v1964
      %v1972 = vpack.c.b16 %v1967, %v1966
      %v1973 = vpack.c.b16 %v1969, %v1968
      %v1979 = vsel %vm492, %v1800, 0
      %v1982 = vsel %vm492, %v1809, 0
      %v1985 = vsel %vm492, %v1818, 0
      %v1988 = vsel %vm492, %v1827, 0
      %v1991 = vsel %vm492, %v1836, 0
      %v1994 = vsel %vm492, %v1845, 0
      %v1997 = vsel %vm492, %v1854, 0
      %v2000 = vsel %vm492, %v1863, 0
      %v2003 = vsel %vm492, %v1872, 0
      %v2006 = vsel %vm492, %v1881, 0
      %v2009 = vsel %vm492, %v1890, 0
      %v2012 = vsel %vm492, %v1899, 0
      %v2015 = vsel %vm492, %v1908, 0
      %v2018 = vsel %vm492, %v1917, 0
      %v2021 = vsel %vm492, %v1926, 0
      %v2024 = vsel %vm492, %v1935, 0
      %v2027 = vsel %vm492, %v1944, 0
      %v2030 = vsel %vm492, %v1953, 0
      %2032 = vmatprep.subr.bf16.mxu0 0
      %2033 = vmatpush1.bf16.msra.mxu0 %v1970
      %2034 = vmatprep.subr.bf16.mxu0 0
      %2035 = vmatpush1.bf16.msra.mxu0 %v1971
      %2036 = vmatprep.subr.bf16.mxu0 0
      %2037 = vmatpush1.bf16.msra.mxu0 %v1972
      %2038 = vmatprep.subr.bf16.mxu0 0
      %2039 = vmatpush1.bf16.msra.mxu0 %v1973
      %2040 = vmatprep.subr.bf16.mxu0 0
      %2041 = vmatpush1.bf16.msra.mxu0 0
      %2042 = vmatprep.subr.bf16.mxu0 0
      %2043 = vmatpush1.bf16.msra.mxu0 0
      %2044 = vmatprep.subr.bf16.mxu0 0
      %2045 = vmatpush1.bf16.msra.mxu0 0
      %2046 = vmatprep.subr.bf16.mxu0 0
      %2047 = vmatpush1.bf16.msra.mxu0 0
      %2048 = vmatprep.subr.bf16.mxu0 0
      %2049 = vmatpush1.bf16.msra.mxu0 0
      %2050 = vmatprep.subr.bf16.mxu0 0
      %2051 = vmatpush1.bf16.msra.mxu0 0
      %2052 = vmatprep.subr.bf16.mxu0 0
      %2053 = vmatpush1.bf16.msra.mxu0 0
      %2054 = vmatprep.subr.bf16.mxu0 0
      %2055 = vmatpush1.bf16.msra.mxu0 0
      %2056 = vmatprep.subr.bf16.mxu0 0
      %2057 = vmatpush1.bf16.msra.mxu0 0
      %2058 = vmatprep.subr.bf16.mxu0 0
      %2059 = vmatpush1.bf16.msra.mxu0 0
      %2060 = vmatprep.subr.bf16.mxu0 0
      %2061 = vmatpush1.bf16.msra.mxu0 0
      %2062 = vmatprep.subr.bf16.mxu0 0
      %2063 = vmatpush1.bf16.msra.mxu0 0
      %2064 = vmatprep.mubr.bf16.mxu0 0
      %2065 = vmatmul.mubr.bf16.gmra.mrb[0].mxu0 %v1979
      %v2066 = vpop.f32.mrb[0].mxu0
      %v2067 = vadd.f32 0.0, %v2066
      %v2068 = vpop.f32.mrb[0].mxu0
      %v2069 = vpop.f32.mrb[0].mxu0
      %v2070 = vadd.f32 0.0, %v2069
      %v2071 = vpop.f32.mrb[0].mxu0
      %2072 = vmatprep.mubr.bf16.mxu0 0
      %2073 = vmatmul.mubr.bf16.gmra.mrb[0].mxu0 %v1982
      %v2074 = vpop.f32.mrb[0].mxu0
      %v2075 = vadd.f32 0.0, %v2074
      %v2076 = vpop.f32.mrb[0].mxu0
      %v2077 = vpop.f32.mrb[0].mxu0
      %v2078 = vadd.f32 0.0, %v2077
      %v2079 = vpop.f32.mrb[0].mxu0
      %2080 = vmatprep.mubr.bf16.mxu0 0
      %2081 = vmatmul.mubr.bf16.gmra.mrb[0].mxu0 %v1985
      %v2082 = vpop.f32.mrb[0].mxu0
      %v2083 = vadd.f32 0.0, %v2082
      %v2084 = vpop.f32.mrb[0].mxu0
      %v2085 = vpop.f32.mrb[0].mxu0
      %v2086 = vadd.f32 0.0, %v2085
      %v2087 = vpop.f32.mrb[0].mxu0
      %2088 = vmatprep.mubr.bf16.mxu0 0
      %2089 = vmatmul.mubr.bf16.gmra.mrb[0].mxu0 %v1988
      %v2090 = vpop.f32.mrb[0].mxu0
      %v2091 = vadd.f32 0.0, %v2090
      %v2092 = vpop.f32.mrb[0].mxu0
      %v2093 = vpop.f32.mrb[0].mxu0
      %v2094 = vadd.f32 0.0, %v2093
      %v2095 = vpop.f32.mrb[0].mxu0
      %2096 = vmatprep.mubr.bf16.mxu0 0
      %2097 = vmatmul.mubr.bf16.gmra.mrb[0].mxu0 %v1991
      %v2098 = vpop.f32.mrb[0].mxu0
      %v2099 = vadd.f32 0.0, %v2098
      %v2100 = vpop.f32.mrb[0].mxu0
      %v2101 = vpop.f32.mrb[0].mxu0
      %v2102 = vadd.f32 0.0, %v2101
      %v2103 = vpop.f32.mrb[0].mxu0
      %2104 = vmatprep.mubr.bf16.mxu0 0
      %2105 = vmatmul.mubr.bf16.gmra.mrb[0].mxu0 %v1994
      %v2106 = vpop.f32.mrb[0].mxu0
      %v2107 = vadd.f32 0.0, %v2106
      %v2108 = vpop.f32.mrb[0].mxu0
      %v2109 = vpop.f32.mrb[0].mxu0
      %v2110 = vadd.f32 0.0, %v2109
      %v2111 = vpop.f32.mrb[0].mxu0
      %2112 = vmatprep.mubr.bf16.mxu0 0
      %2113 = vmatmul.mubr.bf16.gmra.mrb[0].mxu0 %v1997
      %v2114 = vpop.f32.mrb[0].mxu0
      %v2115 = vadd.f32 0.0, %v2114
      %v2116 = vpop.f32.mrb[0].mxu0
      %v2117 = vpop.f32.mrb[0].mxu0
      %v2118 = vadd.f32 0.0, %v2117
      %v2119 = vpop.f32.mrb[0].mxu0
      %2120 = vmatprep.mubr.bf16.mxu0 0
      %2121 = vmatmul.mubr.bf16.gmra.mrb[0].mxu0 %v2000
      %v2122 = vpop.f32.mrb[0].mxu0
      %v2123 = vadd.f32 0.0, %v2122
      %v2124 = vpop.f32.mrb[0].mxu0
      %v2125 = vpop.f32.mrb[0].mxu0
      %v2126 = vadd.f32 0.0, %v2125
      %v2127 = vpop.f32.mrb[0].mxu0
      %2128 = vmatprep.mubr.bf16.mxu0 0
      %2129 = vmatmul.mubr.bf16.gmra.mrb[0].mxu0 %v2003
      %v2130 = vpop.f32.mrb[0].mxu0
      %v2131 = vadd.f32 0.0, %v2130
      %v2132 = vpop.f32.mrb[0].mxu0
      %v2133 = vpop.f32.mrb[0].mxu0
      %v2134 = vadd.f32 0.0, %v2133
      %v2135 = vpop.f32.mrb[0].mxu0
      %2136 = vmatprep.mubr.bf16.mxu0 0
      %2137 = vmatmul.mubr.bf16.gmra.mrb[0].mxu0 %v2006
      %v2138 = vpop.f32.mrb[0].mxu0
      %v2139 = vadd.f32 0.0, %v2138
      %v2140 = vpop.f32.mrb[0].mxu0
      %v2141 = vpop.f32.mrb[0].mxu0
      %v2142 = vadd.f32 0.0, %v2141
      %v2143 = vpop.f32.mrb[0].mxu0
      %2144 = vmatprep.mubr.bf16.mxu0 0
      %2145 = vmatmul.mubr.bf16.gmra.mrb[0].mxu0 %v2009
      %v2146 = vpop.f32.mrb[0].mxu0
      %v2147 = vadd.f32 0.0, %v2146
      %v2148 = vpop.f32.mrb[0].mxu0
      %v2149 = vpop.f32.mrb[0].mxu0
      %v2150 = vadd.f32 0.0, %v2149
      %v2151 = vpop.f32.mrb[0].mxu0
      %2152 = vmatprep.mubr.bf16.mxu0 0
      %2153 = vmatmul.mubr.bf16.gmra.mrb[0].mxu0 %v2012
      %v2154 = vpop.f32.mrb[0].mxu0
      %v2155 = vadd.f32 0.0, %v2154
      %v2156 = vpop.f32.mrb[0].mxu0
      %v2157 = vpop.f32.mrb[0].mxu0
      %v2158 = vadd.f32 0.0, %v2157
      %v2159 = vpop.f32.mrb[0].mxu0
      %2160 = vmatprep.mubr.bf16.mxu0 0
      %2161 = vmatmul.mubr.bf16.gmra.mrb[0].mxu0 %v2015
      %v2162 = vpop.f32.mrb[0].mxu0
      %v2163 = vadd.f32 0.0, %v2162
      %v2164 = vpop.f32.mrb[0].mxu0
      %v2165 = vpop.f32.mrb[0].mxu0
      %v2166 = vadd.f32 0.0, %v2165
      %v2167 = vpop.f32.mrb[0].mxu0
      %2168 = vmatprep.mubr.bf16.mxu0 0
      %2169 = vmatmul.mubr.bf16.gmra.mrb[0].mxu0 %v2018
      %v2170 = vpop.f32.mrb[0].mxu0
      %v2171 = vadd.f32 0.0, %v2170
      %v2172 = vpop.f32.mrb[0].mxu0
      %v2173 = vpop.f32.mrb[0].mxu0
      %v2174 = vadd.f32 0.0, %v2173
      %v2175 = vpop.f32.mrb[0].mxu0
      %2176 = vmatprep.mubr.bf16.mxu0 0
      %2177 = vmatmul.mubr.bf16.gmra.mrb[0].mxu0 %v2021
      %v2178 = vpop.f32.mrb[0].mxu0
      %v2179 = vadd.f32 0.0, %v2178
      %v2180 = vpop.f32.mrb[0].mxu0
      %v2181 = vpop.f32.mrb[0].mxu0
      %v2182 = vadd.f32 0.0, %v2181
      %v2183 = vpop.f32.mrb[0].mxu0
      %2184 = vmatprep.mubr.bf16.mxu0 0
      %2185 = vmatmul.mubr.bf16.gmra.mrb[0].mxu0 %v2024
      %v2186 = vpop.f32.mrb[0].mxu0
      %v2187 = vadd.f32 0.0, %v2186
      %v2188 = vpop.f32.mrb[0].mxu0
      %v2189 = vpop.f32.mrb[0].mxu0
      %v2190 = vadd.f32 0.0, %v2189
      %v2191 = vpop.f32.mrb[0].mxu0
      %2192 = vmatprep.mubr.bf16.mxu0 0
      %2193 = vmatmul.mubr.bf16.gmra.mrb[0].mxu0 %v2027
      %v2194 = vpop.f32.mrb[0].mxu0
      %v2195 = vadd.f32 0.0, %v2194
      %v2196 = vpop.f32.mrb[0].mxu0
      %v2197 = vpop.f32.mrb[0].mxu0
      %v2198 = vadd.f32 0.0, %v2197
      %v2199 = vpop.f32.mrb[0].mxu0
      %2200 = vmatprep.mubr.bf16.mxu0 0
      %2201 = vmatmul.mubr.bf16.gmra.mrb[0].mxu0 %v2030
      %v2202 = vpop.f32.mrb[0].mxu0
      %v2203 = vadd.f32 0.0, %v2202
      %v2204 = vpop.f32.mrb[0].mxu0
      %v2205 = vpop.f32.mrb[0].mxu0
      %v2206 = vadd.f32 0.0, %v2205
      %v2207 = vpop.f32.mrb[0].mxu0
      %2208 = vdwg.mxu0
      %v2209 = vadd.f32 %v1734, %v2067
      %v2210 = vadd.f32 %v1735, %v2070
      %v2211 = vadd.f32 %v1736, %v2075
      %v2212 = vadd.f32 %v1737, %v2078
      %v2213 = vadd.f32 %v1738, %v2083
      %v2214 = vadd.f32 %v1739, %v2086
      %v2215 = vadd.f32 %v1740, %v2091
      %v2216 = vadd.f32 %v1741, %v2094
      %v2217 = vadd.f32 %v1742, %v2099
      %v2218 = vadd.f32 %v1743, %v2102
      %v2219 = vadd.f32 %v1744, %v2107
      %v2220 = vadd.f32 %v1745, %v2110
      %v2221 = vadd.f32 %v1746, %v2115
      %v2222 = vadd.f32 %v1747, %v2118
      %v2223 = vadd.f32 %v1748, %v2123
      %v2224 = vadd.f32 %v1749, %v2126
      %v2225 = vadd.f32 %v1750, %v2131
      %v2226 = vadd.f32 %v1751, %v2134
      %v2227 = vadd.f32 %v1752, %v2139
      %v2228 = vadd.f32 %v1753, %v2142
      %v2229 = vadd.f32 %v1754, %v2147
      %v2230 = vadd.f32 %v1755, %v2150
      %v2231 = vadd.f32 %v1756, %v2155
      %v2232 = vadd.f32 %v1757, %v2158
      %v2233 = vadd.f32 %v1758, %v2163
      %v2234 = vadd.f32 %v1759, %v2166
      %v2235 = vadd.f32 %v1760, %v2171
      %v2236 = vadd.f32 %v1761, %v2174
      %v2237 = vadd.f32 %v1762, %v2179
      %v2238 = vadd.f32 %v1763, %v2182
      %v2239 = vadd.f32 %v1764, %v2187
      %v2240 = vadd.f32 %v1765, %v2190
      %v2241 = vadd.f32 %v1766, %v2195
      %v2242 = vadd.f32 %v1767, %v2198
      %v2243 = vadd.f32 %v1768, %v2203
      %v2244 = vadd.f32 %v1769, %v2206
      %v2245 = vld [vmem:[%s165 + $0x8] sm:$0xc]
      %s2246 = scalar_lea.vmem %s1, 160
      %v2247 = vld [vmem:[%s2246] sm:$0xf]
      %v2248 = vld [vmem:[%s2246 + $0x4] sm:$0xf]
      %v2249 = vld [vmem:[%s2246 + $0x8] sm:$0xf]
      %v2250 = vld [vmem:[%s2246 + $0xc] sm:$0xf]
      %v2251 = vld [vmem:[%s2246 + $0x10] sm:$0xf]
      %v2252 = vld [vmem:[%s2246 + $0x14] sm:$0xf]
      %v2253 = vld [vmem:[%s2246 + $0x18] sm:$0xf]
      %v2254 = vld [vmem:[%s2246 + $0x1c] sm:$0xf]
      %v2256 = vunpack.c.l.b16 %v2245
      %v2257 = vpack.c.b16 %v1387, %v2256
      %vm2258 = vcmask 1045504
      %v2259 = vrot.slane %v2257, 2
      %v2260 = vrot.slane %v1424, 2
      %v2261 = vsel %vm2258, %v2259, %v2260
      %v2262 = vrot.slane %v1425, 2
      %v2263 = vsel %vm2258, %v2260, %v2262
      %v2264 = vrot.slane %v1426, 2
      %v2265 = vsel %vm2258, %v2262, %v2264
      %v2266 = vrot.slane %v1427, 2
      %v2267 = vsel %vm2258, %v2264, %v2266
      %v2268 = vrot.slane %v1428, 2
      %v2269 = vsel %vm2258, %v2266, %v2268
      %v2270 = vrot.slane %v1429, 2
      %v2271 = vsel %vm2258, %v2268, %v2270
      %v2272 = vrot.slane %v1430, 2
      %v2273 = vsel %vm2258, %v2270, %v2272
      %v2274 = vrot.slane %v1431, 2
      %v2275 = vsel %vm2258, %v2272, %v2274
      %v2276 = vrot.slane %v1432, 2
      %v2277 = vsel %vm2258, %v2274, %v2276
      %v2278 = vrot.slane %v1433, 2
      %v2279 = vsel %vm2258, %v2276, %v2278
      %v2280 = vrot.slane %v1434, 2
      %v2281 = vsel %vm2258, %v2278, %v2280
      %v2282 = vrot.slane %v1435, 2
      %v2283 = vsel %vm2258, %v2280, %v2282
      %v2284 = vrot.slane %v1436, 2
      %v2285 = vsel %vm2258, %v2282, %v2284
      %v2286 = vrot.slane %v1437, 2
      %v2287 = vsel %vm2258, %v2284, %v2286
      %v2288 = vrot.slane %v1438, 2
      %v2289 = vsel %vm2258, %v2286, %v2288
      %v2290 = vrot.slane %v1439, 2
      %v2291 = vsel %vm2258, %v2288, %v2290
      %v2292 = vrot.slane %v1440, 2
      %v2293 = vsel %vm2258, %v2290, %v2292
      %v2294 = vrot.slane %v1782, 2
      %v2295 = vsel %vm2258, %v2292, %v2294
      %v2304 = vunpack.c.l.b16 %v2247
      %v2305 = vunpack.c.l.b16 %v2248
      %v2306 = vunpack.c.l.b16 %v2249
      %v2307 = vunpack.c.l.b16 %v2250
      %v2308 = vunpack.c.l.b16 %v2251
      %v2309 = vunpack.c.l.b16 %v2252
      %v2310 = vunpack.c.l.b16 %v2253
      %v2311 = vunpack.c.l.b16 %v2254
      %v2312 = vpack.c.b16 %v2305, %v2304
      %v2313 = vpack.c.b16 %v2307, %v2306
      %v2314 = vpack.c.b16 %v2309, %v2308
      %v2315 = vpack.c.b16 %v2311, %v2310
      %v2321 = vsel %vm492, %v2261, 0
      %v2324 = vsel %vm492, %v2263, 0
      %v2327 = vsel %vm492, %v2265, 0
      %v2330 = vsel %vm492, %v2267, 0
      %v2333 = vsel %vm492, %v2269, 0
      %v2336 = vsel %vm492, %v2271, 0
      %v2339 = vsel %vm492, %v2273, 0
      %v2342 = vsel %vm492, %v2275, 0
      %v2345 = vsel %vm492, %v2277, 0
      %v2348 = vsel %vm492, %v2279, 0
      %v2351 = vsel %vm492, %v2281, 0
      %v2354 = vsel %vm492, %v2283, 0
      %v2357 = vsel %vm492, %v2285, 0
      %v2360 = vsel %vm492, %v2287, 0
      %v2363 = vsel %vm492, %v2289, 0
      %v2366 = vsel %vm492, %v2291, 0
      %v2369 = vsel %vm492, %v2293, 0
      %v2372 = vsel %vm492, %v2295, 0
      %2374 = vmatprep.subr.bf16.mxu0 0
      %2375 = vmatpush1.bf16.msra.mxu0 %v2312
      %2376 = vmatprep.subr.bf16.mxu0 0
      %2377 = vmatpush1.bf16.msra.mxu0 %v2313
      %2378 = vmatprep.subr.bf16.mxu0 0
      %2379 = vmatpush1.bf16.msra.mxu0 %v2314
      %2380 = vmatprep.subr.bf16.mxu0 0
      %2381 = vmatpush1.bf16.msra.mxu0 %v2315
      %2382 = vmatprep.subr.bf16.mxu0 0
      %2383 = vmatpush1.bf16.msra.mxu0 0
      %2384 = vmatprep.subr.bf16.mxu0 0
      %2385 = vmatpush1.bf16.msra.mxu0 0
      %2386 = vmatprep.subr.bf16.mxu0 0
      %2387 = vmatpush1.bf16.msra.mxu0 0
      %2388 = vmatprep.subr.bf16.mxu0 0
      %2389 = vmatpush1.bf16.msra.mxu0 0
      %2390 = vmatprep.subr.bf16.mxu0 0
      %2391 = vmatpush1.bf16.msra.mxu0 0
      %2392 = vmatprep.subr.bf16.mxu0 0
      %2393 = vmatpush1.bf16.msra.mxu0 0
      %2394 = vmatprep.subr.bf16.mxu0 0
      %2395 = vmatpush1.bf16.msra.mxu0 0
      %2396 = vmatprep.subr.bf16.mxu0 0
      %2397 = vmatpush1.bf16.msra.mxu0 0
      %2398 = vmatprep.subr.bf16.mxu0 0
      %2399 = vmatpush1.bf16.msra.mxu0 0
      %2400 = vmatprep.subr.bf16.mxu0 0
      %2401 = vmatpush1.bf16.msra.mxu0 0
      %2402 = vmatprep.subr.bf16.mxu0 0
      %2403 = vmatpush1.bf16.msra.mxu0 0
      %2404 = vmatprep.subr.bf16.mxu0 0
      %2405 = vmatpush1.bf16.msra.mxu0 0
      %2406 = vmatprep.mubr.bf16.mxu0 0
      %2407 = vmatmul.mubr.bf16.gmra.mrb[0].mxu0 %v2321
      %v2408 = vpop.f32.mrb[0].mxu0
      %v2409 = vadd.f32 0.0, %v2408
      %v2410 = vpop.f32.mrb[0].mxu0
      %v2411 = vpop.f32.mrb[0].mxu0
      %v2412 = vadd.f32 0.0, %v2411
      %v2413 = vpop.f32.mrb[0].mxu0
      %2414 = vmatprep.mubr.bf16.mxu0 0
      %2415 = vmatmul.mubr.bf16.gmra.mrb[0].mxu0 %v2324
      %v2416 = vpop.f32.mrb[0].mxu0
      %v2417 = vadd.f32 0.0, %v2416
      %v2418 = vpop.f32.mrb[0].mxu0
      %v2419 = vpop.f32.mrb[0].mxu0
      %v2420 = vadd.f32 0.0, %v2419
      %v2421 = vpop.f32.mrb[0].mxu0
      %2422 = vmatprep.mubr.bf16.mxu0 0
      %2423 = vmatmul.mubr.bf16.gmra.mrb[0].mxu0 %v2327
      %v2424 = vpop.f32.mrb[0].mxu0
      %v2425 = vadd.f32 0.0, %v2424
      %v2426 = vpop.f32.mrb[0].mxu0
      %v2427 = vpop.f32.mrb[0].mxu0
      %v2428 = vadd.f32 0.0, %v2427
      %v2429 = vpop.f32.mrb[0].mxu0
      %2430 = vmatprep.mubr.bf16.mxu0 0
      %2431 = vmatmul.mubr.bf16.gmra.mrb[0].mxu0 %v2330
      %v2432 = vpop.f32.mrb[0].mxu0
      %v2433 = vadd.f32 0.0, %v2432
      %v2434 = vpop.f32.mrb[0].mxu0
      %v2435 = vpop.f32.mrb[0].mxu0
      %v2436 = vadd.f32 0.0, %v2435
      %v2437 = vpop.f32.mrb[0].mxu0
      %2438 = vmatprep.mubr.bf16.mxu0 0
      %2439 = vmatmul.mubr.bf16.gmra.mrb[0].mxu0 %v2333
      %v2440 = vpop.f32.mrb[0].mxu0
      %v2441 = vadd.f32 0.0, %v2440
      %v2442 = vpop.f32.mrb[0].mxu0
      %v2443 = vpop.f32.mrb[0].mxu0
      %v2444 = vadd.f32 0.0, %v2443
      %v2445 = vpop.f32.mrb[0].mxu0
      %2446 = vmatprep.mubr.bf16.mxu0 0
      %2447 = vmatmul.mubr.bf16.gmra.mrb[0].mxu0 %v2336
      %v2448 = vpop.f32.mrb[0].mxu0
      %v2449 = vadd.f32 0.0, %v2448
      %v2450 = vpop.f32.mrb[0].mxu0
      %v2451 = vpop.f32.mrb[0].mxu0
      %v2452 = vadd.f32 0.0, %v2451
      %v2453 = vpop.f32.mrb[0].mxu0
      %2454 = vmatprep.mubr.bf16.mxu0 0
      %2455 = vmatmul.mubr.bf16.gmra.mrb[0].mxu0 %v2339
      %v2456 = vpop.f32.mrb[0].mxu0
      %v2457 = vadd.f32 0.0, %v2456
      %v2458 = vpop.f32.mrb[0].mxu0
      %v2459 = vpop.f32.mrb[0].mxu0
      %v2460 = vadd.f32 0.0, %v2459
      %v2461 = vpop.f32.mrb[0].mxu0
      %2462 = vmatprep.mubr.bf16.mxu0 0
      %2463 = vmatmul.mubr.bf16.gmra.mrb[0].mxu0 %v2342
      %v2464 = vpop.f32.mrb[0].mxu0
      %v2465 = vadd.f32 0.0, %v2464
      %v2466 = vpop.f32.mrb[0].mxu0
      %v2467 = vpop.f32.mrb[0].mxu0
      %v2468 = vadd.f32 0.0, %v2467
      %v2469 = vpop.f32.mrb[0].mxu0
      %2470 = vmatprep.mubr.bf16.mxu0 0
      %2471 = vmatmul.mubr.bf16.gmra.mrb[0].mxu0 %v2345
      %v2472 = vpop.f32.mrb[0].mxu0
      %v2473 = vadd.f32 0.0, %v2472
      %v2474 = vpop.f32.mrb[0].mxu0
      %v2475 = vpop.f32.mrb[0].mxu0
      %v2476 = vadd.f32 0.0, %v2475
      %v2477 = vpop.f32.mrb[0].mxu0
      %2478 = vmatprep.mubr.bf16.mxu0 0
      %2479 = vmatmul.mubr.bf16.gmra.mrb[0].mxu0 %v2348
      %v2480 = vpop.f32.mrb[0].mxu0
      %v2481 = vadd.f32 0.0, %v2480
      %v2482 = vpop.f32.mrb[0].mxu0
      %v2483 = vpop.f32.mrb[0].mxu0
      %v2484 = vadd.f32 0.0, %v2483
      %v2485 = vpop.f32.mrb[0].mxu0
      %2486 = vmatprep.mubr.bf16.mxu0 0
      %2487 = vmatmul.mubr.bf16.gmra.mrb[0].mxu0 %v2351
      %v2488 = vpop.f32.mrb[0].mxu0
      %v2489 = vadd.f32 0.0, %v2488
      %v2490 = vpop.f32.mrb[0].mxu0
      %v2491 = vpop.f32.mrb[0].mxu0
      %v2492 = vadd.f32 0.0, %v2491
      %v2493 = vpop.f32.mrb[0].mxu0
      %2494 = vmatprep.mubr.bf16.mxu0 0
      %2495 = vmatmul.mubr.bf16.gmra.mrb[0].mxu0 %v2354
      %v2496 = vpop.f32.mrb[0].mxu0
      %v2497 = vadd.f32 0.0, %v2496
      %v2498 = vpop.f32.mrb[0].mxu0
      %v2499 = vpop.f32.mrb[0].mxu0
      %v2500 = vadd.f32 0.0, %v2499
      %v2501 = vpop.f32.mrb[0].mxu0
      %2502 = vmatprep.mubr.bf16.mxu0 0
      %2503 = vmatmul.mubr.bf16.gmra.mrb[0].mxu0 %v2357
      %v2504 = vpop.f32.mrb[0].mxu0
      %v2505 = vadd.f32 0.0, %v2504
      %v2506 = vpop.f32.mrb[0].mxu0
      %v2507 = vpop.f32.mrb[0].mxu0
      %v2508 = vadd.f32 0.0, %v2507
      %v2509 = vpop.f32.mrb[0].mxu0
      %2510 = vmatprep.mubr.bf16.mxu0 0
      %2511 = vmatmul.mubr.bf16.gmra.mrb[0].mxu0 %v2360
      %v2512 = vpop.f32.mrb[0].mxu0
      %v2513 = vadd.f32 0.0, %v2512
      %v2514 = vpop.f32.mrb[0].mxu0
      %v2515 = vpop.f32.mrb[0].mxu0
      %v2516 = vadd.f32 0.0, %v2515
      %v2517 = vpop.f32.mrb[0].mxu0
      %2518 = vmatprep.mubr.bf16.mxu0 0
      %2519 = vmatmul.mubr.bf16.gmra.mrb[0].mxu0 %v2363
      %v2520 = vpop.f32.mrb[0].mxu0
      %v2521 = vadd.f32 0.0, %v2520
      %v2522 = vpop.f32.mrb[0].mxu0
      %v2523 = vpop.f32.mrb[0].mxu0
      %v2524 = vadd.f32 0.0, %v2523
      %v2525 = vpop.f32.mrb[0].mxu0
      %2526 = vmatprep.mubr.bf16.mxu0 0
      %2527 = vmatmul.mubr.bf16.gmra.mrb[0].mxu0 %v2366
      %v2528 = vpop.f32.mrb[0].mxu0
      %v2529 = vadd.f32 0.0, %v2528
      %v2530 = vpop.f32.mrb[0].mxu0
      %v2531 = vpop.f32.mrb[0].mxu0
      %v2532 = vadd.f32 0.0, %v2531
      %v2533 = vpop.f32.mrb[0].mxu0
      %2534 = vmatprep.mubr.bf16.mxu0 0
      %2535 = vmatmul.mubr.bf16.gmra.mrb[0].mxu0 %v2369
      %v2536 = vpop.f32.mrb[0].mxu0
      %v2537 = vadd.f32 0.0, %v2536
      %v2538 = vpop.f32.mrb[0].mxu0
      %v2539 = vpop.f32.mrb[0].mxu0
      %v2540 = vadd.f32 0.0, %v2539
      %v2541 = vpop.f32.mrb[0].mxu0
      %2542 = vmatprep.mubr.bf16.mxu0 0
      %2543 = vmatmul.mubr.bf16.gmra.mrb[0].mxu0 %v2372
      %v2544 = vpop.f32.mrb[0].mxu0
      %v2545 = vadd.f32 0.0, %v2544
      %v2546 = vpop.f32.mrb[0].mxu0
      %v2547 = vpop.f32.mrb[0].mxu0
      %v2548 = vadd.f32 0.0, %v2547
      %v2549 = vpop.f32.mrb[0].mxu0
      %2550 = vdwg.mxu0
      %v2551 = vadd.f32 %v2209, %v2409
      %v2552 = vadd.f32 %v2210, %v2412
      %v2553 = vadd.f32 %v2211, %v2417
      %v2554 = vadd.f32 %v2212, %v2420
      %v2555 = vadd.f32 %v2213, %v2425
      %v2556 = vadd.f32 %v2214, %v2428
      %v2557 = vadd.f32 %v2215, %v2433
      %v2558 = vadd.f32 %v2216, %v2436
      %v2559 = vadd.f32 %v2217, %v2441
      %v2560 = vadd.f32 %v2218, %v2444
      %v2561 = vadd.f32 %v2219, %v2449
      %v2562 = vadd.f32 %v2220, %v2452
      %v2563 = vadd.f32 %v2221, %v2457
      %v2564 = vadd.f32 %v2222, %v2460
      %v2565 = vadd.f32 %v2223, %v2465
      %v2566 = vadd.f32 %v2224, %v2468
      %v2567 = vadd.f32 %v2225, %v2473
      %v2568 = vadd.f32 %v2226, %v2476
      %v2569 = vadd.f32 %v2227, %v2481
      %v2570 = vadd.f32 %v2228, %v2484
      %v2571 = vadd.f32 %v2229, %v2489
      %v2572 = vadd.f32 %v2230, %v2492
      %v2573 = vadd.f32 %v2231, %v2497
      %v2574 = vadd.f32 %v2232, %v2500
      %v2575 = vadd.f32 %v2233, %v2505
      %v2576 = vadd.f32 %v2234, %v2508
      %v2577 = vadd.f32 %v2235, %v2513
      %v2578 = vadd.f32 %v2236, %v2516
      %v2579 = vadd.f32 %v2237, %v2521
      %v2580 = vadd.f32 %v2238, %v2524
      %v2581 = vadd.f32 %v2239, %v2529
      %v2582 = vadd.f32 %v2240, %v2532
      %v2583 = vadd.f32 %v2241, %v2537
      %v2584 = vadd.f32 %v2242, %v2540
      %v2585 = vadd.f32 %v2243, %v2545
      %v2586 = vadd.f32 %v2244, %v2548
      %v2587 = vld [vmem:[%s165 + $0x10] sm:$0xc]
      %v2588 = vld [vmem:[%s165 + $0x14] sm:$0xf]
      %v2589 = vld [vmem:[%s165 + $0x18] sm:$0xf]
      %v2590 = vld [vmem:[%s165 + $0x1c] sm:$0xf]
      %v2591 = vld [vmem:[%s165 + $0x20] sm:$0xf]
      %v2592 = vld [vmem:[%s165 + $0x24] sm:$0xf]
      %v2593 = vld [vmem:[%s165 + $0x28] sm:$0xf]
      %v2594 = vld [vmem:[%s165 + $0x2c] sm:$0xf]
      %v2595 = vld [vmem:[%s165 + $0x30] sm:$0xf]
      %v2596 = vld [vmem:[%s165 + $0x34] sm:$0xf]
      %v2597 = vld [vmem:[%s165 + $0x38] sm:$0xf]
      %v2598 = vld [vmem:[%s165 + $0x3c] sm:$0xf]
      %v2599 = vld [vmem:[%s165 + $0x40] sm:$0xf]
      %v2600 = vld [vmem:[%s165 + $0x44] sm:$0xf]
      %v2601 = vld [vmem:[%s165 + $0x48] sm:$0xf]
      %v2602 = vld [vmem:[%s165 + $0x4c] sm:$0xf]
      %v2603 = vld [vmem:[%s165 + $0x50] sm:$0xf]
      %v2604 = vld [vmem:[%s165 + $0x54] sm:$0xf]
      %v2605 = vld [vmem:[%s165 + $0x58] sm:$0xf]
      %v2606 = vld [vmem:[%s165 + $0x5c] sm:$0xf]
      %v2607 = vld [vmem:[%s165 + $0x60] sm:$0xf]
      %v2608 = vld [vmem:[%s165 + $0x64] sm:$0xf]
      %v2609 = vld [vmem:[%s165 + $0x68] sm:$0xf]
      %v2610 = vld [vmem:[%s165 + $0x6c] sm:$0xf]
      %v2611 = vld [vmem:[%s165 + $0x70] sm:$0xf]
      %v2612 = vld [vmem:[%s165 + $0x74] sm:$0xf]
      %v2613 = vld [vmem:[%s165 + $0x78] sm:$0xf]
      %v2614 = vld [vmem:[%s165 + $0x7c] sm:$0xf]
      %v2615 = vld [vmem:[%s165 + $0x80] sm:$0xf]
      %v2616 = vld [vmem:[%s165 + $0x84] sm:$0xf]
      %v2617 = vld [vmem:[%s165 + $0x88] sm:$0xf]
      %v2618 = vld [vmem:[%s165 + $0x8c] sm:$0xf]
      %v2619 = vld [vmem:[%s165 + $0x90] sm:$0xf]
      %v2620 = vld [vmem:[%s165 + $0x94] sm:$0xf]
      %v2621 = vld [vmem:[%s165 + $0x98] sm:$0xf]
      %v2622 = vld [vmem:[%s165 + $0x9c] sm:$0xf]
      %v2623 = vld [vmem:[%s165 + $0xa0] sm:$0x3]
      %s2624 = scalar_lea.vmem %s1, 192
      %v2625 = vld [vmem:[%s2624] sm:$0xf]
      %v2626 = vld [vmem:[%s2624 + $0x4] sm:$0xf]
      %v2627 = vld [vmem:[%s2624 + $0x8] sm:$0xf]
      %v2628 = vld [vmem:[%s2624 + $0xc] sm:$0xf]
      %v2629 = vld [vmem:[%s2624 + $0x10] sm:$0xf]
      %v2630 = vld [vmem:[%s2624 + $0x14] sm:$0xf]
      %v2631 = vld [vmem:[%s2624 + $0x18] sm:$0xf]
      %v2632 = vld [vmem:[%s2624 + $0x1c] sm:$0xf]
      %v2670 = vunpack.c.l.b16 %v2587
      %v2671 = vunpack.c.l.b16 %v2588
      %v2672 = vunpack.c.l.b16 %v2589
      %v2673 = vunpack.c.l.b16 %v2590
      %v2674 = vunpack.c.l.b16 %v2591
      %v2675 = vunpack.c.l.b16 %v2592
      %v2676 = vunpack.c.l.b16 %v2593
      %v2677 = vunpack.c.l.b16 %v2594
      %v2678 = vunpack.c.l.b16 %v2595
      %v2679 = vunpack.c.l.b16 %v2596
      %v2680 = vunpack.c.l.b16 %v2597
      %v2681 = vunpack.c.l.b16 %v2598
      %v2682 = vunpack.c.l.b16 %v2599
      %v2683 = vunpack.c.l.b16 %v2600
      %v2684 = vunpack.c.l.b16 %v2601
      %v2685 = vunpack.c.l.b16 %v2602
      %v2686 = vunpack.c.l.b16 %v2603
      %v2687 = vunpack.c.l.b16 %v2604
      %v2688 = vunpack.c.l.b16 %v2605
      %v2689 = vunpack.c.l.b16 %v2606
      %v2690 = vunpack.c.l.b16 %v2607
      %v2691 = vunpack.c.l.b16 %v2608
      %v2692 = vunpack.c.l.b16 %v2609
      %v2693 = vunpack.c.l.b16 %v2610
      %v2694 = vunpack.c.l.b16 %v2611
      %v2695 = vunpack.c.l.b16 %v2612
      %v2696 = vunpack.c.l.b16 %v2613
      %v2697 = vunpack.c.l.b16 %v2614
      %v2698 = vunpack.c.l.b16 %v2615
      %v2699 = vunpack.c.l.b16 %v2616
      %v2700 = vunpack.c.l.b16 %v2617
      %v2701 = vunpack.c.l.b16 %v2618
      %v2702 = vunpack.c.l.b16 %v2619
      %v2703 = vunpack.c.l.b16 %v2620
      %v2704 = vunpack.c.l.b16 %v2621
      %v2705 = vunpack.c.l.b16 %v2622
      %v2706 = vunpack.c.l.b16 %v2623
      %v2707 = vpack.c.b16 %v2671, %v2670
      %v2708 = vpack.c.b16 %v2673, %v2672
      %v2709 = vpack.c.b16 %v2675, %v2674
      %v2710 = vpack.c.b16 %v2677, %v2676
      %v2711 = vpack.c.b16 %v2679, %v2678
      %v2712 = vpack.c.b16 %v2681, %v2680
      %v2713 = vpack.c.b16 %v2683, %v2682
      %v2714 = vpack.c.b16 %v2685, %v2684
      %v2715 = vpack.c.b16 %v2687, %v2686
      %v2716 = vpack.c.b16 %v2689, %v2688
      %v2717 = vpack.c.b16 %v2691, %v2690
      %v2718 = vpack.c.b16 %v2693, %v2692
      %v2719 = vpack.c.b16 %v2695, %v2694
      %v2720 = vpack.c.b16 %v2697, %v2696
      %v2721 = vpack.c.b16 %v2699, %v2698
      %v2722 = vpack.c.b16 %v2701, %v2700
      %v2723 = vpack.c.b16 %v2703, %v2702
      %v2724 = vpack.c.b16 %v2705, %v2704
      %v2725 = vpack.c.b16 %v2706, %v2706
      %v2726 = vrot.slane %v2707, 2
      %v2727 = vrot.slane %v2708, 2
      %v2728 = vsel %vm2258, %v2726, %v2727
      %v2729 = vrot.slane %v2709, 2
      %v2730 = vsel %vm2258, %v2727, %v2729
      %v2731 = vrot.slane %v2710, 2
      %v2732 = vsel %vm2258, %v2729, %v2731
      %v2733 = vrot.slane %v2711, 2
      %v2734 = vsel %vm2258, %v2731, %v2733
      %v2735 = vrot.slane %v2712, 2
      %v2736 = vsel %vm2258, %v2733, %v2735
      %v2737 = vrot.slane %v2713, 2
      %v2738 = vsel %vm2258, %v2735, %v2737
      %v2739 = vrot.slane %v2714, 2
      %v2740 = vsel %vm2258, %v2737, %v2739
      %v2741 = vrot.slane %v2715, 2
      %v2742 = vsel %vm2258, %v2739, %v2741
      %v2743 = vrot.slane %v2716, 2
      %v2744 = vsel %vm2258, %v2741, %v2743
      %v2745 = vrot.slane %v2717, 2
      %v2746 = vsel %vm2258, %v2743, %v2745
      %v2747 = vrot.slane %v2718, 2
      %v2748 = vsel %vm2258, %v2745, %v2747
      %v2749 = vrot.slane %v2719, 2
      %v2750 = vsel %vm2258, %v2747, %v2749
      %v2751 = vrot.slane %v2720, 2
      %v2752 = vsel %vm2258, %v2749, %v2751
      %v2753 = vrot.slane %v2721, 2
      %v2754 = vsel %vm2258, %v2751, %v2753
      %v2755 = vrot.slane %v2722, 2
      %v2756 = vsel %vm2258, %v2753, %v2755
      %v2757 = vrot.slane %v2723, 2
      %v2758 = vsel %vm2258, %v2755, %v2757
      %v2759 = vrot.slane %v2724, 2
      %v2760 = vsel %vm2258, %v2757, %v2759
      %v2761 = vrot.slane %v2725, 2
      %v2762 = vsel %vm2258, %v2759, %v2761
      %v2771 = vunpack.c.l.b16 %v2625
      %v2772 = vunpack.c.l.b16 %v2626
      %v2773 = vunpack.c.l.b16 %v2627
      %v2774 = vunpack.c.l.b16 %v2628
      %v2775 = vunpack.c.l.b16 %v2629
      %v2776 = vunpack.c.l.b16 %v2630
      %v2777 = vunpack.c.l.b16 %v2631
      %v2778 = vunpack.c.l.b16 %v2632
      %v2779 = vpack.c.b16 %v2772, %v2771
      %v2780 = vpack.c.b16 %v2774, %v2773
      %v2781 = vpack.c.b16 %v2776, %v2775
      %v2782 = vpack.c.b16 %v2778, %v2777
      %v2788 = vsel %vm492, %v2728, 0
      %v2791 = vsel %vm492, %v2730, 0
      %v2794 = vsel %vm492, %v2732, 0
      %v2797 = vsel %vm492, %v2734, 0
      %v2800 = vsel %vm492, %v2736, 0
      %v2803 = vsel %vm492, %v2738, 0
      %v2806 = vsel %vm492, %v2740, 0
      %v2809 = vsel %vm492, %v2742, 0
      %v2812 = vsel %vm492, %v2744, 0
      %v2815 = vsel %vm492, %v2746, 0
      %v2818 = vsel %vm492, %v2748, 0
      %v2821 = vsel %vm492, %v2750, 0
      %v2824 = vsel %vm492, %v2752, 0
      %v2827 = vsel %vm492, %v2754, 0
      %v2830 = vsel %vm492, %v2756, 0
      %v2833 = vsel %vm492, %v2758, 0
      %v2836 = vsel %vm492, %v2760, 0
      %v2839 = vsel %vm492, %v2762, 0
      %2841 = vmatprep.subr.bf16.mxu0 0
      %2842 = vmatpush1.bf16.msra.mxu0 %v2779
      %2843 = vmatprep.subr.bf16.mxu0 0
      %2844 = vmatpush1.bf16.msra.mxu0 %v2780
      %2845 = vmatprep.subr.bf16.mxu0 0
      %2846 = vmatpush1.bf16.msra.mxu0 %v2781
      %2847 = vmatprep.subr.bf16.mxu0 0
      %2848 = vmatpush1.bf16.msra.mxu0 %v2782
      %2849 = vmatprep.subr.bf16.mxu0 0
      %2850 = vmatpush1.bf16.msra.mxu0 0
      %2851 = vmatprep.subr.bf16.mxu0 0
      %2852 = vmatpush1.bf16.msra.mxu0 0
      %2853 = vmatprep.subr.bf16.mxu0 0
      %2854 = vmatpush1.bf16.msra.mxu0 0
      %2855 = vmatprep.subr.bf16.mxu0 0
      %2856 = vmatpush1.bf16.msra.mxu0 0
      %2857 = vmatprep.subr.bf16.mxu0 0
      %2858 = vmatpush1.bf16.msra.mxu0 0
      %2859 = vmatprep.subr.bf16.mxu0 0
      %2860 = vmatpush1.bf16.msra.mxu0 0
      %2861 = vmatprep.subr.bf16.mxu0 0
      %2862 = vmatpush1.bf16.msra.mxu0 0
      %2863 = vmatprep.subr.bf16.mxu0 0
      %2864 = vmatpush1.bf16.msra.mxu0 0
      %2865 = vmatprep.subr.bf16.mxu0 0
      %2866 = vmatpush1.bf16.msra.mxu0 0
      %2867 = vmatprep.subr.bf16.mxu0 0
      %2868 = vmatpush1.bf16.msra.mxu0 0
      %2869 = vmatprep.subr.bf16.mxu0 0
      %2870 = vmatpush1.bf16.msra.mxu0 0
      %2871 = vmatprep.subr.bf16.mxu0 0
      %2872 = vmatpush1.bf16.msra.mxu0 0
      %2873 = vmatprep.mubr.bf16.mxu0 0
      %2874 = vmatmul.mubr.bf16.gmra.mrb[0].mxu0 %v2788
      %v2875 = vpop.f32.mrb[0].mxu0
      %v2876 = vadd.f32 0.0, %v2875
      %v2877 = vpop.f32.mrb[0].mxu0
      %v2878 = vpop.f32.mrb[0].mxu0
      %v2879 = vadd.f32 0.0, %v2878
      %v2880 = vpop.f32.mrb[0].mxu0
      %2881 = vmatprep.mubr.bf16.mxu0 0
      %2882 = vmatmul.mubr.bf16.gmra.mrb[0].mxu0 %v2791
      %v2883 = vpop.f32.mrb[0].mxu0
      %v2884 = vadd.f32 0.0, %v2883
      %v2885 = vpop.f32.mrb[0].mxu0
      %v2886 = vpop.f32.mrb[0].mxu0
      %v2887 = vadd.f32 0.0, %v2886
      %v2888 = vpop.f32.mrb[0].mxu0
      %2889 = vmatprep.mubr.bf16.mxu0 0
      %2890 = vmatmul.mubr.bf16.gmra.mrb[0].mxu0 %v2794
      %v2891 = vpop.f32.mrb[0].mxu0
      %v2892 = vadd.f32 0.0, %v2891
      %v2893 = vpop.f32.mrb[0].mxu0
      %v2894 = vpop.f32.mrb[0].mxu0
      %v2895 = vadd.f32 0.0, %v2894
      %v2896 = vpop.f32.mrb[0].mxu0
      %2897 = vmatprep.mubr.bf16.mxu0 0
      %2898 = vmatmul.mubr.bf16.gmra.mrb[0].mxu0 %v2797
      %v2899 = vpop.f32.mrb[0].mxu0
      %v2900 = vadd.f32 0.0, %v2899
      %v2901 = vpop.f32.mrb[0].mxu0
      %v2902 = vpop.f32.mrb[0].mxu0
      %v2903 = vadd.f32 0.0, %v2902
      %v2904 = vpop.f32.mrb[0].mxu0
      %2905 = vmatprep.mubr.bf16.mxu0 0
      %2906 = vmatmul.mubr.bf16.gmra.mrb[0].mxu0 %v2800
      %v2907 = vpop.f32.mrb[0].mxu0
      %v2908 = vadd.f32 0.0, %v2907
      %v2909 = vpop.f32.mrb[0].mxu0
      %v2910 = vpop.f32.mrb[0].mxu0
      %v2911 = vadd.f32 0.0, %v2910
      %v2912 = vpop.f32.mrb[0].mxu0
      %2913 = vmatprep.mubr.bf16.mxu0 0
      %2914 = vmatmul.mubr.bf16.gmra.mrb[0].mxu0 %v2803
      %v2915 = vpop.f32.mrb[0].mxu0
      %v2916 = vadd.f32 0.0, %v2915
      %v2917 = vpop.f32.mrb[0].mxu0
      %v2918 = vpop.f32.mrb[0].mxu0
      %v2919 = vadd.f32 0.0, %v2918
      %v2920 = vpop.f32.mrb[0].mxu0
      %2921 = vmatprep.mubr.bf16.mxu0 0
      %2922 = vmatmul.mubr.bf16.gmra.mrb[0].mxu0 %v2806
      %v2923 = vpop.f32.mrb[0].mxu0
      %v2924 = vadd.f32 0.0, %v2923
      %v2925 = vpop.f32.mrb[0].mxu0
      %v2926 = vpop.f32.mrb[0].mxu0
      %v2927 = vadd.f32 0.0, %v2926
      %v2928 = vpop.f32.mrb[0].mxu0
      %2929 = vmatprep.mubr.bf16.mxu0 0
      %2930 = vmatmul.mubr.bf16.gmra.mrb[0].mxu0 %v2809
      %v2931 = vpop.f32.mrb[0].mxu0
      %v2932 = vadd.f32 0.0, %v2931
      %v2933 = vpop.f32.mrb[0].mxu0
      %v2934 = vpop.f32.mrb[0].mxu0
      %v2935 = vadd.f32 0.0, %v2934
      %v2936 = vpop.f32.mrb[0].mxu0
      %2937 = vmatprep.mubr.bf16.mxu0 0
      %2938 = vmatmul.mubr.bf16.gmra.mrb[0].mxu0 %v2812
      %v2939 = vpop.f32.mrb[0].mxu0
      %v2940 = vadd.f32 0.0, %v2939
      %v2941 = vpop.f32.mrb[0].mxu0
      %v2942 = vpop.f32.mrb[0].mxu0
      %v2943 = vadd.f32 0.0, %v2942
      %v2944 = vpop.f32.mrb[0].mxu0
      %2945 = vmatprep.mubr.bf16.mxu0 0
      %2946 = vmatmul.mubr.bf16.gmra.mrb[0].mxu0 %v2815
      %v2947 = vpop.f32.mrb[0].mxu0
      %v2948 = vadd.f32 0.0, %v2947
      %v2949 = vpop.f32.mrb[0].mxu0
      %v2950 = vpop.f32.mrb[0].mxu0
      %v2951 = vadd.f32 0.0, %v2950
      %v2952 = vpop.f32.mrb[0].mxu0
      %2953 = vmatprep.mubr.bf16.mxu0 0
      %2954 = vmatmul.mubr.bf16.gmra.mrb[0].mxu0 %v2818
      %v2955 = vpop.f32.mrb[0].mxu0
      %v2956 = vadd.f32 0.0, %v2955
      %v2957 = vpop.f32.mrb[0].mxu0
      %v2958 = vpop.f32.mrb[0].mxu0
      %v2959 = vadd.f32 0.0, %v2958
      %v2960 = vpop.f32.mrb[0].mxu0
      %2961 = vmatprep.mubr.bf16.mxu0 0
      %2962 = vmatmul.mubr.bf16.gmra.mrb[0].mxu0 %v2821
      %v2963 = vpop.f32.mrb[0].mxu0
      %v2964 = vadd.f32 0.0, %v2963
      %v2965 = vpop.f32.mrb[0].mxu0
      %v2966 = vpop.f32.mrb[0].mxu0
      %v2967 = vadd.f32 0.0, %v2966
      %v2968 = vpop.f32.mrb[0].mxu0
      %2969 = vmatprep.mubr.bf16.mxu0 0
      %2970 = vmatmul.mubr.bf16.gmra.mrb[0].mxu0 %v2824
      %v2971 = vpop.f32.mrb[0].mxu0
      %v2972 = vadd.f32 0.0, %v2971
      %v2973 = vpop.f32.mrb[0].mxu0
      %v2974 = vpop.f32.mrb[0].mxu0
      %v2975 = vadd.f32 0.0, %v2974
      %v2976 = vpop.f32.mrb[0].mxu0
      %2977 = vmatprep.mubr.bf16.mxu0 0
      %2978 = vmatmul.mubr.bf16.gmra.mrb[0].mxu0 %v2827
      %v2979 = vpop.f32.mrb[0].mxu0
      %v2980 = vadd.f32 0.0, %v2979
      %v2981 = vpop.f32.mrb[0].mxu0
      %v2982 = vpop.f32.mrb[0].mxu0
      %v2983 = vadd.f32 0.0, %v2982
      %v2984 = vpop.f32.mrb[0].mxu0
      %2985 = vmatprep.mubr.bf16.mxu0 0
      %2986 = vmatmul.mubr.bf16.gmra.mrb[0].mxu0 %v2830
      %v2987 = vpop.f32.mrb[0].mxu0
      %v2988 = vadd.f32 0.0, %v2987
      %v2989 = vpop.f32.mrb[0].mxu0
      %v2990 = vpop.f32.mrb[0].mxu0
      %v2991 = vadd.f32 0.0, %v2990
      %v2992 = vpop.f32.mrb[0].mxu0
      %2993 = vmatprep.mubr.bf16.mxu0 0
      %2994 = vmatmul.mubr.bf16.gmra.mrb[0].mxu0 %v2833
      %v2995 = vpop.f32.mrb[0].mxu0
      %v2996 = vadd.f32 0.0, %v2995
      %v2997 = vpop.f32.mrb[0].mxu0
      %v2998 = vpop.f32.mrb[0].mxu0
      %v2999 = vadd.f32 0.0, %v2998
      %v3000 = vpop.f32.mrb[0].mxu0
      %3001 = vmatprep.mubr.bf16.mxu0 0
      %3002 = vmatmul.mubr.bf16.gmra.mrb[0].mxu0 %v2836
      %v3003 = vpop.f32.mrb[0].mxu0
      %v3004 = vadd.f32 0.0, %v3003
      %v3005 = vpop.f32.mrb[0].mxu0
      %v3006 = vpop.f32.mrb[0].mxu0
      %v3007 = vadd.f32 0.0, %v3006
      %v3008 = vpop.f32.mrb[0].mxu0
      %3009 = vmatprep.mubr.bf16.mxu0 0
      %3010 = vmatmul.mubr.bf16.gmra.mrb[0].mxu0 %v2839
      %v3011 = vpop.f32.mrb[0].mxu0
      %v3012 = vadd.f32 0.0, %v3011
      %v3013 = vpop.f32.mrb[0].mxu0
      %v3014 = vpop.f32.mrb[0].mxu0
      %v3015 = vadd.f32 0.0, %v3014
      %v3016 = vpop.f32.mrb[0].mxu0
      %3017 = vdwg.mxu0
      %v3018 = vadd.f32 %v2551, %v2876
      %v3019 = vadd.f32 %v2552, %v2879
      %v3020 = vadd.f32 %v2553, %v2884
      %v3021 = vadd.f32 %v2554, %v2887
      %v3022 = vadd.f32 %v2555, %v2892
      %v3023 = vadd.f32 %v2556, %v2895
      %v3024 = vadd.f32 %v2557, %v2900
      %v3025 = vadd.f32 %v2558, %v2903
      %v3026 = vadd.f32 %v2559, %v2908
      %v3027 = vadd.f32 %v2560, %v2911
      %v3028 = vadd.f32 %v2561, %v2916
      %v3029 = vadd.f32 %v2562, %v2919
      %v3030 = vadd.f32 %v2563, %v2924
      %v3031 = vadd.f32 %v2564, %v2927
      %v3032 = vadd.f32 %v2565, %v2932
      %v3033 = vadd.f32 %v2566, %v2935
      %v3034 = vadd.f32 %v2567, %v2940
      %v3035 = vadd.f32 %v2568, %v2943
      %v3036 = vadd.f32 %v2569, %v2948
      %v3037 = vadd.f32 %v2570, %v2951
      %v3038 = vadd.f32 %v2571, %v2956
      %v3039 = vadd.f32 %v2572, %v2959
      %v3040 = vadd.f32 %v2573, %v2964
      %v3041 = vadd.f32 %v2574, %v2967
      %v3042 = vadd.f32 %v2575, %v2972
      %v3043 = vadd.f32 %v2576, %v2975
      %v3044 = vadd.f32 %v2577, %v2980
      %v3045 = vadd.f32 %v2578, %v2983
      %v3046 = vadd.f32 %v2579, %v2988
      %v3047 = vadd.f32 %v2580, %v2991
      %v3048 = vadd.f32 %v2581, %v2996
      %v3049 = vadd.f32 %v2582, %v2999
      %v3050 = vadd.f32 %v2583, %v3004
      %v3051 = vadd.f32 %v2584, %v3007
      %v3052 = vadd.f32 %v2585, %v3012
      %v3053 = vadd.f32 %v2586, %v3015
      %v3054 = vld [vmem:[%s165 + $0xa0] sm:$0x7]
      %s3055 = scalar_lea.vmem %s1, 224
      %v3056 = vld [vmem:[%s3055] sm:$0xf]
      %v3057 = vld [vmem:[%s3055 + $0x4] sm:$0xf]
      %v3058 = vld [vmem:[%s3055 + $0x8] sm:$0xf]
      %v3059 = vld [vmem:[%s3055 + $0xc] sm:$0xf]
      %v3060 = vld [vmem:[%s3055 + $0x10] sm:$0xf]
      %v3061 = vld [vmem:[%s3055 + $0x14] sm:$0xf]
      %v3062 = vld [vmem:[%s3055 + $0x18] sm:$0xf]
      %v3063 = vld [vmem:[%s3055 + $0x1c] sm:$0xf]
      %v3065 = vunpack.c.l.b16 %v3054
      %v3066 = vpack.c.b16 %v3065, %v3065
      %vm3067 = vsmask.f32 5376
      %v3069 = vshrl.u32 %v2707, 16
      %v3071 = vrot.slane %v3069, 2
      %v3072 = vshll.u32 %v2707, 16
      %v3074 = vrot.slane %v3072, 3
      %v3075 = vor.u32 %v3071, %v3074
      %v3077 = vshrl.u32 %v2708, 16
      %v3079 = vrot.slane %v3077, 2
      %v3080 = vshll.u32 %v2708, 16
      %v3082 = vrot.slane %v3080, 3
      %v3083 = vor.u32 %v3079, %v3082
      %v3084 = vsel %vm3067, %v3075, %v3083
      %v3086 = vshrl.u32 %v2709, 16
      %v3088 = vrot.slane %v3086, 2
      %v3089 = vshll.u32 %v2709, 16
      %v3091 = vrot.slane %v3089, 3
      %v3092 = vor.u32 %v3088, %v3091
      %v3093 = vsel %vm3067, %v3083, %v3092
      %v3095 = vshrl.u32 %v2710, 16
      %v3097 = vrot.slane %v3095, 2
      %v3098 = vshll.u32 %v2710, 16
      %v3100 = vrot.slane %v3098, 3
      %v3101 = vor.u32 %v3097, %v3100
      %v3102 = vsel %vm3067, %v3092, %v3101
      %v3104 = vshrl.u32 %v2711, 16
      %v3106 = vrot.slane %v3104, 2
      %v3107 = vshll.u32 %v2711, 16
      %v3109 = vrot.slane %v3107, 3
      %v3110 = vor.u32 %v3106, %v3109
      %v3111 = vsel %vm3067, %v3101, %v3110
      %v3113 = vshrl.u32 %v2712, 16
      %v3115 = vrot.slane %v3113, 2
      %v3116 = vshll.u32 %v2712, 16
      %v3118 = vrot.slane %v3116, 3
      %v3119 = vor.u32 %v3115, %v3118
      %v3120 = vsel %vm3067, %v3110, %v3119
      %v3122 = vshrl.u32 %v2713, 16
      %v3124 = vrot.slane %v3122, 2
      %v3125 = vshll.u32 %v2713, 16
      %v3127 = vrot.slane %v3125, 3
      %v3128 = vor.u32 %v3124, %v3127
      %v3129 = vsel %vm3067, %v3119, %v3128
      %v3131 = vshrl.u32 %v2714, 16
      %v3133 = vrot.slane %v3131, 2
      %v3134 = vshll.u32 %v2714, 16
      %v3136 = vrot.slane %v3134, 3
      %v3137 = vor.u32 %v3133, %v3136
      %v3138 = vsel %vm3067, %v3128, %v3137
      %v3140 = vshrl.u32 %v2715, 16
      %v3142 = vrot.slane %v3140, 2
      %v3143 = vshll.u32 %v2715, 16
      %v3145 = vrot.slane %v3143, 3
      %v3146 = vor.u32 %v3142, %v3145
      %v3147 = vsel %vm3067, %v3137, %v3146
      %v3149 = vshrl.u32 %v2716, 16
      %v3151 = vrot.slane %v3149, 2
      %v3152 = vshll.u32 %v2716, 16
      %v3154 = vrot.slane %v3152, 3
      %v3155 = vor.u32 %v3151, %v3154
      %v3156 = vsel %vm3067, %v3146, %v3155
      %v3158 = vshrl.u32 %v2717, 16
      %v3160 = vrot.slane %v3158, 2
      %v3161 = vshll.u32 %v2717, 16
      %v3163 = vrot.slane %v3161, 3
      %v3164 = vor.u32 %v3160, %v3163
      %v3165 = vsel %vm3067, %v3155, %v3164
      %v3167 = vshrl.u32 %v2718, 16
      %v3169 = vrot.slane %v3167, 2
      %v3170 = vshll.u32 %v2718, 16
      %v3172 = vrot.slane %v3170, 3
      %v3173 = vor.u32 %v3169, %v3172
      %v3174 = vsel %vm3067, %v3164, %v3173
      %v3176 = vshrl.u32 %v2719, 16
      %v3178 = vrot.slane %v3176, 2
      %v3179 = vshll.u32 %v2719, 16
      %v3181 = vrot.slane %v3179, 3
      %v3182 = vor.u32 %v3178, %v3181
      %v3183 = vsel %vm3067, %v3173, %v3182
      %v3185 = vshrl.u32 %v2720, 16
      %v3187 = vrot.slane %v3185, 2
      %v3188 = vshll.u32 %v2720, 16
      %v3190 = vrot.slane %v3188, 3
      %v3191 = vor.u32 %v3187, %v3190
      %v3192 = vsel %vm3067, %v3182, %v3191
      %v3194 = vshrl.u32 %v2721, 16
      %v3196 = vrot.slane %v3194, 2
      %v3197 = vshll.u32 %v2721, 16
      %v3199 = vrot.slane %v3197, 3
      %v3200 = vor.u32 %v3196, %v3199
      %v3201 = vsel %vm3067, %v3191, %v3200
      %v3203 = vshrl.u32 %v2722, 16
      %v3205 = vrot.slane %v3203, 2
      %v3206 = vshll.u32 %v2722, 16
      %v3208 = vrot.slane %v3206, 3
      %v3209 = vor.u32 %v3205, %v3208
      %v3210 = vsel %vm3067, %v3200, %v3209
      %v3212 = vshrl.u32 %v2723, 16
      %v3214 = vrot.slane %v3212, 2
      %v3215 = vshll.u32 %v2723, 16
      %v3217 = vrot.slane %v3215, 3
      %v3218 = vor.u32 %v3214, %v3217
      %v3219 = vsel %vm3067, %v3209, %v3218
      %v3221 = vshrl.u32 %v2724, 16
      %v3223 = vrot.slane %v3221, 2
      %v3224 = vshll.u32 %v2724, 16
      %v3226 = vrot.slane %v3224, 3
      %v3227 = vor.u32 %v3223, %v3226
      %v3228 = vsel %vm3067, %v3218, %v3227
      %v3230 = vshrl.u32 %v3066, 16
      %v3232 = vrot.slane %v3230, 2
      %v3233 = vshll.u32 %v3066, 16
      %v3235 = vrot.slane %v3233, 3
      %v3236 = vor.u32 %v3232, %v3235
      %v3237 = vsel %vm3067, %v3227, %v3236
      %v3246 = vunpack.c.l.b16 %v3056
      %v3247 = vunpack.c.l.b16 %v3057
      %v3248 = vunpack.c.l.b16 %v3058
      %v3249 = vunpack.c.l.b16 %v3059
      %v3250 = vunpack.c.l.b16 %v3060
      %v3251 = vunpack.c.l.b16 %v3061
      %v3252 = vunpack.c.l.b16 %v3062
      %v3253 = vunpack.c.l.b16 %v3063
      %v3254 = vpack.c.b16 %v3247, %v3246
      %v3255 = vpack.c.b16 %v3249, %v3248
      %v3256 = vpack.c.b16 %v3251, %v3250
      %v3257 = vpack.c.b16 %v3253, %v3252
      %v3263 = vsel %vm492, %v3084, 0
      %v3266 = vsel %vm492, %v3093, 0
      %v3269 = vsel %vm492, %v3102, 0
      %v3272 = vsel %vm492, %v3111, 0
      %v3275 = vsel %vm492, %v3120, 0
      %v3278 = vsel %vm492, %v3129, 0
      %v3281 = vsel %vm492, %v3138, 0
      %v3284 = vsel %vm492, %v3147, 0
      %v3287 = vsel %vm492, %v3156, 0
      %v3290 = vsel %vm492, %v3165, 0
      %v3293 = vsel %vm492, %v3174, 0
      %v3296 = vsel %vm492, %v3183, 0
      %v3299 = vsel %vm492, %v3192, 0
      %v3302 = vsel %vm492, %v3201, 0
      %v3305 = vsel %vm492, %v3210, 0
      %v3308 = vsel %vm492, %v3219, 0
      %v3311 = vsel %vm492, %v3228, 0
      %v3314 = vsel %vm492, %v3237, 0
      %3316 = vmatprep.subr.bf16.mxu0 0
      %3317 = vmatpush1.bf16.msra.mxu0 %v3254
      %3318 = vmatprep.subr.bf16.mxu0 0
      %3319 = vmatpush1.bf16.msra.mxu0 %v3255
      %3320 = vmatprep.subr.bf16.mxu0 0
      %3321 = vmatpush1.bf16.msra.mxu0 %v3256
      %3322 = vmatprep.subr.bf16.mxu0 0
      %3323 = vmatpush1.bf16.msra.mxu0 %v3257
      %3324 = vmatprep.subr.bf16.mxu0 0
      %3325 = vmatpush1.bf16.msra.mxu0 0
      %3326 = vmatprep.subr.bf16.mxu0 0
      %3327 = vmatpush1.bf16.msra.mxu0 0
      %3328 = vmatprep.subr.bf16.mxu0 0
      %3329 = vmatpush1.bf16.msra.mxu0 0
      %3330 = vmatprep.subr.bf16.mxu0 0
      %3331 = vmatpush1.bf16.msra.mxu0 0
      %3332 = vmatprep.subr.bf16.mxu0 0
      %3333 = vmatpush1.bf16.msra.mxu0 0
      %3334 = vmatprep.subr.bf16.mxu0 0
      %3335 = vmatpush1.bf16.msra.mxu0 0
      %3336 = vmatprep.subr.bf16.mxu0 0
      %3337 = vmatpush1.bf16.msra.mxu0 0
      %3338 = vmatprep.subr.bf16.mxu0 0
      %3339 = vmatpush1.bf16.msra.mxu0 0
      %3340 = vmatprep.subr.bf16.mxu0 0
      %3341 = vmatpush1.bf16.msra.mxu0 0
      %3342 = vmatprep.subr.bf16.mxu0 0
      %3343 = vmatpush1.bf16.msra.mxu0 0
      %3344 = vmatprep.subr.bf16.mxu0 0
      %3345 = vmatpush1.bf16.msra.mxu0 0
      %3346 = vmatprep.subr.bf16.mxu0 0
      %3347 = vmatpush1.bf16.msra.mxu0 0
      %3348 = vmatprep.mubr.bf16.mxu0 0
      %3349 = vmatmul.mubr.bf16.gmra.mrb[0].mxu0 %v3263
      %v3350 = vpop.f32.mrb[0].mxu0
      %v3351 = vadd.f32 0.0, %v3350
      %v3352 = vpop.f32.mrb[0].mxu0
      %v3353 = vpop.f32.mrb[0].mxu0
      %v3354 = vadd.f32 0.0, %v3353
      %v3355 = vpop.f32.mrb[0].mxu0
      %3356 = vmatprep.mubr.bf16.mxu0 0
      %3357 = vmatmul.mubr.bf16.gmra.mrb[0].mxu0 %v3266
      %v3358 = vpop.f32.mrb[0].mxu0
      %v3359 = vadd.f32 0.0, %v3358
      %v3360 = vpop.f32.mrb[0].mxu0
      %v3361 = vpop.f32.mrb[0].mxu0
      %v3362 = vadd.f32 0.0, %v3361
      %v3363 = vpop.f32.mrb[0].mxu0
      %3364 = vmatprep.mubr.bf16.mxu0 0
      %3365 = vmatmul.mubr.bf16.gmra.mrb[0].mxu0 %v3269
      %v3366 = vpop.f32.mrb[0].mxu0
      %v3367 = vadd.f32 0.0, %v3366
      %v3368 = vpop.f32.mrb[0].mxu0
      %v3369 = vpop.f32.mrb[0].mxu0
      %v3370 = vadd.f32 0.0, %v3369
      %v3371 = vpop.f32.mrb[0].mxu0
      %3372 = vmatprep.mubr.bf16.mxu0 0
      %3373 = vmatmul.mubr.bf16.gmra.mrb[0].mxu0 %v3272
      %v3374 = vpop.f32.mrb[0].mxu0
      %v3375 = vadd.f32 0.0, %v3374
      %v3376 = vpop.f32.mrb[0].mxu0
      %v3377 = vpop.f32.mrb[0].mxu0
      %v3378 = vadd.f32 0.0, %v3377
      %v3379 = vpop.f32.mrb[0].mxu0
      %3380 = vmatprep.mubr.bf16.mxu0 0
      %3381 = vmatmul.mubr.bf16.gmra.mrb[0].mxu0 %v3275
      %v3382 = vpop.f32.mrb[0].mxu0
      %v3383 = vadd.f32 0.0, %v3382
      %v3384 = vpop.f32.mrb[0].mxu0
      %v3385 = vpop.f32.mrb[0].mxu0
      %v3386 = vadd.f32 0.0, %v3385
      %v3387 = vpop.f32.mrb[0].mxu0
      %3388 = vmatprep.mubr.bf16.mxu0 0
      %3389 = vmatmul.mubr.bf16.gmra.mrb[0].mxu0 %v3278
      %v3390 = vpop.f32.mrb[0].mxu0
      %v3391 = vadd.f32 0.0, %v3390
      %v3392 = vpop.f32.mrb[0].mxu0
      %v3393 = vpop.f32.mrb[0].mxu0
      %v3394 = vadd.f32 0.0, %v3393
      %v3395 = vpop.f32.mrb[0].mxu0
      %3396 = vmatprep.mubr.bf16.mxu0 0
      %3397 = vmatmul.mubr.bf16.gmra.mrb[0].mxu0 %v3281
      %v3398 = vpop.f32.mrb[0].mxu0
      %v3399 = vadd.f32 0.0, %v3398
      %v3400 = vpop.f32.mrb[0].mxu0
      %v3401 = vpop.f32.mrb[0].mxu0
      %v3402 = vadd.f32 0.0, %v3401
      %v3403 = vpop.f32.mrb[0].mxu0
      %3404 = vmatprep.mubr.bf16.mxu0 0
      %3405 = vmatmul.mubr.bf16.gmra.mrb[0].mxu0 %v3284
      %v3406 = vpop.f32.mrb[0].mxu0
      %v3407 = vadd.f32 0.0, %v3406
      %v3408 = vpop.f32.mrb[0].mxu0
      %v3409 = vpop.f32.mrb[0].mxu0
      %v3410 = vadd.f32 0.0, %v3409
      %v3411 = vpop.f32.mrb[0].mxu0
      %3412 = vmatprep.mubr.bf16.mxu0 0
      %3413 = vmatmul.mubr.bf16.gmra.mrb[0].mxu0 %v3287
      %v3414 = vpop.f32.mrb[0].mxu0
      %v3415 = vadd.f32 0.0, %v3414
      %v3416 = vpop.f32.mrb[0].mxu0
      %v3417 = vpop.f32.mrb[0].mxu0
      %v3418 = vadd.f32 0.0, %v3417
      %v3419 = vpop.f32.mrb[0].mxu0
      %3420 = vmatprep.mubr.bf16.mxu0 0
      %3421 = vmatmul.mubr.bf16.gmra.mrb[0].mxu0 %v3290
      %v3422 = vpop.f32.mrb[0].mxu0
      %v3423 = vadd.f32 0.0, %v3422
      %v3424 = vpop.f32.mrb[0].mxu0
      %v3425 = vpop.f32.mrb[0].mxu0
      %v3426 = vadd.f32 0.0, %v3425
      %v3427 = vpop.f32.mrb[0].mxu0
      %3428 = vmatprep.mubr.bf16.mxu0 0
      %3429 = vmatmul.mubr.bf16.gmra.mrb[0].mxu0 %v3293
      %v3430 = vpop.f32.mrb[0].mxu0
      %v3431 = vadd.f32 0.0, %v3430
      %v3432 = vpop.f32.mrb[0].mxu0
      %v3433 = vpop.f32.mrb[0].mxu0
      %v3434 = vadd.f32 0.0, %v3433
      %v3435 = vpop.f32.mrb[0].mxu0
      %3436 = vmatprep.mubr.bf16.mxu0 0
      %3437 = vmatmul.mubr.bf16.gmra.mrb[0].mxu0 %v3296
      %v3438 = vpop.f32.mrb[0].mxu0
      %v3439 = vadd.f32 0.0, %v3438
      %v3440 = vpop.f32.mrb[0].mxu0
      %v3441 = vpop.f32.mrb[0].mxu0
      %v3442 = vadd.f32 0.0, %v3441
      %v3443 = vpop.f32.mrb[0].mxu0
      %3444 = vmatprep.mubr.bf16.mxu0 0
      %3445 = vmatmul.mubr.bf16.gmra.mrb[0].mxu0 %v3299
      %v3446 = vpop.f32.mrb[0].mxu0
      %v3447 = vadd.f32 0.0, %v3446
      %v3448 = vpop.f32.mrb[0].mxu0
      %v3449 = vpop.f32.mrb[0].mxu0
      %v3450 = vadd.f32 0.0, %v3449
      %v3451 = vpop.f32.mrb[0].mxu0
      %3452 = vmatprep.mubr.bf16.mxu0 0
      %3453 = vmatmul.mubr.bf16.gmra.mrb[0].mxu0 %v3302
      %v3454 = vpop.f32.mrb[0].mxu0
      %v3455 = vadd.f32 0.0, %v3454
      %v3456 = vpop.f32.mrb[0].mxu0
      %v3457 = vpop.f32.mrb[0].mxu0
      %v3458 = vadd.f32 0.0, %v3457
      %v3459 = vpop.f32.mrb[0].mxu0
      %3460 = vmatprep.mubr.bf16.mxu0 0
      %3461 = vmatmul.mubr.bf16.gmra.mrb[0].mxu0 %v3305
      %v3462 = vpop.f32.mrb[0].mxu0
      %v3463 = vadd.f32 0.0, %v3462
      %v3464 = vpop.f32.mrb[0].mxu0
      %v3465 = vpop.f32.mrb[0].mxu0
      %v3466 = vadd.f32 0.0, %v3465
      %v3467 = vpop.f32.mrb[0].mxu0
      %3468 = vmatprep.mubr.bf16.mxu0 0
      %3469 = vmatmul.mubr.bf16.gmra.mrb[0].mxu0 %v3308
      %v3470 = vpop.f32.mrb[0].mxu0
      %v3471 = vadd.f32 0.0, %v3470
      %v3472 = vpop.f32.mrb[0].mxu0
      %v3473 = vpop.f32.mrb[0].mxu0
      %v3474 = vadd.f32 0.0, %v3473
      %v3475 = vpop.f32.mrb[0].mxu0
      %3476 = vmatprep.mubr.bf16.mxu0 0
      %3477 = vmatmul.mubr.bf16.gmra.mrb[0].mxu0 %v3311
      %v3478 = vpop.f32.mrb[0].mxu0
      %v3479 = vadd.f32 0.0, %v3478
      %v3480 = vpop.f32.mrb[0].mxu0
      %v3481 = vpop.f32.mrb[0].mxu0
      %v3482 = vadd.f32 0.0, %v3481
      %v3483 = vpop.f32.mrb[0].mxu0
      %3484 = vmatprep.mubr.bf16.mxu0 0
      %3485 = vmatmul.mubr.bf16.gmra.mrb[0].mxu0 %v3314
      %v3486 = vpop.f32.mrb[0].mxu0
      %v3487 = vadd.f32 0.0, %v3486
      %v3488 = vpop.f32.mrb[0].mxu0
      %v3489 = vpop.f32.mrb[0].mxu0
      %v3490 = vadd.f32 0.0, %v3489
      %v3491 = vpop.f32.mrb[0].mxu0
      %3492 = vdwg.mxu0
      %v3493 = vadd.f32 %v3018, %v3351
      %v3494 = vadd.f32 %v3019, %v3354
      %v3495 = vadd.f32 %v3020, %v3359
      %v3496 = vadd.f32 %v3021, %v3362
      %v3497 = vadd.f32 %v3022, %v3367
      %v3498 = vadd.f32 %v3023, %v3370
      %v3499 = vadd.f32 %v3024, %v3375
      %v3500 = vadd.f32 %v3025, %v3378
      %v3501 = vadd.f32 %v3026, %v3383
      %v3502 = vadd.f32 %v3027, %v3386
      %v3503 = vadd.f32 %v3028, %v3391
      %v3504 = vadd.f32 %v3029, %v3394
      %v3505 = vadd.f32 %v3030, %v3399
      %v3506 = vadd.f32 %v3031, %v3402
      %v3507 = vadd.f32 %v3032, %v3407
      %v3508 = vadd.f32 %v3033, %v3410
      %v3509 = vadd.f32 %v3034, %v3415
      %v3510 = vadd.f32 %v3035, %v3418
      %v3511 = vadd.f32 %v3036, %v3423
      %v3512 = vadd.f32 %v3037, %v3426
      %v3513 = vadd.f32 %v3038, %v3431
      %v3514 = vadd.f32 %v3039, %v3434
      %v3515 = vadd.f32 %v3040, %v3439
      %v3516 = vadd.f32 %v3041, %v3442
      %v3517 = vadd.f32 %v3042, %v3447
      %v3518 = vadd.f32 %v3043, %v3450
      %v3519 = vadd.f32 %v3044, %v3455
      %v3520 = vadd.f32 %v3045, %v3458
      %v3521 = vadd.f32 %v3046, %v3463
      %v3522 = vadd.f32 %v3047, %v3466
      %v3523 = vadd.f32 %v3048, %v3471
      %v3524 = vadd.f32 %v3049, %v3474
      %v3525 = vadd.f32 %v3050, %v3479
      %v3526 = vadd.f32 %v3051, %v3482
      %v3527 = vadd.f32 %v3052, %v3487
      %v3528 = vadd.f32 %v3053, %v3490
      %v3529 = vld [vmem:[%s165 + $0x10] sm:$0x8]
      %s3530 = scalar_lea.vmem %s1, 256
      %v3531 = vld [vmem:[%s3530] sm:$0xf]
      %v3532 = vld [vmem:[%s3530 + $0x4] sm:$0xf]
      %v3533 = vld [vmem:[%s3530 + $0x8] sm:$0xf]
      %v3534 = vld [vmem:[%s3530 + $0xc] sm:$0xf]
      %v3535 = vld [vmem:[%s3530 + $0x10] sm:$0xf]
      %v3536 = vld [vmem:[%s3530 + $0x14] sm:$0xf]
      %v3537 = vld [vmem:[%s3530 + $0x18] sm:$0xf]
      %v3538 = vld [vmem:[%s3530 + $0x1c] sm:$0xf]
      %v3540 = vunpack.c.l.b16 %v3529
      %v3541 = vpack.c.b16 %v2671, %v3540
      %vm3542 = vcmask 1044480
      %v3543 = vrot.slane %v3541, 3
      %v3544 = vrot.slane %v2708, 3
      %v3545 = vsel %vm3542, %v3543, %v3544
      %v3546 = vrot.slane %v2709, 3
      %v3547 = vsel %vm3542, %v3544, %v3546
      %v3548 = vrot.slane %v2710, 3
      %v3549 = vsel %vm3542, %v3546, %v3548
      %v3550 = vrot.slane %v2711, 3
      %v3551 = vsel %vm3542, %v3548, %v3550
      %v3552 = vrot.slane %v2712, 3
      %v3553 = vsel %vm3542, %v3550, %v3552
      %v3554 = vrot.slane %v2713, 3
      %v3555 = vsel %vm3542, %v3552, %v3554
      %v3556 = vrot.slane %v2714, 3
      %v3557 = vsel %vm3542, %v3554, %v3556
      %v3558 = vrot.slane %v2715, 3
      %v3559 = vsel %vm3542, %v3556, %v3558
      %v3560 = vrot.slane %v2716, 3
      %v3561 = vsel %vm3542, %v3558, %v3560
      %v3562 = vrot.slane %v2717, 3
      %v3563 = vsel %vm3542, %v3560, %v3562
      %v3564 = vrot.slane %v2718, 3
      %v3565 = vsel %vm3542, %v3562, %v3564
      %v3566 = vrot.slane %v2719, 3
      %v3567 = vsel %vm3542, %v3564, %v3566
      %v3568 = vrot.slane %v2720, 3
      %v3569 = vsel %vm3542, %v3566, %v3568
      %v3570 = vrot.slane %v2721, 3
      %v3571 = vsel %vm3542, %v3568, %v3570
      %v3572 = vrot.slane %v2722, 3
      %v3573 = vsel %vm3542, %v3570, %v3572
      %v3574 = vrot.slane %v2723, 3
      %v3575 = vsel %vm3542, %v3572, %v3574
      %v3576 = vrot.slane %v2724, 3
      %v3577 = vsel %vm3542, %v3574, %v3576
      %v3578 = vrot.slane %v3066, 3
      %v3579 = vsel %vm3542, %v3576, %v3578
      %v3588 = vunpack.c.l.b16 %v3531
      %v3589 = vunpack.c.l.b16 %v3532
      %v3590 = vunpack.c.l.b16 %v3533
      %v3591 = vunpack.c.l.b16 %v3534
      %v3592 = vunpack.c.l.b16 %v3535
      %v3593 = vunpack.c.l.b16 %v3536
      %v3594 = vunpack.c.l.b16 %v3537
      %v3595 = vunpack.c.l.b16 %v3538
      %v3596 = vpack.c.b16 %v3589, %v3588
      %v3597 = vpack.c.b16 %v3591, %v3590
      %v3598 = vpack.c.b16 %v3593, %v3592
      %v3599 = vpack.c.b16 %v3595, %v3594
      %v3605 = vsel %vm492, %v3545, 0
      %v3608 = vsel %vm492, %v3547, 0
      %v3611 = vsel %vm492, %v3549, 0
      %v3614 = vsel %vm492, %v3551, 0
      %v3617 = vsel %vm492, %v3553, 0
      %v3620 = vsel %vm492, %v3555, 0
      %v3623 = vsel %vm492, %v3557, 0
      %v3626 = vsel %vm492, %v3559, 0
      %v3629 = vsel %vm492, %v3561, 0
      %v3632 = vsel %vm492, %v3563, 0
      %v3635 = vsel %vm492, %v3565, 0
      %v3638 = vsel %vm492, %v3567, 0
      %v3641 = vsel %vm492, %v3569, 0
      %v3644 = vsel %vm492, %v3571, 0
      %v3647 = vsel %vm492, %v3573, 0
      %v3650 = vsel %vm492, %v3575, 0
      %v3653 = vsel %vm492, %v3577, 0
      %v3656 = vsel %vm492, %v3579, 0
      %3658 = vmatprep.subr.bf16.mxu0 0
      %3659 = vmatpush1.bf16.msra.mxu0 %v3596
      %3660 = vmatprep.subr.bf16.mxu0 0
      %3661 = vmatpush1.bf16.msra.mxu0 %v3597
      %3662 = vmatprep.subr.bf16.mxu0 0
      %3663 = vmatpush1.bf16.msra.mxu0 %v3598
      %3664 = vmatprep.subr.bf16.mxu0 0
      %3665 = vmatpush1.bf16.msra.mxu0 %v3599
      %3666 = vmatprep.subr.bf16.mxu0 0
      %3667 = vmatpush1.bf16.msra.mxu0 0
      %3668 = vmatprep.subr.bf16.mxu0 0
      %3669 = vmatpush1.bf16.msra.mxu0 0
      %3670 = vmatprep.subr.bf16.mxu0 0
      %3671 = vmatpush1.bf16.msra.mxu0 0
      %3672 = vmatprep.subr.bf16.mxu0 0
      %3673 = vmatpush1.bf16.msra.mxu0 0
      %3674 = vmatprep.subr.bf16.mxu0 0
      %3675 = vmatpush1.bf16.msra.mxu0 0
      %3676 = vmatprep.subr.bf16.mxu0 0
      %3677 = vmatpush1.bf16.msra.mxu0 0
      %3678 = vmatprep.subr.bf16.mxu0 0
      %3679 = vmatpush1.bf16.msra.mxu0 0
      %3680 = vmatprep.subr.bf16.mxu0 0
      %3681 = vmatpush1.bf16.msra.mxu0 0
      %3682 = vmatprep.subr.bf16.mxu0 0
      %3683 = vmatpush1.bf16.msra.mxu0 0
      %3684 = vmatprep.subr.bf16.mxu0 0
      %3685 = vmatpush1.bf16.msra.mxu0 0
      %3686 = vmatprep.subr.bf16.mxu0 0
      %3687 = vmatpush1.bf16.msra.mxu0 0
      %3688 = vmatprep.subr.bf16.mxu0 0
      %3689 = vmatpush1.bf16.msra.mxu0 0
      %3690 = vmatprep.mubr.bf16.mxu0 0
      %3691 = vmatmul.mubr.bf16.gmra.mrb[0].mxu0 %v3605
      %v3692 = vpop.f32.mrb[0].mxu0
      %v3693 = vadd.f32 0.0, %v3692
      %v3694 = vpop.f32.mrb[0].mxu0
      %v3695 = vpop.f32.mrb[0].mxu0
      %v3696 = vadd.f32 0.0, %v3695
      %v3697 = vpop.f32.mrb[0].mxu0
      %3698 = vmatprep.mubr.bf16.mxu0 0
      %3699 = vmatmul.mubr.bf16.gmra.mrb[0].mxu0 %v3608
      %v3700 = vpop.f32.mrb[0].mxu0
      %v3701 = vadd.f32 0.0, %v3700
      %v3702 = vpop.f32.mrb[0].mxu0
      %v3703 = vpop.f32.mrb[0].mxu0
      %v3704 = vadd.f32 0.0, %v3703
      %v3705 = vpop.f32.mrb[0].mxu0
      %3706 = vmatprep.mubr.bf16.mxu0 0
      %3707 = vmatmul.mubr.bf16.gmra.mrb[0].mxu0 %v3611
      %v3708 = vpop.f32.mrb[0].mxu0
      %v3709 = vadd.f32 0.0, %v3708
      %v3710 = vpop.f32.mrb[0].mxu0
      %v3711 = vpop.f32.mrb[0].mxu0
      %v3712 = vadd.f32 0.0, %v3711
      %v3713 = vpop.f32.mrb[0].mxu0
      %3714 = vmatprep.mubr.bf16.mxu0 0
      %3715 = vmatmul.mubr.bf16.gmra.mrb[0].mxu0 %v3614
      %v3716 = vpop.f32.mrb[0].mxu0
      %v3717 = vadd.f32 0.0, %v3716
      %v3718 = vpop.f32.mrb[0].mxu0
      %v3719 = vpop.f32.mrb[0].mxu0
      %v3720 = vadd.f32 0.0, %v3719
      %v3721 = vpop.f32.mrb[0].mxu0
      %3722 = vmatprep.mubr.bf16.mxu0 0
      %3723 = vmatmul.mubr.bf16.gmra.mrb[0].mxu0 %v3617
      %v3724 = vpop.f32.mrb[0].mxu0
      %v3725 = vadd.f32 0.0, %v3724
      %v3726 = vpop.f32.mrb[0].mxu0
      %v3727 = vpop.f32.mrb[0].mxu0
      %v3728 = vadd.f32 0.0, %v3727
      %v3729 = vpop.f32.mrb[0].mxu0
      %3730 = vmatprep.mubr.bf16.mxu0 0
      %3731 = vmatmul.mubr.bf16.gmra.mrb[0].mxu0 %v3620
      %v3732 = vpop.f32.mrb[0].mxu0
      %v3733 = vadd.f32 0.0, %v3732
      %v3734 = vpop.f32.mrb[0].mxu0
      %v3735 = vpop.f32.mrb[0].mxu0
      %v3736 = vadd.f32 0.0, %v3735
      %v3737 = vpop.f32.mrb[0].mxu0
      %3738 = vmatprep.mubr.bf16.mxu0 0
      %3739 = vmatmul.mubr.bf16.gmra.mrb[0].mxu0 %v3623
      %v3740 = vpop.f32.mrb[0].mxu0
      %v3741 = vadd.f32 0.0, %v3740
      %v3742 = vpop.f32.mrb[0].mxu0
      %v3743 = vpop.f32.mrb[0].mxu0
      %v3744 = vadd.f32 0.0, %v3743
      %v3745 = vpop.f32.mrb[0].mxu0
      %3746 = vmatprep.mubr.bf16.mxu0 0
      %3747 = vmatmul.mubr.bf16.gmra.mrb[0].mxu0 %v3626
      %v3748 = vpop.f32.mrb[0].mxu0
      %v3749 = vadd.f32 0.0, %v3748
      %v3750 = vpop.f32.mrb[0].mxu0
      %v3751 = vpop.f32.mrb[0].mxu0
      %v3752 = vadd.f32 0.0, %v3751
      %v3753 = vpop.f32.mrb[0].mxu0
      %3754 = vmatprep.mubr.bf16.mxu0 0
      %3755 = vmatmul.mubr.bf16.gmra.mrb[0].mxu0 %v3629
      %v3756 = vpop.f32.mrb[0].mxu0
      %v3757 = vadd.f32 0.0, %v3756
      %v3758 = vpop.f32.mrb[0].mxu0
      %v3759 = vpop.f32.mrb[0].mxu0
      %v3760 = vadd.f32 0.0, %v3759
      %v3761 = vpop.f32.mrb[0].mxu0
      %3762 = vmatprep.mubr.bf16.mxu0 0
      %3763 = vmatmul.mubr.bf16.gmra.mrb[0].mxu0 %v3632
      %v3764 = vpop.f32.mrb[0].mxu0
      %v3765 = vadd.f32 0.0, %v3764
      %v3766 = vpop.f32.mrb[0].mxu0
      %v3767 = vpop.f32.mrb[0].mxu0
      %v3768 = vadd.f32 0.0, %v3767
      %v3769 = vpop.f32.mrb[0].mxu0
      %3770 = vmatprep.mubr.bf16.mxu0 0
      %3771 = vmatmul.mubr.bf16.gmra.mrb[0].mxu0 %v3635
      %v3772 = vpop.f32.mrb[0].mxu0
      %v3773 = vadd.f32 0.0, %v3772
      %v3774 = vpop.f32.mrb[0].mxu0
      %v3775 = vpop.f32.mrb[0].mxu0
      %v3776 = vadd.f32 0.0, %v3775
      %v3777 = vpop.f32.mrb[0].mxu0
      %3778 = vmatprep.mubr.bf16.mxu0 0
      %3779 = vmatmul.mubr.bf16.gmra.mrb[0].mxu0 %v3638
      %v3780 = vpop.f32.mrb[0].mxu0
      %v3781 = vadd.f32 0.0, %v3780
      %v3782 = vpop.f32.mrb[0].mxu0
      %v3783 = vpop.f32.mrb[0].mxu0
      %v3784 = vadd.f32 0.0, %v3783
      %v3785 = vpop.f32.mrb[0].mxu0
      %3786 = vmatprep.mubr.bf16.mxu0 0
      %3787 = vmatmul.mubr.bf16.gmra.mrb[0].mxu0 %v3641
      %v3788 = vpop.f32.mrb[0].mxu0
      %v3789 = vadd.f32 0.0, %v3788
      %v3790 = vpop.f32.mrb[0].mxu0
      %v3791 = vpop.f32.mrb[0].mxu0
      %v3792 = vadd.f32 0.0, %v3791
      %v3793 = vpop.f32.mrb[0].mxu0
      %3794 = vmatprep.mubr.bf16.mxu0 0
      %3795 = vmatmul.mubr.bf16.gmra.mrb[0].mxu0 %v3644
      %v3796 = vpop.f32.mrb[0].mxu0
      %v3797 = vadd.f32 0.0, %v3796
      %v3798 = vpop.f32.mrb[0].mxu0
      %v3799 = vpop.f32.mrb[0].mxu0
      %v3800 = vadd.f32 0.0, %v3799
      %v3801 = vpop.f32.mrb[0].mxu0
      %3802 = vmatprep.mubr.bf16.mxu0 0
      %3803 = vmatmul.mubr.bf16.gmra.mrb[0].mxu0 %v3647
      %v3804 = vpop.f32.mrb[0].mxu0
      %v3805 = vadd.f32 0.0, %v3804
      %v3806 = vpop.f32.mrb[0].mxu0
      %v3807 = vpop.f32.mrb[0].mxu0
      %v3808 = vadd.f32 0.0, %v3807
      %v3809 = vpop.f32.mrb[0].mxu0
      %3810 = vmatprep.mubr.bf16.mxu0 0
      %3811 = vmatmul.mubr.bf16.gmra.mrb[0].mxu0 %v3650
      %v3812 = vpop.f32.mrb[0].mxu0
      %v3813 = vadd.f32 0.0, %v3812
      %v3814 = vpop.f32.mrb[0].mxu0
      %v3815 = vpop.f32.mrb[0].mxu0
      %v3816 = vadd.f32 0.0, %v3815
      %v3817 = vpop.f32.mrb[0].mxu0
      %3818 = vmatprep.mubr.bf16.mxu0 0
      %3819 = vmatmul.mubr.bf16.gmra.mrb[0].mxu0 %v3653
      %v3820 = vpop.f32.mrb[0].mxu0
      %v3821 = vadd.f32 0.0, %v3820
      %v3822 = vpop.f32.mrb[0].mxu0
      %v3823 = vpop.f32.mrb[0].mxu0
      %v3824 = vadd.f32 0.0, %v3823
      %v3825 = vpop.f32.mrb[0].mxu0
      %3826 = vmatprep.mubr.bf16.mxu0 0
      %3827 = vmatmul.mubr.bf16.gmra.mrb[0].mxu0 %v3656
      %v3828 = vpop.f32.mrb[0].mxu0
      %v3829 = vadd.f32 0.0, %v3828
      %v3830 = vpop.f32.mrb[0].mxu0
      %v3831 = vpop.f32.mrb[0].mxu0
      %v3832 = vadd.f32 0.0, %v3831
      %v3833 = vpop.f32.mrb[0].mxu0
      %3834 = vdwg.mxu0
      %v3835 = vadd.f32 %v3493, %v3693
      %v3836 = vadd.f32 %v3494, %v3696
      %v3837 = vadd.f32 %v3495, %v3701
      %v3838 = vadd.f32 %v3496, %v3704
      %v3839 = vadd.f32 %v3497, %v3709
      %v3840 = vadd.f32 %v3498, %v3712
      %v3841 = vadd.f32 %v3499, %v3717
      %v3842 = vadd.f32 %v3500, %v3720
      %v3843 = vadd.f32 %v3501, %v3725
      %v3844 = vadd.f32 %v3502, %v3728
      %v3845 = vadd.f32 %v3503, %v3733
      %v3846 = vadd.f32 %v3504, %v3736
      %v3847 = vadd.f32 %v3505, %v3741
      %v3848 = vadd.f32 %v3506, %v3744
      %v3849 = vadd.f32 %v3507, %v3749
      %v3850 = vadd.f32 %v3508, %v3752
      %v3851 = vadd.f32 %v3509, %v3757
      %v3852 = vadd.f32 %v3510, %v3760
      %v3853 = vadd.f32 %v3511, %v3765
      %v3854 = vadd.f32 %v3512, %v3768
      %v3855 = vadd.f32 %v3513, %v3773
      %v3856 = vadd.f32 %v3514, %v3776
      %v3857 = vadd.f32 %v3515, %v3781
      %v3858 = vadd.f32 %v3516, %v3784
      %v3859 = vadd.f32 %v3517, %v3789
      %v3860 = vadd.f32 %v3518, %v3792
      %v3861 = vadd.f32 %v3519, %v3797
      %v3862 = vadd.f32 %v3520, %v3800
      %v3863 = vadd.f32 %v3521, %v3805
      %v3864 = vadd.f32 %v3522, %v3808
      %v3865 = vadd.f32 %v3523, %v3813
      %v3866 = vadd.f32 %v3524, %v3816
      %v3867 = vadd.f32 %v3525, %v3821
      %v3868 = vadd.f32 %v3526, %v3824
      %v3869 = vadd.f32 %v3527, %v3829
      %v3870 = vadd.f32 %v3528, %v3832
      %v3871 = vld [vmem:[%s2] sm:$0x1]
      %v3873 = vlaneseq
      %v3874 = vshrl.u32 %v3873, 7
      %v3875 = vsub.s32 0, %v3874
      %v3876 = vrot.slane %v3871, %v3875
      %v3878 = vadd.f32 %v3835, %v3876
      %v3879 = vadd.f32 %v3836, %v3876
      %v3880 = vadd.f32 %v3837, %v3876
      %v3881 = vadd.f32 %v3838, %v3876
      %v3882 = vadd.f32 %v3839, %v3876
      %v3883 = vadd.f32 %v3840, %v3876
      %v3884 = vadd.f32 %v3841, %v3876
      %v3885 = vadd.f32 %v3842, %v3876
      %v3886 = vadd.f32 %v3843, %v3876
      %v3887 = vadd.f32 %v3844, %v3876
      %v3888 = vadd.f32 %v3845, %v3876
      %v3889 = vadd.f32 %v3846, %v3876
      %v3890 = vadd.f32 %v3847, %v3876
      %v3891 = vadd.f32 %v3848, %v3876
      %v3892 = vadd.f32 %v3849, %v3876
      %v3893 = vadd.f32 %v3850, %v3876
      %v3894 = vadd.f32 %v3851, %v3876
      %v3895 = vadd.f32 %v3852, %v3876
      %v3896 = vadd.f32 %v3853, %v3876
      %v3897 = vadd.f32 %v3854, %v3876
      %v3898 = vadd.f32 %v3855, %v3876
      %v3899 = vadd.f32 %v3856, %v3876
      %v3900 = vadd.f32 %v3857, %v3876
      %v3901 = vadd.f32 %v3858, %v3876
      %v3902 = vadd.f32 %v3859, %v3876
      %v3903 = vadd.f32 %v3860, %v3876
      %v3904 = vadd.f32 %v3861, %v3876
      %v3905 = vadd.f32 %v3862, %v3876
      %v3906 = vadd.f32 %v3863, %v3876
      %v3907 = vadd.f32 %v3864, %v3876
      %v3908 = vadd.f32 %v3865, %v3876
      %v3909 = vadd.f32 %v3866, %v3876
      %v3910 = vadd.f32 %v3867, %v3876
      %v3911 = vadd.f32 %v3868, %v3876
      %v3912 = vadd.f32 %v3869, %v3876
      %v3913 = vadd.f32 %v3870, %v3876
      %v3914 = vmax.f32 %v3878, 0.0
      %v3915 = vmax.f32 %v3879, 0.0
      %v3916 = vmax.f32 %v3880, 0.0
      %v3917 = vmax.f32 %v3881, 0.0
      %v3918 = vmax.f32 %v3882, 0.0
      %v3919 = vmax.f32 %v3883, 0.0
      %v3920 = vmax.f32 %v3884, 0.0
      %v3921 = vmax.f32 %v3885, 0.0
      %v3922 = vmax.f32 %v3886, 0.0
      %v3923 = vmax.f32 %v3887, 0.0
      %v3924 = vmax.f32 %v3888, 0.0
      %v3925 = vmax.f32 %v3889, 0.0
      %v3926 = vmax.f32 %v3890, 0.0
      %v3927 = vmax.f32 %v3891, 0.0
      %v3928 = vmax.f32 %v3892, 0.0
      %v3929 = vmax.f32 %v3893, 0.0
      %v3930 = vmax.f32 %v3894, 0.0
      %v3931 = vmax.f32 %v3895, 0.0
      %v3932 = vmax.f32 %v3896, 0.0
      %v3933 = vmax.f32 %v3897, 0.0
      %v3934 = vmax.f32 %v3898, 0.0
      %v3935 = vmax.f32 %v3899, 0.0
      %v3936 = vmax.f32 %v3900, 0.0
      %v3937 = vmax.f32 %v3901, 0.0
      %v3938 = vmax.f32 %v3902, 0.0
      %v3939 = vmax.f32 %v3903, 0.0
      %v3940 = vmax.f32 %v3904, 0.0
      %v3941 = vmax.f32 %v3905, 0.0
      %v3942 = vmax.f32 %v3906, 0.0
      %v3943 = vmax.f32 %v3907, 0.0
      %v3944 = vmax.f32 %v3908, 0.0
      %v3945 = vmax.f32 %v3909, 0.0
      %v3946 = vmax.f32 %v3910, 0.0
      %v3947 = vmax.f32 %v3911, 0.0
      %v3948 = vmax.f32 %v3912, 0.0
      %v3949 = vmax.f32 %v3913, 0.0
      %v3950 = vpack.c.bf16 %v3915, %v3914
      %v3951 = vpack.c.bf16 %v3917, %v3916
      %v3952 = vpack.c.bf16 %v3919, %v3918
      %v3953 = vpack.c.bf16 %v3921, %v3920
      %v3954 = vpack.c.bf16 %v3923, %v3922
      %v3955 = vpack.c.bf16 %v3925, %v3924
      %v3956 = vpack.c.bf16 %v3927, %v3926
      %v3957 = vpack.c.bf16 %v3929, %v3928
      %v3958 = vpack.c.bf16 %v3931, %v3930
      %v3959 = vpack.c.bf16 %v3933, %v3932
      %v3960 = vpack.c.bf16 %v3935, %v3934
      %v3961 = vpack.c.bf16 %v3937, %v3936
      %v3962 = vpack.c.bf16 %v3939, %v3938
      %v3963 = vpack.c.bf16 %v3941, %v3940
      %v3964 = vpack.c.bf16 %v3943, %v3942
      %v3965 = vpack.c.bf16 %v3945, %v3944
      %v3966 = vpack.c.bf16 %v3947, %v3946
      %v3967 = vpack.c.bf16 %v3949, %v3948
      %v3986 = vunpack.c.l.b16 %v3950
      %v3987 = vunpack.c.h.b16 %v3950
      %v3988 = vunpack.c.l.b16 %v3951
      %v3989 = vunpack.c.h.b16 %v3951
      %v3990 = vunpack.c.l.b16 %v3952
      %v3991 = vunpack.c.h.b16 %v3952
      %v3992 = vunpack.c.l.b16 %v3953
      %v3993 = vunpack.c.h.b16 %v3953
      %v3994 = vunpack.c.l.b16 %v3954
      %v3995 = vunpack.c.h.b16 %v3954
      %v3996 = vunpack.c.l.b16 %v3955
      %v3997 = vunpack.c.h.b16 %v3955
      %v3998 = vunpack.c.l.b16 %v3956
      %v3999 = vunpack.c.h.b16 %v3956
      %v4000 = vunpack.c.l.b16 %v3957
      %v4001 = vunpack.c.h.b16 %v3957
      %v4002 = vunpack.c.l.b16 %v3958
      %v4003 = vunpack.c.h.b16 %v3958
      %v4004 = vunpack.c.l.b16 %v3959
      %v4005 = vunpack.c.h.b16 %v3959
      %v4006 = vunpack.c.l.b16 %v3960
      %v4007 = vunpack.c.h.b16 %v3960
      %v4008 = vunpack.c.l.b16 %v3961
      %v4009 = vunpack.c.h.b16 %v3961
      %v4010 = vunpack.c.l.b16 %v3962
      %v4011 = vunpack.c.h.b16 %v3962
      %v4012 = vunpack.c.l.b16 %v3963
      %v4013 = vunpack.c.h.b16 %v3963
      %v4014 = vunpack.c.l.b16 %v3964
      %v4015 = vunpack.c.h.b16 %v3964
      %v4016 = vunpack.c.l.b16 %v3965
      %v4017 = vunpack.c.h.b16 %v3965
      %v4018 = vunpack.c.l.b16 %v3966
      %v4019 = vunpack.c.h.b16 %v3966
      %v4020 = vunpack.c.l.b16 %v3967
      %v4021 = vunpack.c.h.b16 %v3967
      %v4022 = vpack.c.b16 %v3986, %v3986
      %v4023 = vpack.c.b16 %v3987, %v3987
      %v4024 = vpack.c.b16 %v3988, %v3988
      %v4025 = vpack.c.b16 %v3989, %v3989
      %v4026 = vpack.c.b16 %v3990, %v3990
      %v4027 = vpack.c.b16 %v3991, %v3991
      %v4028 = vpack.c.b16 %v3992, %v3992
      %v4029 = vpack.c.b16 %v3993, %v3993
      %v4030 = vpack.c.b16 %v3994, %v3994
      %v4031 = vpack.c.b16 %v3995, %v3995
      %v4032 = vpack.c.b16 %v3996, %v3996
      %v4033 = vpack.c.b16 %v3997, %v3997
      %v4034 = vpack.c.b16 %v3998, %v3998
      %v4035 = vpack.c.b16 %v3999, %v3999
      %v4036 = vpack.c.b16 %v4000, %v4000
      %v4037 = vpack.c.b16 %v4001, %v4001
      %v4038 = vpack.c.b16 %v4002, %v4002
      %v4039 = vpack.c.b16 %v4003, %v4003
      %v4040 = vpack.c.b16 %v4004, %v4004
      %v4041 = vpack.c.b16 %v4005, %v4005
      %v4042 = vpack.c.b16 %v4006, %v4006
      %v4043 = vpack.c.b16 %v4007, %v4007
      %v4044 = vpack.c.b16 %v4008, %v4008
      %v4045 = vpack.c.b16 %v4009, %v4009
      %v4046 = vpack.c.b16 %v4010, %v4010
      %v4047 = vpack.c.b16 %v4011, %v4011
      %v4048 = vpack.c.b16 %v4012, %v4012
      %v4049 = vpack.c.b16 %v4013, %v4013
      %v4050 = vpack.c.b16 %v4014, %v4014
      %v4051 = vpack.c.b16 %v4015, %v4015
      %v4052 = vpack.c.b16 %v4016, %v4016
      %v4053 = vpack.c.b16 %v4017, %v4017
      %v4054 = vpack.c.b16 %v4018, %v4018
      %v4055 = vpack.c.b16 %v4019, %v4019
      %v4056 = vpack.c.b16 %v4020, %v4020
      %v4057 = vpack.c.b16 %v4021, %v4021
      %4094 = vst [vmem:[%s170] sm:$0xf] %v4022
      %4095 = vst [vmem:[%s170 + $0x4] sm:$0xf] %v4023
      %4096 = vst [vmem:[%s170 + $0x8] sm:$0xf] %v4024
      %4097 = vst [vmem:[%s170 + $0xc] sm:$0xf] %v4025
      %4098 = vst [vmem:[%s170 + $0x10] sm:$0xf] %v4026
      %4099 = vst [vmem:[%s170 + $0x14] sm:$0xf] %v4027
      %4100 = vst [vmem:[%s170 + $0x18] sm:$0xf] %v4028
      %4101 = vst [vmem:[%s170 + $0x1c] sm:$0xf] %v4029
      %4102 = vst [vmem:[%s170 + $0x20] sm:$0xf] %v4030
      %4103 = vst [vmem:[%s170 + $0x24] sm:$0xf] %v4031
      %4104 = vst [vmem:[%s170 + $0x28] sm:$0xf] %v4032
      %4105 = vst [vmem:[%s170 + $0x2c] sm:$0xf] %v4033
      %4106 = vst [vmem:[%s170 + $0x30] sm:$0xf] %v4034
      %4107 = vst [vmem:[%s170 + $0x34] sm:$0xf] %v4035
      %4108 = vst [vmem:[%s170 + $0x38] sm:$0xf] %v4036
      %4109 = vst [vmem:[%s170 + $0x3c] sm:$0xf] %v4037
      %4110 = vst [vmem:[%s170 + $0x40] sm:$0xf] %v4038
      %4111 = vst [vmem:[%s170 + $0x44] sm:$0xf] %v4039
      %4112 = vst [vmem:[%s170 + $0x48] sm:$0xf] %v4040
      %4113 = vst [vmem:[%s170 + $0x4c] sm:$0xf] %v4041
      %4114 = vst [vmem:[%s170 + $0x50] sm:$0xf] %v4042
      %4115 = vst [vmem:[%s170 + $0x54] sm:$0xf] %v4043
      %4116 = vst [vmem:[%s170 + $0x58] sm:$0xf] %v4044
      %4117 = vst [vmem:[%s170 + $0x5c] sm:$0xf] %v4045
      %4118 = vst [vmem:[%s170 + $0x60] sm:$0xf] %v4046
      %4119 = vst [vmem:[%s170 + $0x64] sm:$0xf] %v4047
      %4120 = vst [vmem:[%s170 + $0x68] sm:$0xf] %v4048
      %4121 = vst [vmem:[%s170 + $0x6c] sm:$0xf] %v4049
      %4122 = vst [vmem:[%s170 + $0x70] sm:$0xf] %v4050
      %4123 = vst [vmem:[%s170 + $0x74] sm:$0xf] %v4051
      %4124 = vst [vmem:[%s170 + $0x78] sm:$0xf] %v4052
      %4125 = vst [vmem:[%s170 + $0x7c] sm:$0xf] %v4053
      %4126 = vst [vmem:[%s170 + $0x80] sm:$0xf] %v4054
      %4127 = vst [vmem:[%s170 + $0x84] sm:$0xf] %v4055
      %4128 = vst [vmem:[%s170 + $0x88] sm:$0xf] %v4056
      %4129 = vst [vmem:[%s170 + $0x8c] sm:$0xf] %v4057
      %p4130 = scmp.lt.s32.totalorder %s14, 1
      %s4131 = scalar_select %p4130, %s14, 1
      %s4132 = smul.addr %s4131, 36
      %s4133 = smul.addr %s4132, 4
      %s4134 = scalar_lea.vmem %s3, %s4133
      // Predicated region
      $region33: #{make_b_forward.7} parent=31 // pred_check
        %p4135 = pneg %p100
      $region34: #{make_b_forward.7} parent=31 // pred_check_branch
        %4137 = sbr.rel (%p4135) target = $region36
      $region35: #{make_b_forward.7} parent=31 // pred_region
        _
      $region36: #{make_b_forward.7} parent=31 // pred_fallthru
        _
    $region32: #{make_b_forward.7} parent=5 // pred_fallthru
      _
    %p4138 = scmp.le.s32.totalorder 2, %s9
    // Predicated region
    $region37: #{make_b_forward.7} parent=5 // pred_check
      %p4139 = pneg %p4138
    $region38: #{make_b_forward.7} parent=5 // pred_check_branch
      %4141 = sbr.rel (%p4139) target = $region40
    $region39: #{make_b_forward.7} parent=5 // pred_region
      %s4142 = ssub.s32 %s9, 2
      // Predicated region
      $region41: #{make_b_forward.7} parent=39 // pred_check
        %p4143 = pneg %p106
      $region42: #{make_b_forward.7} parent=39 // pred_check_branch
        %4145 = sbr.rel (%p4143) target = $region44
      $region43: #{make_b_forward.7} parent=39 // pred_region
        %p4146 = scmp.lt.s32.totalorder %s15, 1
        %s4147 = scalar_select %p4146, %s15, 1
        %s4148 = smul.addr %s4147, 36
        %s4149 = smul.addr %s4148, 4
        %s4150 = scalar_lea.vmem %s3, %s4149
      $region44: #{make_b_forward.7} parent=39 // pred_fallthru
        _
    $region40: #{make_b_forward.7} parent=5 // pred_fallthru
      _
  $region6: #{make_b_forward.7} parent=0 // loop_footer
    %s13 = sadd.s32 1, %s9
  $region7: #{make_b_forward.7} parent=0 // loop_footer_branch
    %8 = sbr.rel target = $region3
  $region8: #{make_b_forward.7} parent=0 // loop_exit
    _

// kernel: make_b_forward.8
$region0: #{make_b_forward.8}
  #allocation0 [shape = 'u32[]', space=smem, size = 0x4, offset = 0x4, fixed_abs, tag = 'smem constant byte address 0x4 - core index']
  #allocation1 [shape = 'u32[144,128]{1,0:T(1,128)}', space=vmem, size = 0x12000, scoped, tag = 'internal scratch']
  %s0 = inlined_call_operand.vmem [shape: bf16[2,2,2,72,96], index: 0, kind: input, shape index: {}]
  %s1 = inlined_call_operand.vmem [shape: bf16[9,96,128], index: 1, kind: input, shape index: {}]
  %s2 = inlined_call_operand.vmem [shape: f32[1,128], index: 2, kind: input, shape index: {}]
  %s3 = inlined_call_operand.vmem [shape: f32[2,56,128], index: 3, kind: output, shape index: {}]
  %s4 = sld [smem:[#allocation0]]
  $region45: #{make_b_forward.8} parent=0
    _
  %s6 = ssub.s32 1, %s4
  %s7 = scalar_select 0, %s6, %s4
  loop: start=0, step=1, limit=4
  $region2: #{make_b_forward.8} parent=0 // loop_pre_header
    _
  $region3: #{make_b_forward.8} parent=0 // loop_header
    %s9 = sphi 0, %s13
    %p10 = scmp.ge.s32.totalorder %s9, 4
    %s19 = sphi 0, %s21
    %s22 = sphi 0, %s19
    %s23 = sphi 0, %s22
    %s39 = sphi 0, %s23
    %s43 = sphi 0, %s43
    %s45 = sphi 0, %s43
    %s46 = sphi 0, %s45
    %s60 = sphi 0, %s46
    %s64 = sphi 0, %s64
    %s66 = sphi 0, %s64
    %s67 = sphi 0, %s66
    %s81 = sphi 0, %s67
    %s87 = sphi 0, %s89
    %s90 = sphi 0, %s87
    %s91 = sphi 0, %s90
    %s107 = sphi 0, %s91
  $region4: #{make_b_forward.8} parent=0 // loop_header_branch
    %12 = sbr.rel (%p10) target = $region8
  $region5: #{make_b_forward.8} parent=0 // loop_body
    %s14 = ssub.s32 %s9, 1
    %s15 = ssub.s32 %s9, 2
    %s16 = sadd.s32 %s9, 1
    %s17 = ssub.s32 %s9, %s16
    %p18 = scmp.eq.s32.totalorder %s17, 0
    %s20 = sadd.s32 %s19, 1
    %s21 = scalar_select %p18, %s19, %s20
    %p24 = pneg %p18
    %p25 = scmp.eq.s32.totalorder %s9, 1
    %p26 = por %p24, %p25
    %p27 = scmp.ne.s32.totalorder %s19, %s22
    %p28 = scmp.eq.s32.totalorder %s9, 0
    %p29 = por %p27, %p28
    %p30 = scmp.ne.s32.totalorder %s19, %s22
    %p31 = scmp.eq.s32.totalorder %s14, 1
    %p32 = por %p30, %p31
    %p33 = scmp.ne.s32.totalorder %s22, %s23
    %p34 = scmp.eq.s32.totalorder %s14, 0
    %p35 = por %p33, %p34
    %p36 = scmp.ne.s32.totalorder %s22, %s23
    %p37 = scmp.eq.s32.totalorder %s15, 1
    %p38 = por %p36, %p37
    %p40 = scmp.ne.s32.totalorder %s23, %s39
    %p41 = scmp.eq.s32.totalorder %s15, 0
    %p42 = por %p40, %p41
    %s44 = sadd.s32 %s43, 1
    %p47 = scmp.eq.s32.totalorder %s9, 1
    %p48 = scmp.ne.s32.totalorder %s43, %s45
    %p49 = scmp.eq.s32.totalorder %s9, 0
    %p50 = por %p48, %p49
    %p51 = scmp.ne.s32.totalorder %s43, %s45
    %p52 = scmp.eq.s32.totalorder %s14, 1
    %p53 = por %p51, %p52
    %p54 = scmp.ne.s32.totalorder %s45, %s46
    %p55 = scmp.eq.s32.totalorder %s14, 0
    %p56 = por %p54, %p55
    %p57 = scmp.ne.s32.totalorder %s45, %s46
    %p58 = scmp.eq.s32.totalorder %s15, 1
    %p59 = por %p57, %p58
    %p61 = scmp.ne.s32.totalorder %s46, %s60
    %p62 = scmp.eq.s32.totalorder %s15, 0
    %p63 = por %p61, %p62
    %s65 = sadd.s32 %s64, 1
    %p68 = scmp.eq.s32.totalorder %s9, 1
    %p69 = scmp.ne.s32.totalorder %s64, %s66
    %p70 = scmp.eq.s32.totalorder %s9, 0
    %p71 = por %p69, %p70
    %p72 = scmp.ne.s32.totalorder %s64, %s66
    %p73 = scmp.eq.s32.totalorder %s14, 1
    %p74 = por %p72, %p73
    %p75 = scmp.ne.s32.totalorder %s66, %s67
    %p76 = scmp.eq.s32.totalorder %s14, 0
    %p77 = por %p75, %p76
    %p78 = scmp.ne.s32.totalorder %s66, %s67
    %p79 = scmp.eq.s32.totalorder %s15, 1
    %p80 = por %p78, %p79
    %p82 = scmp.ne.s32.totalorder %s67, %s81
    %p83 = scmp.eq.s32.totalorder %s15, 0
    %p84 = por %p82, %p83
    %s85 = ssub.s32 %s9, %s16
    %p86 = scmp.eq.s32.totalorder %s85, 0
    %s88 = sadd.s32 %s87, 1
    %s89 = scalar_select %p86, %s87, %s88
    %p92 = pneg %p86
    %p93 = scmp.eq.s32.totalorder %s9, 1
    %p94 = por %p92, %p93
    %p95 = scmp.ne.s32.totalorder %s87, %s90
    %p96 = scmp.eq.s32.totalorder %s9, 0
    %p97 = por %p95, %p96
    %p98 = scmp.ne.s32.totalorder %s87, %s90
    %p99 = scmp.eq.s32.totalorder %s14, 1
    %p100 = por %p98, %p99
    %p101 = scmp.ne.s32.totalorder %s90, %s91
    %p102 = scmp.eq.s32.totalorder %s14, 0
    %p103 = por %p101, %p102
    %p104 = scmp.ne.s32.totalorder %s90, %s91
    %p105 = scmp.eq.s32.totalorder %s15, 1
    %p106 = por %p104, %p105
    %p108 = scmp.ne.s32.totalorder %s91, %s107
    %p109 = scmp.eq.s32.totalorder %s15, 0
    %p110 = por %p108, %p109
    %p111 = scmp.le.s32.totalorder 1, %s9
    %p112 = scmp.lt.s32.totalorder %s9, 3
    %p113 = pnand %p111, %p112
    %p114 = pneg %p113
    // Predicated region
    $region9: #{make_b_forward.8} parent=5 // pred_check
      _
    $region10: #{make_b_forward.8} parent=5 // pred_check_branch
      %116 = sbr.rel (%p113) target = $region12
    $region11: #{make_b_forward.8} parent=5 // pred_region
      %s117 = ssub.s32 %s9, 1
      // Predicated region
      $region13: #{make_b_forward.8} parent=11 // pred_check
        %p118 = pneg %p56
      $region14: #{make_b_forward.8} parent=11 // pred_check_branch
        %120 = sbr.rel (%p118) target = $region16
      $region15: #{make_b_forward.8} parent=11 // pred_region
        _
      $region16: #{make_b_forward.8} parent=11 // pred_fallthru
        _
      // Predicated region
      $region17: #{make_b_forward.8} parent=11 // pred_check
        %p121 = pneg %p77
      $region18: #{make_b_forward.8} parent=11 // pred_check_branch
        %123 = sbr.rel (%p121) target = $region20
      $region19: #{make_b_forward.8} parent=11 // pred_region
        _
      $region20: #{make_b_forward.8} parent=11 // pred_fallthru
        _
    $region12: #{make_b_forward.8} parent=5 // pred_fallthru
      _
    %p124 = scmp.lt.s32.totalorder %s9, 2
    // Predicated region
    $region21: #{make_b_forward.8} parent=5 // pred_check
      %p125 = pneg %p124
    $region22: #{make_b_forward.8} parent=5 // pred_check_branch
      %127 = sbr.rel (%p125) target = $region24
    $region23: #{make_b_forward.8} parent=5 // pred_region
      // Predicated region
      $region25: #{make_b_forward.8} parent=23 // pred_check
        %p128 = pneg %p29
      $region26: #{make_b_forward.8} parent=23 // pred_check_branch
        %130 = sbr.rel (%p128) target = $region28
      $region27: #{make_b_forward.8} parent=23 // pred_region
        %p131 = scmp.lt.s32.totalorder %s9, 1
        %s132 = scalar_select %p131, %s9, 1
        %s133 = smul.addr %s132, 36
        %s134 = smul.addr %s133, 4
        %s135 = scalar_lea.vmem %s0, %s134
      $region28: #{make_b_forward.8} parent=23 // pred_fallthru
        _
    $region24: #{make_b_forward.8} parent=5 // pred_fallthru
      _
    %p136 = scmp.le.s32.totalorder 1, %s9
    %p137 = scmp.lt.s32.totalorder %s9, 3
    %p138 = pnand %p136, %p137
    %p139 = pneg %p138
    // Predicated region
    $region29: #{make_b_forward.8} parent=5 // pred_check
      _
    $region30: #{make_b_forward.8} parent=5 // pred_check_branch
      %141 = sbr.rel (%p138) target = $region32
    $region31: #{make_b_forward.8} parent=5 // pred_region
      %s142 = ssub.s32 %s9, 1
      %p143 = scmp.lt.s32.totalorder %s14, 1
      %s144 = scalar_select %p143, %s14, 1
      %s145 = smul.addr %s144, 36
      %s146 = smul.addr %s145, 4
      %s147 = scalar_lea.vmem %s0, %s146
      %p148 = pneg %p35
      %p149 = pneg %p32
      %p150 = pneg %p56
      %p151 = pneg %p53
      %p152 = pneg %p77
      %p153 = pneg %p74
      %p154 = pneg %p103
      %p155 = pneg %p100
      %p156 = scmp.lt.s32.totalorder %s14, 1
      %s157 = scalar_select %p156, %s14, 1
      %s158 = smul.addr %s157, 7
      %s159 = smul.addr %s158, 8
      %s160 = scalar_lea.vmem %s3, %s159
      %p161 = scmp.lt.s32.totalorder %s14, 1
      %s162 = scalar_select %p161, %s14, 1
      %s163 = smul.addr %s162, 36
      %s164 = smul.addr %s163, 4
      %s165 = scalar_lea.vmem %s0, %s164
      %p166 = scmp.lt.s32.totalorder %s14, 1
      %s167 = scalar_select %p166, %s14, 1
      %s168 = smul.addr %s167, 7
      %s169 = smul.addr %s168, 8
      %s170 = scalar_lea.vmem %s3, %s169
      %v172 = vld [vmem:[%s165] sm:$0xf]
      %v173 = vld [vmem:[%s165 + $0x4] sm:$0xf]
      %v174 = vld [vmem:[%s165 + $0x8] sm:$0xf]
      %v175 = vld [vmem:[%s165 + $0xc] sm:$0xf]
      %v176 = vld [vmem:[%s165 + $0x10] sm:$0xf]
      %v177 = vld [vmem:[%s165 + $0x14] sm:$0xf]
      %v178 = vld [vmem:[%s165 + $0x18] sm:$0xf]
      %v179 = vld [vmem:[%s1] sm:$0xf]
      %v180 = vld [vmem:[%s1 + $0x4] sm:$0xf]
      %v181 = vld [vmem:[%s1 + $0x8] sm:$0xf]
      %v182 = vld [vmem:[%s1 + $0xc] sm:$0xf]
      %v183 = vld [vmem:[%s1 + $0x10] sm:$0xf]
      %v184 = vld [vmem:[%s1 + $0x14] sm:$0xf]
      %v185 = vld [vmem:[%s1 + $0x18] sm:$0xf]
      %v186 = vld [vmem:[%s1 + $0x1c] sm:$0xf]
      %v187 = vld [vmem:[%s1 + $0x20] sm:$0xf]
      %v188 = vld [vmem:[%s1 + $0x24] sm:$0xf]
      %v189 = vld [vmem:[%s1 + $0x28] sm:$0xf]
      %v190 = vld [vmem:[%s1 + $0x2c] sm:$0xf]
      %s191 = scalar_lea.vmem %s165, 36
      %v192 = vld [vmem:[%s191] sm:$0xf]
      %v193 = vld [vmem:[%s191 + $0x4] sm:$0xf]
      %v194 = vld [vmem:[%s191 + $0x8] sm:$0xf]
      %v195 = vld [vmem:[%s191 + $0xc] sm:$0xf]
      %v196 = vld [vmem:[%s191 + $0x10] sm:$0xf]
      %v197 = vld [vmem:[%s191 + $0x14] sm:$0xf]
      %v198 = vld [vmem:[%s191 + $0x18] sm:$0xf]
      %s199 = scalar_lea.vmem %s1, 48
      %v200 = vld [vmem:[%s199] sm:$0xf]
      %v201 = vld [vmem:[%s199 + $0x4] sm:$0xf]
      %v202 = vld [vmem:[%s199 + $0x8] sm:$0xf]
      %v203 = vld [vmem:[%s199 + $0xc] sm:$0xf]
      %v204 = vld [vmem:[%s199 + $0x10] sm:$0xf]
      %v205 = vld [vmem:[%s199 + $0x14] sm:$0xf]
      %v206 = vld [vmem:[%s199 + $0x18] sm:$0xf]
      %v207 = vld [vmem:[%s199 + $0x1c] sm:$0xf]
      %v208 = vld [vmem:[%s199 + $0x20] sm:$0xf]
      %v209 = vld [vmem:[%s199 + $0x24] sm:$0xf]
      %v210 = vld [vmem:[%s199 + $0x28] sm:$0xf]
      %v211 = vld [vmem:[%s199 + $0x2c] sm:$0xf]
      %v219 = vunpack.c.l.b16 %v192
      %v220 = vunpack.c.l.b16 %v193
      %v221 = vunpack.c.l.b16 %v194
      %v222 = vunpack.c.l.b16 %v195
      %v223 = vunpack.c.l.b16 %v196
      %v224 = vunpack.c.l.b16 %v197
      %v225 = vunpack.c.l.b16 %v198
      %v226 = vpack.c.b16 %v220, %v219
      %v227 = vpack.c.b16 %v222, %v221
      %v228 = vpack.c.b16 %v224, %v223
      %v229 = vpack.c.b16 %v225, %v225
      %v242 = vunpack.c.l.b16 %v200
      %v243 = vunpack.c.l.b16 %v201
      %v244 = vunpack.c.l.b16 %v202
      %v245 = vunpack.c.l.b16 %v203
      %v246 = vunpack.c.l.b16 %v204
      %v247 = vunpack.c.l.b16 %v205
      %v248 = vunpack.c.l.b16 %v206
      %v249 = vunpack.c.l.b16 %v207
      %v250 = vunpack.c.l.b16 %v208
      %v251 = vunpack.c.l.b16 %v209
      %v252 = vunpack.c.l.b16 %v210
      %v253 = vunpack.c.l.b16 %v211
      %v254 = vpack.c.b16 %v243, %v242
      %v255 = vpack.c.b16 %v245, %v244
      %v256 = vpack.c.b16 %v247, %v246
      %v257 = vpack.c.b16 %v249, %v248
      %v258 = vpack.c.b16 %v251, %v250
      %v259 = vpack.c.b16 %v253, %v252
      %vm266 = vcmask 785408
      %v268 = vsel %vm266, %v226, 0
      %v271 = vsel %vm266, %v227, 0
      %v274 = vsel %vm266, %v228, 0
      %v277 = vsel %vm266, %v229, 0
      %279 = vmatprep.subr.bf16.mxu0 0
      %280 = vmatpush1.bf16.msra.mxu0 %v254
      %281 = vmatprep.subr.bf16.mxu0 0
      %282 = vmatpush1.bf16.msra.mxu0 %v255
      %283 = vmatprep.subr.bf16.mxu0 0
      %284 = vmatpush1.bf16.msra.mxu0 %v256
      %285 = vmatprep.subr.bf16.mxu0 0
      %286 = vmatpush1.bf16.msra.mxu0 %v257
      %287 = vmatprep.subr.bf16.mxu0 0
      %288 = vmatpush1.bf16.msra.mxu0 %v258
      %289 = vmatprep.subr.bf16.mxu0 0
      %290 = vmatpush1.bf16.msra.mxu0 %v259
      %291 = vmatprep.subr.bf16.mxu0 0
      %292 = vmatpush1.bf16.msra.mxu0 0
      %293 = vmatprep.subr.bf16.mxu0 0
      %294 = vmatpush1.bf16.msra.mxu0 0
      %295 = vmatprep.subr.bf16.mxu0 0
      %296 = vmatpush1.bf16.msra.mxu0 0
      %297 = vmatprep.subr.bf16.mxu0 0
      %298 = vmatpush1.bf16.msra.mxu0 0
      %299 = vmatprep.subr.bf16.mxu0 0
      %300 = vmatpush1.bf16.msra.mxu0 0
      %301 = vmatprep.subr.bf16.mxu0 0
      %302 = vmatpush1.bf16.msra.mxu0 0
      %303 = vmatprep.subr.bf16.mxu0 0
      %304 = vmatpush1.bf16.msra.mxu0 0
      %305 = vmatprep.subr.bf16.mxu0 0
      %306 = vmatpush1.bf16.msra.mxu0 0
      %307 = vmatprep.subr.bf16.mxu0 0
      %308 = vmatpush1.bf16.msra.mxu0 0
      %309 = vmatprep.subr.bf16.mxu0 0
      %310 = vmatpush1.bf16.msra.mxu0 0
      %311 = vmatprep.mubr.bf16.mxu0 0
      %312 = vmatmul.mubr.bf16.gmra.mrb[0].mxu0 %v268
      %v313 = vpop.f32.mrb[0].mxu0
      %v314 = vadd.f32 0.0, %v313
      %v315 = vpop.f32.mrb[0].mxu0
      %v316 = vpop.f32.mrb[0].mxu0
      %v317 = vadd.f32 0.0, %v316
      %v318 = vpop.f32.mrb[0].mxu0
      %319 = vmatprep.mubr.bf16.mxu0 0
      %320 = vmatmul.mubr.bf16.gmra.mrb[0].mxu0 %v271
      %v321 = vpop.f32.mrb[0].mxu0
      %v322 = vadd.f32 0.0, %v321
      %v323 = vpop.f32.mrb[0].mxu0
      %v324 = vpop.f32.mrb[0].mxu0
      %v325 = vadd.f32 0.0, %v324
      %v326 = vpop.f32.mrb[0].mxu0
      %327 = vmatprep.mubr.bf16.mxu0 0
      %328 = vmatmul.mubr.bf16.gmra.mrb[0].mxu0 %v274
      %v329 = vpop.f32.mrb[0].mxu0
      %v330 = vadd.f32 0.0, %v329
      %v331 = vpop.f32.mrb[0].mxu0
      %v332 = vpop.f32.mrb[0].mxu0
      %v333 = vadd.f32 0.0, %v332
      %v334 = vpop.f32.mrb[0].mxu0
      %335 = vmatprep.mubr.bf16.mxu0 0
      %336 = vmatmul.mubr.bf16.gmra.mrb[0].mxu0 %v277
      %v337 = vpop.f32.mrb[0].mxu0
      %v338 = vadd.f32 0.0, %v337
      %v339 = vpop.f32.mrb[0].mxu0
      %v340 = vpop.f32.mrb[0].mxu0
      %v341 = vpop.f32.mrb[0].mxu0
      %342 = vdwg.mxu0
      %v350 = vunpack.c.l.b16 %v172
      %v351 = vunpack.c.l.b16 %v173
      %v352 = vunpack.c.l.b16 %v174
      %v353 = vunpack.c.l.b16 %v175
      %v354 = vunpack.c.l.b16 %v176
      %v355 = vunpack.c.l.b16 %v177
      %v356 = vunpack.c.l.b16 %v178
      %v357 = vpack.c.b16 %v351, %v350
      %v358 = vpack.c.b16 %v353, %v352
      %v359 = vpack.c.b16 %v355, %v354
      %v360 = vpack.c.b16 %v356, %v356
      %v373 = vunpack.c.l.b16 %v179
      %v374 = vunpack.c.l.b16 %v180
      %v375 = vunpack.c.l.b16 %v181
      %v376 = vunpack.c.l.b16 %v182
      %v377 = vunpack.c.l.b16 %v183
      %v378 = vunpack.c.l.b16 %v184
      %v379 = vunpack.c.l.b16 %v185
      %v380 = vunpack.c.l.b16 %v186
      %v381 = vunpack.c.l.b16 %v187
      %v382 = vunpack.c.l.b16 %v188
      %v383 = vunpack.c.l.b16 %v189
      %v384 = vunpack.c.l.b16 %v190
      %v385 = vpack.c.b16 %v374, %v373
      %v386 = vpack.c.b16 %v376, %v375
      %v387 = vpack.c.b16 %v378, %v377
      %v388 = vpack.c.b16 %v380, %v379
      %v389 = vpack.c.b16 %v382, %v381
      %v390 = vpack.c.b16 %v384, %v383
      %v398 = vsel %vm266, %v357, 0
      %v401 = vsel %vm266, %v358, 0
      %v404 = vsel %vm266, %v359, 0
      %v407 = vsel %vm266, %v360, 0
      %409 = vmatprep.subr.bf16.mxu0 0
      %410 = vmatpush1.bf16.msra.mxu0 %v385
      %411 = vmatprep.subr.bf16.mxu0 0
      %412 = vmatpush1.bf16.msra.mxu0 %v386
      %413 = vmatprep.subr.bf16.mxu0 0
      %414 = vmatpush1.bf16.msra.mxu0 %v387
      %415 = vmatprep.subr.bf16.mxu0 0
      %416 = vmatpush1.bf16.msra.mxu0 %v388
      %417 = vmatprep.subr.bf16.mxu0 0
      %418 = vmatpush1.bf16.msra.mxu0 %v389
      %419 = vmatprep.subr.bf16.mxu0 0
      %420 = vmatpush1.bf16.msra.mxu0 %v390
      %421 = vmatprep.subr.bf16.mxu0 0
      %422 = vmatpush1.bf16.msra.mxu0 0
      %423 = vmatprep.subr.bf16.mxu0 0
      %424 = vmatpush1.bf16.msra.mxu0 0
      %425 = vmatprep.subr.bf16.mxu0 0
      %426 = vmatpush1.bf16.msra.mxu0 0
      %427 = vmatprep.subr.bf16.mxu0 0
      %428 = vmatpush1.bf16.msra.mxu0 0
      %429 = vmatprep.subr.bf16.mxu0 0
      %430 = vmatpush1.bf16.msra.mxu0 0
      %431 = vmatprep.subr.bf16.mxu0 0
      %432 = vmatpush1.bf16.msra.mxu0 0
      %433 = vmatprep.subr.bf16.mxu0 0
      %434 = vmatpush1.bf16.msra.mxu0 0
      %435 = vmatprep.subr.bf16.mxu0 0
      %436 = vmatpush1.bf16.msra.mxu0 0
      %437 = vmatprep.subr.bf16.mxu0 0
      %438 = vmatpush1.bf16.msra.mxu0 0
      %439 = vmatprep.subr.bf16.mxu0 0
      %440 = vmatpush1.bf16.msra.mxu0 0
      %441 = vmatprep.mubr.bf16.mxu0 0
      %442 = vmatmul.mubr.bf16.gmra.mrb[0].mxu0 %v398
      %v443 = vpop.f32.mrb[0].mxu0
      %v444 = vadd.f32 %v314, %v443
      %v445 = vpop.f32.mrb[0].mxu0
      %v446 = vpop.f32.mrb[0].mxu0
      %v447 = vadd.f32 %v317, %v446
      %v448 = vpop.f32.mrb[0].mxu0
      %449 = vmatprep.mubr.bf16.mxu0 0
      %450 = vmatmul.mubr.bf16.gmra.mrb[0].mxu0 %v401
      %v451 = vpop.f32.mrb[0].mxu0
      %v452 = vadd.f32 %v322, %v451
      %v453 = vpop.f32.mrb[0].mxu0
      %v454 = vpop.f32.mrb[0].mxu0
      %v455 = vadd.f32 %v325, %v454
      %v456 = vpop.f32.mrb[0].mxu0
      %457 = vmatprep.mubr.bf16.mxu0 0
      %458 = vmatmul.mubr.bf16.gmra.mrb[0].mxu0 %v404
      %v459 = vpop.f32.mrb[0].mxu0
      %v460 = vadd.f32 %v330, %v459
      %v461 = vpop.f32.mrb[0].mxu0
      %v462 = vpop.f32.mrb[0].mxu0
      %v463 = vadd.f32 %v333, %v462
      %v464 = vpop.f32.mrb[0].mxu0
      %465 = vmatprep.mubr.bf16.mxu0 0
      %466 = vmatmul.mubr.bf16.gmra.mrb[0].mxu0 %v407
      %v467 = vpop.f32.mrb[0].mxu0
      %v468 = vadd.f32 %v338, %v467
      %v469 = vpop.f32.mrb[0].mxu0
      %v470 = vpop.f32.mrb[0].mxu0
      %v471 = vpop.f32.mrb[0].mxu0
      %472 = vdwg.mxu0
      %v473 = vld [vmem:[%s165] sm:$0xf]
      %v474 = vld [vmem:[%s165 + $0x4] sm:$0xf]
      %v475 = vld [vmem:[%s165 + $0x8] sm:$0xf]
      %v476 = vld [vmem:[%s165 + $0xc] sm:$0xf]
      %v477 = vld [vmem:[%s165 + $0x10] sm:$0xf]
      %v478 = vld [vmem:[%s165 + $0x14] sm:$0xf]
      %v479 = vld [vmem:[%s165 + $0x18] sm:$0xf]
      %v480 = vld [vmem:[%s165 + $0x1c] sm:$0x1]
      %s481 = scalar_lea.vmem %s1, 96
      %v482 = vld [vmem:[%s481] sm:$0xf]
      %v483 = vld [vmem:[%s481 + $0x4] sm:$0xf]
      %v484 = vld [vmem:[%s481 + $0x8] sm:$0xf]
      %v485 = vld [vmem:[%s481 + $0xc] sm:$0xf]
      %v486 = vld [vmem:[%s481 + $0x10] sm:$0xf]
      %v487 = vld [vmem:[%s481 + $0x14] sm:$0xf]
      %v488 = vld [vmem:[%s481 + $0x18] sm:$0xf]
      %v489 = vld [vmem:[%s481 + $0x1c] sm:$0xf]
      %v490 = vld [vmem:[%s481 + $0x20] sm:$0xf]
      %v491 = vld [vmem:[%s481 + $0x24] sm:$0xf]
      %v492 = vld [vmem:[%s481 + $0x28] sm:$0xf]
      %v493 = vld [vmem:[%s481 + $0x2c] sm:$0xf]
      %v502 = vunpack.c.l.b16 %v473
      %v503 = vunpack.c.l.b16 %v474
      %v504 = vunpack.c.l.b16 %v475
      %v505 = vunpack.c.l.b16 %v476
      %v506 = vunpack.c.l.b16 %v477
      %v507 = vunpack.c.l.b16 %v478
      %v508 = vunpack.c.l.b16 %v479
      %v509 = vunpack.c.l.b16 %v480
      %v510 = vpack.c.b16 %v503, %v502
      %v511 = vpack.c.b16 %v505, %v504
      %v512 = vpack.c.b16 %v507, %v506
      %v513 = vpack.c.b16 %v509, %v508
      %vm514 = vsmask.f32 7424
      %v516 = vshrl.u32 %v510, 16
      %v518 = vshll.u32 %v510, 16
      %v520 = vrot.slane %v518, 1
      %v521 = vor.u32 %v516, %v520
      %v523 = vshll.u32 %v511, 16
      %v525 = vrot.slane %v523, 1
      %v526 = vsel %vm514, %v521, %v525
      %v527 = vshrl.u32 %v511, 16
      %v529 = vor.u32 %v527, %v525
      %v531 = vshll.u32 %v512, 16
      %v533 = vrot.slane %v531, 1
      %v534 = vsel %vm514, %v529, %v533
      %v535 = vshrl.u32 %v512, 16
      %v537 = vor.u32 %v535, %v533
      %v539 = vshll.u32 %v513, 16
      %v541 = vrot.slane %v539, 1
      %v542 = vsel %vm514, %v537, %v541
      %v543 = vshrl.u32 %v513, 16
      %v545 = vor.u32 %v543, %v541
      %v558 = vunpack.c.l.b16 %v482
      %v559 = vunpack.c.l.b16 %v483
      %v560 = vunpack.c.l.b16 %v484
      %v561 = vunpack.c.l.b16 %v485
      %v562 = vunpack.c.l.b16 %v486
      %v563 = vunpack.c.l.b16 %v487
      %v564 = vunpack.c.l.b16 %v488
      %v565 = vunpack.c.l.b16 %v489
      %v566 = vunpack.c.l.b16 %v490
      %v567 = vunpack.c.l.b16 %v491
      %v568 = vunpack.c.l.b16 %v492
      %v569 = vunpack.c.l.b16 %v493
      %v570 = vpack.c.b16 %v559, %v558
      %v571 = vpack.c.b16 %v561, %v560
      %v572 = vpack.c.b16 %v563, %v562
      %v573 = vpack.c.b16 %v565, %v564
      %v574 = vpack.c.b16 %v567, %v566
      %v575 = vpack.c.b16 %v569, %v568
      %v583 = vsel %vm266, %v526, 0
      %v586 = vsel %vm266, %v534, 0
      %v589 = vsel %vm266, %v542, 0
      %v592 = vsel %vm266, %v545, 0
      %594 = vmatprep.subr.bf16.mxu0 0
      %595 = vmatpush1.bf16.msra.mxu0 %v570
      %596 = vmatprep.subr.bf16.mxu0 0
      %597 = vmatpush1.bf16.msra.mxu0 %v571
      %598 = vmatprep.subr.bf16.mxu0 0
      %599 = vmatpush1.bf16.msra.mxu0 %v572
      %600 = vmatprep.subr.bf16.mxu0 0
      %601 = vmatpush1.bf16.msra.mxu0 %v573
      %602 = vmatprep.subr.bf16.mxu0 0
      %603 = vmatpush1.bf16.msra.mxu0 %v574
      %604 = vmatprep.subr.bf16.mxu0 0
      %605 = vmatpush1.bf16.msra.mxu0 %v575
      %606 = vmatprep.subr.bf16.mxu0 0
      %607 = vmatpush1.bf16.msra.mxu0 0
      %608 = vmatprep.subr.bf16.mxu0 0
      %609 = vmatpush1.bf16.msra.mxu0 0
      %610 = vmatprep.subr.bf16.mxu0 0
      %611 = vmatpush1.bf16.msra.mxu0 0
      %612 = vmatprep.subr.bf16.mxu0 0
      %613 = vmatpush1.bf16.msra.mxu0 0
      %614 = vmatprep.subr.bf16.mxu0 0
      %615 = vmatpush1.bf16.msra.mxu0 0
      %616 = vmatprep.subr.bf16.mxu0 0
      %617 = vmatpush1.bf16.msra.mxu0 0
      %618 = vmatprep.subr.bf16.mxu0 0
      %619 = vmatpush1.bf16.msra.mxu0 0
      %620 = vmatprep.subr.bf16.mxu0 0
      %621 = vmatpush1.bf16.msra.mxu0 0
      %622 = vmatprep.subr.bf16.mxu0 0
      %623 = vmatpush1.bf16.msra.mxu0 0
      %624 = vmatprep.subr.bf16.mxu0 0
      %625 = vmatpush1.bf16.msra.mxu0 0
      %626 = vmatprep.mubr.bf16.mxu0 0
      %627 = vmatmul.mubr.bf16.gmra.mrb[0].mxu0 %v583
      %v628 = vpop.f32.mrb[0].mxu0
      %v629 = vadd.f32 0.0, %v628
      %v630 = vpop.f32.mrb[0].mxu0
      %v631 = vpop.f32.mrb[0].mxu0
      %v632 = vadd.f32 0.0, %v631
      %v633 = vpop.f32.mrb[0].mxu0
      %634 = vmatprep.mubr.bf16.mxu0 0
      %635 = vmatmul.mubr.bf16.gmra.mrb[0].mxu0 %v586
      %v636 = vpop.f32.mrb[0].mxu0
      %v637 = vadd.f32 0.0, %v636
      %v638 = vpop.f32.mrb[0].mxu0
      %v639 = vpop.f32.mrb[0].mxu0
      %v640 = vadd.f32 0.0, %v639
      %v641 = vpop.f32.mrb[0].mxu0
      %642 = vmatprep.mubr.bf16.mxu0 0
      %643 = vmatmul.mubr.bf16.gmra.mrb[0].mxu0 %v589
      %v644 = vpop.f32.mrb[0].mxu0
      %v645 = vadd.f32 0.0, %v644
      %v646 = vpop.f32.mrb[0].mxu0
      %v647 = vpop.f32.mrb[0].mxu0
      %v648 = vadd.f32 0.0, %v647
      %v649 = vpop.f32.mrb[0].mxu0
      %650 = vmatprep.mubr.bf16.mxu0 0
      %651 = vmatmul.mubr.bf16.gmra.mrb[0].mxu0 %v592
      %v652 = vpop.f32.mrb[0].mxu0
      %v653 = vadd.f32 0.0, %v652
      %v654 = vpop.f32.mrb[0].mxu0
      %v655 = vpop.f32.mrb[0].mxu0
      %v656 = vpop.f32.mrb[0].mxu0
      %657 = vdwg.mxu0
      %v658 = vadd.f32 %v444, %v629
      %v659 = vadd.f32 %v447, %v632
      %v660 = vadd.f32 %v452, %v637
      %v661 = vadd.f32 %v455, %v640
      %v662 = vadd.f32 %v460, %v645
      %v663 = vadd.f32 %v463, %v648
      %v664 = vadd.f32 %v468, %v653
      %s665 = scalar_lea.vmem %s165, 72
      %v666 = vld [vmem:[%s665] sm:$0xf]
      %v667 = vld [vmem:[%s665 + $0x4] sm:$0xf]
      %v668 = vld [vmem:[%s665 + $0x8] sm:$0xf]
      %v669 = vld [vmem:[%s665 + $0xc] sm:$0xf]
      %v670 = vld [vmem:[%s665 + $0x10] sm:$0xf]
      %v671 = vld [vmem:[%s665 + $0x14] sm:$0xf]
      %v672 = vld [vmem:[%s665 + $0x18] sm:$0xf]
      %s673 = scalar_lea.vmem %s1, 144
      %v674 = vld [vmem:[%s673] sm:$0xf]
      %v675 = vld [vmem:[%s673 + $0x4] sm:$0xf]
      %v676 = vld [vmem:[%s673 + $0x8] sm:$0xf]
      %v677 = vld [vmem:[%s673 + $0xc] sm:$0xf]
      %v678 = vld [vmem:[%s673 + $0x10] sm:$0xf]
      %v679 = vld [vmem:[%s673 + $0x14] sm:$0xf]
      %v680 = vld [vmem:[%s673 + $0x18] sm:$0xf]
      %v681 = vld [vmem:[%s673 + $0x1c] sm:$0xf]
      %v682 = vld [vmem:[%s673 + $0x20] sm:$0xf]
      %v683 = vld [vmem:[%s673 + $0x24] sm:$0xf]
      %v684 = vld [vmem:[%s673 + $0x28] sm:$0xf]
      %v685 = vld [vmem:[%s673 + $0x2c] sm:$0xf]
      %v693 = vunpack.c.l.b16 %v666
      %v694 = vunpack.c.l.b16 %v667
      %v695 = vunpack.c.l.b16 %v668
      %v696 = vunpack.c.l.b16 %v669
      %v697 = vunpack.c.l.b16 %v670
      %v698 = vunpack.c.l.b16 %v671
      %v699 = vunpack.c.l.b16 %v672
      %v700 = vpack.c.b16 %v694, %v693
      %v701 = vpack.c.b16 %v696, %v695
      %v702 = vpack.c.b16 %v698, %v697
      %v703 = vpack.c.b16 %v699, %v699
      %v716 = vunpack.c.l.b16 %v674
      %v717 = vunpack.c.l.b16 %v675
      %v718 = vunpack.c.l.b16 %v676
      %v719 = vunpack.c.l.b16 %v677
      %v720 = vunpack.c.l.b16 %v678
      %v721 = vunpack.c.l.b16 %v679
      %v722 = vunpack.c.l.b16 %v680
      %v723 = vunpack.c.l.b16 %v681
      %v724 = vunpack.c.l.b16 %v682
      %v725 = vunpack.c.l.b16 %v683
      %v726 = vunpack.c.l.b16 %v684
      %v727 = vunpack.c.l.b16 %v685
      %v728 = vpack.c.b16 %v717, %v716
      %v729 = vpack.c.b16 %v719, %v718
      %v730 = vpack.c.b16 %v721, %v720
      %v731 = vpack.c.b16 %v723, %v722
      %v732 = vpack.c.b16 %v725, %v724
      %v733 = vpack.c.b16 %v727, %v726
      %v741 = vsel %vm266, %v700, 0
      %v744 = vsel %vm266, %v701, 0
      %v747 = vsel %vm266, %v702, 0
      %v750 = vsel %vm266, %v703, 0
      %752 = vmatprep.subr.bf16.mxu0 0
      %753 = vmatpush1.bf16.msra.mxu0 %v728
      %754 = vmatprep.subr.bf16.mxu0 0
      %755 = vmatpush1.bf16.msra.mxu0 %v729
      %756 = vmatprep.subr.bf16.mxu0 0
      %757 = vmatpush1.bf16.msra.mxu0 %v730
      %758 = vmatprep.subr.bf16.mxu0 0
      %759 = vmatpush1.bf16.msra.mxu0 %v731
      %760 = vmatprep.subr.bf16.mxu0 0
      %761 = vmatpush1.bf16.msra.mxu0 %v732
      %762 = vmatprep.subr.bf16.mxu0 0
      %763 = vmatpush1.bf16.msra.mxu0 %v733
      %764 = vmatprep.subr.bf16.mxu0 0
      %765 = vmatpush1.bf16.msra.mxu0 0
      %766 = vmatprep.subr.bf16.mxu0 0
      %767 = vmatpush1.bf16.msra.mxu0 0
      %768 = vmatprep.subr.bf16.mxu0 0
      %769 = vmatpush1.bf16.msra.mxu0 0
      %770 = vmatprep.subr.bf16.mxu0 0
      %771 = vmatpush1.bf16.msra.mxu0 0
      %772 = vmatprep.subr.bf16.mxu0 0
      %773 = vmatpush1.bf16.msra.mxu0 0
      %774 = vmatprep.subr.bf16.mxu0 0
      %775 = vmatpush1.bf16.msra.mxu0 0
      %776 = vmatprep.subr.bf16.mxu0 0
      %777 = vmatpush1.bf16.msra.mxu0 0
      %778 = vmatprep.subr.bf16.mxu0 0
      %779 = vmatpush1.bf16.msra.mxu0 0
      %780 = vmatprep.subr.bf16.mxu0 0
      %781 = vmatpush1.bf16.msra.mxu0 0
      %782 = vmatprep.subr.bf16.mxu0 0
      %783 = vmatpush1.bf16.msra.mxu0 0
      %784 = vmatprep.mubr.bf16.mxu0 0
      %785 = vmatmul.mubr.bf16.gmra.mrb[0].mxu0 %v741
      %v786 = vpop.f32.mrb[0].mxu0
      %v787 = vadd.f32 0.0, %v786
      %v788 = vpop.f32.mrb[0].mxu0
      %v789 = vpop.f32.mrb[0].mxu0
      %v790 = vadd.f32 0.0, %v789
      %v791 = vpop.f32.mrb[0].mxu0
      %792 = vmatprep.mubr.bf16.mxu0 0
      %793 = vmatmul.mubr.bf16.gmra.mrb[0].mxu0 %v744
      %v794 = vpop.f32.mrb[0].mxu0
      %v795 = vadd.f32 0.0, %v794
      %v796 = vpop.f32.mrb[0].mxu0
      %v797 = vpop.f32.mrb[0].mxu0
      %v798 = vadd.f32 0.0, %v797
      %v799 = vpop.f32.mrb[0].mxu0
      %800 = vmatprep.mubr.bf16.mxu0 0
      %801 = vmatmul.mubr.bf16.gmra.mrb[0].mxu0 %v747
      %v802 = vpop.f32.mrb[0].mxu0
      %v803 = vadd.f32 0.0, %v802
      %v804 = vpop.f32.mrb[0].mxu0
      %v805 = vpop.f32.mrb[0].mxu0
      %v806 = vadd.f32 0.0, %v805
      %v807 = vpop.f32.mrb[0].mxu0
      %808 = vmatprep.mubr.bf16.mxu0 0
      %809 = vmatmul.mubr.bf16.gmra.mrb[0].mxu0 %v750
      %v810 = vpop.f32.mrb[0].mxu0
      %v811 = vadd.f32 0.0, %v810
      %v812 = vpop.f32.mrb[0].mxu0
      %v813 = vpop.f32.mrb[0].mxu0
      %v814 = vpop.f32.mrb[0].mxu0
      %815 = vdwg.mxu0
      %v816 = vadd.f32 %v658, %v787
      %v817 = vadd.f32 %v659, %v790
      %v818 = vadd.f32 %v660, %v795
      %v819 = vadd.f32 %v661, %v798
      %v820 = vadd.f32 %v662, %v803
      %v821 = vadd.f32 %v663, %v806
      %v822 = vadd.f32 %v664, %v811
      %s823 = scalar_lea.vmem %s165, 108
      %v824 = vld [vmem:[%s823] sm:$0xf]
      %v825 = vld [vmem:[%s823 + $0x4] sm:$0xf]
      %v826 = vld [vmem:[%s823 + $0x8] sm:$0xf]
      %v827 = vld [vmem:[%s823 + $0xc] sm:$0xf]
      %v828 = vld [vmem:[%s823 + $0x10] sm:$0xf]
      %v829 = vld [vmem:[%s823 + $0x14] sm:$0xf]
      %v830 = vld [vmem:[%s823 + $0x18] sm:$0xf]
      %s831 = scalar_lea.vmem %s1, 192
      %v832 = vld [vmem:[%s831] sm:$0xf]
      %v833 = vld [vmem:[%s831 + $0x4] sm:$0xf]
      %v834 = vld [vmem:[%s831 + $0x8] sm:$0xf]
      %v835 = vld [vmem:[%s831 + $0xc] sm:$0xf]
      %v836 = vld [vmem:[%s831 + $0x10] sm:$0xf]
      %v837 = vld [vmem:[%s831 + $0x14] sm:$0xf]
      %v838 = vld [vmem:[%s831 + $0x18] sm:$0xf]
      %v839 = vld [vmem:[%s831 + $0x1c] sm:$0xf]
      %v840 = vld [vmem:[%s831 + $0x20] sm:$0xf]
      %v841 = vld [vmem:[%s831 + $0x24] sm:$0xf]
      %v842 = vld [vmem:[%s831 + $0x28] sm:$0xf]
      %v843 = vld [vmem:[%s831 + $0x2c] sm:$0xf]
      %v851 = vunpack.c.l.b16 %v824
      %v852 = vunpack.c.l.b16 %v825
      %v853 = vunpack.c.l.b16 %v826
      %v854 = vunpack.c.l.b16 %v827
      %v855 = vunpack.c.l.b16 %v828
      %v856 = vunpack.c.l.b16 %v829
      %v857 = vunpack.c.l.b16 %v830
      %v858 = vpack.c.b16 %v852, %v851
      %v859 = vpack.c.b16 %v854, %v853
      %v860 = vpack.c.b16 %v856, %v855
      %v861 = vpack.c.b16 %v857, %v857
      %v874 = vunpack.c.l.b16 %v832
      %v875 = vunpack.c.l.b16 %v833
      %v876 = vunpack.c.l.b16 %v834
      %v877 = vunpack.c.l.b16 %v835
      %v878 = vunpack.c.l.b16 %v836
      %v879 = vunpack.c.l.b16 %v837
      %v880 = vunpack.c.l.b16 %v838
      %v881 = vunpack.c.l.b16 %v839
      %v882 = vunpack.c.l.b16 %v840
      %v883 = vunpack.c.l.b16 %v841
      %v884 = vunpack.c.l.b16 %v842
      %v885 = vunpack.c.l.b16 %v843
      %v886 = vpack.c.b16 %v875, %v874
      %v887 = vpack.c.b16 %v877, %v876
      %v888 = vpack.c.b16 %v879, %v878
      %v889 = vpack.c.b16 %v881, %v880
      %v890 = vpack.c.b16 %v883, %v882
      %v891 = vpack.c.b16 %v885, %v884
      %v899 = vsel %vm266, %v858, 0
      %v902 = vsel %vm266, %v859, 0
      %v905 = vsel %vm266, %v860, 0
      %v908 = vsel %vm266, %v861, 0
      %910 = vmatprep.subr.bf16.mxu0 0
      %911 = vmatpush1.bf16.msra.mxu0 %v886
      %912 = vmatprep.subr.bf16.mxu0 0
      %913 = vmatpush1.bf16.msra.mxu0 %v887
      %914 = vmatprep.subr.bf16.mxu0 0
      %915 = vmatpush1.bf16.msra.mxu0 %v888
      %916 = vmatprep.subr.bf16.mxu0 0
      %917 = vmatpush1.bf16.msra.mxu0 %v889
      %918 = vmatprep.subr.bf16.mxu0 0
      %919 = vmatpush1.bf16.msra.mxu0 %v890
      %920 = vmatprep.subr.bf16.mxu0 0
      %921 = vmatpush1.bf16.msra.mxu0 %v891
      %922 = vmatprep.subr.bf16.mxu0 0
      %923 = vmatpush1.bf16.msra.mxu0 0
      %924 = vmatprep.subr.bf16.mxu0 0
      %925 = vmatpush1.bf16.msra.mxu0 0
      %926 = vmatprep.subr.bf16.mxu0 0
      %927 = vmatpush1.bf16.msra.mxu0 0
      %928 = vmatprep.subr.bf16.mxu0 0
      %929 = vmatpush1.bf16.msra.mxu0 0
      %930 = vmatprep.subr.bf16.mxu0 0
      %931 = vmatpush1.bf16.msra.mxu0 0
      %932 = vmatprep.subr.bf16.mxu0 0
      %933 = vmatpush1.bf16.msra.mxu0 0
      %934 = vmatprep.subr.bf16.mxu0 0
      %935 = vmatpush1.bf16.msra.mxu0 0
      %936 = vmatprep.subr.bf16.mxu0 0
      %937 = vmatpush1.bf16.msra.mxu0 0
      %938 = vmatprep.subr.bf16.mxu0 0
      %939 = vmatpush1.bf16.msra.mxu0 0
      %940 = vmatprep.subr.bf16.mxu0 0
      %941 = vmatpush1.bf16.msra.mxu0 0
      %942 = vmatprep.mubr.bf16.mxu0 0
      %943 = vmatmul.mubr.bf16.gmra.mrb[0].mxu0 %v899
      %v944 = vpop.f32.mrb[0].mxu0
      %v945 = vadd.f32 0.0, %v944
      %v946 = vpop.f32.mrb[0].mxu0
      %v947 = vpop.f32.mrb[0].mxu0
      %v948 = vadd.f32 0.0, %v947
      %v949 = vpop.f32.mrb[0].mxu0
      %950 = vmatprep.mubr.bf16.mxu0 0
      %951 = vmatmul.mubr.bf16.gmra.mrb[0].mxu0 %v902
      %v952 = vpop.f32.mrb[0].mxu0
      %v953 = vadd.f32 0.0, %v952
      %v954 = vpop.f32.mrb[0].mxu0
      %v955 = vpop.f32.mrb[0].mxu0
      %v956 = vadd.f32 0.0, %v955
      %v957 = vpop.f32.mrb[0].mxu0
      %958 = vmatprep.mubr.bf16.mxu0 0
      %959 = vmatmul.mubr.bf16.gmra.mrb[0].mxu0 %v905
      %v960 = vpop.f32.mrb[0].mxu0
      %v961 = vadd.f32 0.0, %v960
      %v962 = vpop.f32.mrb[0].mxu0
      %v963 = vpop.f32.mrb[0].mxu0
      %v964 = vadd.f32 0.0, %v963
      %v965 = vpop.f32.mrb[0].mxu0
      %966 = vmatprep.mubr.bf16.mxu0 0
      %967 = vmatmul.mubr.bf16.gmra.mrb[0].mxu0 %v908
      %v968 = vpop.f32.mrb[0].mxu0
      %v969 = vadd.f32 0.0, %v968
      %v970 = vpop.f32.mrb[0].mxu0
      %v971 = vpop.f32.mrb[0].mxu0
      %v972 = vpop.f32.mrb[0].mxu0
      %973 = vdwg.mxu0
      %v974 = vadd.f32 %v816, %v945
      %v975 = vadd.f32 %v817, %v948
      %v976 = vadd.f32 %v818, %v953
      %v977 = vadd.f32 %v819, %v956
      %v978 = vadd.f32 %v820, %v961
      %v979 = vadd.f32 %v821, %v964
      %v980 = vadd.f32 %v822, %v969
      %v981 = vld [vmem:[%s665] sm:$0xf]
      %v982 = vld [vmem:[%s665 + $0x4] sm:$0xf]
      %v983 = vld [vmem:[%s665 + $0x8] sm:$0xf]
      %v984 = vld [vmem:[%s665 + $0xc] sm:$0xf]
      %v985 = vld [vmem:[%s665 + $0x10] sm:$0xf]
      %v986 = vld [vmem:[%s665 + $0x14] sm:$0xf]
      %v987 = vld [vmem:[%s665 + $0x18] sm:$0xf]
      %v988 = vld [vmem:[%s665 + $0x1c] sm:$0x1]
      %s989 = scalar_lea.vmem %s1, 240
      %v990 = vld [vmem:[%s989] sm:$0xf]
      %v991 = vld [vmem:[%s989 + $0x4] sm:$0xf]
      %v992 = vld [vmem:[%s989 + $0x8] sm:$0xf]
      %v993 = vld [vmem:[%s989 + $0xc] sm:$0xf]
      %v994 = vld [vmem:[%s989 + $0x10] sm:$0xf]
      %v995 = vld [vmem:[%s989 + $0x14] sm:$0xf]
      %v996 = vld [vmem:[%s989 + $0x18] sm:$0xf]
      %v997 = vld [vmem:[%s989 + $0x1c] sm:$0xf]
      %v998 = vld [vmem:[%s989 + $0x20] sm:$0xf]
      %v999 = vld [vmem:[%s989 + $0x24] sm:$0xf]
      %v1000 = vld [vmem:[%s989 + $0x28] sm:$0xf]
      %v1001 = vld [vmem:[%s989 + $0x2c] sm:$0xf]
      %v1010 = vunpack.c.l.b16 %v981
      %v1011 = vunpack.c.l.b16 %v982
      %v1012 = vunpack.c.l.b16 %v983
      %v1013 = vunpack.c.l.b16 %v984
      %v1014 = vunpack.c.l.b16 %v985
      %v1015 = vunpack.c.l.b16 %v986
      %v1016 = vunpack.c.l.b16 %v987
      %v1017 = vunpack.c.l.b16 %v988
      %v1018 = vpack.c.b16 %v1011, %v1010
      %v1019 = vpack.c.b16 %v1013, %v1012
      %v1020 = vpack.c.b16 %v1015, %v1014
      %v1021 = vpack.c.b16 %v1017, %v1016
      %v1023 = vshrl.u32 %v1018, 16
      %v1025 = vshll.u32 %v1018, 16
      %v1027 = vrot.slane %v1025, 1
      %v1028 = vor.u32 %v1023, %v1027
      %v1030 = vshll.u32 %v1019, 16
      %v1032 = vrot.slane %v1030, 1
      %v1033 = vsel %vm514, %v1028, %v1032
      %v1034 = vshrl.u32 %v1019, 16
      %v1036 = vor.u32 %v1034, %v1032
      %v1038 = vshll.u32 %v1020, 16
      %v1040 = vrot.slane %v1038, 1
      %v1041 = vsel %vm514, %v1036, %v1040
      %v1042 = vshrl.u32 %v1020, 16
      %v1044 = vor.u32 %v1042, %v1040
      %v1046 = vshll.u32 %v1021, 16
      %v1048 = vrot.slane %v1046, 1
      %v1049 = vsel %vm514, %v1044, %v1048
      %v1050 = vshrl.u32 %v1021, 16
      %v1052 = vor.u32 %v1050, %v1048
      %v1065 = vunpack.c.l.b16 %v990
      %v1066 = vunpack.c.l.b16 %v991
      %v1067 = vunpack.c.l.b16 %v992
      %v1068 = vunpack.c.l.b16 %v993
      %v1069 = vunpack.c.l.b16 %v994
      %v1070 = vunpack.c.l.b16 %v995
      %v1071 = vunpack.c.l.b16 %v996
      %v1072 = vunpack.c.l.b16 %v997
      %v1073 = vunpack.c.l.b16 %v998
      %v1074 = vunpack.c.l.b16 %v999
      %v1075 = vunpack.c.l.b16 %v1000
      %v1076 = vunpack.c.l.b16 %v1001
      %v1077 = vpack.c.b16 %v1066, %v1065
      %v1078 = vpack.c.b16 %v1068, %v1067
      %v1079 = vpack.c.b16 %v1070, %v1069
      %v1080 = vpack.c.b16 %v1072, %v1071
      %v1081 = vpack.c.b16 %v1074, %v1073
      %v1082 = vpack.c.b16 %v1076, %v1075
      %v1090 = vsel %vm266, %v1033, 0
      %v1093 = vsel %vm266, %v1041, 0
      %v1096 = vsel %vm266, %v1049, 0
      %v1099 = vsel %vm266, %v1052, 0
      %1101 = vmatprep.subr.bf16.mxu0 0
      %1102 = vmatpush1.bf16.msra.mxu0 %v1077
      %1103 = vmatprep.subr.bf16.mxu0 0
      %1104 = vmatpush1.bf16.msra.mxu0 %v1078
      %1105 = vmatprep.subr.bf16.mxu0 0
      %1106 = vmatpush1.bf16.msra.mxu0 %v1079
      %1107 = vmatprep.subr.bf16.mxu0 0
      %1108 = vmatpush1.bf16.msra.mxu0 %v1080
      %1109 = vmatprep.subr.bf16.mxu0 0
      %1110 = vmatpush1.bf16.msra.mxu0 %v1081
      %1111 = vmatprep.subr.bf16.mxu0 0
      %1112 = vmatpush1.bf16.msra.mxu0 %v1082
      %1113 = vmatprep.subr.bf16.mxu0 0
      %1114 = vmatpush1.bf16.msra.mxu0 0
      %1115 = vmatprep.subr.bf16.mxu0 0
      %1116 = vmatpush1.bf16.msra.mxu0 0
      %1117 = vmatprep.subr.bf16.mxu0 0
      %1118 = vmatpush1.bf16.msra.mxu0 0
      %1119 = vmatprep.subr.bf16.mxu0 0
      %1120 = vmatpush1.bf16.msra.mxu0 0
      %1121 = vmatprep.subr.bf16.mxu0 0
      %1122 = vmatpush1.bf16.msra.mxu0 0
      %1123 = vmatprep.subr.bf16.mxu0 0
      %1124 = vmatpush1.bf16.msra.mxu0 0
      %1125 = vmatprep.subr.bf16.mxu0 0
      %1126 = vmatpush1.bf16.msra.mxu0 0
      %1127 = vmatprep.subr.bf16.mxu0 0
      %1128 = vmatpush1.bf16.msra.mxu0 0
      %1129 = vmatprep.subr.bf16.mxu0 0
      %1130 = vmatpush1.bf16.msra.mxu0 0
      %1131 = vmatprep.subr.bf16.mxu0 0
      %1132 = vmatpush1.bf16.msra.mxu0 0
      %1133 = vmatprep.mubr.bf16.mxu0 0
      %1134 = vmatmul.mubr.bf16.gmra.mrb[0].mxu0 %v1090
      %v1135 = vpop.f32.mrb[0].mxu0
      %v1136 = vadd.f32 0.0, %v1135
      %v1137 = vpop.f32.mrb[0].mxu0
      %v1138 = vpop.f32.mrb[0].mxu0
      %v1139 = vadd.f32 0.0, %v1138
      %v1140 = vpop.f32.mrb[0].mxu0
      %1141 = vmatprep.mubr.bf16.mxu0 0
      %1142 = vmatmul.mubr.bf16.gmra.mrb[0].mxu0 %v1093
      %v1143 = vpop.f32.mrb[0].mxu0
      %v1144 = vadd.f32 0.0, %v1143
      %v1145 = vpop.f32.mrb[0].mxu0
      %v1146 = vpop.f32.mrb[0].mxu0
      %v1147 = vadd.f32 0.0, %v1146
      %v1148 = vpop.f32.mrb[0].mxu0
      %1149 = vmatprep.mubr.bf16.mxu0 0
      %1150 = vmatmul.mubr.bf16.gmra.mrb[0].mxu0 %v1096
      %v1151 = vpop.f32.mrb[0].mxu0
      %v1152 = vadd.f32 0.0, %v1151
      %v1153 = vpop.f32.mrb[0].mxu0
      %v1154 = vpop.f32.mrb[0].mxu0
      %v1155 = vadd.f32 0.0, %v1154
      %v1156 = vpop.f32.mrb[0].mxu0
      %1157 = vmatprep.mubr.bf16.mxu0 0
      %1158 = vmatmul.mubr.bf16.gmra.mrb[0].mxu0 %v1099
      %v1159 = vpop.f32.mrb[0].mxu0
      %v1160 = vadd.f32 0.0, %v1159
      %v1161 = vpop.f32.mrb[0].mxu0
      %v1162 = vpop.f32.mrb[0].mxu0
      %v1163 = vpop.f32.mrb[0].mxu0
      %1164 = vdwg.mxu0
      %v1165 = vadd.f32 %v974, %v1136
      %v1166 = vadd.f32 %v975, %v1139
      %v1167 = vadd.f32 %v976, %v1144
      %v1168 = vadd.f32 %v977, %v1147
      %v1169 = vadd.f32 %v978, %v1152
      %v1170 = vadd.f32 %v979, %v1155
      %v1171 = vadd.f32 %v980, %v1160
      %v1172 = vld [vmem:[%s165 + $0x1c] sm:$0xf]
      %s1173 = scalar_lea.vmem %s1, 288
      %v1174 = vld [vmem:[%s1173] sm:$0xf]
      %v1175 = vld [vmem:[%s1173 + $0x4] sm:$0xf]
      %v1176 = vld [vmem:[%s1173 + $0x8] sm:$0xf]
      %v1177 = vld [vmem:[%s1173 + $0xc] sm:$0xf]
      %v1178 = vld [vmem:[%s1173 + $0x10] sm:$0xf]
      %v1179 = vld [vmem:[%s1173 + $0x14] sm:$0xf]
      %v1180 = vld [vmem:[%s1173 + $0x18] sm:$0xf]
      %v1181 = vld [vmem:[%s1173 + $0x1c] sm:$0xf]
      %v1182 = vld [vmem:[%s1173 + $0x20] sm:$0xf]
      %v1183 = vld [vmem:[%s1173 + $0x24] sm:$0xf]
      %v1184 = vld [vmem:[%s1173 + $0x28] sm:$0xf]
      %v1185 = vld [vmem:[%s1173 + $0x2c] sm:$0xf]
      %v1187 = vunpack.c.l.b16 %v1172
      %v1188 = vpack.c.b16 %v504, %v503
      %v1189 = vpack.c.b16 %v506, %v505
      %v1190 = vpack.c.b16 %v508, %v507
      %v1191 = vpack.c.b16 %v1187, %v1187
      %v1204 = vunpack.c.l.b16 %v1174
      %v1205 = vunpack.c.l.b16 %v1175
      %v1206 = vunpack.c.l.b16 %v1176
      %v1207 = vunpack.c.l.b16 %v1177
      %v1208 = vunpack.c.l.b16 %v1178
      %v1209 = vunpack.c.l.b16 %v1179
      %v1210 = vunpack.c.l.b16 %v1180
      %v1211 = vunpack.c.l.b16 %v1181
      %v1212 = vunpack.c.l.b16 %v1182
      %v1213 = vunpack.c.l.b16 %v1183
      %v1214 = vunpack.c.l.b16 %v1184
      %v1215 = vunpack.c.l.b16 %v1185
      %v1216 = vpack.c.b16 %v1205, %v1204
      %v1217 = vpack.c.b16 %v1207, %v1206
      %v1218 = vpack.c.b16 %v1209, %v1208
      %v1219 = vpack.c.b16 %v1211, %v1210
      %v1220 = vpack.c.b16 %v1213, %v1212
      %v1221 = vpack.c.b16 %v1215, %v1214
      %v1229 = vsel %vm266, %v1188, 0
      %v1232 = vsel %vm266, %v1189, 0
      %v1235 = vsel %vm266, %v1190, 0
      %v1238 = vsel %vm266, %v1191, 0
      %1240 = vmatprep.subr.bf16.mxu0 0
      %1241 = vmatpush1.bf16.msra.mxu0 %v1216
      %1242 = vmatprep.subr.bf16.mxu0 0
      %1243 = vmatpush1.bf16.msra.mxu0 %v1217
      %1244 = vmatprep.subr.bf16.mxu0 0
      %1245 = vmatpush1.bf16.msra.mxu0 %v1218
      %1246 = vmatprep.subr.bf16.mxu0 0
      %1247 = vmatpush1.bf16.msra.mxu0 %v1219
      %1248 = vmatprep.subr.bf16.mxu0 0
      %1249 = vmatpush1.bf16.msra.mxu0 %v1220
      %1250 = vmatprep.subr.bf16.mxu0 0
      %1251 = vmatpush1.bf16.msra.mxu0 %v1221
      %1252 = vmatprep.subr.bf16.mxu0 0
      %1253 = vmatpush1.bf16.msra.mxu0 0
      %1254 = vmatprep.subr.bf16.mxu0 0
      %1255 = vmatpush1.bf16.msra.mxu0 0
      %1256 = vmatprep.subr.bf16.mxu0 0
      %1257 = vmatpush1.bf16.msra.mxu0 0
      %1258 = vmatprep.subr.bf16.mxu0 0
      %1259 = vmatpush1.bf16.msra.mxu0 0
      %1260 = vmatprep.subr.bf16.mxu0 0
      %1261 = vmatpush1.bf16.msra.mxu0 0
      %1262 = vmatprep.subr.bf16.mxu0 0
      %1263 = vmatpush1.bf16.msra.mxu0 0
      %1264 = vmatprep.subr.bf16.mxu0 0
      %1265 = vmatpush1.bf16.msra.mxu0 0
      %1266 = vmatprep.subr.bf16.mxu0 0
      %1267 = vmatpush1.bf16.msra.mxu0 0
      %1268 = vmatprep.subr.bf16.mxu0 0
      %1269 = vmatpush1.bf16.msra.mxu0 0
      %1270 = vmatprep.subr.bf16.mxu0 0
      %1271 = vmatpush1.bf16.msra.mxu0 0
      %1272 = vmatprep.mubr.bf16.mxu0 0
      %1273 = vmatmul.mubr.bf16.gmra.mrb[0].mxu0 %v1229
      %v1274 = vpop.f32.mrb[0].mxu0
      %v1275 = vadd.f32 0.0, %v1274
      %v1276 = vpop.f32.mrb[0].mxu0
      %v1277 = vpop.f32.mrb[0].mxu0
      %v1278 = vadd.f32 0.0, %v1277
      %v1279 = vpop.f32.mrb[0].mxu0
      %1280 = vmatprep.mubr.bf16.mxu0 0
      %1281 = vmatmul.mubr.bf16.gmra.mrb[0].mxu0 %v1232
      %v1282 = vpop.f32.mrb[0].mxu0
      %v1283 = vadd.f32 0.0, %v1282
      %v1284 = vpop.f32.mrb[0].mxu0
      %v1285 = vpop.f32.mrb[0].mxu0
      %v1286 = vadd.f32 0.0, %v1285
      %v1287 = vpop.f32.mrb[0].mxu0
      %1288 = vmatprep.mubr.bf16.mxu0 0
      %1289 = vmatmul.mubr.bf16.gmra.mrb[0].mxu0 %v1235
      %v1290 = vpop.f32.mrb[0].mxu0
      %v1291 = vadd.f32 0.0, %v1290
      %v1292 = vpop.f32.mrb[0].mxu0
      %v1293 = vpop.f32.mrb[0].mxu0
      %v1294 = vadd.f32 0.0, %v1293
      %v1295 = vpop.f32.mrb[0].mxu0
      %1296 = vmatprep.mubr.bf16.mxu0 0
      %1297 = vmatmul.mubr.bf16.gmra.mrb[0].mxu0 %v1238
      %v1298 = vpop.f32.mrb[0].mxu0
      %v1299 = vadd.f32 0.0, %v1298
      %v1300 = vpop.f32.mrb[0].mxu0
      %v1301 = vpop.f32.mrb[0].mxu0
      %v1302 = vpop.f32.mrb[0].mxu0
      %1303 = vdwg.mxu0
      %v1304 = vadd.f32 %v1165, %v1275
      %v1305 = vadd.f32 %v1166, %v1278
      %v1306 = vadd.f32 %v1167, %v1283
      %v1307 = vadd.f32 %v1168, %v1286
      %v1308 = vadd.f32 %v1169, %v1291
      %v1309 = vadd.f32 %v1170, %v1294
      %v1310 = vadd.f32 %v1171, %v1299
      %v1311 = vld [vmem:[%s191 + $0x4] sm:$0xf]
      %v1312 = vld [vmem:[%s191 + $0x8] sm:$0xf]
      %v1313 = vld [vmem:[%s191 + $0xc] sm:$0xf]
      %v1314 = vld [vmem:[%s191 + $0x10] sm:$0xf]
      %v1315 = vld [vmem:[%s191 + $0x14] sm:$0xf]
      %v1316 = vld [vmem:[%s191 + $0x18] sm:$0xf]
      %v1317 = vld [vmem:[%s191 + $0x1c] sm:$0xf]
      %s1318 = scalar_lea.vmem %s1, 336
      %v1319 = vld [vmem:[%s1318] sm:$0xf]
      %v1320 = vld [vmem:[%s1318 + $0x4] sm:$0xf]
      %v1321 = vld [vmem:[%s1318 + $0x8] sm:$0xf]
      %v1322 = vld [vmem:[%s1318 + $0xc] sm:$0xf]
      %v1323 = vld [vmem:[%s1318 + $0x10] sm:$0xf]
      %v1324 = vld [vmem:[%s1318 + $0x14] sm:$0xf]
      %v1325 = vld [vmem:[%s1318 + $0x18] sm:$0xf]
      %v1326 = vld [vmem:[%s1318 + $0x1c] sm:$0xf]
      %v1327 = vld [vmem:[%s1318 + $0x20] sm:$0xf]
      %v1328 = vld [vmem:[%s1318 + $0x24] sm:$0xf]
      %v1329 = vld [vmem:[%s1318 + $0x28] sm:$0xf]
      %v1330 = vld [vmem:[%s1318 + $0x2c] sm:$0xf]
      %v1338 = vunpack.c.l.b16 %v1311
      %v1339 = vunpack.c.l.b16 %v1312
      %v1340 = vunpack.c.l.b16 %v1313
      %v1341 = vunpack.c.l.b16 %v1314
      %v1342 = vunpack.c.l.b16 %v1315
      %v1343 = vunpack.c.l.b16 %v1316
      %v1344 = vunpack.c.l.b16 %v1317
      %v1345 = vpack.c.b16 %v1339, %v1338
      %v1346 = vpack.c.b16 %v1341, %v1340
      %v1347 = vpack.c.b16 %v1343, %v1342
      %v1348 = vpack.c.b16 %v1344, %v1344
      %v1361 = vunpack.c.l.b16 %v1319
      %v1362 = vunpack.c.l.b16 %v1320
      %v1363 = vunpack.c.l.b16 %v1321
      %v1364 = vunpack.c.l.b16 %v1322
      %v1365 = vunpack.c.l.b16 %v1323
      %v1366 = vunpack.c.l.b16 %v1324
      %v1367 = vunpack.c.l.b16 %v1325
      %v1368 = vunpack.c.l.b16 %v1326
      %v1369 = vunpack.c.l.b16 %v1327
      %v1370 = vunpack.c.l.b16 %v1328
      %v1371 = vunpack.c.l.b16 %v1329
      %v1372 = vunpack.c.l.b16 %v1330
      %v1373 = vpack.c.b16 %v1362, %v1361
      %v1374 = vpack.c.b16 %v1364, %v1363
      %v1375 = vpack.c.b16 %v1366, %v1365
      %v1376 = vpack.c.b16 %v1368, %v1367
      %v1377 = vpack.c.b16 %v1370, %v1369
      %v1378 = vpack.c.b16 %v1372, %v1371
      %v1386 = vsel %vm266, %v1345, 0
      %v1389 = vsel %vm266, %v1346, 0
      %v1392 = vsel %vm266, %v1347, 0
      %v1395 = vsel %vm266, %v1348, 0
      %1397 = vmatprep.subr.bf16.mxu0 0
      %1398 = vmatpush1.bf16.msra.mxu0 %v1373
      %1399 = vmatprep.subr.bf16.mxu0 0
      %1400 = vmatpush1.bf16.msra.mxu0 %v1374
      %1401 = vmatprep.subr.bf16.mxu0 0
      %1402 = vmatpush1.bf16.msra.mxu0 %v1375
      %1403 = vmatprep.subr.bf16.mxu0 0
      %1404 = vmatpush1.bf16.msra.mxu0 %v1376
      %1405 = vmatprep.subr.bf16.mxu0 0
      %1406 = vmatpush1.bf16.msra.mxu0 %v1377
      %1407 = vmatprep.subr.bf16.mxu0 0
      %1408 = vmatpush1.bf16.msra.mxu0 %v1378
      %1409 = vmatprep.subr.bf16.mxu0 0
      %1410 = vmatpush1.bf16.msra.mxu0 0
      %1411 = vmatprep.subr.bf16.mxu0 0
      %1412 = vmatpush1.bf16.msra.mxu0 0
      %1413 = vmatprep.subr.bf16.mxu0 0
      %1414 = vmatpush1.bf16.msra.mxu0 0
      %1415 = vmatprep.subr.bf16.mxu0 0
      %1416 = vmatpush1.bf16.msra.mxu0 0
      %1417 = vmatprep.subr.bf16.mxu0 0
      %1418 = vmatpush1.bf16.msra.mxu0 0
      %1419 = vmatprep.subr.bf16.mxu0 0
      %1420 = vmatpush1.bf16.msra.mxu0 0
      %1421 = vmatprep.subr.bf16.mxu0 0
      %1422 = vmatpush1.bf16.msra.mxu0 0
      %1423 = vmatprep.subr.bf16.mxu0 0
      %1424 = vmatpush1.bf16.msra.mxu0 0
      %1425 = vmatprep.subr.bf16.mxu0 0
      %1426 = vmatpush1.bf16.msra.mxu0 0
      %1427 = vmatprep.subr.bf16.mxu0 0
      %1428 = vmatpush1.bf16.msra.mxu0 0
      %1429 = vmatprep.mubr.bf16.mxu0 0
      %1430 = vmatmul.mubr.bf16.gmra.mrb[0].mxu0 %v1386
      %v1431 = vpop.f32.mrb[0].mxu0
      %v1432 = vadd.f32 0.0, %v1431
      %v1433 = vpop.f32.mrb[0].mxu0
      %v1434 = vpop.f32.mrb[0].mxu0
      %v1435 = vadd.f32 0.0, %v1434
      %v1436 = vpop.f32.mrb[0].mxu0
      %1437 = vmatprep.mubr.bf16.mxu0 0
      %1438 = vmatmul.mubr.bf16.gmra.mrb[0].mxu0 %v1389
      %v1439 = vpop.f32.mrb[0].mxu0
      %v1440 = vadd.f32 0.0, %v1439
      %v1441 = vpop.f32.mrb[0].mxu0
      %v1442 = vpop.f32.mrb[0].mxu0
      %v1443 = vadd.f32 0.0, %v1442
      %v1444 = vpop.f32.mrb[0].mxu0
      %1445 = vmatprep.mubr.bf16.mxu0 0
      %1446 = vmatmul.mubr.bf16.gmra.mrb[0].mxu0 %v1392
      %v1447 = vpop.f32.mrb[0].mxu0
      %v1448 = vadd.f32 0.0, %v1447
      %v1449 = vpop.f32.mrb[0].mxu0
      %v1450 = vpop.f32.mrb[0].mxu0
      %v1451 = vadd.f32 0.0, %v1450
      %v1452 = vpop.f32.mrb[0].mxu0
      %1453 = vmatprep.mubr.bf16.mxu0 0
      %1454 = vmatmul.mubr.bf16.gmra.mrb[0].mxu0 %v1395
      %v1455 = vpop.f32.mrb[0].mxu0
      %v1456 = vadd.f32 0.0, %v1455
      %v1457 = vpop.f32.mrb[0].mxu0
      %v1458 = vpop.f32.mrb[0].mxu0
      %v1459 = vpop.f32.mrb[0].mxu0
      %1460 = vdwg.mxu0
      %v1461 = vadd.f32 %v1304, %v1432
      %v1462 = vadd.f32 %v1305, %v1435
      %v1463 = vadd.f32 %v1306, %v1440
      %v1464 = vadd.f32 %v1307, %v1443
      %v1465 = vadd.f32 %v1308, %v1448
      %v1466 = vadd.f32 %v1309, %v1451
      %v1467 = vadd.f32 %v1310, %v1456
      %v1468 = vld [vmem:[%s165 + $0x4] sm:$0xf]
      %v1469 = vld [vmem:[%s165 + $0x8] sm:$0xf]
      %v1470 = vld [vmem:[%s165 + $0xc] sm:$0xf]
      %v1471 = vld [vmem:[%s165 + $0x10] sm:$0xf]
      %v1472 = vld [vmem:[%s165 + $0x14] sm:$0xf]
      %v1473 = vld [vmem:[%s165 + $0x18] sm:$0xf]
      %v1474 = vld [vmem:[%s165 + $0x1c] sm:$0xf]
      %v1475 = vld [vmem:[%s165 + $0x20] sm:$0x1]
      %s1476 = scalar_lea.vmem %s1, 384
      %v1477 = vld [vmem:[%s1476] sm:$0xf]
      %v1478 = vld [vmem:[%s1476 + $0x4] sm:$0xf]
      %v1479 = vld [vmem:[%s1476 + $0x8] sm:$0xf]
      %v1480 = vld [vmem:[%s1476 + $0xc] sm:$0xf]
      %v1481 = vld [vmem:[%s1476 + $0x10] sm:$0xf]
      %v1482 = vld [vmem:[%s1476 + $0x14] sm:$0xf]
      %v1483 = vld [vmem:[%s1476 + $0x18] sm:$0xf]
      %v1484 = vld [vmem:[%s1476 + $0x1c] sm:$0xf]
      %v1485 = vld [vmem:[%s1476 + $0x20] sm:$0xf]
      %v1486 = vld [vmem:[%s1476 + $0x24] sm:$0xf]
      %v1487 = vld [vmem:[%s1476 + $0x28] sm:$0xf]
      %v1488 = vld [vmem:[%s1476 + $0x2c] sm:$0xf]
      %v1497 = vunpack.c.l.b16 %v1468
      %v1498 = vunpack.c.l.b16 %v1469
      %v1499 = vunpack.c.l.b16 %v1470
      %v1500 = vunpack.c.l.b16 %v1471
      %v1501 = vunpack.c.l.b16 %v1472
      %v1502 = vunpack.c.l.b16 %v1473
      %v1503 = vunpack.c.l.b16 %v1474
      %v1504 = vunpack.c.l.b16 %v1475
      %v1505 = vpack.c.b16 %v1498, %v1497
      %v1506 = vpack.c.b16 %v1500, %v1499
      %v1507 = vpack.c.b16 %v1502, %v1501
      %v1508 = vpack.c.b16 %v1504, %v1503
      %v1510 = vshrl.u32 %v1505, 16
      %v1512 = vshll.u32 %v1505, 16
      %v1514 = vrot.slane %v1512, 1
      %v1515 = vor.u32 %v1510, %v1514
      %v1517 = vshll.u32 %v1506, 16
      %v1519 = vrot.slane %v1517, 1
      %v1520 = vsel %vm514, %v1515, %v1519
      %v1521 = vshrl.u32 %v1506, 16
      %v1523 = vor.u32 %v1521, %v1519
      %v1525 = vshll.u32 %v1507, 16
      %v1527 = vrot.slane %v1525, 1
      %v1528 = vsel %vm514, %v1523, %v1527
      %v1529 = vshrl.u32 %v1507, 16
      %v1531 = vor.u32 %v1529, %v1527
      %v1533 = vshll.u32 %v1508, 16
      %v1535 = vrot.slane %v1533, 1
      %v1536 = vsel %vm514, %v1531, %v1535
      %v1537 = vshrl.u32 %v1508, 16
      %v1539 = vor.u32 %v1537, %v1535
      %v1552 = vunpack.c.l.b16 %v1477
      %v1553 = vunpack.c.l.b16 %v1478
      %v1554 = vunpack.c.l.b16 %v1479
      %v1555 = vunpack.c.l.b16 %v1480
      %v1556 = vunpack.c.l.b16 %v1481
      %v1557 = vunpack.c.l.b16 %v1482
      %v1558 = vunpack.c.l.b16 %v1483
      %v1559 = vunpack.c.l.b16 %v1484
      %v1560 = vunpack.c.l.b16 %v1485
      %v1561 = vunpack.c.l.b16 %v1486
      %v1562 = vunpack.c.l.b16 %v1487
      %v1563 = vunpack.c.l.b16 %v1488
      %v1564 = vpack.c.b16 %v1553, %v1552
      %v1565 = vpack.c.b16 %v1555, %v1554
      %v1566 = vpack.c.b16 %v1557, %v1556
      %v1567 = vpack.c.b16 %v1559, %v1558
      %v1568 = vpack.c.b16 %v1561, %v1560
      %v1569 = vpack.c.b16 %v1563, %v1562
      %v1577 = vsel %vm266, %v1520, 0
      %v1580 = vsel %vm266, %v1528, 0
      %v1583 = vsel %vm266, %v1536, 0
      %v1586 = vsel %vm266, %v1539, 0
      %1588 = vmatprep.subr.bf16.mxu0 0
      %1589 = vmatpush1.bf16.msra.mxu0 %v1564
      %1590 = vmatprep.subr.bf16.mxu0 0
      %1591 = vmatpush1.bf16.msra.mxu0 %v1565
      %1592 = vmatprep.subr.bf16.mxu0 0
      %1593 = vmatpush1.bf16.msra.mxu0 %v1566
      %1594 = vmatprep.subr.bf16.mxu0 0
      %1595 = vmatpush1.bf16.msra.mxu0 %v1567
      %1596 = vmatprep.subr.bf16.mxu0 0
      %1597 = vmatpush1.bf16.msra.mxu0 %v1568
      %1598 = vmatprep.subr.bf16.mxu0 0
      %1599 = vmatpush1.bf16.msra.mxu0 %v1569
      %1600 = vmatprep.subr.bf16.mxu0 0
      %1601 = vmatpush1.bf16.msra.mxu0 0
      %1602 = vmatprep.subr.bf16.mxu0 0
      %1603 = vmatpush1.bf16.msra.mxu0 0
      %1604 = vmatprep.subr.bf16.mxu0 0
      %1605 = vmatpush1.bf16.msra.mxu0 0
      %1606 = vmatprep.subr.bf16.mxu0 0
      %1607 = vmatpush1.bf16.msra.mxu0 0
      %1608 = vmatprep.subr.bf16.mxu0 0
      %1609 = vmatpush1.bf16.msra.mxu0 0
      %1610 = vmatprep.subr.bf16.mxu0 0
      %1611 = vmatpush1.bf16.msra.mxu0 0
      %1612 = vmatprep.subr.bf16.mxu0 0
      %1613 = vmatpush1.bf16.msra.mxu0 0
      %1614 = vmatprep.subr.bf16.mxu0 0
      %1615 = vmatpush1.bf16.msra.mxu0 0
      %1616 = vmatprep.subr.bf16.mxu0 0
      %1617 = vmatpush1.bf16.msra.mxu0 0
      %1618 = vmatprep.subr.bf16.mxu0 0
      %1619 = vmatpush1.bf16.msra.mxu0 0
      %1620 = vmatprep.mubr.bf16.mxu0 0
      %1621 = vmatmul.mubr.bf16.gmra.mrb[0].mxu0 %v1577
      %v1622 = vpop.f32.mrb[0].mxu0
      %v1623 = vadd.f32 0.0, %v1622
      %v1624 = vpop.f32.mrb[0].mxu0
      %v1625 = vpop.f32.mrb[0].mxu0
      %v1626 = vadd.f32 0.0, %v1625
      %v1627 = vpop.f32.mrb[0].mxu0
      %1628 = vmatprep.mubr.bf16.mxu0 0
      %1629 = vmatmul.mubr.bf16.gmra.mrb[0].mxu0 %v1580
      %v1630 = vpop.f32.mrb[0].mxu0
      %v1631 = vadd.f32 0.0, %v1630
      %v1632 = vpop.f32.mrb[0].mxu0
      %v1633 = vpop.f32.mrb[0].mxu0
      %v1634 = vadd.f32 0.0, %v1633
      %v1635 = vpop.f32.mrb[0].mxu0
      %1636 = vmatprep.mubr.bf16.mxu0 0
      %1637 = vmatmul.mubr.bf16.gmra.mrb[0].mxu0 %v1583
      %v1638 = vpop.f32.mrb[0].mxu0
      %v1639 = vadd.f32 0.0, %v1638
      %v1640 = vpop.f32.mrb[0].mxu0
      %v1641 = vpop.f32.mrb[0].mxu0
      %v1642 = vadd.f32 0.0, %v1641
      %v1643 = vpop.f32.mrb[0].mxu0
      %1644 = vmatprep.mubr.bf16.mxu0 0
      %1645 = vmatmul.mubr.bf16.gmra.mrb[0].mxu0 %v1586
      %v1646 = vpop.f32.mrb[0].mxu0
      %v1647 = vadd.f32 0.0, %v1646
      %v1648 = vpop.f32.mrb[0].mxu0
      %v1649 = vpop.f32.mrb[0].mxu0
      %v1650 = vpop.f32.mrb[0].mxu0
      %1651 = vdwg.mxu0
      %v1652 = vadd.f32 %v1461, %v1623
      %v1653 = vadd.f32 %v1462, %v1626
      %v1654 = vadd.f32 %v1463, %v1631
      %v1655 = vadd.f32 %v1464, %v1634
      %v1656 = vadd.f32 %v1465, %v1639
      %v1657 = vadd.f32 %v1466, %v1642
      %v1658 = vadd.f32 %v1467, %v1647
      %v1659 = vld [vmem:[%s2] sm:$0x1]
      %v1661 = vlaneseq
      %v1662 = vshrl.u32 %v1661, 7
      %v1663 = vsub.s32 0, %v1662
      %v1664 = vrot.slane %v1659, %v1663
      %v1666 = vadd.f32 %v1652, %v1664
      %v1667 = vadd.f32 %v1653, %v1664
      %v1668 = vadd.f32 %v1654, %v1664
      %v1669 = vadd.f32 %v1655, %v1664
      %v1670 = vadd.f32 %v1656, %v1664
      %v1671 = vadd.f32 %v1657, %v1664
      %v1672 = vadd.f32 %v1658, %v1664
      %v1673 = vmax.f32 %v1666, 0.0
      %v1674 = vmax.f32 %v1667, 0.0
      %v1675 = vmax.f32 %v1668, 0.0
      %v1676 = vmax.f32 %v1669, 0.0
      %v1677 = vmax.f32 %v1670, 0.0
      %v1678 = vmax.f32 %v1671, 0.0
      %v1679 = vmax.f32 %v1672, 0.0
      %1680 = vst [vmem:[%s170] sm:$0xff] %v1673
      %1681 = vst [vmem:[%s170 + $0x8] sm:$0xff] %v1674
      %1682 = vst [vmem:[%s170 + $0x10] sm:$0xff] %v1675
      %1683 = vst [vmem:[%s170 + $0x18] sm:$0xff] %v1676
      %1684 = vst [vmem:[%s170 + $0x20] sm:$0xff] %v1677
      %1685 = vst [vmem:[%s170 + $0x28] sm:$0xff] %v1678
      %1686 = vst [vmem:[%s170 + $0x30] sm:$0xff] %v1679
      %p1687 = scmp.lt.s32.totalorder %s14, 1
      %s1688 = scalar_select %p1687, %s14, 1
      %s1689 = smul.addr %s1688, 7
      %s1690 = smul.addr %s1689, 8
      %s1691 = scalar_lea.vmem %s3, %s1690
      // Predicated region
      $region33: #{make_b_forward.8} parent=31 // pred_check
        %p1692 = pneg %p100
      $region34: #{make_b_forward.8} parent=31 // pred_check_branch
        %1694 = sbr.rel (%p1692) target = $region36
      $region35: #{make_b_forward.8} parent=31 // pred_region
        _
      $region36: #{make_b_forward.8} parent=31 // pred_fallthru
        _
    $region32: #{make_b_forward.8} parent=5 // pred_fallthru
      _
    %p1695 = scmp.le.s32.totalorder 2, %s9
    // Predicated region
    $region37: #{make_b_forward.8} parent=5 // pred_check
      %p1696 = pneg %p1695
    $region38: #{make_b_forward.8} parent=5 // pred_check_branch
      %1698 = sbr.rel (%p1696) target = $region40
    $region39: #{make_b_forward.8} parent=5 // pred_region
      %s1699 = ssub.s32 %s9, 2
      // Predicated region
      $region41: #{make_b_forward.8} parent=39 // pred_check
        %p1700 = pneg %p106
      $region42: #{make_b_forward.8} parent=39 // pred_check_branch
        %1702 = sbr.rel (%p1700) target = $region44
      $region43: #{make_b_forward.8} parent=39 // pred_region
        %p1703 = scmp.lt.s32.totalorder %s15, 1
        %s1704 = scalar_select %p1703, %s15, 1
        %s1705 = smul.addr %s1704, 7
        %s1706 = smul.addr %s1705, 8
        %s1707 = scalar_lea.vmem %s3, %s1706
      $region44: #{make_b_forward.8} parent=39 // pred_fallthru
        _
    $region40: #{make_b_forward.8} parent=5 // pred_fallthru
      _
  $region6: #{make_b_forward.8} parent=0 // loop_footer
    %s13 = sadd.s32 1, %s9
  $region7: #{make_b_forward.8} parent=0 // loop_footer_branch
    %8 = sbr.rel target = $region3
  $region8: #{make_b_forward.8} parent=0 // loop_exit
    _

// kernel: make_b_forward.9
$region0: #{make_b_forward.9}
  #allocation0 [shape = 'u32[]', space=smem, size = 0x4, offset = 0x4, fixed_abs, tag = 'smem constant byte address 0x4 - core index']
  #allocation1 [shape = 'u32[144,128]{1,0:T(1,128)}', space=vmem, size = 0x12000, scoped, tag = 'internal scratch']
  %s0 = inlined_call_operand.vmem [shape: f32[2,2,2,72,4], index: 0, kind: input, shape index: {}]
  %s1 = inlined_call_operand.vmem [shape: f32[2,56,4], index: 1, kind: output, shape index: {}]
  %s2 = sld [smem:[#allocation0]]
  $region37: #{make_b_forward.9} parent=0
    _
  %s4 = ssub.s32 1, %s2
  %s5 = scalar_select 0, %s4, %s2
  loop: start=0, step=1, limit=4
  $region2: #{make_b_forward.9} parent=0 // loop_pre_header
    _
  $region3: #{make_b_forward.9} parent=0 // loop_header
    %s7 = sphi 0, %s11
    %p8 = scmp.ge.s32.totalorder %s7, 4
    %s17 = sphi 0, %s19
    %s20 = sphi 0, %s17
    %s21 = sphi 0, %s20
    %s37 = sphi 0, %s21
    %s43 = sphi 0, %s45
    %s46 = sphi 0, %s43
    %s47 = sphi 0, %s46
    %s63 = sphi 0, %s47
  $region4: #{make_b_forward.9} parent=0 // loop_header_branch
    %10 = sbr.rel (%p8) target = $region8
  $region5: #{make_b_forward.9} parent=0 // loop_body
    %s12 = ssub.s32 %s7, 1
    %s13 = ssub.s32 %s7, 2
    %s14 = sadd.s32 %s7, 1
    %s15 = ssub.s32 %s7, %s14
    %p16 = scmp.eq.s32.totalorder %s15, 0
    %s18 = sadd.s32 %s17, 1
    %s19 = scalar_select %p16, %s17, %s18
    %p22 = pneg %p16
    %p23 = scmp.eq.s32.totalorder %s7, 1
    %p24 = por %p22, %p23
    %p25 = scmp.ne.s32.totalorder %s17, %s20
    %p26 = scmp.eq.s32.totalorder %s7, 0
    %p27 = por %p25, %p26
    %p28 = scmp.ne.s32.totalorder %s17, %s20
    %p29 = scmp.eq.s32.totalorder %s12, 1
    %p30 = por %p28, %p29
    %p31 = scmp.ne.s32.totalorder %s20, %s21
    %p32 = scmp.eq.s32.totalorder %s12, 0
    %p33 = por %p31, %p32
    %p34 = scmp.ne.s32.totalorder %s20, %s21
    %p35 = scmp.eq.s32.totalorder %s13, 1
    %p36 = por %p34, %p35
    %p38 = scmp.ne.s32.totalorder %s21, %s37
    %p39 = scmp.eq.s32.totalorder %s13, 0
    %p40 = por %p38, %p39
    %s41 = ssub.s32 %s7, %s14
    %p42 = scmp.eq.s32.totalorder %s41, 0
    %s44 = sadd.s32 %s43, 1
    %s45 = scalar_select %p42, %s43, %s44
    %p48 = pneg %p42
    %p49 = scmp.eq.s32.totalorder %s7, 1
    %p50 = por %p48, %p49
    %p51 = scmp.ne.s32.totalorder %s43, %s46
    %p52 = scmp.eq.s32.totalorder %s7, 0
    %p53 = por %p51, %p52
    %p54 = scmp.ne.s32.totalorder %s43, %s46
    %p55 = scmp.eq.s32.totalorder %s12, 1
    %p56 = por %p54, %p55
    %p57 = scmp.ne.s32.totalorder %s46, %s47
    %p58 = scmp.eq.s32.totalorder %s12, 0
    %p59 = por %p57, %p58
    %p60 = scmp.ne.s32.totalorder %s46, %s47
    %p61 = scmp.eq.s32.totalorder %s13, 1
    %p62 = por %p60, %p61
    %p64 = scmp.ne.s32.totalorder %s47, %s63
    %p65 = scmp.eq.s32.totalorder %s13, 0
    %p66 = por %p64, %p65
    %p67 = scmp.le.s32.totalorder 1, %s7
    %p68 = scmp.lt.s32.totalorder %s7, 3
    %p69 = pnand %p67, %p68
    %p70 = pneg %p69
    // Predicated region
    $region9: #{make_b_forward.9} parent=5 // pred_check
      _
    $region10: #{make_b_forward.9} parent=5 // pred_check_branch
      %72 = sbr.rel (%p69) target = $region12
    $region11: #{make_b_forward.9} parent=5 // pred_region
      %s73 = ssub.s32 %s7, 1
    $region12: #{make_b_forward.9} parent=5 // pred_fallthru
      _
    %p74 = scmp.lt.s32.totalorder %s7, 2
    // Predicated region
    $region13: #{make_b_forward.9} parent=5 // pred_check
      %p75 = pneg %p74
    $region14: #{make_b_forward.9} parent=5 // pred_check_branch
      %77 = sbr.rel (%p75) target = $region16
    $region15: #{make_b_forward.9} parent=5 // pred_region
      // Predicated region
      $region17: #{make_b_forward.9} parent=15 // pred_check
        %p78 = pneg %p27
      $region18: #{make_b_forward.9} parent=15 // pred_check_branch
        %80 = sbr.rel (%p78) target = $region20
      $region19: #{make_b_forward.9} parent=15 // pred_region
        %p81 = scmp.lt.s32.totalorder %s7, 1
        %s82 = scalar_select %p81, %s7, 1
        %s83 = smul.addr %s82, 36
        %s84 = smul.addr %s83, 8
        %s85 = scalar_lea.vmem %s0, %s84
      $region20: #{make_b_forward.9} parent=15 // pred_fallthru
        _
    $region16: #{make_b_forward.9} parent=5 // pred_fallthru
      _
    %p86 = scmp.le.s32.totalorder 1, %s7
    %p87 = scmp.lt.s32.totalorder %s7, 3
    %p88 = pnand %p86, %p87
    %p89 = pneg %p88
    // Predicated region
    $region21: #{make_b_forward.9} parent=5 // pred_check
      _
    $region22: #{make_b_forward.9} parent=5 // pred_check_branch
      %91 = sbr.rel (%p88) target = $region24
    $region23: #{make_b_forward.9} parent=5 // pred_region
      %s92 = ssub.s32 %s7, 1
      %p93 = scmp.lt.s32.totalorder %s12, 1
      %s94 = scalar_select %p93, %s12, 1
      %s95 = smul.addr %s94, 36
      %s96 = smul.addr %s95, 8
      %s97 = scalar_lea.vmem %s0, %s96
      %p98 = pneg %p33
      %p99 = pneg %p30
      %p100 = pneg %p59
      %p101 = pneg %p56
      %p102 = scmp.lt.s32.totalorder %s12, 1
      %s103 = scalar_select %p102, %s12, 1
      %s104 = smul.addr %s103, 7
      %s105 = smul.addr %s104, 8
      %s106 = scalar_lea.vmem %s1, %s105
      %p107 = scmp.lt.s32.totalorder %s12, 1
      %s108 = scalar_select %p107, %s12, 1
      %s109 = smul.addr %s108, 36
      %s110 = smul.addr %s109, 8
      %s111 = scalar_lea.vmem %s0, %s110
      %p112 = scmp.lt.s32.totalorder %s12, 1
      %s113 = scalar_select %p112, %s12, 1
      %s114 = smul.addr %s113, 7
      %s115 = smul.addr %s114, 8
      %s116 = scalar_lea.vmem %s1, %s115
      %v117 = vld [vmem:[%s111] sm:$0xff]
      %v118 = vld [vmem:[%s111 + $0x8] sm:$0xff]
      %v119 = vld [vmem:[%s111 + $0x10] sm:$0xff]
      %v120 = vld [vmem:[%s111 + $0x18] sm:$0xff]
      %v121 = vld [vmem:[%s111 + $0x20] sm:$0xff]
      %v122 = vld [vmem:[%s111 + $0x28] sm:$0xff]
      %v123 = vld [vmem:[%s111 + $0x30] sm:$0xff]
      %s124 = scalar_lea.vmem %s111, 72
      %v125 = vld [vmem:[%s124] sm:$0xff]
      %v126 = vld [vmem:[%s124 + $0x8] sm:$0xff]
      %v127 = vld [vmem:[%s124 + $0x10] sm:$0xff]
      %v128 = vld [vmem:[%s124 + $0x18] sm:$0xff]
      %v129 = vld [vmem:[%s124 + $0x20] sm:$0xff]
      %v130 = vld [vmem:[%s124 + $0x28] sm:$0xff]
      %v131 = vld [vmem:[%s124 + $0x30] sm:$0xff]
      %v132 = vmax.f32 %v117, %v125
      %v133 = vmax.f32 %v118, %v126
      %v134 = vmax.f32 %v119, %v127
      %v135 = vmax.f32 %v120, %v128
      %v136 = vmax.f32 %v121, %v129
      %v137 = vmax.f32 %v122, %v130
      %v138 = vmax.f32 %v123, %v131
      %v139 = vld [vmem:[%s111 + $0x1] sm:$0xff]
      %v140 = vld [vmem:[%s111 + $0x9] sm:$0xff]
      %v141 = vld [vmem:[%s111 + $0x11] sm:$0xff]
      %v142 = vld [vmem:[%s111 + $0x19] sm:$0xff]
      %v143 = vld [vmem:[%s111 + $0x21] sm:$0xff]
      %v144 = vld [vmem:[%s111 + $0x29] sm:$0xff]
      %v145 = vld [vmem:[%s111 + $0x31] sm:$0xff]
      %v146 = vmax.f32 %v132, %v139
      %v147 = vmax.f32 %v133, %v140
      %v148 = vmax.f32 %v134, %v141
      %v149 = vmax.f32 %v135, %v142
      %v150 = vmax.f32 %v136, %v143
      %v151 = vmax.f32 %v137, %v144
      %v152 = vmax.f32 %v138, %v145
      %s153 = scalar_lea.vmem %s111, 144
      %v154 = vld [vmem:[%s153] sm:$0xff]
      %v155 = vld [vmem:[%s153 + $0x8] sm:$0xff]
      %v156 = vld [vmem:[%s153 + $0x10] sm:$0xff]
      %v157 = vld [vmem:[%s153 + $0x18] sm:$0xff]
      %v158 = vld [vmem:[%s153 + $0x20] sm:$0xff]
      %v159 = vld [vmem:[%s153 + $0x28] sm:$0xff]
      %v160 = vld [vmem:[%s153 + $0x30] sm:$0xff]
      %v161 = vmax.f32 %v146, %v154
      %v162 = vmax.f32 %v147, %v155
      %v163 = vmax.f32 %v148, %v156
      %v164 = vmax.f32 %v149, %v157
      %v165 = vmax.f32 %v150, %v158
      %v166 = vmax.f32 %v151, %v159
      %v167 = vmax.f32 %v152, %v160
      %s168 = scalar_lea.vmem %s111, 216
      %v169 = vld [vmem:[%s168] sm:$0xff]
      %v170 = vld [vmem:[%s168 + $0x8] sm:$0xff]
      %v171 = vld [vmem:[%s168 + $0x10] sm:$0xff]
      %v172 = vld [vmem:[%s168 + $0x18] sm:$0xff]
      %v173 = vld [vmem:[%s168 + $0x20] sm:$0xff]
      %v174 = vld [vmem:[%s168 + $0x28] sm:$0xff]
      %v175 = vld [vmem:[%s168 + $0x30] sm:$0xff]
      %v176 = vmax.f32 %v161, %v169
      %v177 = vmax.f32 %v162, %v170
      %v178 = vmax.f32 %v163, %v171
      %v179 = vmax.f32 %v164, %v172
      %v180 = vmax.f32 %v165, %v173
      %v181 = vmax.f32 %v166, %v174
      %v182 = vmax.f32 %v167, %v175
      %v183 = vld [vmem:[%s153 + $0x1] sm:$0xff]
      %v184 = vld [vmem:[%s153 + $0x9] sm:$0xff]
      %v185 = vld [vmem:[%s153 + $0x11] sm:$0xff]
      %v186 = vld [vmem:[%s153 + $0x19] sm:$0xff]
      %v187 = vld [vmem:[%s153 + $0x21] sm:$0xff]
      %v188 = vld [vmem:[%s153 + $0x29] sm:$0xff]
      %v189 = vld [vmem:[%s153 + $0x31] sm:$0xff]
      %v190 = vmax.f32 %v176, %v183
      %v191 = vmax.f32 %v177, %v184
      %v192 = vmax.f32 %v178, %v185
      %v193 = vmax.f32 %v179, %v186
      %v194 = vmax.f32 %v180, %v187
      %v195 = vmax.f32 %v181, %v188
      %v196 = vmax.f32 %v182, %v189
      %v197 = vld [vmem:[%s111 + $0x38] sm:$0xff]
      %v198 = vmax.f32 %v190, %v118
      %v199 = vmax.f32 %v191, %v119
      %v200 = vmax.f32 %v192, %v120
      %v201 = vmax.f32 %v193, %v121
      %v202 = vmax.f32 %v194, %v122
      %v203 = vmax.f32 %v195, %v123
      %v204 = vmax.f32 %v196, %v197
      %v205 = vld [vmem:[%s124 + $0x38] sm:$0xff]
      %v206 = vmax.f32 %v198, %v126
      %v207 = vmax.f32 %v199, %v127
      %v208 = vmax.f32 %v200, %v128
      %v209 = vmax.f32 %v201, %v129
      %v210 = vmax.f32 %v202, %v130
      %v211 = vmax.f32 %v203, %v131
      %v212 = vmax.f32 %v204, %v205
      %v213 = vld [vmem:[%s111 + $0x39] sm:$0xff]
      %v214 = vmax.f32 %v206, %v140
      %v215 = vmax.f32 %v207, %v141
      %v216 = vmax.f32 %v208, %v142
      %v217 = vmax.f32 %v209, %v143
      %v218 = vmax.f32 %v210, %v144
      %v219 = vmax.f32 %v211, %v145
      %v220 = vmax.f32 %v212, %v213
      %vm221 = vcmask 31744
      %222 = vst.msk [vmem:[%s116] sm:$0xff] %vm221, %v214
      %223 = vst.msk [vmem:[%s116 + $0x8] sm:$0xff] %vm221, %v215
      %224 = vst.msk [vmem:[%s116 + $0x10] sm:$0xff] %vm221, %v216
      %225 = vst.msk [vmem:[%s116 + $0x18] sm:$0xff] %vm221, %v217
      %226 = vst.msk [vmem:[%s116 + $0x20] sm:$0xff] %vm221, %v218
      %227 = vst.msk [vmem:[%s116 + $0x28] sm:$0xff] %vm221, %v219
      %228 = vst.msk [vmem:[%s116 + $0x30] sm:$0xff] %vm221, %v220
      %p229 = scmp.lt.s32.totalorder %s12, 1
      %s230 = scalar_select %p229, %s12, 1
      %s231 = smul.addr %s230, 7
      %s232 = smul.addr %s231, 8
      %s233 = scalar_lea.vmem %s1, %s232
      // Predicated region
      $region25: #{make_b_forward.9} parent=23 // pred_check
        %p234 = pneg %p56
      $region26: #{make_b_forward.9} parent=23 // pred_check_branch
        %236 = sbr.rel (%p234) target = $region28
      $region27: #{make_b_forward.9} parent=23 // pred_region
        _
      $region28: #{make_b_forward.9} parent=23 // pred_fallthru
        _
    $region24: #{make_b_forward.9} parent=5 // pred_fallthru
      _
    %p237 = scmp.le.s32.totalorder 2, %s7
    // Predicated region
    $region29: #{make_b_forward.9} parent=5 // pred_check
      %p238 = pneg %p237
    $region30: #{make_b_forward.9} parent=5 // pred_check_branch
      %240 = sbr.rel (%p238) target = $region32
    $region31: #{make_b_forward.9} parent=5 // pred_region
      %s241 = ssub.s32 %s7, 2
      // Predicated region
      $region33: #{make_b_forward.9} parent=31 // pred_check
        %p242 = pneg %p62
      $region34: #{make_b_forward.9} parent=31 // pred_check_branch
        %244 = sbr.rel (%p242) target = $region36
      $region35: #{make_b_forward.9} parent=31 // pred_region
        %p245 = scmp.lt.s32.totalorder %s13, 1
        %s246 = scalar_select %p245, %s13, 1
        %s247 = smul.addr %s246, 7
        %s248 = smul.addr %s247, 8
        %s249 = scalar_lea.vmem %s1, %s248
      $region36: #{make_b_forward.9} parent=31 // pred_fallthru
        _
    $region32: #{make_b_forward.9} parent=5 // pred_fallthru
      _
  $region6: #{make_b_forward.9} parent=0 // loop_footer
    %s11 = sadd.s32 1, %s7
  $region7: #{make_b_forward.9} parent=0 // loop_footer_branch
    %6 = sbr.rel target = $region3
  $region8: #{make_b_forward.9} parent=0 // loop_exit
    _

// kernel: make_b_forward.5
$region0: #{make_b_forward.5}
  #allocation0 [shape = 'u32[]', space=smem, size = 0x4, offset = 0x4, fixed_abs, tag = 'smem constant byte address 0x4 - core index']
  #allocation1 [shape = 'u32[144,128]{1,0:T(1,128)}', space=vmem, size = 0x12000, scoped, tag = 'internal scratch']
  %s0 = inlined_call_operand.vmem [shape: bf16[2,2,2,72,4], index: 0, kind: input, shape index: {}]
  %s1 = inlined_call_operand.vmem [shape: bf16[9,4,384], index: 1, kind: input, shape index: {}]
  %s2 = inlined_call_operand.vmem [shape: f32[1,384], index: 2, kind: input, shape index: {}]
  %s3 = inlined_call_operand.vmem [shape: f32[2,56,384], index: 3, kind: output, shape index: {}]
  %s4 = sld [smem:[#allocation0]]
  $region45: #{make_b_forward.5} parent=0
    _
  %s6 = ssub.s32 1, %s4
  %s7 = scalar_select 0, %s6, %s4
  loop: start=0, step=1, limit=4
  $region2: #{make_b_forward.5} parent=0 // loop_pre_header
    _
  $region3: #{make_b_forward.5} parent=0 // loop_header
    %s9 = sphi 0, %s13
    %p10 = scmp.ge.s32.totalorder %s9, 4
    %s19 = sphi 0, %s21
    %s22 = sphi 0, %s19
    %s23 = sphi 0, %s22
    %s39 = sphi 0, %s23
    %s43 = sphi 0, %s43
    %s45 = sphi 0, %s43
    %s46 = sphi 0, %s45
    %s60 = sphi 0, %s46
    %s64 = sphi 0, %s64
    %s66 = sphi 0, %s64
    %s67 = sphi 0, %s66
    %s81 = sphi 0, %s67
    %s87 = sphi 0, %s89
    %s90 = sphi 0, %s87
    %s91 = sphi 0, %s90
    %s107 = sphi 0, %s91
  $region4: #{make_b_forward.5} parent=0 // loop_header_branch
    %12 = sbr.rel (%p10) target = $region8
  $region5: #{make_b_forward.5} parent=0 // loop_body
    %s14 = ssub.s32 %s9, 1
    %s15 = ssub.s32 %s9, 2
    %s16 = sadd.s32 %s9, 1
    %s17 = ssub.s32 %s9, %s16
    %p18 = scmp.eq.s32.totalorder %s17, 0
    %s20 = sadd.s32 %s19, 1
    %s21 = scalar_select %p18, %s19, %s20
    %p24 = pneg %p18
    %p25 = scmp.eq.s32.totalorder %s9, 1
    %p26 = por %p24, %p25
    %p27 = scmp.ne.s32.totalorder %s19, %s22
    %p28 = scmp.eq.s32.totalorder %s9, 0
    %p29 = por %p27, %p28
    %p30 = scmp.ne.s32.totalorder %s19, %s22
    %p31 = scmp.eq.s32.totalorder %s14, 1
    %p32 = por %p30, %p31
    %p33 = scmp.ne.s32.totalorder %s22, %s23
    %p34 = scmp.eq.s32.totalorder %s14, 0
    %p35 = por %p33, %p34
    %p36 = scmp.ne.s32.totalorder %s22, %s23
    %p37 = scmp.eq.s32.totalorder %s15, 1
    %p38 = por %p36, %p37
    %p40 = scmp.ne.s32.totalorder %s23, %s39
    %p41 = scmp.eq.s32.totalorder %s15, 0
    %p42 = por %p40, %p41
    %s44 = sadd.s32 %s43, 1
    %p47 = scmp.eq.s32.totalorder %s9, 1
    %p48 = scmp.ne.s32.totalorder %s43, %s45
    %p49 = scmp.eq.s32.totalorder %s9, 0
    %p50 = por %p48, %p49
    %p51 = scmp.ne.s32.totalorder %s43, %s45
    %p52 = scmp.eq.s32.totalorder %s14, 1
    %p53 = por %p51, %p52
    %p54 = scmp.ne.s32.totalorder %s45, %s46
    %p55 = scmp.eq.s32.totalorder %s14, 0
    %p56 = por %p54, %p55
    %p57 = scmp.ne.s32.totalorder %s45, %s46
    %p58 = scmp.eq.s32.totalorder %s15, 1
    %p59 = por %p57, %p58
    %p61 = scmp.ne.s32.totalorder %s46, %s60
    %p62 = scmp.eq.s32.totalorder %s15, 0
    %p63 = por %p61, %p62
    %s65 = sadd.s32 %s64, 1
    %p68 = scmp.eq.s32.totalorder %s9, 1
    %p69 = scmp.ne.s32.totalorder %s64, %s66
    %p70 = scmp.eq.s32.totalorder %s9, 0
    %p71 = por %p69, %p70
    %p72 = scmp.ne.s32.totalorder %s64, %s66
    %p73 = scmp.eq.s32.totalorder %s14, 1
    %p74 = por %p72, %p73
    %p75 = scmp.ne.s32.totalorder %s66, %s67
    %p76 = scmp.eq.s32.totalorder %s14, 0
    %p77 = por %p75, %p76
    %p78 = scmp.ne.s32.totalorder %s66, %s67
    %p79 = scmp.eq.s32.totalorder %s15, 1
    %p80 = por %p78, %p79
    %p82 = scmp.ne.s32.totalorder %s67, %s81
    %p83 = scmp.eq.s32.totalorder %s15, 0
    %p84 = por %p82, %p83
    %s85 = ssub.s32 %s9, %s16
    %p86 = scmp.eq.s32.totalorder %s85, 0
    %s88 = sadd.s32 %s87, 1
    %s89 = scalar_select %p86, %s87, %s88
    %p92 = pneg %p86
    %p93 = scmp.eq.s32.totalorder %s9, 1
    %p94 = por %p92, %p93
    %p95 = scmp.ne.s32.totalorder %s87, %s90
    %p96 = scmp.eq.s32.totalorder %s9, 0
    %p97 = por %p95, %p96
    %p98 = scmp.ne.s32.totalorder %s87, %s90
    %p99 = scmp.eq.s32.totalorder %s14, 1
    %p100 = por %p98, %p99
    %p101 = scmp.ne.s32.totalorder %s90, %s91
    %p102 = scmp.eq.s32.totalorder %s14, 0
    %p103 = por %p101, %p102
    %p104 = scmp.ne.s32.totalorder %s90, %s91
    %p105 = scmp.eq.s32.totalorder %s15, 1
    %p106 = por %p104, %p105
    %p108 = scmp.ne.s32.totalorder %s91, %s107
    %p109 = scmp.eq.s32.totalorder %s15, 0
    %p110 = por %p108, %p109
    %p111 = scmp.le.s32.totalorder 1, %s9
    %p112 = scmp.lt.s32.totalorder %s9, 3
    %p113 = pnand %p111, %p112
    %p114 = pneg %p113
    // Predicated region
    $region9: #{make_b_forward.5} parent=5 // pred_check
      _
    $region10: #{make_b_forward.5} parent=5 // pred_check_branch
      %116 = sbr.rel (%p113) target = $region12
    $region11: #{make_b_forward.5} parent=5 // pred_region
      %s117 = ssub.s32 %s9, 1
      // Predicated region
      $region13: #{make_b_forward.5} parent=11 // pred_check
        %p118 = pneg %p56
      $region14: #{make_b_forward.5} parent=11 // pred_check_branch
        %120 = sbr.rel (%p118) target = $region16
      $region15: #{make_b_forward.5} parent=11 // pred_region
        _
      $region16: #{make_b_forward.5} parent=11 // pred_fallthru
        _
      // Predicated region
      $region17: #{make_b_forward.5} parent=11 // pred_check
        %p121 = pneg %p77
      $region18: #{make_b_forward.5} parent=11 // pred_check_branch
        %123 = sbr.rel (%p121) target = $region20
      $region19: #{make_b_forward.5} parent=11 // pred_region
        _
      $region20: #{make_b_forward.5} parent=11 // pred_fallthru
        _
    $region12: #{make_b_forward.5} parent=5 // pred_fallthru
      _
    %p124 = scmp.lt.s32.totalorder %s9, 2
    // Predicated region
    $region21: #{make_b_forward.5} parent=5 // pred_check
      %p125 = pneg %p124
    $region22: #{make_b_forward.5} parent=5 // pred_check_branch
      %127 = sbr.rel (%p125) target = $region24
    $region23: #{make_b_forward.5} parent=5 // pred_region
      // Predicated region
      $region25: #{make_b_forward.5} parent=23 // pred_check
        %p128 = pneg %p29
      $region26: #{make_b_forward.5} parent=23 // pred_check_branch
        %130 = sbr.rel (%p128) target = $region28
      $region27: #{make_b_forward.5} parent=23 // pred_region
        %p131 = scmp.lt.s32.totalorder %s9, 1
        %s132 = scalar_select %p131, %s9, 1
        %s133 = smul.addr %s132, 36
        %s134 = smul.addr %s133, 4
        %s135 = scalar_lea.vmem %s0, %s134
      $region28: #{make_b_forward.5} parent=23 // pred_fallthru
        _
    $region24: #{make_b_forward.5} parent=5 // pred_fallthru
      _
    %p136 = scmp.le.s32.totalorder 1, %s9
    %p137 = scmp.lt.s32.totalorder %s9, 3
    %p138 = pnand %p136, %p137
    %p139 = pneg %p138
    // Predicated region
    $region29: #{make_b_forward.5} parent=5 // pred_check
      _
    $region30: #{make_b_forward.5} parent=5 // pred_check_branch
      %141 = sbr.rel (%p138) target = $region32
    $region31: #{make_b_forward.5} parent=5 // pred_region
      %s142 = ssub.s32 %s9, 1
      %p143 = scmp.lt.s32.totalorder %s14, 1
      %s144 = scalar_select %p143, %s14, 1
      %s145 = smul.addr %s144, 36
      %s146 = smul.addr %s145, 4
      %s147 = scalar_lea.vmem %s0, %s146
      %p148 = pneg %p35
      %p149 = pneg %p32
      %p150 = pneg %p56
      %p151 = pneg %p53
      %p152 = pneg %p77
      %p153 = pneg %p74
      %p154 = pneg %p103
      %p155 = pneg %p100
      %p156 = scmp.lt.s32.totalorder %s14, 1
      %s157 = scalar_select %p156, %s14, 1
      %s158 = smul.addr %s157, 21
      %s159 = smul.addr %s158, 8
      %s160 = scalar_lea.vmem %s3, %s159
      %p161 = scmp.lt.s32.totalorder %s14, 1
      %s162 = scalar_select %p161, %s14, 1
      %s163 = smul.addr %s162, 36
      %s164 = smul.addr %s163, 4
      %s165 = scalar_lea.vmem %s0, %s164
      %p166 = scmp.lt.s32.totalorder %s14, 1
      %s167 = scalar_select %p166, %s14, 1
      %s168 = smul.addr %s167, 21
      %s169 = smul.addr %s168, 8
      %s170 = scalar_lea.vmem %s3, %s169
      %v172 = vld [vmem:[%s165] sm:$0xf]
      %v173 = vld [vmem:[%s165 + $0x4] sm:$0xf]
      %v174 = vld [vmem:[%s165 + $0x8] sm:$0xf]
      %v175 = vld [vmem:[%s165 + $0xc] sm:$0xf]
      %v176 = vld [vmem:[%s165 + $0x10] sm:$0xf]
      %v177 = vld [vmem:[%s165 + $0x14] sm:$0xf]
      %v178 = vld [vmem:[%s165 + $0x18] sm:$0xf]
      %v179 = vld [vmem:[%s1] sm:$0x3f]
      %s180 = scalar_lea.vmem %s165, 36
      %v181 = vld [vmem:[%s180] sm:$0xf]
      %v182 = vld [vmem:[%s180 + $0x4] sm:$0xf]
      %v183 = vld [vmem:[%s180 + $0x8] sm:$0xf]
      %v184 = vld [vmem:[%s180 + $0xc] sm:$0xf]
      %v185 = vld [vmem:[%s180 + $0x10] sm:$0xf]
      %v186 = vld [vmem:[%s180 + $0x14] sm:$0xf]
      %v187 = vld [vmem:[%s180 + $0x18] sm:$0xf]
      %s188 = scalar_lea.vmem %s1, 6
      %v189 = vld [vmem:[%s188] sm:$0x3f]
      %v197 = vunpack.c.l.b16 %v181
      %v198 = vunpack.c.l.b16 %v182
      %v199 = vunpack.c.l.b16 %v183
      %v200 = vunpack.c.l.b16 %v184
      %v201 = vunpack.c.l.b16 %v185
      %v202 = vunpack.c.l.b16 %v186
      %v203 = vunpack.c.l.b16 %v187
      %v204 = vpack.c.b16 %v198, %v197
      %v205 = vpack.c.b16 %v200, %v199
      %v206 = vpack.c.b16 %v202, %v201
      %v207 = vpack.c.b16 %v203, %v203
      %v209 = vcombine.high %v189, %v189
      %v211 = vunpack.c.l.s4 1983009808
      %v212 = vunpack.c.0.s8 %v211
      %v213 = vlaneseq
      %v214 = vshrl.u32 %v213, 7
      %v215 = vsub.s32 %v212, %v214
      %v216 = vrot.slane %v189, %v215
      %v218 = vunpack.c.l.s4 1983009808
      %v219 = vunpack.c.0.s8 %v218
      %v220 = vlaneseq
      %v221 = vshrl.u32 %v220, 7
      %v222 = vsub.s32 %v219, %v221
      %v223 = vrot.slane %v209, %v222
      %v224 = vcombine.high %v216, %v216
      %vm225 = vcmask 31744
      %v227 = vsel %vm225, %v204, 0
      %v230 = vsel %vm225, %v205, 0
      %v233 = vsel %vm225, %v206, 0
      %v236 = vsel %vm225, %v207, 0
      %vm238 = vcmask 1041408
      %v240 = vsel %vm238, %v216, 0
      %v243 = vsel %vm238, %v224, 0
      %v246 = vsel %vm238, %v223, 0
      %248 = vmatprep.subr.bf16.mxu0 %v243
      %249 = vmatpush1.bf16.msra.mxu0 %v240
      %250 = vmatprep.subr.bf16.mxu0 0
      %251 = vmatpush1.bf16.msra.mxu0 0
      %252 = vmatprep.subr.bf16.mxu0 0
      %253 = vmatpush1.bf16.msra.mxu0 0
      %254 = vmatprep.subr.bf16.mxu0 0
      %255 = vmatpush1.bf16.msra.mxu0 0
      %256 = vmatprep.subr.bf16.mxu0 0
      %257 = vmatpush1.bf16.msra.mxu0 0
      %258 = vmatprep.subr.bf16.mxu0 0
      %259 = vmatpush1.bf16.msra.mxu0 0
      %260 = vmatprep.subr.bf16.mxu0 0
      %261 = vmatpush1.bf16.msra.mxu0 0
      %262 = vmatprep.subr.bf16.mxu0 0
      %263 = vmatpush1.bf16.msra.mxu0 0
      %264 = vmatprep.subr.bf16.mxu0 0
      %265 = vmatpush1.bf16.msra.mxu0 0
      %266 = vmatprep.subr.bf16.mxu0 0
      %267 = vmatpush1.bf16.msra.mxu0 0
      %268 = vmatprep.subr.bf16.mxu0 0
      %269 = vmatpush1.bf16.msra.mxu0 0
      %270 = vmatprep.subr.bf16.mxu0 0
      %271 = vmatpush1.bf16.msra.mxu0 0
      %272 = vmatprep.subr.bf16.mxu0 0
      %273 = vmatpush1.bf16.msra.mxu0 0
      %274 = vmatprep.subr.bf16.mxu0 0
      %275 = vmatpush1.bf16.msra.mxu0 0
      %276 = vmatprep.subr.bf16.mxu0 0
      %277 = vmatpush1.bf16.msra.mxu0 0
      %278 = vmatprep.subr.bf16.mxu0 0
      %279 = vmatpush1.bf16.msra.mxu0 0
      %280 = vmatprep.mubr.bf16.mxu0 0
      %281 = vmatmul.mubr.bf16.gmra.mrb[0].mxu0 %v227
      %v282 = vpop.f32.mrb[0].mxu0
      %v283 = vadd.f32 0.0, %v282
      %v284 = vpop.f32.mrb[0].mxu0
      %v285 = vadd.f32 0.0, %v284
      %v286 = vpop.f32.mrb[0].mxu0
      %v287 = vadd.f32 0.0, %v286
      %v288 = vpop.f32.mrb[0].mxu0
      %v289 = vadd.f32 0.0, %v288
      %290 = vmatprep.mubr.bf16.mxu0 0
      %291 = vmatmul.mubr.bf16.gmra.mrb[0].mxu0 %v230
      %v292 = vpop.f32.mrb[0].mxu0
      %v293 = vadd.f32 0.0, %v292
      %v294 = vpop.f32.mrb[0].mxu0
      %v295 = vadd.f32 0.0, %v294
      %v296 = vpop.f32.mrb[0].mxu0
      %v297 = vadd.f32 0.0, %v296
      %v298 = vpop.f32.mrb[0].mxu0
      %v299 = vadd.f32 0.0, %v298
      %300 = vmatprep.mubr.bf16.mxu0 0
      %301 = vmatmul.mubr.bf16.gmra.mrb[0].mxu0 %v233
      %v302 = vpop.f32.mrb[0].mxu0
      %v303 = vadd.f32 0.0, %v302
      %v304 = vpop.f32.mrb[0].mxu0
      %v305 = vadd.f32 0.0, %v304
      %v306 = vpop.f32.mrb[0].mxu0
      %v307 = vadd.f32 0.0, %v306
      %v308 = vpop.f32.mrb[0].mxu0
      %v309 = vadd.f32 0.0, %v308
      %310 = vmatprep.mubr.bf16.mxu0 0
      %311 = vmatmul.mubr.bf16.gmra.mrb[0].mxu0 %v236
      %v312 = vpop.f32.mrb[0].mxu0
      %v313 = vadd.f32 0.0, %v312
      %v314 = vpop.f32.mrb[0].mxu0
      %v315 = vadd.f32 0.0, %v314
      %v316 = vpop.f32.mrb[0].mxu0
      %v317 = vpop.f32.mrb[0].mxu0
      %318 = vdwg.mxu0
      %319 = vmatprep.subr.bf16.mxu0 0
      %320 = vmatpush1.bf16.msra.mxu0 %v246
      %321 = vmatprep.subr.bf16.mxu0 0
      %322 = vmatpush1.bf16.msra.mxu0 0
      %323 = vmatprep.subr.bf16.mxu0 0
      %324 = vmatpush1.bf16.msra.mxu0 0
      %325 = vmatprep.subr.bf16.mxu0 0
      %326 = vmatpush1.bf16.msra.mxu0 0
      %327 = vmatprep.subr.bf16.mxu0 0
      %328 = vmatpush1.bf16.msra.mxu0 0
      %329 = vmatprep.subr.bf16.mxu0 0
      %330 = vmatpush1.bf16.msra.mxu0 0
      %331 = vmatprep.subr.bf16.mxu0 0
      %332 = vmatpush1.bf16.msra.mxu0 0
      %333 = vmatprep.subr.bf16.mxu0 0
      %334 = vmatpush1.bf16.msra.mxu0 0
      %335 = vmatprep.subr.bf16.mxu0 0
      %336 = vmatpush1.bf16.msra.mxu0 0
      %337 = vmatprep.subr.bf16.mxu0 0
      %338 = vmatpush1.bf16.msra.mxu0 0
      %339 = vmatprep.subr.bf16.mxu0 0
      %340 = vmatpush1.bf16.msra.mxu0 0
      %341 = vmatprep.subr.bf16.mxu0 0
      %342 = vmatpush1.bf16.msra.mxu0 0
      %343 = vmatprep.subr.bf16.mxu0 0
      %344 = vmatpush1.bf16.msra.mxu0 0
      %345 = vmatprep.subr.bf16.mxu0 0
      %346 = vmatpush1.bf16.msra.mxu0 0
      %347 = vmatprep.subr.bf16.mxu0 0
      %348 = vmatpush1.bf16.msra.mxu0 0
      %349 = vmatprep.subr.bf16.mxu0 0
      %350 = vmatpush1.bf16.msra.mxu0 0
      %351 = vmatprep.mubr.bf16.mxu0 0
      %352 = vmatmul.mubr.bf16.gmra.mrb[0].mxu0 %v227
      %v353 = vpop.f32.mrb[0].mxu0
      %v354 = vadd.f32 0.0, %v353
      %v355 = vpop.f32.mrb[0].mxu0
      %v356 = vpop.f32.mrb[0].mxu0
      %v357 = vadd.f32 0.0, %v356
      %v358 = vpop.f32.mrb[0].mxu0
      %359 = vmatprep.mubr.bf16.mxu0 0
      %360 = vmatmul.mubr.bf16.gmra.mrb[0].mxu0 %v230
      %v361 = vpop.f32.mrb[0].mxu0
      %v362 = vadd.f32 0.0, %v361
      %v363 = vpop.f32.mrb[0].mxu0
      %v364 = vpop.f32.mrb[0].mxu0
      %v365 = vadd.f32 0.0, %v364
      %v366 = vpop.f32.mrb[0].mxu0
      %367 = vmatprep.mubr.bf16.mxu0 0
      %368 = vmatmul.mubr.bf16.gmra.mrb[0].mxu0 %v233
      %v369 = vpop.f32.mrb[0].mxu0
      %v370 = vadd.f32 0.0, %v369
      %v371 = vpop.f32.mrb[0].mxu0
      %v372 = vpop.f32.mrb[0].mxu0
      %v373 = vadd.f32 0.0, %v372
      %v374 = vpop.f32.mrb[0].mxu0
      %375 = vmatprep.mubr.bf16.mxu0 0
      %376 = vmatmul.mubr.bf16.gmra.mrb[0].mxu0 %v236
      %v377 = vpop.f32.mrb[0].mxu0
      %v378 = vadd.f32 0.0, %v377
      %v379 = vpop.f32.mrb[0].mxu0
      %v380 = vpop.f32.mrb[0].mxu0
      %v381 = vpop.f32.mrb[0].mxu0
      %382 = vdwg.mxu0
      %v390 = vunpack.c.l.b16 %v172
      %v391 = vunpack.c.l.b16 %v173
      %v392 = vunpack.c.l.b16 %v174
      %v393 = vunpack.c.l.b16 %v175
      %v394 = vunpack.c.l.b16 %v176
      %v395 = vunpack.c.l.b16 %v177
      %v396 = vunpack.c.l.b16 %v178
      %v397 = vpack.c.b16 %v391, %v390
      %v398 = vpack.c.b16 %v393, %v392
      %v399 = vpack.c.b16 %v395, %v394
      %v400 = vpack.c.b16 %v396, %v396
      %v402 = vcombine.high %v179, %v179
      %v404 = vunpack.c.l.s4 1983009808
      %v405 = vunpack.c.0.s8 %v404
      %v406 = vlaneseq
      %v407 = vshrl.u32 %v406, 7
      %v408 = vsub.s32 %v405, %v407
      %v409 = vrot.slane %v179, %v408
      %v411 = vunpack.c.l.s4 1983009808
      %v412 = vunpack.c.0.s8 %v411
      %v413 = vlaneseq
      %v414 = vshrl.u32 %v413, 7
      %v415 = vsub.s32 %v412, %v414
      %v416 = vrot.slane %v402, %v415
      %v417 = vcombine.high %v409, %v409
      %v419 = vsel %vm225, %v397, 0
      %v422 = vsel %vm225, %v398, 0
      %v425 = vsel %vm225, %v399, 0
      %v428 = vsel %vm225, %v400, 0
      %v431 = vsel %vm238, %v409, 0
      %v434 = vsel %vm238, %v417, 0
      %v437 = vsel %vm238, %v416, 0
      %439 = vmatprep.subr.bf16.mxu0 %v434
      %440 = vmatpush1.bf16.msra.mxu0 %v431
      %441 = vmatprep.subr.bf16.mxu0 0
      %442 = vmatpush1.bf16.msra.mxu0 0
      %443 = vmatprep.subr.bf16.mxu0 0
      %444 = vmatpush1.bf16.msra.mxu0 0
      %445 = vmatprep.subr.bf16.mxu0 0
      %446 = vmatpush1.bf16.msra.mxu0 0
      %447 = vmatprep.subr.bf16.mxu0 0
      %448 = vmatpush1.bf16.msra.mxu0 0
      %449 = vmatprep.subr.bf16.mxu0 0
      %450 = vmatpush1.bf16.msra.mxu0 0
      %451 = vmatprep.subr.bf16.mxu0 0
      %452 = vmatpush1.bf16.msra.mxu0 0
      %453 = vmatprep.subr.bf16.mxu0 0
      %454 = vmatpush1.bf16.msra.mxu0 0
      %455 = vmatprep.subr.bf16.mxu0 0
      %456 = vmatpush1.bf16.msra.mxu0 0
      %457 = vmatprep.subr.bf16.mxu0 0
      %458 = vmatpush1.bf16.msra.mxu0 0
      %459 = vmatprep.subr.bf16.mxu0 0
      %460 = vmatpush1.bf16.msra.mxu0 0
      %461 = vmatprep.subr.bf16.mxu0 0
      %462 = vmatpush1.bf16.msra.mxu0 0
      %463 = vmatprep.subr.bf16.mxu0 0
      %464 = vmatpush1.bf16.msra.mxu0 0
      %465 = vmatprep.subr.bf16.mxu0 0
      %466 = vmatpush1.bf16.msra.mxu0 0
      %467 = vmatprep.subr.bf16.mxu0 0
      %468 = vmatpush1.bf16.msra.mxu0 0
      %469 = vmatprep.subr.bf16.mxu0 0
      %470 = vmatpush1.bf16.msra.mxu0 0
      %471 = vmatprep.mubr.bf16.mxu0 0
      %472 = vmatmul.mubr.bf16.gmra.mrb[0].mxu0 %v419
      %v473 = vpop.f32.mrb[0].mxu0
      %v474 = vadd.f32 %v283, %v473
      %v475 = vpop.f32.mrb[0].mxu0
      %v476 = vadd.f32 %v285, %v475
      %v477 = vpop.f32.mrb[0].mxu0
      %v478 = vadd.f32 %v287, %v477
      %v479 = vpop.f32.mrb[0].mxu0
      %v480 = vadd.f32 %v289, %v479
      %481 = vmatprep.mubr.bf16.mxu0 0
      %482 = vmatmul.mubr.bf16.gmra.mrb[0].mxu0 %v422
      %v483 = vpop.f32.mrb[0].mxu0
      %v484 = vadd.f32 %v293, %v483
      %v485 = vpop.f32.mrb[0].mxu0
      %v486 = vadd.f32 %v295, %v485
      %v487 = vpop.f32.mrb[0].mxu0
      %v488 = vadd.f32 %v297, %v487
      %v489 = vpop.f32.mrb[0].mxu0
      %v490 = vadd.f32 %v299, %v489
      %491 = vmatprep.mubr.bf16.mxu0 0
      %492 = vmatmul.mubr.bf16.gmra.mrb[0].mxu0 %v425
      %v493 = vpop.f32.mrb[0].mxu0
      %v494 = vadd.f32 %v303, %v493
      %v495 = vpop.f32.mrb[0].mxu0
      %v496 = vadd.f32 %v305, %v495
      %v497 = vpop.f32.mrb[0].mxu0
      %v498 = vadd.f32 %v307, %v497
      %v499 = vpop.f32.mrb[0].mxu0
      %v500 = vadd.f32 %v309, %v499
      %501 = vmatprep.mubr.bf16.mxu0 0
      %502 = vmatmul.mubr.bf16.gmra.mrb[0].mxu0 %v428
      %v503 = vpop.f32.mrb[0].mxu0
      %v504 = vadd.f32 %v313, %v503
      %v505 = vpop.f32.mrb[0].mxu0
      %v506 = vadd.f32 %v315, %v505
      %v507 = vpop.f32.mrb[0].mxu0
      %v508 = vpop.f32.mrb[0].mxu0
      %509 = vdwg.mxu0
      %510 = vmatprep.subr.bf16.mxu0 0
      %511 = vmatpush1.bf16.msra.mxu0 %v437
      %512 = vmatprep.subr.bf16.mxu0 0
      %513 = vmatpush1.bf16.msra.mxu0 0
      %514 = vmatprep.subr.bf16.mxu0 0
      %515 = vmatpush1.bf16.msra.mxu0 0
      %516 = vmatprep.subr.bf16.mxu0 0
      %517 = vmatpush1.bf16.msra.mxu0 0
      %518 = vmatprep.subr.bf16.mxu0 0
      %519 = vmatpush1.bf16.msra.mxu0 0
      %520 = vmatprep.subr.bf16.mxu0 0
      %521 = vmatpush1.bf16.msra.mxu0 0
      %522 = vmatprep.subr.bf16.mxu0 0
      %523 = vmatpush1.bf16.msra.mxu0 0
      %524 = vmatprep.subr.bf16.mxu0 0
      %525 = vmatpush1.bf16.msra.mxu0 0
      %526 = vmatprep.subr.bf16.mxu0 0
      %527 = vmatpush1.bf16.msra.mxu0 0
      %528 = vmatprep.subr.bf16.mxu0 0
      %529 = vmatpush1.bf16.msra.mxu0 0
      %530 = vmatprep.subr.bf16.mxu0 0
      %531 = vmatpush1.bf16.msra.mxu0 0
      %532 = vmatprep.subr.bf16.mxu0 0
      %533 = vmatpush1.bf16.msra.mxu0 0
      %534 = vmatprep.subr.bf16.mxu0 0
      %535 = vmatpush1.bf16.msra.mxu0 0
      %536 = vmatprep.subr.bf16.mxu0 0
      %537 = vmatpush1.bf16.msra.mxu0 0
      %538 = vmatprep.subr.bf16.mxu0 0
      %539 = vmatpush1.bf16.msra.mxu0 0
      %540 = vmatprep.subr.bf16.mxu0 0
      %541 = vmatpush1.bf16.msra.mxu0 0
      %542 = vmatprep.mubr.bf16.mxu0 0
      %543 = vmatmul.mubr.bf16.gmra.mrb[0].mxu0 %v419
      %v544 = vpop.f32.mrb[0].mxu0
      %v545 = vadd.f32 %v354, %v544
      %v546 = vpop.f32.mrb[0].mxu0
      %v547 = vpop.f32.mrb[0].mxu0
      %v548 = vadd.f32 %v357, %v547
      %v549 = vpop.f32.mrb[0].mxu0
      %550 = vmatprep.mubr.bf16.mxu0 0
      %551 = vmatmul.mubr.bf16.gmra.mrb[0].mxu0 %v422
      %v552 = vpop.f32.mrb[0].mxu0
      %v553 = vadd.f32 %v362, %v552
      %v554 = vpop.f32.mrb[0].mxu0
      %v555 = vpop.f32.mrb[0].mxu0
      %v556 = vadd.f32 %v365, %v555
      %v557 = vpop.f32.mrb[0].mxu0
      %558 = vmatprep.mubr.bf16.mxu0 0
      %559 = vmatmul.mubr.bf16.gmra.mrb[0].mxu0 %v425
      %v560 = vpop.f32.mrb[0].mxu0
      %v561 = vadd.f32 %v370, %v560
      %v562 = vpop.f32.mrb[0].mxu0
      %v563 = vpop.f32.mrb[0].mxu0
      %v564 = vadd.f32 %v373, %v563
      %v565 = vpop.f32.mrb[0].mxu0
      %566 = vmatprep.mubr.bf16.mxu0 0
      %567 = vmatmul.mubr.bf16.gmra.mrb[0].mxu0 %v428
      %v568 = vpop.f32.mrb[0].mxu0
      %v569 = vadd.f32 %v378, %v568
      %v570 = vpop.f32.mrb[0].mxu0
      %v571 = vpop.f32.mrb[0].mxu0
      %v572 = vpop.f32.mrb[0].mxu0
      %573 = vdwg.mxu0
      %v574 = vld [vmem:[%s165] sm:$0xf]
      %v575 = vld [vmem:[%s165 + $0x4] sm:$0xf]
      %v576 = vld [vmem:[%s165 + $0x8] sm:$0xf]
      %v577 = vld [vmem:[%s165 + $0xc] sm:$0xf]
      %v578 = vld [vmem:[%s165 + $0x10] sm:$0xf]
      %v579 = vld [vmem:[%s165 + $0x14] sm:$0xf]
      %v580 = vld [vmem:[%s165 + $0x18] sm:$0xf]
      %v581 = vld [vmem:[%s165 + $0x1c] sm:$0x1]
      %s582 = scalar_lea.vmem %s1, 12
      %v583 = vld [vmem:[%s582] sm:$0x3f]
      %v592 = vunpack.c.l.b16 %v574
      %v593 = vunpack.c.l.b16 %v575
      %v594 = vunpack.c.l.b16 %v576
      %v595 = vunpack.c.l.b16 %v577
      %v596 = vunpack.c.l.b16 %v578
      %v597 = vunpack.c.l.b16 %v579
      %v598 = vunpack.c.l.b16 %v580
      %v599 = vunpack.c.l.b16 %v581
      %v600 = vpack.c.b16 %v593, %v592
      %v601 = vpack.c.b16 %v595, %v594
      %v602 = vpack.c.b16 %v597, %v596
      %v603 = vpack.c.b16 %v599, %v598
      %vm604 = vsmask.f32 7424
      %v606 = vshrl.u32 %v600, 16
      %v608 = vshll.u32 %v600, 16
      %v610 = vrot.slane %v608, 1
      %v611 = vor.u32 %v606, %v610
      %v613 = vshll.u32 %v601, 16
      %v615 = vrot.slane %v613, 1
      %v616 = vsel %vm604, %v611, %v615
      %v617 = vshrl.u32 %v601, 16
      %v619 = vor.u32 %v617, %v615
      %v621 = vshll.u32 %v602, 16
      %v623 = vrot.slane %v621, 1
      %v624 = vsel %vm604, %v619, %v623
      %v625 = vshrl.u32 %v602, 16
      %v627 = vor.u32 %v625, %v623
      %v629 = vshll.u32 %v603, 16
      %v631 = vrot.slane %v629, 1
      %v632 = vsel %vm604, %v627, %v631
      %v633 = vshrl.u32 %v603, 16
      %v635 = vor.u32 %v633, %v631
      %v637 = vcombine.high %v583, %v583
      %v639 = vunpack.c.l.s4 1983009808
      %v640 = vunpack.c.0.s8 %v639
      %v641 = vlaneseq
      %v642 = vshrl.u32 %v641, 7
      %v643 = vsub.s32 %v640, %v642
      %v644 = vrot.slane %v583, %v643
      %v646 = vunpack.c.l.s4 1983009808
      %v647 = vunpack.c.0.s8 %v646
      %v648 = vlaneseq
      %v649 = vshrl.u32 %v648, 7
      %v650 = vsub.s32 %v647, %v649
      %v651 = vrot.slane %v637, %v650
      %v652 = vcombine.high %v644, %v644
      %v654 = vsel %vm225, %v616, 0
      %v657 = vsel %vm225, %v624, 0
      %v660 = vsel %vm225, %v632, 0
      %v663 = vsel %vm225, %v635, 0
      %v666 = vsel %vm238, %v644, 0
      %v669 = vsel %vm238, %v652, 0
      %v672 = vsel %vm238, %v651, 0
      %674 = vmatprep.subr.bf16.mxu0 %v669
      %675 = vmatpush1.bf16.msra.mxu0 %v666
      %676 = vmatprep.subr.bf16.mxu0 0
      %677 = vmatpush1.bf16.msra.mxu0 0
      %678 = vmatprep.subr.bf16.mxu0 0
      %679 = vmatpush1.bf16.msra.mxu0 0
      %680 = vmatprep.subr.bf16.mxu0 0
      %681 = vmatpush1.bf16.msra.mxu0 0
      %682 = vmatprep.subr.bf16.mxu0 0
      %683 = vmatpush1.bf16.msra.mxu0 0
      %684 = vmatprep.subr.bf16.mxu0 0
      %685 = vmatpush1.bf16.msra.mxu0 0
      %686 = vmatprep.subr.bf16.mxu0 0
      %687 = vmatpush1.bf16.msra.mxu0 0
      %688 = vmatprep.subr.bf16.mxu0 0
      %689 = vmatpush1.bf16.msra.mxu0 0
      %690 = vmatprep.subr.bf16.mxu0 0
      %691 = vmatpush1.bf16.msra.mxu0 0
      %692 = vmatprep.subr.bf16.mxu0 0
      %693 = vmatpush1.bf16.msra.mxu0 0
      %694 = vmatprep.subr.bf16.mxu0 0
      %695 = vmatpush1.bf16.msra.mxu0 0
      %696 = vmatprep.subr.bf16.mxu0 0
      %697 = vmatpush1.bf16.msra.mxu0 0
      %698 = vmatprep.subr.bf16.mxu0 0
      %699 = vmatpush1.bf16.msra.mxu0 0
      %700 = vmatprep.subr.bf16.mxu0 0
      %701 = vmatpush1.bf16.msra.mxu0 0
      %702 = vmatprep.subr.bf16.mxu0 0
      %703 = vmatpush1.bf16.msra.mxu0 0
      %704 = vmatprep.subr.bf16.mxu0 0
      %705 = vmatpush1.bf16.msra.mxu0 0
      %706 = vmatprep.mubr.bf16.mxu0 0
      %707 = vmatmul.mubr.bf16.gmra.mrb[0].mxu0 %v654
      %v708 = vpop.f32.mrb[0].mxu0
      %v709 = vadd.f32 0.0, %v708
      %v710 = vpop.f32.mrb[0].mxu0
      %v711 = vadd.f32 0.0, %v710
      %v712 = vpop.f32.mrb[0].mxu0
      %v713 = vadd.f32 0.0, %v712
      %v714 = vpop.f32.mrb[0].mxu0
      %v715 = vadd.f32 0.0, %v714
      %716 = vmatprep.mubr.bf16.mxu0 0
      %717 = vmatmul.mubr.bf16.gmra.mrb[0].mxu0 %v657
      %v718 = vpop.f32.mrb[0].mxu0
      %v719 = vadd.f32 0.0, %v718
      %v720 = vpop.f32.mrb[0].mxu0
      %v721 = vadd.f32 0.0, %v720
      %v722 = vpop.f32.mrb[0].mxu0
      %v723 = vadd.f32 0.0, %v722
      %v724 = vpop.f32.mrb[0].mxu0
      %v725 = vadd.f32 0.0, %v724
      %726 = vmatprep.mubr.bf16.mxu0 0
      %727 = vmatmul.mubr.bf16.gmra.mrb[0].mxu0 %v660
      %v728 = vpop.f32.mrb[0].mxu0
      %v729 = vadd.f32 0.0, %v728
      %v730 = vpop.f32.mrb[0].mxu0
      %v731 = vadd.f32 0.0, %v730
      %v732 = vpop.f32.mrb[0].mxu0
      %v733 = vadd.f32 0.0, %v732
      %v734 = vpop.f32.mrb[0].mxu0
      %v735 = vadd.f32 0.0, %v734
      %736 = vmatprep.mubr.bf16.mxu0 0
      %737 = vmatmul.mubr.bf16.gmra.mrb[0].mxu0 %v663
      %v738 = vpop.f32.mrb[0].mxu0
      %v739 = vadd.f32 0.0, %v738
      %v740 = vpop.f32.mrb[0].mxu0
      %v741 = vadd.f32 0.0, %v740
      %v742 = vpop.f32.mrb[0].mxu0
      %v743 = vpop.f32.mrb[0].mxu0
      %744 = vdwg.mxu0
      %745 = vmatprep.subr.bf16.mxu0 0
      %746 = vmatpush1.bf16.msra.mxu0 %v672
      %747 = vmatprep.subr.bf16.mxu0 0
      %748 = vmatpush1.bf16.msra.mxu0 0
      %749 = vmatprep.subr.bf16.mxu0 0
      %750 = vmatpush1.bf16.msra.mxu0 0
      %751 = vmatprep.subr.bf16.mxu0 0
      %752 = vmatpush1.bf16.msra.mxu0 0
      %753 = vmatprep.subr.bf16.mxu0 0
      %754 = vmatpush1.bf16.msra.mxu0 0
      %755 = vmatprep.subr.bf16.mxu0 0
      %756 = vmatpush1.bf16.msra.mxu0 0
      %757 = vmatprep.subr.bf16.mxu0 0
      %758 = vmatpush1.bf16.msra.mxu0 0
      %759 = vmatprep.subr.bf16.mxu0 0
      %760 = vmatpush1.bf16.msra.mxu0 0
      %761 = vmatprep.subr.bf16.mxu0 0
      %762 = vmatpush1.bf16.msra.mxu0 0
      %763 = vmatprep.subr.bf16.mxu0 0
      %764 = vmatpush1.bf16.msra.mxu0 0
      %765 = vmatprep.subr.bf16.mxu0 0
      %766 = vmatpush1.bf16.msra.mxu0 0
      %767 = vmatprep.subr.bf16.mxu0 0
      %768 = vmatpush1.bf16.msra.mxu0 0
      %769 = vmatprep.subr.bf16.mxu0 0
      %770 = vmatpush1.bf16.msra.mxu0 0
      %771 = vmatprep.subr.bf16.mxu0 0
      %772 = vmatpush1.bf16.msra.mxu0 0
      %773 = vmatprep.subr.bf16.mxu0 0
      %774 = vmatpush1.bf16.msra.mxu0 0
      %775 = vmatprep.subr.bf16.mxu0 0
      %776 = vmatpush1.bf16.msra.mxu0 0
      %777 = vmatprep.mubr.bf16.mxu0 0
      %778 = vmatmul.mubr.bf16.gmra.mrb[0].mxu0 %v654
      %v779 = vpop.f32.mrb[0].mxu0
      %v780 = vadd.f32 0.0, %v779
      %v781 = vpop.f32.mrb[0].mxu0
      %v782 = vpop.f32.mrb[0].mxu0
      %v783 = vadd.f32 0.0, %v782
      %v784 = vpop.f32.mrb[0].mxu0
      %785 = vmatprep.mubr.bf16.mxu0 0
      %786 = vmatmul.mubr.bf16.gmra.mrb[0].mxu0 %v657
      %v787 = vpop.f32.mrb[0].mxu0
      %v788 = vadd.f32 0.0, %v787
      %v789 = vpop.f32.mrb[0].mxu0
      %v790 = vpop.f32.mrb[0].mxu0
      %v791 = vadd.f32 0.0, %v790
      %v792 = vpop.f32.mrb[0].mxu0
      %793 = vmatprep.mubr.bf16.mxu0 0
      %794 = vmatmul.mubr.bf16.gmra.mrb[0].mxu0 %v660
      %v795 = vpop.f32.mrb[0].mxu0
      %v796 = vadd.f32 0.0, %v795
      %v797 = vpop.f32.mrb[0].mxu0
      %v798 = vpop.f32.mrb[0].mxu0
      %v799 = vadd.f32 0.0, %v798
      %v800 = vpop.f32.mrb[0].mxu0
      %801 = vmatprep.mubr.bf16.mxu0 0
      %802 = vmatmul.mubr.bf16.gmra.mrb[0].mxu0 %v663
      %v803 = vpop.f32.mrb[0].mxu0
      %v804 = vadd.f32 0.0, %v803
      %v805 = vpop.f32.mrb[0].mxu0
      %v806 = vpop.f32.mrb[0].mxu0
      %v807 = vpop.f32.mrb[0].mxu0
      %808 = vdwg.mxu0
      %v809 = vadd.f32 %v474, %v709
      %v810 = vadd.f32 %v476, %v711
      %v811 = vadd.f32 %v545, %v780
      %v812 = vadd.f32 %v478, %v713
      %v813 = vadd.f32 %v480, %v715
      %v814 = vadd.f32 %v548, %v783
      %v815 = vadd.f32 %v484, %v719
      %v816 = vadd.f32 %v486, %v721
      %v817 = vadd.f32 %v553, %v788
      %v818 = vadd.f32 %v488, %v723
      %v819 = vadd.f32 %v490, %v725
      %v820 = vadd.f32 %v556, %v791
      %v821 = vadd.f32 %v494, %v729
      %v822 = vadd.f32 %v496, %v731
      %v823 = vadd.f32 %v561, %v796
      %v824 = vadd.f32 %v498, %v733
      %v825 = vadd.f32 %v500, %v735
      %v826 = vadd.f32 %v564, %v799
      %v827 = vadd.f32 %v504, %v739
      %v828 = vadd.f32 %v506, %v741
      %v829 = vadd.f32 %v569, %v804
      %s830 = scalar_lea.vmem %s165, 72
      %v831 = vld [vmem:[%s830] sm:$0xf]
      %v832 = vld [vmem:[%s830 + $0x4] sm:$0xf]
      %v833 = vld [vmem:[%s830 + $0x8] sm:$0xf]
      %v834 = vld [vmem:[%s830 + $0xc] sm:$0xf]
      %v835 = vld [vmem:[%s830 + $0x10] sm:$0xf]
      %v836 = vld [vmem:[%s830 + $0x14] sm:$0xf]
      %v837 = vld [vmem:[%s830 + $0x18] sm:$0xf]
      %s838 = scalar_lea.vmem %s1, 18
      %v839 = vld [vmem:[%s838] sm:$0x3f]
      %v847 = vunpack.c.l.b16 %v831
      %v848 = vunpack.c.l.b16 %v832
      %v849 = vunpack.c.l.b16 %v833
      %v850 = vunpack.c.l.b16 %v834
      %v851 = vunpack.c.l.b16 %v835
      %v852 = vunpack.c.l.b16 %v836
      %v853 = vunpack.c.l.b16 %v837
      %v854 = vpack.c.b16 %v848, %v847
      %v855 = vpack.c.b16 %v850, %v849
      %v856 = vpack.c.b16 %v852, %v851
      %v857 = vpack.c.b16 %v853, %v853
      %v859 = vcombine.high %v839, %v839
      %v861 = vunpack.c.l.s4 1983009808
      %v862 = vunpack.c.0.s8 %v861
      %v863 = vlaneseq
      %v864 = vshrl.u32 %v863, 7
      %v865 = vsub.s32 %v862, %v864
      %v866 = vrot.slane %v839, %v865
      %v868 = vunpack.c.l.s4 1983009808
      %v869 = vunpack.c.0.s8 %v868
      %v870 = vlaneseq
      %v871 = vshrl.u32 %v870, 7
      %v872 = vsub.s32 %v869, %v871
      %v873 = vrot.slane %v859, %v872
      %v874 = vcombine.high %v866, %v866
      %v876 = vsel %vm225, %v854, 0
      %v879 = vsel %vm225, %v855, 0
      %v882 = vsel %vm225, %v856, 0
      %v885 = vsel %vm225, %v857, 0
      %v888 = vsel %vm238, %v866, 0
      %v891 = vsel %vm238, %v874, 0
      %v894 = vsel %vm238, %v873, 0
      %896 = vmatprep.subr.bf16.mxu0 %v891
      %897 = vmatpush1.bf16.msra.mxu0 %v888
      %898 = vmatprep.subr.bf16.mxu0 0
      %899 = vmatpush1.bf16.msra.mxu0 0
      %900 = vmatprep.subr.bf16.mxu0 0
      %901 = vmatpush1.bf16.msra.mxu0 0
      %902 = vmatprep.subr.bf16.mxu0 0
      %903 = vmatpush1.bf16.msra.mxu0 0
      %904 = vmatprep.subr.bf16.mxu0 0
      %905 = vmatpush1.bf16.msra.mxu0 0
      %906 = vmatprep.subr.bf16.mxu0 0
      %907 = vmatpush1.bf16.msra.mxu0 0
      %908 = vmatprep.subr.bf16.mxu0 0
      %909 = vmatpush1.bf16.msra.mxu0 0
      %910 = vmatprep.subr.bf16.mxu0 0
      %911 = vmatpush1.bf16.msra.mxu0 0
      %912 = vmatprep.subr.bf16.mxu0 0
      %913 = vmatpush1.bf16.msra.mxu0 0
      %914 = vmatprep.subr.bf16.mxu0 0
      %915 = vmatpush1.bf16.msra.mxu0 0
      %916 = vmatprep.subr.bf16.mxu0 0
      %917 = vmatpush1.bf16.msra.mxu0 0
      %918 = vmatprep.subr.bf16.mxu0 0
      %919 = vmatpush1.bf16.msra.mxu0 0
      %920 = vmatprep.subr.bf16.mxu0 0
      %921 = vmatpush1.bf16.msra.mxu0 0
      %922 = vmatprep.subr.bf16.mxu0 0
      %923 = vmatpush1.bf16.msra.mxu0 0
      %924 = vmatprep.subr.bf16.mxu0 0
      %925 = vmatpush1.bf16.msra.mxu0 0
      %926 = vmatprep.subr.bf16.mxu0 0
      %927 = vmatpush1.bf16.msra.mxu0 0
      %928 = vmatprep.mubr.bf16.mxu0 0
      %929 = vmatmul.mubr.bf16.gmra.mrb[0].mxu0 %v876
      %v930 = vpop.f32.mrb[0].mxu0
      %v931 = vadd.f32 0.0, %v930
      %v932 = vpop.f32.mrb[0].mxu0
      %v933 = vadd.f32 0.0, %v932
      %v934 = vpop.f32.mrb[0].mxu0
      %v935 = vadd.f32 0.0, %v934
      %v936 = vpop.f32.mrb[0].mxu0
      %v937 = vadd.f32 0.0, %v936
      %938 = vmatprep.mubr.bf16.mxu0 0
      %939 = vmatmul.mubr.bf16.gmra.mrb[0].mxu0 %v879
      %v940 = vpop.f32.mrb[0].mxu0
      %v941 = vadd.f32 0.0, %v940
      %v942 = vpop.f32.mrb[0].mxu0
      %v943 = vadd.f32 0.0, %v942
      %v944 = vpop.f32.mrb[0].mxu0
      %v945 = vadd.f32 0.0, %v944
      %v946 = vpop.f32.mrb[0].mxu0
      %v947 = vadd.f32 0.0, %v946
      %948 = vmatprep.mubr.bf16.mxu0 0
      %949 = vmatmul.mubr.bf16.gmra.mrb[0].mxu0 %v882
      %v950 = vpop.f32.mrb[0].mxu0
      %v951 = vadd.f32 0.0, %v950
      %v952 = vpop.f32.mrb[0].mxu0
      %v953 = vadd.f32 0.0, %v952
      %v954 = vpop.f32.mrb[0].mxu0
      %v955 = vadd.f32 0.0, %v954
      %v956 = vpop.f32.mrb[0].mxu0
      %v957 = vadd.f32 0.0, %v956
      %958 = vmatprep.mubr.bf16.mxu0 0
      %959 = vmatmul.mubr.bf16.gmra.mrb[0].mxu0 %v885
      %v960 = vpop.f32.mrb[0].mxu0
      %v961 = vadd.f32 0.0, %v960
      %v962 = vpop.f32.mrb[0].mxu0
      %v963 = vadd.f32 0.0, %v962
      %v964 = vpop.f32.mrb[0].mxu0
      %v965 = vpop.f32.mrb[0].mxu0
      %966 = vdwg.mxu0
      %967 = vmatprep.subr.bf16.mxu0 0
      %968 = vmatpush1.bf16.msra.mxu0 %v894
      %969 = vmatprep.subr.bf16.mxu0 0
      %970 = vmatpush1.bf16.msra.mxu0 0
      %971 = vmatprep.subr.bf16.mxu0 0
      %972 = vmatpush1.bf16.msra.mxu0 0
      %973 = vmatprep.subr.bf16.mxu0 0
      %974 = vmatpush1.bf16.msra.mxu0 0
      %975 = vmatprep.subr.bf16.mxu0 0
      %976 = vmatpush1.bf16.msra.mxu0 0
      %977 = vmatprep.subr.bf16.mxu0 0
      %978 = vmatpush1.bf16.msra.mxu0 0
      %979 = vmatprep.subr.bf16.mxu0 0
      %980 = vmatpush1.bf16.msra.mxu0 0
      %981 = vmatprep.subr.bf16.mxu0 0
      %982 = vmatpush1.bf16.msra.mxu0 0
      %983 = vmatprep.subr.bf16.mxu0 0
      %984 = vmatpush1.bf16.msra.mxu0 0
      %985 = vmatprep.subr.bf16.mxu0 0
      %986 = vmatpush1.bf16.msra.mxu0 0
      %987 = vmatprep.subr.bf16.mxu0 0
      %988 = vmatpush1.bf16.msra.mxu0 0
      %989 = vmatprep.subr.bf16.mxu0 0
      %990 = vmatpush1.bf16.msra.mxu0 0
      %991 = vmatprep.subr.bf16.mxu0 0
      %992 = vmatpush1.bf16.msra.mxu0 0
      %993 = vmatprep.subr.bf16.mxu0 0
      %994 = vmatpush1.bf16.msra.mxu0 0
      %995 = vmatprep.subr.bf16.mxu0 0
      %996 = vmatpush1.bf16.msra.mxu0 0
      %997 = vmatprep.subr.bf16.mxu0 0
      %998 = vmatpush1.bf16.msra.mxu0 0
      %999 = vmatprep.mubr.bf16.mxu0 0
      %1000 = vmatmul.mubr.bf16.gmra.mrb[0].mxu0 %v876
      %v1001 = vpop.f32.mrb[0].mxu0
      %v1002 = vadd.f32 0.0, %v1001
      %v1003 = vpop.f32.mrb[0].mxu0
      %v1004 = vpop.f32.mrb[0].mxu0
      %v1005 = vadd.f32 0.0, %v1004
      %v1006 = vpop.f32.mrb[0].mxu0
      %1007 = vmatprep.mubr.bf16.mxu0 0
      %1008 = vmatmul.mubr.bf16.gmra.mrb[0].mxu0 %v879
      %v1009 = vpop.f32.mrb[0].mxu0
      %v1010 = vadd.f32 0.0, %v1009
      %v1011 = vpop.f32.mrb[0].mxu0
      %v1012 = vpop.f32.mrb[0].mxu0
      %v1013 = vadd.f32 0.0, %v1012
      %v1014 = vpop.f32.mrb[0].mxu0
      %1015 = vmatprep.mubr.bf16.mxu0 0
      %1016 = vmatmul.mubr.bf16.gmra.mrb[0].mxu0 %v882
      %v1017 = vpop.f32.mrb[0].mxu0
      %v1018 = vadd.f32 0.0, %v1017
      %v1019 = vpop.f32.mrb[0].mxu0
      %v1020 = vpop.f32.mrb[0].mxu0
      %v1021 = vadd.f32 0.0, %v1020
      %v1022 = vpop.f32.mrb[0].mxu0
      %1023 = vmatprep.mubr.bf16.mxu0 0
      %1024 = vmatmul.mubr.bf16.gmra.mrb[0].mxu0 %v885
      %v1025 = vpop.f32.mrb[0].mxu0
      %v1026 = vadd.f32 0.0, %v1025
      %v1027 = vpop.f32.mrb[0].mxu0
      %v1028 = vpop.f32.mrb[0].mxu0
      %v1029 = vpop.f32.mrb[0].mxu0
      %1030 = vdwg.mxu0
      %v1031 = vadd.f32 %v809, %v931
      %v1032 = vadd.f32 %v810, %v933
      %v1033 = vadd.f32 %v811, %v1002
      %v1034 = vadd.f32 %v812, %v935
      %v1035 = vadd.f32 %v813, %v937
      %v1036 = vadd.f32 %v814, %v1005
      %v1037 = vadd.f32 %v815, %v941
      %v1038 = vadd.f32 %v816, %v943
      %v1039 = vadd.f32 %v817, %v1010
      %v1040 = vadd.f32 %v818, %v945
      %v1041 = vadd.f32 %v819, %v947
      %v1042 = vadd.f32 %v820, %v1013
      %v1043 = vadd.f32 %v821, %v951
      %v1044 = vadd.f32 %v822, %v953
      %v1045 = vadd.f32 %v823, %v1018
      %v1046 = vadd.f32 %v824, %v955
      %v1047 = vadd.f32 %v825, %v957
      %v1048 = vadd.f32 %v826, %v1021
      %v1049 = vadd.f32 %v827, %v961
      %v1050 = vadd.f32 %v828, %v963
      %v1051 = vadd.f32 %v829, %v1026
      %s1052 = scalar_lea.vmem %s165, 108
      %v1053 = vld [vmem:[%s1052] sm:$0xf]
      %v1054 = vld [vmem:[%s1052 + $0x4] sm:$0xf]
      %v1055 = vld [vmem:[%s1052 + $0x8] sm:$0xf]
      %v1056 = vld [vmem:[%s1052 + $0xc] sm:$0xf]
      %v1057 = vld [vmem:[%s1052 + $0x10] sm:$0xf]
      %v1058 = vld [vmem:[%s1052 + $0x14] sm:$0xf]
      %v1059 = vld [vmem:[%s1052 + $0x18] sm:$0xf]
      %s1060 = scalar_lea.vmem %s1, 24
      %v1061 = vld [vmem:[%s1060] sm:$0x3f]
      %v1069 = vunpack.c.l.b16 %v1053
      %v1070 = vunpack.c.l.b16 %v1054
      %v1071 = vunpack.c.l.b16 %v1055
      %v1072 = vunpack.c.l.b16 %v1056
      %v1073 = vunpack.c.l.b16 %v1057
      %v1074 = vunpack.c.l.b16 %v1058
      %v1075 = vunpack.c.l.b16 %v1059
      %v1076 = vpack.c.b16 %v1070, %v1069
      %v1077 = vpack.c.b16 %v1072, %v1071
      %v1078 = vpack.c.b16 %v1074, %v1073
      %v1079 = vpack.c.b16 %v1075, %v1075
      %v1081 = vcombine.high %v1061, %v1061
      %v1083 = vunpack.c.l.s4 1983009808
      %v1084 = vunpack.c.0.s8 %v1083
      %v1085 = vlaneseq
      %v1086 = vshrl.u32 %v1085, 7
      %v1087 = vsub.s32 %v1084, %v1086
      %v1088 = vrot.slane %v1061, %v1087
      %v1090 = vunpack.c.l.s4 1983009808
      %v1091 = vunpack.c.0.s8 %v1090
      %v1092 = vlaneseq
      %v1093 = vshrl.u32 %v1092, 7
      %v1094 = vsub.s32 %v1091, %v1093
      %v1095 = vrot.slane %v1081, %v1094
      %v1096 = vcombine.high %v1088, %v1088
      %v1098 = vsel %vm225, %v1076, 0
      %v1101 = vsel %vm225, %v1077, 0
      %v1104 = vsel %vm225, %v1078, 0
      %v1107 = vsel %vm225, %v1079, 0
      %v1110 = vsel %vm238, %v1088, 0
      %v1113 = vsel %vm238, %v1096, 0
      %v1116 = vsel %vm238, %v1095, 0
      %1118 = vmatprep.subr.bf16.mxu0 %v1113
      %1119 = vmatpush1.bf16.msra.mxu0 %v1110
      %1120 = vmatprep.subr.bf16.mxu0 0
      %1121 = vmatpush1.bf16.msra.mxu0 0
      %1122 = vmatprep.subr.bf16.mxu0 0
      %1123 = vmatpush1.bf16.msra.mxu0 0
      %1124 = vmatprep.subr.bf16.mxu0 0
      %1125 = vmatpush1.bf16.msra.mxu0 0
      %1126 = vmatprep.subr.bf16.mxu0 0
      %1127 = vmatpush1.bf16.msra.mxu0 0
      %1128 = vmatprep.subr.bf16.mxu0 0
      %1129 = vmatpush1.bf16.msra.mxu0 0
      %1130 = vmatprep.subr.bf16.mxu0 0
      %1131 = vmatpush1.bf16.msra.mxu0 0
      %1132 = vmatprep.subr.bf16.mxu0 0
      %1133 = vmatpush1.bf16.msra.mxu0 0
      %1134 = vmatprep.subr.bf16.mxu0 0
      %1135 = vmatpush1.bf16.msra.mxu0 0
      %1136 = vmatprep.subr.bf16.mxu0 0
      %1137 = vmatpush1.bf16.msra.mxu0 0
      %1138 = vmatprep.subr.bf16.mxu0 0
      %1139 = vmatpush1.bf16.msra.mxu0 0
      %1140 = vmatprep.subr.bf16.mxu0 0
      %1141 = vmatpush1.bf16.msra.mxu0 0
      %1142 = vmatprep.subr.bf16.mxu0 0
      %1143 = vmatpush1.bf16.msra.mxu0 0
      %1144 = vmatprep.subr.bf16.mxu0 0
      %1145 = vmatpush1.bf16.msra.mxu0 0
      %1146 = vmatprep.subr.bf16.mxu0 0
      %1147 = vmatpush1.bf16.msra.mxu0 0
      %1148 = vmatprep.subr.bf16.mxu0 0
      %1149 = vmatpush1.bf16.msra.mxu0 0
      %1150 = vmatprep.mubr.bf16.mxu0 0
      %1151 = vmatmul.mubr.bf16.gmra.mrb[0].mxu0 %v1098
      %v1152 = vpop.f32.mrb[0].mxu0
      %v1153 = vadd.f32 0.0, %v1152
      %v1154 = vpop.f32.mrb[0].mxu0
      %v1155 = vadd.f32 0.0, %v1154
      %v1156 = vpop.f32.mrb[0].mxu0
      %v1157 = vadd.f32 0.0, %v1156
      %v1158 = vpop.f32.mrb[0].mxu0
      %v1159 = vadd.f32 0.0, %v1158
      %1160 = vmatprep.mubr.bf16.mxu0 0
      %1161 = vmatmul.mubr.bf16.gmra.mrb[0].mxu0 %v1101
      %v1162 = vpop.f32.mrb[0].mxu0
      %v1163 = vadd.f32 0.0, %v1162
      %v1164 = vpop.f32.mrb[0].mxu0
      %v1165 = vadd.f32 0.0, %v1164
      %v1166 = vpop.f32.mrb[0].mxu0
      %v1167 = vadd.f32 0.0, %v1166
      %v1168 = vpop.f32.mrb[0].mxu0
      %v1169 = vadd.f32 0.0, %v1168
      %1170 = vmatprep.mubr.bf16.mxu0 0
      %1171 = vmatmul.mubr.bf16.gmra.mrb[0].mxu0 %v1104
      %v1172 = vpop.f32.mrb[0].mxu0
      %v1173 = vadd.f32 0.0, %v1172
      %v1174 = vpop.f32.mrb[0].mxu0
      %v1175 = vadd.f32 0.0, %v1174
      %v1176 = vpop.f32.mrb[0].mxu0
      %v1177 = vadd.f32 0.0, %v1176
      %v1178 = vpop.f32.mrb[0].mxu0
      %v1179 = vadd.f32 0.0, %v1178
      %1180 = vmatprep.mubr.bf16.mxu0 0
      %1181 = vmatmul.mubr.bf16.gmra.mrb[0].mxu0 %v1107
      %v1182 = vpop.f32.mrb[0].mxu0
      %v1183 = vadd.f32 0.0, %v1182
      %v1184 = vpop.f32.mrb[0].mxu0
      %v1185 = vadd.f32 0.0, %v1184
      %v1186 = vpop.f32.mrb[0].mxu0
      %v1187 = vpop.f32.mrb[0].mxu0
      %1188 = vdwg.mxu0
      %1189 = vmatprep.subr.bf16.mxu0 0
      %1190 = vmatpush1.bf16.msra.mxu0 %v1116
      %1191 = vmatprep.subr.bf16.mxu0 0
      %1192 = vmatpush1.bf16.msra.mxu0 0
      %1193 = vmatprep.subr.bf16.mxu0 0
      %1194 = vmatpush1.bf16.msra.mxu0 0
      %1195 = vmatprep.subr.bf16.mxu0 0
      %1196 = vmatpush1.bf16.msra.mxu0 0
      %1197 = vmatprep.subr.bf16.mxu0 0
      %1198 = vmatpush1.bf16.msra.mxu0 0
      %1199 = vmatprep.subr.bf16.mxu0 0
      %1200 = vmatpush1.bf16.msra.mxu0 0
      %1201 = vmatprep.subr.bf16.mxu0 0
      %1202 = vmatpush1.bf16.msra.mxu0 0
      %1203 = vmatprep.subr.bf16.mxu0 0
      %1204 = vmatpush1.bf16.msra.mxu0 0
      %1205 = vmatprep.subr.bf16.mxu0 0
      %1206 = vmatpush1.bf16.msra.mxu0 0
      %1207 = vmatprep.subr.bf16.mxu0 0
      %1208 = vmatpush1.bf16.msra.mxu0 0
      %1209 = vmatprep.subr.bf16.mxu0 0
      %1210 = vmatpush1.bf16.msra.mxu0 0
      %1211 = vmatprep.subr.bf16.mxu0 0
      %1212 = vmatpush1.bf16.msra.mxu0 0
      %1213 = vmatprep.subr.bf16.mxu0 0
      %1214 = vmatpush1.bf16.msra.mxu0 0
      %1215 = vmatprep.subr.bf16.mxu0 0
      %1216 = vmatpush1.bf16.msra.mxu0 0
      %1217 = vmatprep.subr.bf16.mxu0 0
      %1218 = vmatpush1.bf16.msra.mxu0 0
      %1219 = vmatprep.subr.bf16.mxu0 0
      %1220 = vmatpush1.bf16.msra.mxu0 0
      %1221 = vmatprep.mubr.bf16.mxu0 0
      %1222 = vmatmul.mubr.bf16.gmra.mrb[0].mxu0 %v1098
      %v1223 = vpop.f32.mrb[0].mxu0
      %v1224 = vadd.f32 0.0, %v1223
      %v1225 = vpop.f32.mrb[0].mxu0
      %v1226 = vpop.f32.mrb[0].mxu0
      %v1227 = vadd.f32 0.0, %v1226
      %v1228 = vpop.f32.mrb[0].mxu0
      %1229 = vmatprep.mubr.bf16.mxu0 0
      %1230 = vmatmul.mubr.bf16.gmra.mrb[0].mxu0 %v1101
      %v1231 = vpop.f32.mrb[0].mxu0
      %v1232 = vadd.f32 0.0, %v1231
      %v1233 = vpop.f32.mrb[0].mxu0
      %v1234 = vpop.f32.mrb[0].mxu0
      %v1235 = vadd.f32 0.0, %v1234
      %v1236 = vpop.f32.mrb[0].mxu0
      %1237 = vmatprep.mubr.bf16.mxu0 0
      %1238 = vmatmul.mubr.bf16.gmra.mrb[0].mxu0 %v1104
      %v1239 = vpop.f32.mrb[0].mxu0
      %v1240 = vadd.f32 0.0, %v1239
      %v1241 = vpop.f32.mrb[0].mxu0
      %v1242 = vpop.f32.mrb[0].mxu0
      %v1243 = vadd.f32 0.0, %v1242
      %v1244 = vpop.f32.mrb[0].mxu0
      %1245 = vmatprep.mubr.bf16.mxu0 0
      %1246 = vmatmul.mubr.bf16.gmra.mrb[0].mxu0 %v1107
      %v1247 = vpop.f32.mrb[0].mxu0
      %v1248 = vadd.f32 0.0, %v1247
      %v1249 = vpop.f32.mrb[0].mxu0
      %v1250 = vpop.f32.mrb[0].mxu0
      %v1251 = vpop.f32.mrb[0].mxu0
      %1252 = vdwg.mxu0
      %v1253 = vadd.f32 %v1031, %v1153
      %v1254 = vadd.f32 %v1032, %v1155
      %v1255 = vadd.f32 %v1033, %v1224
      %v1256 = vadd.f32 %v1034, %v1157
      %v1257 = vadd.f32 %v1035, %v1159
      %v1258 = vadd.f32 %v1036, %v1227
      %v1259 = vadd.f32 %v1037, %v1163
      %v1260 = vadd.f32 %v1038, %v1165
      %v1261 = vadd.f32 %v1039, %v1232
      %v1262 = vadd.f32 %v1040, %v1167
      %v1263 = vadd.f32 %v1041, %v1169
      %v1264 = vadd.f32 %v1042, %v1235
      %v1265 = vadd.f32 %v1043, %v1173
      %v1266 = vadd.f32 %v1044, %v1175
      %v1267 = vadd.f32 %v1045, %v1240
      %v1268 = vadd.f32 %v1046, %v1177
      %v1269 = vadd.f32 %v1047, %v1179
      %v1270 = vadd.f32 %v1048, %v1243
      %v1271 = vadd.f32 %v1049, %v1183
      %v1272 = vadd.f32 %v1050, %v1185
      %v1273 = vadd.f32 %v1051, %v1248
      %v1274 = vld [vmem:[%s830] sm:$0xf]
      %v1275 = vld [vmem:[%s830 + $0x4] sm:$0xf]
      %v1276 = vld [vmem:[%s830 + $0x8] sm:$0xf]
      %v1277 = vld [vmem:[%s830 + $0xc] sm:$0xf]
      %v1278 = vld [vmem:[%s830 + $0x10] sm:$0xf]
      %v1279 = vld [vmem:[%s830 + $0x14] sm:$0xf]
      %v1280 = vld [vmem:[%s830 + $0x18] sm:$0xf]
      %v1281 = vld [vmem:[%s830 + $0x1c] sm:$0x1]
      %s1282 = scalar_lea.vmem %s1, 30
      %v1283 = vld [vmem:[%s1282] sm:$0x3f]
      %v1292 = vunpack.c.l.b16 %v1274
      %v1293 = vunpack.c.l.b16 %v1275
      %v1294 = vunpack.c.l.b16 %v1276
      %v1295 = vunpack.c.l.b16 %v1277
      %v1296 = vunpack.c.l.b16 %v1278
      %v1297 = vunpack.c.l.b16 %v1279
      %v1298 = vunpack.c.l.b16 %v1280
      %v1299 = vunpack.c.l.b16 %v1281
      %v1300 = vpack.c.b16 %v1293, %v1292
      %v1301 = vpack.c.b16 %v1295, %v1294
      %v1302 = vpack.c.b16 %v1297, %v1296
      %v1303 = vpack.c.b16 %v1299, %v1298
      %v1305 = vshrl.u32 %v1300, 16
      %v1307 = vshll.u32 %v1300, 16
      %v1309 = vrot.slane %v1307, 1
      %v1310 = vor.u32 %v1305, %v1309
      %v1312 = vshll.u32 %v1301, 16
      %v1314 = vrot.slane %v1312, 1
      %v1315 = vsel %vm604, %v1310, %v1314
      %v1316 = vshrl.u32 %v1301, 16
      %v1318 = vor.u32 %v1316, %v1314
      %v1320 = vshll.u32 %v1302, 16
      %v1322 = vrot.slane %v1320, 1
      %v1323 = vsel %vm604, %v1318, %v1322
      %v1324 = vshrl.u32 %v1302, 16
      %v1326 = vor.u32 %v1324, %v1322
      %v1328 = vshll.u32 %v1303, 16
      %v1330 = vrot.slane %v1328, 1
      %v1331 = vsel %vm604, %v1326, %v1330
      %v1332 = vshrl.u32 %v1303, 16
      %v1334 = vor.u32 %v1332, %v1330
      %v1336 = vcombine.high %v1283, %v1283
      %v1338 = vunpack.c.l.s4 1983009808
      %v1339 = vunpack.c.0.s8 %v1338
      %v1340 = vlaneseq
      %v1341 = vshrl.u32 %v1340, 7
      %v1342 = vsub.s32 %v1339, %v1341
      %v1343 = vrot.slane %v1283, %v1342
      %v1345 = vunpack.c.l.s4 1983009808
      %v1346 = vunpack.c.0.s8 %v1345
      %v1347 = vlaneseq
      %v1348 = vshrl.u32 %v1347, 7
      %v1349 = vsub.s32 %v1346, %v1348
      %v1350 = vrot.slane %v1336, %v1349
      %v1351 = vcombine.high %v1343, %v1343
      %v1353 = vsel %vm225, %v1315, 0
      %v1356 = vsel %vm225, %v1323, 0
      %v1359 = vsel %vm225, %v1331, 0
      %v1362 = vsel %vm225, %v1334, 0
      %v1365 = vsel %vm238, %v1343, 0
      %v1368 = vsel %vm238, %v1351, 0
      %v1371 = vsel %vm238, %v1350, 0
      %1373 = vmatprep.subr.bf16.mxu0 %v1368
      %1374 = vmatpush1.bf16.msra.mxu0 %v1365
      %1375 = vmatprep.subr.bf16.mxu0 0
      %1376 = vmatpush1.bf16.msra.mxu0 0
      %1377 = vmatprep.subr.bf16.mxu0 0
      %1378 = vmatpush1.bf16.msra.mxu0 0
      %1379 = vmatprep.subr.bf16.mxu0 0
      %1380 = vmatpush1.bf16.msra.mxu0 0
      %1381 = vmatprep.subr.bf16.mxu0 0
      %1382 = vmatpush1.bf16.msra.mxu0 0
      %1383 = vmatprep.subr.bf16.mxu0 0
      %1384 = vmatpush1.bf16.msra.mxu0 0
      %1385 = vmatprep.subr.bf16.mxu0 0
      %1386 = vmatpush1.bf16.msra.mxu0 0
      %1387 = vmatprep.subr.bf16.mxu0 0
      %1388 = vmatpush1.bf16.msra.mxu0 0
      %1389 = vmatprep.subr.bf16.mxu0 0
      %1390 = vmatpush1.bf16.msra.mxu0 0
      %1391 = vmatprep.subr.bf16.mxu0 0
      %1392 = vmatpush1.bf16.msra.mxu0 0
      %1393 = vmatprep.subr.bf16.mxu0 0
      %1394 = vmatpush1.bf16.msra.mxu0 0
      %1395 = vmatprep.subr.bf16.mxu0 0
      %1396 = vmatpush1.bf16.msra.mxu0 0
      %1397 = vmatprep.subr.bf16.mxu0 0
      %1398 = vmatpush1.bf16.msra.mxu0 0
      %1399 = vmatprep.subr.bf16.mxu0 0
      %1400 = vmatpush1.bf16.msra.mxu0 0
      %1401 = vmatprep.subr.bf16.mxu0 0
      %1402 = vmatpush1.bf16.msra.mxu0 0
      %1403 = vmatprep.subr.bf16.mxu0 0
      %1404 = vmatpush1.bf16.msra.mxu0 0
      %1405 = vmatprep.mubr.bf16.mxu0 0
      %1406 = vmatmul.mubr.bf16.gmra.mrb[0].mxu0 %v1353
      %v1407 = vpop.f32.mrb[0].mxu0
      %v1408 = vadd.f32 0.0, %v1407
      %v1409 = vpop.f32.mrb[0].mxu0
      %v1410 = vadd.f32 0.0, %v1409
      %v1411 = vpop.f32.mrb[0].mxu0
      %v1412 = vadd.f32 0.0, %v1411
      %v1413 = vpop.f32.mrb[0].mxu0
      %v1414 = vadd.f32 0.0, %v1413
      %1415 = vmatprep.mubr.bf16.mxu0 0
      %1416 = vmatmul.mubr.bf16.gmra.mrb[0].mxu0 %v1356
      %v1417 = vpop.f32.mrb[0].mxu0
      %v1418 = vadd.f32 0.0, %v1417
      %v1419 = vpop.f32.mrb[0].mxu0
      %v1420 = vadd.f32 0.0, %v1419
      %v1421 = vpop.f32.mrb[0].mxu0
      %v1422 = vadd.f32 0.0, %v1421
      %v1423 = vpop.f32.mrb[0].mxu0
      %v1424 = vadd.f32 0.0, %v1423
      %1425 = vmatprep.mubr.bf16.mxu0 0
      %1426 = vmatmul.mubr.bf16.gmra.mrb[0].mxu0 %v1359
      %v1427 = vpop.f32.mrb[0].mxu0
      %v1428 = vadd.f32 0.0, %v1427
      %v1429 = vpop.f32.mrb[0].mxu0
      %v1430 = vadd.f32 0.0, %v1429
      %v1431 = vpop.f32.mrb[0].mxu0
      %v1432 = vadd.f32 0.0, %v1431
      %v1433 = vpop.f32.mrb[0].mxu0
      %v1434 = vadd.f32 0.0, %v1433
      %1435 = vmatprep.mubr.bf16.mxu0 0
      %1436 = vmatmul.mubr.bf16.gmra.mrb[0].mxu0 %v1362
      %v1437 = vpop.f32.mrb[0].mxu0
      %v1438 = vadd.f32 0.0, %v1437
      %v1439 = vpop.f32.mrb[0].mxu0
      %v1440 = vadd.f32 0.0, %v1439
      %v1441 = vpop.f32.mrb[0].mxu0
      %v1442 = vpop.f32.mrb[0].mxu0
      %1443 = vdwg.mxu0
      %1444 = vmatprep.subr.bf16.mxu0 0
      %1445 = vmatpush1.bf16.msra.mxu0 %v1371
      %1446 = vmatprep.subr.bf16.mxu0 0
      %1447 = vmatpush1.bf16.msra.mxu0 0
      %1448 = vmatprep.subr.bf16.mxu0 0
      %1449 = vmatpush1.bf16.msra.mxu0 0
      %1450 = vmatprep.subr.bf16.mxu0 0
      %1451 = vmatpush1.bf16.msra.mxu0 0
      %1452 = vmatprep.subr.bf16.mxu0 0
      %1453 = vmatpush1.bf16.msra.mxu0 0
      %1454 = vmatprep.subr.bf16.mxu0 0
      %1455 = vmatpush1.bf16.msra.mxu0 0
      %1456 = vmatprep.subr.bf16.mxu0 0
      %1457 = vmatpush1.bf16.msra.mxu0 0
      %1458 = vmatprep.subr.bf16.mxu0 0
      %1459 = vmatpush1.bf16.msra.mxu0 0
      %1460 = vmatprep.subr.bf16.mxu0 0
      %1461 = vmatpush1.bf16.msra.mxu0 0
      %1462 = vmatprep.subr.bf16.mxu0 0
      %1463 = vmatpush1.bf16.msra.mxu0 0
      %1464 = vmatprep.subr.bf16.mxu0 0
      %1465 = vmatpush1.bf16.msra.mxu0 0
      %1466 = vmatprep.subr.bf16.mxu0 0
      %1467 = vmatpush1.bf16.msra.mxu0 0
      %1468 = vmatprep.subr.bf16.mxu0 0
      %1469 = vmatpush1.bf16.msra.mxu0 0
      %1470 = vmatprep.subr.bf16.mxu0 0
      %1471 = vmatpush1.bf16.msra.mxu0 0
      %1472 = vmatprep.subr.bf16.mxu0 0
      %1473 = vmatpush1.bf16.msra.mxu0 0
      %1474 = vmatprep.subr.bf16.mxu0 0
      %1475 = vmatpush1.bf16.msra.mxu0 0
      %1476 = vmatprep.mubr.bf16.mxu0 0
      %1477 = vmatmul.mubr.bf16.gmra.mrb[0].mxu0 %v1353
      %v1478 = vpop.f32.mrb[0].mxu0
      %v1479 = vadd.f32 0.0, %v1478
      %v1480 = vpop.f32.mrb[0].mxu0
      %v1481 = vpop.f32.mrb[0].mxu0
      %v1482 = vadd.f32 0.0, %v1481
      %v1483 = vpop.f32.mrb[0].mxu0
      %1484 = vmatprep.mubr.bf16.mxu0 0
      %1485 = vmatmul.mubr.bf16.gmra.mrb[0].mxu0 %v1356
      %v1486 = vpop.f32.mrb[0].mxu0
      %v1487 = vadd.f32 0.0, %v1486
      %v1488 = vpop.f32.mrb[0].mxu0
      %v1489 = vpop.f32.mrb[0].mxu0
      %v1490 = vadd.f32 0.0, %v1489
      %v1491 = vpop.f32.mrb[0].mxu0
      %1492 = vmatprep.mubr.bf16.mxu0 0
      %1493 = vmatmul.mubr.bf16.gmra.mrb[0].mxu0 %v1359
      %v1494 = vpop.f32.mrb[0].mxu0
      %v1495 = vadd.f32 0.0, %v1494
      %v1496 = vpop.f32.mrb[0].mxu0
      %v1497 = vpop.f32.mrb[0].mxu0
      %v1498 = vadd.f32 0.0, %v1497
      %v1499 = vpop.f32.mrb[0].mxu0
      %1500 = vmatprep.mubr.bf16.mxu0 0
      %1501 = vmatmul.mubr.bf16.gmra.mrb[0].mxu0 %v1362
      %v1502 = vpop.f32.mrb[0].mxu0
      %v1503 = vadd.f32 0.0, %v1502
      %v1504 = vpop.f32.mrb[0].mxu0
      %v1505 = vpop.f32.mrb[0].mxu0
      %v1506 = vpop.f32.mrb[0].mxu0
      %1507 = vdwg.mxu0
      %v1508 = vadd.f32 %v1253, %v1408
      %v1509 = vadd.f32 %v1254, %v1410
      %v1510 = vadd.f32 %v1255, %v1479
      %v1511 = vadd.f32 %v1256, %v1412
      %v1512 = vadd.f32 %v1257, %v1414
      %v1513 = vadd.f32 %v1258, %v1482
      %v1514 = vadd.f32 %v1259, %v1418
      %v1515 = vadd.f32 %v1260, %v1420
      %v1516 = vadd.f32 %v1261, %v1487
      %v1517 = vadd.f32 %v1262, %v1422
      %v1518 = vadd.f32 %v1263, %v1424
      %v1519 = vadd.f32 %v1264, %v1490
      %v1520 = vadd.f32 %v1265, %v1428
      %v1521 = vadd.f32 %v1266, %v1430
      %v1522 = vadd.f32 %v1267, %v1495
      %v1523 = vadd.f32 %v1268, %v1432
      %v1524 = vadd.f32 %v1269, %v1434
      %v1525 = vadd.f32 %v1270, %v1498
      %v1526 = vadd.f32 %v1271, %v1438
      %v1527 = vadd.f32 %v1272, %v1440
      %v1528 = vadd.f32 %v1273, %v1503
      %v1529 = vld [vmem:[%s165 + $0x4] sm:$0xf]
      %v1530 = vld [vmem:[%s165 + $0x8] sm:$0xf]
      %v1531 = vld [vmem:[%s165 + $0xc] sm:$0xf]
      %v1532 = vld [vmem:[%s165 + $0x10] sm:$0xf]
      %v1533 = vld [vmem:[%s165 + $0x14] sm:$0xf]
      %v1534 = vld [vmem:[%s165 + $0x18] sm:$0xf]
      %v1535 = vld [vmem:[%s165 + $0x1c] sm:$0xf]
      %s1536 = scalar_lea.vmem %s1, 36
      %v1537 = vld [vmem:[%s1536] sm:$0x3f]
      %v1545 = vunpack.c.l.b16 %v1529
      %v1546 = vunpack.c.l.b16 %v1530
      %v1547 = vunpack.c.l.b16 %v1531
      %v1548 = vunpack.c.l.b16 %v1532
      %v1549 = vunpack.c.l.b16 %v1533
      %v1550 = vunpack.c.l.b16 %v1534
      %v1551 = vunpack.c.l.b16 %v1535
      %v1552 = vpack.c.b16 %v1546, %v1545
      %v1553 = vpack.c.b16 %v1548, %v1547
      %v1554 = vpack.c.b16 %v1550, %v1549
      %v1555 = vpack.c.b16 %v1551, %v1551
      %v1557 = vcombine.high %v1537, %v1537
      %v1559 = vunpack.c.l.s4 1983009808
      %v1560 = vunpack.c.0.s8 %v1559
      %v1561 = vlaneseq
      %v1562 = vshrl.u32 %v1561, 7
      %v1563 = vsub.s32 %v1560, %v1562
      %v1564 = vrot.slane %v1537, %v1563
      %v1566 = vunpack.c.l.s4 1983009808
      %v1567 = vunpack.c.0.s8 %v1566
      %v1568 = vlaneseq
      %v1569 = vshrl.u32 %v1568, 7
      %v1570 = vsub.s32 %v1567, %v1569
      %v1571 = vrot.slane %v1557, %v1570
      %v1572 = vcombine.high %v1564, %v1564
      %v1574 = vsel %vm225, %v1552, 0
      %v1577 = vsel %vm225, %v1553, 0
      %v1580 = vsel %vm225, %v1554, 0
      %v1583 = vsel %vm225, %v1555, 0
      %v1586 = vsel %vm238, %v1564, 0
      %v1589 = vsel %vm238, %v1572, 0
      %v1592 = vsel %vm238, %v1571, 0
      %1594 = vmatprep.subr.bf16.mxu0 %v1589
      %1595 = vmatpush1.bf16.msra.mxu0 %v1586
      %1596 = vmatprep.subr.bf16.mxu0 0
      %1597 = vmatpush1.bf16.msra.mxu0 0
      %1598 = vmatprep.subr.bf16.mxu0 0
      %1599 = vmatpush1.bf16.msra.mxu0 0
      %1600 = vmatprep.subr.bf16.mxu0 0
      %1601 = vmatpush1.bf16.msra.mxu0 0
      %1602 = vmatprep.subr.bf16.mxu0 0
      %1603 = vmatpush1.bf16.msra.mxu0 0
      %1604 = vmatprep.subr.bf16.mxu0 0
      %1605 = vmatpush1.bf16.msra.mxu0 0
      %1606 = vmatprep.subr.bf16.mxu0 0
      %1607 = vmatpush1.bf16.msra.mxu0 0
      %1608 = vmatprep.subr.bf16.mxu0 0
      %1609 = vmatpush1.bf16.msra.mxu0 0
      %1610 = vmatprep.subr.bf16.mxu0 0
      %1611 = vmatpush1.bf16.msra.mxu0 0
      %1612 = vmatprep.subr.bf16.mxu0 0
      %1613 = vmatpush1.bf16.msra.mxu0 0
      %1614 = vmatprep.subr.bf16.mxu0 0
      %1615 = vmatpush1.bf16.msra.mxu0 0
      %1616 = vmatprep.subr.bf16.mxu0 0
      %1617 = vmatpush1.bf16.msra.mxu0 0
      %1618 = vmatprep.subr.bf16.mxu0 0
      %1619 = vmatpush1.bf16.msra.mxu0 0
      %1620 = vmatprep.subr.bf16.mxu0 0
      %1621 = vmatpush1.bf16.msra.mxu0 0
      %1622 = vmatprep.subr.bf16.mxu0 0
      %1623 = vmatpush1.bf16.msra.mxu0 0
      %1624 = vmatprep.subr.bf16.mxu0 0
      %1625 = vmatpush1.bf16.msra.mxu0 0
      %1626 = vmatprep.mubr.bf16.mxu0 0
      %1627 = vmatmul.mubr.bf16.gmra.mrb[0].mxu0 %v1574
      %v1628 = vpop.f32.mrb[0].mxu0
      %v1629 = vadd.f32 0.0, %v1628
      %v1630 = vpop.f32.mrb[0].mxu0
      %v1631 = vadd.f32 0.0, %v1630
      %v1632 = vpop.f32.mrb[0].mxu0
      %v1633 = vadd.f32 0.0, %v1632
      %v1634 = vpop.f32.mrb[0].mxu0
      %v1635 = vadd.f32 0.0, %v1634
      %1636 = vmatprep.mubr.bf16.mxu0 0
      %1637 = vmatmul.mubr.bf16.gmra.mrb[0].mxu0 %v1577
      %v1638 = vpop.f32.mrb[0].mxu0
      %v1639 = vadd.f32 0.0, %v1638
      %v1640 = vpop.f32.mrb[0].mxu0
      %v1641 = vadd.f32 0.0, %v1640
      %v1642 = vpop.f32.mrb[0].mxu0
      %v1643 = vadd.f32 0.0, %v1642
      %v1644 = vpop.f32.mrb[0].mxu0
      %v1645 = vadd.f32 0.0, %v1644
      %1646 = vmatprep.mubr.bf16.mxu0 0
      %1647 = vmatmul.mubr.bf16.gmra.mrb[0].mxu0 %v1580
      %v1648 = vpop.f32.mrb[0].mxu0
      %v1649 = vadd.f32 0.0, %v1648
      %v1650 = vpop.f32.mrb[0].mxu0
      %v1651 = vadd.f32 0.0, %v1650
      %v1652 = vpop.f32.mrb[0].mxu0
      %v1653 = vadd.f32 0.0, %v1652
      %v1654 = vpop.f32.mrb[0].mxu0
      %v1655 = vadd.f32 0.0, %v1654
      %1656 = vmatprep.mubr.bf16.mxu0 0
      %1657 = vmatmul.mubr.bf16.gmra.mrb[0].mxu0 %v1583
      %v1658 = vpop.f32.mrb[0].mxu0
      %v1659 = vadd.f32 0.0, %v1658
      %v1660 = vpop.f32.mrb[0].mxu0
      %v1661 = vadd.f32 0.0, %v1660
      %v1662 = vpop.f32.mrb[0].mxu0
      %v1663 = vpop.f32.mrb[0].mxu0
      %1664 = vdwg.mxu0
      %1665 = vmatprep.subr.bf16.mxu0 0
      %1666 = vmatpush1.bf16.msra.mxu0 %v1592
      %1667 = vmatprep.subr.bf16.mxu0 0
      %1668 = vmatpush1.bf16.msra.mxu0 0
      %1669 = vmatprep.subr.bf16.mxu0 0
      %1670 = vmatpush1.bf16.msra.mxu0 0
      %1671 = vmatprep.subr.bf16.mxu0 0
      %1672 = vmatpush1.bf16.msra.mxu0 0
      %1673 = vmatprep.subr.bf16.mxu0 0
      %1674 = vmatpush1.bf16.msra.mxu0 0
      %1675 = vmatprep.subr.bf16.mxu0 0
      %1676 = vmatpush1.bf16.msra.mxu0 0
      %1677 = vmatprep.subr.bf16.mxu0 0
      %1678 = vmatpush1.bf16.msra.mxu0 0
      %1679 = vmatprep.subr.bf16.mxu0 0
      %1680 = vmatpush1.bf16.msra.mxu0 0
      %1681 = vmatprep.subr.bf16.mxu0 0
      %1682 = vmatpush1.bf16.msra.mxu0 0
      %1683 = vmatprep.subr.bf16.mxu0 0
      %1684 = vmatpush1.bf16.msra.mxu0 0
      %1685 = vmatprep.subr.bf16.mxu0 0
      %1686 = vmatpush1.bf16.msra.mxu0 0
      %1687 = vmatprep.subr.bf16.mxu0 0
      %1688 = vmatpush1.bf16.msra.mxu0 0
      %1689 = vmatprep.subr.bf16.mxu0 0
      %1690 = vmatpush1.bf16.msra.mxu0 0
      %1691 = vmatprep.subr.bf16.mxu0 0
      %1692 = vmatpush1.bf16.msra.mxu0 0
      %1693 = vmatprep.subr.bf16.mxu0 0
      %1694 = vmatpush1.bf16.msra.mxu0 0
      %1695 = vmatprep.subr.bf16.mxu0 0
      %1696 = vmatpush1.bf16.msra.mxu0 0
      %1697 = vmatprep.mubr.bf16.mxu0 0
      %1698 = vmatmul.mubr.bf16.gmra.mrb[0].mxu0 %v1574
      %v1699 = vpop.f32.mrb[0].mxu0
      %v1700 = vadd.f32 0.0, %v1699
      %v1701 = vpop.f32.mrb[0].mxu0
      %v1702 = vpop.f32.mrb[0].mxu0
      %v1703 = vadd.f32 0.0, %v1702
      %v1704 = vpop.f32.mrb[0].mxu0
      %1705 = vmatprep.mubr.bf16.mxu0 0
      %1706 = vmatmul.mubr.bf16.gmra.mrb[0].mxu0 %v1577
      %v1707 = vpop.f32.mrb[0].mxu0
      %v1708 = vadd.f32 0.0, %v1707
      %v1709 = vpop.f32.mrb[0].mxu0
      %v1710 = vpop.f32.mrb[0].mxu0
      %v1711 = vadd.f32 0.0, %v1710
      %v1712 = vpop.f32.mrb[0].mxu0
      %1713 = vmatprep.mubr.bf16.mxu0 0
      %1714 = vmatmul.mubr.bf16.gmra.mrb[0].mxu0 %v1580
      %v1715 = vpop.f32.mrb[0].mxu0
      %v1716 = vadd.f32 0.0, %v1715
      %v1717 = vpop.f32.mrb[0].mxu0
      %v1718 = vpop.f32.mrb[0].mxu0
      %v1719 = vadd.f32 0.0, %v1718
      %v1720 = vpop.f32.mrb[0].mxu0
      %1721 = vmatprep.mubr.bf16.mxu0 0
      %1722 = vmatmul.mubr.bf16.gmra.mrb[0].mxu0 %v1583
      %v1723 = vpop.f32.mrb[0].mxu0
      %v1724 = vadd.f32 0.0, %v1723
      %v1725 = vpop.f32.mrb[0].mxu0
      %v1726 = vpop.f32.mrb[0].mxu0
      %v1727 = vpop.f32.mrb[0].mxu0
      %1728 = vdwg.mxu0
      %v1729 = vadd.f32 %v1508, %v1629
      %v1730 = vadd.f32 %v1509, %v1631
      %v1731 = vadd.f32 %v1510, %v1700
      %v1732 = vadd.f32 %v1511, %v1633
      %v1733 = vadd.f32 %v1512, %v1635
      %v1734 = vadd.f32 %v1513, %v1703
      %v1735 = vadd.f32 %v1514, %v1639
      %v1736 = vadd.f32 %v1515, %v1641
      %v1737 = vadd.f32 %v1516, %v1708
      %v1738 = vadd.f32 %v1517, %v1643
      %v1739 = vadd.f32 %v1518, %v1645
      %v1740 = vadd.f32 %v1519, %v1711
      %v1741 = vadd.f32 %v1520, %v1649
      %v1742 = vadd.f32 %v1521, %v1651
      %v1743 = vadd.f32 %v1522, %v1716
      %v1744 = vadd.f32 %v1523, %v1653
      %v1745 = vadd.f32 %v1524, %v1655
      %v1746 = vadd.f32 %v1525, %v1719
      %v1747 = vadd.f32 %v1526, %v1659
      %v1748 = vadd.f32 %v1527, %v1661
      %v1749 = vadd.f32 %v1528, %v1724
      %v1750 = vld [vmem:[%s180 + $0x4] sm:$0xf]
      %v1751 = vld [vmem:[%s180 + $0x8] sm:$0xf]
      %v1752 = vld [vmem:[%s180 + $0xc] sm:$0xf]
      %v1753 = vld [vmem:[%s180 + $0x10] sm:$0xf]
      %v1754 = vld [vmem:[%s180 + $0x14] sm:$0xf]
      %v1755 = vld [vmem:[%s180 + $0x18] sm:$0xf]
      %v1756 = vld [vmem:[%s180 + $0x1c] sm:$0xf]
      %s1757 = scalar_lea.vmem %s1, 42
      %v1758 = vld [vmem:[%s1757] sm:$0x3f]
      %v1766 = vunpack.c.l.b16 %v1750
      %v1767 = vunpack.c.l.b16 %v1751
      %v1768 = vunpack.c.l.b16 %v1752
      %v1769 = vunpack.c.l.b16 %v1753
      %v1770 = vunpack.c.l.b16 %v1754
      %v1771 = vunpack.c.l.b16 %v1755
      %v1772 = vunpack.c.l.b16 %v1756
      %v1773 = vpack.c.b16 %v1767, %v1766
      %v1774 = vpack.c.b16 %v1769, %v1768
      %v1775 = vpack.c.b16 %v1771, %v1770
      %v1776 = vpack.c.b16 %v1772, %v1772
      %v1778 = vcombine.high %v1758, %v1758
      %v1780 = vunpack.c.l.s4 1983009808
      %v1781 = vunpack.c.0.s8 %v1780
      %v1782 = vlaneseq
      %v1783 = vshrl.u32 %v1782, 7
      %v1784 = vsub.s32 %v1781, %v1783
      %v1785 = vrot.slane %v1758, %v1784
      %v1787 = vunpack.c.l.s4 1983009808
      %v1788 = vunpack.c.0.s8 %v1787
      %v1789 = vlaneseq
      %v1790 = vshrl.u32 %v1789, 7
      %v1791 = vsub.s32 %v1788, %v1790
      %v1792 = vrot.slane %v1778, %v1791
      %v1793 = vcombine.high %v1785, %v1785
      %v1795 = vsel %vm225, %v1773, 0
      %v1798 = vsel %vm225, %v1774, 0
      %v1801 = vsel %vm225, %v1775, 0
      %v1804 = vsel %vm225, %v1776, 0
      %v1807 = vsel %vm238, %v1785, 0
      %v1810 = vsel %vm238, %v1793, 0
      %v1813 = vsel %vm238, %v1792, 0
      %1815 = vmatprep.subr.bf16.mxu0 %v1810
      %1816 = vmatpush1.bf16.msra.mxu0 %v1807
      %1817 = vmatprep.subr.bf16.mxu0 0
      %1818 = vmatpush1.bf16.msra.mxu0 0
      %1819 = vmatprep.subr.bf16.mxu0 0
      %1820 = vmatpush1.bf16.msra.mxu0 0
      %1821 = vmatprep.subr.bf16.mxu0 0
      %1822 = vmatpush1.bf16.msra.mxu0 0
      %1823 = vmatprep.subr.bf16.mxu0 0
      %1824 = vmatpush1.bf16.msra.mxu0 0
      %1825 = vmatprep.subr.bf16.mxu0 0
      %1826 = vmatpush1.bf16.msra.mxu0 0
      %1827 = vmatprep.subr.bf16.mxu0 0
      %1828 = vmatpush1.bf16.msra.mxu0 0
      %1829 = vmatprep.subr.bf16.mxu0 0
      %1830 = vmatpush1.bf16.msra.mxu0 0
      %1831 = vmatprep.subr.bf16.mxu0 0
      %1832 = vmatpush1.bf16.msra.mxu0 0
      %1833 = vmatprep.subr.bf16.mxu0 0
      %1834 = vmatpush1.bf16.msra.mxu0 0
      %1835 = vmatprep.subr.bf16.mxu0 0
      %1836 = vmatpush1.bf16.msra.mxu0 0
      %1837 = vmatprep.subr.bf16.mxu0 0
      %1838 = vmatpush1.bf16.msra.mxu0 0
      %1839 = vmatprep.subr.bf16.mxu0 0
      %1840 = vmatpush1.bf16.msra.mxu0 0
      %1841 = vmatprep.subr.bf16.mxu0 0
      %1842 = vmatpush1.bf16.msra.mxu0 0
      %1843 = vmatprep.subr.bf16.mxu0 0
      %1844 = vmatpush1.bf16.msra.mxu0 0
      %1845 = vmatprep.subr.bf16.mxu0 0
      %1846 = vmatpush1.bf16.msra.mxu0 0
      %1847 = vmatprep.mubr.bf16.mxu0 0
      %1848 = vmatmul.mubr.bf16.gmra.mrb[0].mxu0 %v1795
      %v1849 = vpop.f32.mrb[0].mxu0
      %v1850 = vadd.f32 0.0, %v1849
      %v1851 = vpop.f32.mrb[0].mxu0
      %v1852 = vadd.f32 0.0, %v1851
      %v1853 = vpop.f32.mrb[0].mxu0
      %v1854 = vadd.f32 0.0, %v1853
      %v1855 = vpop.f32.mrb[0].mxu0
      %v1856 = vadd.f32 0.0, %v1855
      %1857 = vmatprep.mubr.bf16.mxu0 0
      %1858 = vmatmul.mubr.bf16.gmra.mrb[0].mxu0 %v1798
      %v1859 = vpop.f32.mrb[0].mxu0
      %v1860 = vadd.f32 0.0, %v1859
      %v1861 = vpop.f32.mrb[0].mxu0
      %v1862 = vadd.f32 0.0, %v1861
      %v1863 = vpop.f32.mrb[0].mxu0
      %v1864 = vadd.f32 0.0, %v1863
      %v1865 = vpop.f32.mrb[0].mxu0
      %v1866 = vadd.f32 0.0, %v1865
      %1867 = vmatprep.mubr.bf16.mxu0 0
      %1868 = vmatmul.mubr.bf16.gmra.mrb[0].mxu0 %v1801
      %v1869 = vpop.f32.mrb[0].mxu0
      %v1870 = vadd.f32 0.0, %v1869
      %v1871 = vpop.f32.mrb[0].mxu0
      %v1872 = vadd.f32 0.0, %v1871
      %v1873 = vpop.f32.mrb[0].mxu0
      %v1874 = vadd.f32 0.0, %v1873
      %v1875 = vpop.f32.mrb[0].mxu0
      %v1876 = vadd.f32 0.0, %v1875
      %1877 = vmatprep.mubr.bf16.mxu0 0
      %1878 = vmatmul.mubr.bf16.gmra.mrb[0].mxu0 %v1804
      %v1879 = vpop.f32.mrb[0].mxu0
      %v1880 = vadd.f32 0.0, %v1879
      %v1881 = vpop.f32.mrb[0].mxu0
      %v1882 = vadd.f32 0.0, %v1881
      %v1883 = vpop.f32.mrb[0].mxu0
      %v1884 = vpop.f32.mrb[0].mxu0
      %1885 = vdwg.mxu0
      %1886 = vmatprep.subr.bf16.mxu0 0
      %1887 = vmatpush1.bf16.msra.mxu0 %v1813
      %1888 = vmatprep.subr.bf16.mxu0 0
      %1889 = vmatpush1.bf16.msra.mxu0 0
      %1890 = vmatprep.subr.bf16.mxu0 0
      %1891 = vmatpush1.bf16.msra.mxu0 0
      %1892 = vmatprep.subr.bf16.mxu0 0
      %1893 = vmatpush1.bf16.msra.mxu0 0
      %1894 = vmatprep.subr.bf16.mxu0 0
      %1895 = vmatpush1.bf16.msra.mxu0 0
      %1896 = vmatprep.subr.bf16.mxu0 0
      %1897 = vmatpush1.bf16.msra.mxu0 0
      %1898 = vmatprep.subr.bf16.mxu0 0
      %1899 = vmatpush1.bf16.msra.mxu0 0
      %1900 = vmatprep.subr.bf16.mxu0 0
      %1901 = vmatpush1.bf16.msra.mxu0 0
      %1902 = vmatprep.subr.bf16.mxu0 0
      %1903 = vmatpush1.bf16.msra.mxu0 0
      %1904 = vmatprep.subr.bf16.mxu0 0
      %1905 = vmatpush1.bf16.msra.mxu0 0
      %1906 = vmatprep.subr.bf16.mxu0 0
      %1907 = vmatpush1.bf16.msra.mxu0 0
      %1908 = vmatprep.subr.bf16.mxu0 0
      %1909 = vmatpush1.bf16.msra.mxu0 0
      %1910 = vmatprep.subr.bf16.mxu0 0
      %1911 = vmatpush1.bf16.msra.mxu0 0
      %1912 = vmatprep.subr.bf16.mxu0 0
      %1913 = vmatpush1.bf16.msra.mxu0 0
      %1914 = vmatprep.subr.bf16.mxu0 0
      %1915 = vmatpush1.bf16.msra.mxu0 0
      %1916 = vmatprep.subr.bf16.mxu0 0
      %1917 = vmatpush1.bf16.msra.mxu0 0
      %1918 = vmatprep.mubr.bf16.mxu0 0
      %1919 = vmatmul.mubr.bf16.gmra.mrb[0].mxu0 %v1795
      %v1920 = vpop.f32.mrb[0].mxu0
      %v1921 = vadd.f32 0.0, %v1920
      %v1922 = vpop.f32.mrb[0].mxu0
      %v1923 = vpop.f32.mrb[0].mxu0
      %v1924 = vadd.f32 0.0, %v1923
      %v1925 = vpop.f32.mrb[0].mxu0
      %1926 = vmatprep.mubr.bf16.mxu0 0
      %1927 = vmatmul.mubr.bf16.gmra.mrb[0].mxu0 %v1798
      %v1928 = vpop.f32.mrb[0].mxu0
      %v1929 = vadd.f32 0.0, %v1928
      %v1930 = vpop.f32.mrb[0].mxu0
      %v1931 = vpop.f32.mrb[0].mxu0
      %v1932 = vadd.f32 0.0, %v1931
      %v1933 = vpop.f32.mrb[0].mxu0
      %1934 = vmatprep.mubr.bf16.mxu0 0
      %1935 = vmatmul.mubr.bf16.gmra.mrb[0].mxu0 %v1801
      %v1936 = vpop.f32.mrb[0].mxu0
      %v1937 = vadd.f32 0.0, %v1936
      %v1938 = vpop.f32.mrb[0].mxu0
      %v1939 = vpop.f32.mrb[0].mxu0
      %v1940 = vadd.f32 0.0, %v1939
      %v1941 = vpop.f32.mrb[0].mxu0
      %1942 = vmatprep.mubr.bf16.mxu0 0
      %1943 = vmatmul.mubr.bf16.gmra.mrb[0].mxu0 %v1804
      %v1944 = vpop.f32.mrb[0].mxu0
      %v1945 = vadd.f32 0.0, %v1944
      %v1946 = vpop.f32.mrb[0].mxu0
      %v1947 = vpop.f32.mrb[0].mxu0
      %v1948 = vpop.f32.mrb[0].mxu0
      %1949 = vdwg.mxu0
      %v1950 = vadd.f32 %v1729, %v1850
      %v1951 = vadd.f32 %v1730, %v1852
      %v1952 = vadd.f32 %v1731, %v1921
      %v1953 = vadd.f32 %v1732, %v1854
      %v1954 = vadd.f32 %v1733, %v1856
      %v1955 = vadd.f32 %v1734, %v1924
      %v1956 = vadd.f32 %v1735, %v1860
      %v1957 = vadd.f32 %v1736, %v1862
      %v1958 = vadd.f32 %v1737, %v1929
      %v1959 = vadd.f32 %v1738, %v1864
      %v1960 = vadd.f32 %v1739, %v1866
      %v1961 = vadd.f32 %v1740, %v1932
      %v1962 = vadd.f32 %v1741, %v1870
      %v1963 = vadd.f32 %v1742, %v1872
      %v1964 = vadd.f32 %v1743, %v1937
      %v1965 = vadd.f32 %v1744, %v1874
      %v1966 = vadd.f32 %v1745, %v1876
      %v1967 = vadd.f32 %v1746, %v1940
      %v1968 = vadd.f32 %v1747, %v1880
      %v1969 = vadd.f32 %v1748, %v1882
      %v1970 = vadd.f32 %v1749, %v1945
      %v1971 = vld [vmem:[%s165 + $0x4] sm:$0xf]
      %v1972 = vld [vmem:[%s165 + $0x8] sm:$0xf]
      %v1973 = vld [vmem:[%s165 + $0xc] sm:$0xf]
      %v1974 = vld [vmem:[%s165 + $0x10] sm:$0xf]
      %v1975 = vld [vmem:[%s165 + $0x14] sm:$0xf]
      %v1976 = vld [vmem:[%s165 + $0x18] sm:$0xf]
      %v1977 = vld [vmem:[%s165 + $0x1c] sm:$0xf]
      %v1978 = vld [vmem:[%s165 + $0x20] sm:$0x1]
      %s1979 = scalar_lea.vmem %s1, 48
      %v1980 = vld [vmem:[%s1979] sm:$0x3f]
      %v1989 = vunpack.c.l.b16 %v1971
      %v1990 = vunpack.c.l.b16 %v1972
      %v1991 = vunpack.c.l.b16 %v1973
      %v1992 = vunpack.c.l.b16 %v1974
      %v1993 = vunpack.c.l.b16 %v1975
      %v1994 = vunpack.c.l.b16 %v1976
      %v1995 = vunpack.c.l.b16 %v1977
      %v1996 = vunpack.c.l.b16 %v1978
      %v1997 = vpack.c.b16 %v1990, %v1989
      %v1998 = vpack.c.b16 %v1992, %v1991
      %v1999 = vpack.c.b16 %v1994, %v1993
      %v2000 = vpack.c.b16 %v1996, %v1995
      %v2002 = vshrl.u32 %v1997, 16
      %v2004 = vshll.u32 %v1997, 16
      %v2006 = vrot.slane %v2004, 1
      %v2007 = vor.u32 %v2002, %v2006
      %v2009 = vshll.u32 %v1998, 16
      %v2011 = vrot.slane %v2009, 1
      %v2012 = vsel %vm604, %v2007, %v2011
      %v2013 = vshrl.u32 %v1998, 16
      %v2015 = vor.u32 %v2013, %v2011
      %v2017 = vshll.u32 %v1999, 16
      %v2019 = vrot.slane %v2017, 1
      %v2020 = vsel %vm604, %v2015, %v2019
      %v2021 = vshrl.u32 %v1999, 16
      %v2023 = vor.u32 %v2021, %v2019
      %v2025 = vshll.u32 %v2000, 16
      %v2027 = vrot.slane %v2025, 1
      %v2028 = vsel %vm604, %v2023, %v2027
      %v2029 = vshrl.u32 %v2000, 16
      %v2031 = vor.u32 %v2029, %v2027
      %v2033 = vcombine.high %v1980, %v1980
      %v2035 = vunpack.c.l.s4 1983009808
      %v2036 = vunpack.c.0.s8 %v2035
      %v2037 = vlaneseq
      %v2038 = vshrl.u32 %v2037, 7
      %v2039 = vsub.s32 %v2036, %v2038
      %v2040 = vrot.slane %v1980, %v2039
      %v2042 = vunpack.c.l.s4 1983009808
      %v2043 = vunpack.c.0.s8 %v2042
      %v2044 = vlaneseq
      %v2045 = vshrl.u32 %v2044, 7
      %v2046 = vsub.s32 %v2043, %v2045
      %v2047 = vrot.slane %v2033, %v2046
      %v2048 = vcombine.high %v2040, %v2040
      %v2050 = vsel %vm225, %v2012, 0
      %v2053 = vsel %vm225, %v2020, 0
      %v2056 = vsel %vm225, %v2028, 0
      %v2059 = vsel %vm225, %v2031, 0
      %v2062 = vsel %vm238, %v2040, 0
      %v2065 = vsel %vm238, %v2048, 0
      %v2068 = vsel %vm238, %v2047, 0
      %2070 = vmatprep.subr.bf16.mxu0 %v2065
      %2071 = vmatpush1.bf16.msra.mxu0 %v2062
      %2072 = vmatprep.subr.bf16.mxu0 0
      %2073 = vmatpush1.bf16.msra.mxu0 0
      %2074 = vmatprep.subr.bf16.mxu0 0
      %2075 = vmatpush1.bf16.msra.mxu0 0
      %2076 = vmatprep.subr.bf16.mxu0 0
      %2077 = vmatpush1.bf16.msra.mxu0 0
      %2078 = vmatprep.subr.bf16.mxu0 0
      %2079 = vmatpush1.bf16.msra.mxu0 0
      %2080 = vmatprep.subr.bf16.mxu0 0
      %2081 = vmatpush1.bf16.msra.mxu0 0
      %2082 = vmatprep.subr.bf16.mxu0 0
      %2083 = vmatpush1.bf16.msra.mxu0 0
      %2084 = vmatprep.subr.bf16.mxu0 0
      %2085 = vmatpush1.bf16.msra.mxu0 0
      %2086 = vmatprep.subr.bf16.mxu0 0
      %2087 = vmatpush1.bf16.msra.mxu0 0
      %2088 = vmatprep.subr.bf16.mxu0 0
      %2089 = vmatpush1.bf16.msra.mxu0 0
      %2090 = vmatprep.subr.bf16.mxu0 0
      %2091 = vmatpush1.bf16.msra.mxu0 0
      %2092 = vmatprep.subr.bf16.mxu0 0
      %2093 = vmatpush1.bf16.msra.mxu0 0
      %2094 = vmatprep.subr.bf16.mxu0 0
      %2095 = vmatpush1.bf16.msra.mxu0 0
      %2096 = vmatprep.subr.bf16.mxu0 0
      %2097 = vmatpush1.bf16.msra.mxu0 0
      %2098 = vmatprep.subr.bf16.mxu0 0
      %2099 = vmatpush1.bf16.msra.mxu0 0
      %2100 = vmatprep.subr.bf16.mxu0 0
      %2101 = vmatpush1.bf16.msra.mxu0 0
      %2102 = vmatprep.mubr.bf16.mxu0 0
      %2103 = vmatmul.mubr.bf16.gmra.mrb[0].mxu0 %v2050
      %v2104 = vpop.f32.mrb[0].mxu0
      %v2105 = vadd.f32 0.0, %v2104
      %v2106 = vpop.f32.mrb[0].mxu0
      %v2107 = vadd.f32 0.0, %v2106
      %v2108 = vpop.f32.mrb[0].mxu0
      %v2109 = vadd.f32 0.0, %v2108
      %v2110 = vpop.f32.mrb[0].mxu0
      %v2111 = vadd.f32 0.0, %v2110
      %2112 = vmatprep.mubr.bf16.mxu0 0
      %2113 = vmatmul.mubr.bf16.gmra.mrb[0].mxu0 %v2053
      %v2114 = vpop.f32.mrb[0].mxu0
      %v2115 = vadd.f32 0.0, %v2114
      %v2116 = vpop.f32.mrb[0].mxu0
      %v2117 = vadd.f32 0.0, %v2116
      %v2118 = vpop.f32.mrb[0].mxu0
      %v2119 = vadd.f32 0.0, %v2118
      %v2120 = vpop.f32.mrb[0].mxu0
      %v2121 = vadd.f32 0.0, %v2120
      %2122 = vmatprep.mubr.bf16.mxu0 0
      %2123 = vmatmul.mubr.bf16.gmra.mrb[0].mxu0 %v2056
      %v2124 = vpop.f32.mrb[0].mxu0
      %v2125 = vadd.f32 0.0, %v2124
      %v2126 = vpop.f32.mrb[0].mxu0
      %v2127 = vadd.f32 0.0, %v2126
      %v2128 = vpop.f32.mrb[0].mxu0
      %v2129 = vadd.f32 0.0, %v2128
      %v2130 = vpop.f32.mrb[0].mxu0
      %v2131 = vadd.f32 0.0, %v2130
      %2132 = vmatprep.mubr.bf16.mxu0 0
      %2133 = vmatmul.mubr.bf16.gmra.mrb[0].mxu0 %v2059
      %v2134 = vpop.f32.mrb[0].mxu0
      %v2135 = vadd.f32 0.0, %v2134
      %v2136 = vpop.f32.mrb[0].mxu0
      %v2137 = vadd.f32 0.0, %v2136
      %v2138 = vpop.f32.mrb[0].mxu0
      %v2139 = vpop.f32.mrb[0].mxu0
      %2140 = vdwg.mxu0
      %2141 = vmatprep.subr.bf16.mxu0 0
      %2142 = vmatpush1.bf16.msra.mxu0 %v2068
      %2143 = vmatprep.subr.bf16.mxu0 0
      %2144 = vmatpush1.bf16.msra.mxu0 0
      %2145 = vmatprep.subr.bf16.mxu0 0
      %2146 = vmatpush1.bf16.msra.mxu0 0
      %2147 = vmatprep.subr.bf16.mxu0 0
      %2148 = vmatpush1.bf16.msra.mxu0 0
      %2149 = vmatprep.subr.bf16.mxu0 0
      %2150 = vmatpush1.bf16.msra.mxu0 0
      %2151 = vmatprep.subr.bf16.mxu0 0
      %2152 = vmatpush1.bf16.msra.mxu0 0
      %2153 = vmatprep.subr.bf16.mxu0 0
      %2154 = vmatpush1.bf16.msra.mxu0 0
      %2155 = vmatprep.subr.bf16.mxu0 0
      %2156 = vmatpush1.bf16.msra.mxu0 0
      %2157 = vmatprep.subr.bf16.mxu0 0
      %2158 = vmatpush1.bf16.msra.mxu0 0
      %2159 = vmatprep.subr.bf16.mxu0 0
      %2160 = vmatpush1.bf16.msra.mxu0 0
      %2161 = vmatprep.subr.bf16.mxu0 0
      %2162 = vmatpush1.bf16.msra.mxu0 0
      %2163 = vmatprep.subr.bf16.mxu0 0
      %2164 = vmatpush1.bf16.msra.mxu0 0
      %2165 = vmatprep.subr.bf16.mxu0 0
      %2166 = vmatpush1.bf16.msra.mxu0 0
      %2167 = vmatprep.subr.bf16.mxu0 0
      %2168 = vmatpush1.bf16.msra.mxu0 0
      %2169 = vmatprep.subr.bf16.mxu0 0
      %2170 = vmatpush1.bf16.msra.mxu0 0
      %2171 = vmatprep.subr.bf16.mxu0 0
      %2172 = vmatpush1.bf16.msra.mxu0 0
      %2173 = vmatprep.mubr.bf16.mxu0 0
      %2174 = vmatmul.mubr.bf16.gmra.mrb[0].mxu0 %v2050
      %v2175 = vpop.f32.mrb[0].mxu0
      %v2176 = vadd.f32 0.0, %v2175
      %v2177 = vpop.f32.mrb[0].mxu0
      %v2178 = vpop.f32.mrb[0].mxu0
      %v2179 = vadd.f32 0.0, %v2178
      %v2180 = vpop.f32.mrb[0].mxu0
      %2181 = vmatprep.mubr.bf16.mxu0 0
      %2182 = vmatmul.mubr.bf16.gmra.mrb[0].mxu0 %v2053
      %v2183 = vpop.f32.mrb[0].mxu0
      %v2184 = vadd.f32 0.0, %v2183
      %v2185 = vpop.f32.mrb[0].mxu0
      %v2186 = vpop.f32.mrb[0].mxu0
      %v2187 = vadd.f32 0.0, %v2186
      %v2188 = vpop.f32.mrb[0].mxu0
      %2189 = vmatprep.mubr.bf16.mxu0 0
      %2190 = vmatmul.mubr.bf16.gmra.mrb[0].mxu0 %v2056
      %v2191 = vpop.f32.mrb[0].mxu0
      %v2192 = vadd.f32 0.0, %v2191
      %v2193 = vpop.f32.mrb[0].mxu0
      %v2194 = vpop.f32.mrb[0].mxu0
      %v2195 = vadd.f32 0.0, %v2194
      %v2196 = vpop.f32.mrb[0].mxu0
      %2197 = vmatprep.mubr.bf16.mxu0 0
      %2198 = vmatmul.mubr.bf16.gmra.mrb[0].mxu0 %v2059
      %v2199 = vpop.f32.mrb[0].mxu0
      %v2200 = vadd.f32 0.0, %v2199
      %v2201 = vpop.f32.mrb[0].mxu0
      %v2202 = vpop.f32.mrb[0].mxu0
      %v2203 = vpop.f32.mrb[0].mxu0
      %2204 = vdwg.mxu0
      %v2205 = vadd.f32 %v1950, %v2105
      %v2206 = vadd.f32 %v1951, %v2107
      %v2207 = vadd.f32 %v1952, %v2176
      %v2208 = vadd.f32 %v1953, %v2109
      %v2209 = vadd.f32 %v1954, %v2111
      %v2210 = vadd.f32 %v1955, %v2179
      %v2211 = vadd.f32 %v1956, %v2115
      %v2212 = vadd.f32 %v1957, %v2117
      %v2213 = vadd.f32 %v1958, %v2184
      %v2214 = vadd.f32 %v1959, %v2119
      %v2215 = vadd.f32 %v1960, %v2121
      %v2216 = vadd.f32 %v1961, %v2187
      %v2217 = vadd.f32 %v1962, %v2125
      %v2218 = vadd.f32 %v1963, %v2127
      %v2219 = vadd.f32 %v1964, %v2192
      %v2220 = vadd.f32 %v1965, %v2129
      %v2221 = vadd.f32 %v1966, %v2131
      %v2222 = vadd.f32 %v1967, %v2195
      %v2223 = vadd.f32 %v1968, %v2135
      %v2224 = vadd.f32 %v1969, %v2137
      %v2225 = vadd.f32 %v1970, %v2200
      %v2226 = vld [vmem:[%s2] sm:$0x7]
      %v2228 = vlaneseq
      %v2229 = vshrl.u32 %v2228, 7
      %v2230 = vsub.s32 0, %v2229
      %v2231 = vrot.slane %v2226, %v2230
      %v2232 = vlaneseq
      %v2233 = vshrl.u32 %v2232, 7
      %v2234 = vsub.s32 1, %v2233
      %v2235 = vrot.slane %v2226, %v2234
      %v2236 = vlaneseq
      %v2237 = vshrl.u32 %v2236, 7
      %v2238 = vsub.s32 2, %v2237
      %v2239 = vrot.slane %v2226, %v2238
      %v2243 = vadd.f32 %v2205, %v2231
      %v2244 = vadd.f32 %v2206, %v2235
      %v2245 = vadd.f32 %v2207, %v2239
      %v2246 = vadd.f32 %v2208, %v2231
      %v2247 = vadd.f32 %v2209, %v2235
      %v2248 = vadd.f32 %v2210, %v2239
      %v2249 = vadd.f32 %v2211, %v2231
      %v2250 = vadd.f32 %v2212, %v2235
      %v2251 = vadd.f32 %v2213, %v2239
      %v2252 = vadd.f32 %v2214, %v2231
      %v2253 = vadd.f32 %v2215, %v2235
      %v2254 = vadd.f32 %v2216, %v2239
      %v2255 = vadd.f32 %v2217, %v2231
      %v2256 = vadd.f32 %v2218, %v2235
      %v2257 = vadd.f32 %v2219, %v2239
      %v2258 = vadd.f32 %v2220, %v2231
      %v2259 = vadd.f32 %v2221, %v2235
      %v2260 = vadd.f32 %v2222, %v2239
      %v2261 = vadd.f32 %v2223, %v2231
      %v2262 = vadd.f32 %v2224, %v2235
      %v2263 = vadd.f32 %v2225, %v2239
      %v2264 = vmax.f32 %v2243, 0.0
      %v2265 = vmax.f32 %v2244, 0.0
      %v2266 = vmax.f32 %v2245, 0.0
      %v2267 = vmax.f32 %v2246, 0.0
      %v2268 = vmax.f32 %v2247, 0.0
      %v2269 = vmax.f32 %v2248, 0.0
      %v2270 = vmax.f32 %v2249, 0.0
      %v2271 = vmax.f32 %v2250, 0.0
      %v2272 = vmax.f32 %v2251, 0.0
      %v2273 = vmax.f32 %v2252, 0.0
      %v2274 = vmax.f32 %v2253, 0.0
      %v2275 = vmax.f32 %v2254, 0.0
      %v2276 = vmax.f32 %v2255, 0.0
      %v2277 = vmax.f32 %v2256, 0.0
      %v2278 = vmax.f32 %v2257, 0.0
      %v2279 = vmax.f32 %v2258, 0.0
      %v2280 = vmax.f32 %v2259, 0.0
      %v2281 = vmax.f32 %v2260, 0.0
      %v2282 = vmax.f32 %v2261, 0.0
      %v2283 = vmax.f32 %v2262, 0.0
      %v2284 = vmax.f32 %v2263, 0.0
      %2285 = vst [vmem:[%s170] sm:$0xff] %v2264
      %2286 = vst [vmem:[%s170 + $0x8] sm:$0xff] %v2265
      %2287 = vst [vmem:[%s170 + $0x10] sm:$0xff] %v2266
      %2288 = vst [vmem:[%s170 + $0x18] sm:$0xff] %v2267
      %2289 = vst [vmem:[%s170 + $0x20] sm:$0xff] %v2268
      %2290 = vst [vmem:[%s170 + $0x28] sm:$0xff] %v2269
      %2291 = vst [vmem:[%s170 + $0x30] sm:$0xff] %v2270
      %2292 = vst [vmem:[%s170 + $0x38] sm:$0xff] %v2271
      %2293 = vst [vmem:[%s170 + $0x40] sm:$0xff] %v2272
      %2294 = vst [vmem:[%s170 + $0x48] sm:$0xff] %v2273
      %2295 = vst [vmem:[%s170 + $0x50] sm:$0xff] %v2274
      %2296 = vst [vmem:[%s170 + $0x58] sm:$0xff] %v2275
      %2297 = vst [vmem:[%s170 + $0x60] sm:$0xff] %v2276
      %2298 = vst [vmem:[%s170 + $0x68] sm:$0xff] %v2277
      %2299 = vst [vmem:[%s170 + $0x70] sm:$0xff] %v2278
      %2300 = vst [vmem:[%s170 + $0x78] sm:$0xff] %v2279
      %2301 = vst [vmem:[%s170 + $0x80] sm:$0xff] %v2280
      %2302 = vst [vmem:[%s170 + $0x88] sm:$0xff] %v2281
      %2303 = vst [vmem:[%s170 + $0x90] sm:$0xff] %v2282
      %2304 = vst [vmem:[%s170 + $0x98] sm:$0xff] %v2283
      %2305 = vst [vmem:[%s170 + $0xa0] sm:$0xff] %v2284
      %p2306 = scmp.lt.s32.totalorder %s14, 1
      %s2307 = scalar_select %p2306, %s14, 1
      %s2308 = smul.addr %s2307, 21
      %s2309 = smul.addr %s2308, 8
      %s2310 = scalar_lea.vmem %s3, %s2309
      // Predicated region
      $region33: #{make_b_forward.5} parent=31 // pred_check
        %p2311 = pneg %p100
      $region34: #{make_b_forward.5} parent=31 // pred_check_branch
        %2313 = sbr.rel (%p2311) target = $region36
      $region35: #{make_b_forward.5} parent=31 // pred_region
        _
      $region36: #{make_b_forward.5} parent=31 // pred_fallthru
        _
    $region32: #{make_b_forward.5} parent=5 // pred_fallthru
      _
    %p2314 = scmp.le.s32.totalorder 2, %s9
    // Predicated region
    $region37: #{make_b_forward.5} parent=5 // pred_check
      %p2315 = pneg %p2314
    $region38: #{make_b_forward.5} parent=5 // pred_check_branch
      %2317 = sbr.rel (%p2315) target = $region40
    $region39: #{make_b_forward.5} parent=5 // pred_region
      %s2318 = ssub.s32 %s9, 2
      // Predicated region
      $region41: #{make_b_forward.5} parent=39 // pred_check
        %p2319 = pneg %p106
      $region42: #{make_b_forward.5} parent=39 // pred_check_branch
        %2321 = sbr.rel (%p2319) target = $region44
      $region43: #{make_b_forward.5} parent=39 // pred_region
        %p2322 = scmp.lt.s32.totalorder %s15, 1
        %s2323 = scalar_select %p2322, %s15, 1
        %s2324 = smul.addr %s2323, 21
        %s2325 = smul.addr %s2324, 8
        %s2326 = scalar_lea.vmem %s3, %s2325
      $region44: #{make_b_forward.5} parent=39 // pred_fallthru
        _
    $region40: #{make_b_forward.5} parent=5 // pred_fallthru
      _
  $region6: #{make_b_forward.5} parent=0 // loop_footer
    %s13 = sadd.s32 1, %s9
  $region7: #{make_b_forward.5} parent=0 // loop_footer_branch
    %8 = sbr.rel target = $region3
  $region8: #{make_b_forward.5} parent=0 // loop_exit
    _

</llo_original>
